<compile_context>
chip_gen: v5e
topology: v5e:2x2
jax: 0.10.0
libtpu: 0.0.40
codegen_flags: <defaults>
</compile_context>

<pallas_src>
import math
import functools

import numpy as np
import jax
import jax.numpy as jnp
from jax.experimental import pallas as pl
from jax.experimental.pallas import tpu as pltpu


BPS_LIST = (2, 4, 6)  # bits/symbol for QPSK, 16QAM, 64QAM (constellation sizes 4, 16, 64)


def _round_up(x, m):
    return (x + m - 1) // m * m


def _build_constellation_map(n_s, w_pad):
    """Affine map from concatenated bits (12*N_s) to concatenated per-encoder Tx
    vectors, each padded to w_pad lanes:  Tx_k = bits_k @ M_k + c_k."""
    hidden = sum(b * n_s for b in BPS_LIST)
    m = np.zeros((hidden, 3 * w_pad), np.float32)
    c = np.zeros((1, 3 * w_pad), np.float32)
    row = 0
    for k, bps in enumerate(BPS_LIST):
        b = bps // 2
        L = 2 ** b
        norm = math.sqrt((2 * L * L - 1) / 3.0)
        col = k * w_pad
        for n in range(n_s):
            for j in range(b):
                w = 2.0 * (2 ** (b - 1 - j)) / norm
                m[row + n * bps + j, col + 2 * n] = w          # I bit -> I level
                m[row + n * bps + b + j, col + 2 * n + 1] = w  # Q bit -> Q level
        c[0, col:col + 2 * n_s] = (1.0 - L) / norm
        row += bps * n_s
    return jnp.asarray(m), jnp.asarray(c)


def _selector_kernel(x_ref, g_ref, p_ref, w_ref, b_ref, m_ref, c_ref, o_ref,
                     *, w_pad, inv_tau, hard):
    # Fused 3-encoder Linear on the MXU (lane-dense: 12*N_s output columns).
    logits = jnp.dot(x_ref[...], w_ref[...],
                     preferred_element_type=jnp.float32) + b_ref[...]
    # gumbel_sigmoid (noise precomputed host-side, passed as an input).
    z = (logits + g_ref[...]) * inv_tau
    y = 1.0 / (1.0 + jnp.exp(-z))
    bits = jnp.where(y > 0.5, 1.0, 0.0) if hard else y
    # map_to_constellation for all three encoders at once (affine -> matmul).
    tx = jnp.dot(bits, m_ref[...],
                 preferred_element_type=jnp.float32) + c_ref[...]
    # Weighted sum over modulation schemes (128-aligned column slices).
    p = p_ref[...]
    acc = (p[:, 0:1] * tx[:, 0:w_pad]
           + p[:, 1:2] * tx[:, w_pad:2 * w_pad]
           + p[:, 2:3] * tx[:, 2 * w_pad:3 * w_pad])
    o_ref[...] = acc.astype(o_ref.dtype)


def power_normalize(x):
    # TODO(synk): PowerNormalize is not defined in the provided spec; using the
    # standard DeepSC convention (divide by sqrt(mean(x^2)) when avg power > 1),
    # applied in plain JAX since it is a global scalar reduction over the output.
    power = jnp.sqrt(jnp.mean(jnp.square(x)))
    return jnp.where(power > 1.0, x / power, x)


def channel_encoder_selector(y_tilde, mod_probs, encoder_params, gumbel_noise,
                             *, n_s, tau=1.0, hard=False, block_rows=256):
    """y_tilde: (B, d_model); mod_probs: (B, 3); encoder_params: 3 x (W, b) with
    W of shape (d_model, bps_k * N_s); gumbel_noise: (B, 12*N_s)."""
    B, d_model = y_tilde.shape
    w_cat = jnp.concatenate([w for w, _ in encoder_params], axis=1)
    b_cat = jnp.concatenate([b for _, b in encoder_params]).reshape(1, -1)
    hidden = w_cat.shape[1]
    assert hidden == sum(b * n_s for b in BPS_LIST)
    assert gumbel_noise.shape == (B, hidden)
    assert mod_probs.shape == (B, 3)

    out_w = 2 * n_s
    w_pad = _round_up(out_w, 128)          # lane-dense per-encoder output slab
    m_cat, c_cat = _build_constellation_map(n_s, w_pad)

    # Row tiling: large tiles amortize per-step overhead; keep >=2 grid steps
    # when the batch allows so the 'parallel' axis can split across TensorCores.
    rows8 = _round_up(B, 8)
    tm = block_rows if rows8 > block_rows else rows8
    rows_p = _round_up(B, tm)

    def pad_rows(a):
        return jnp.pad(a, ((0, rows_p - B), (0, 0))) if rows_p != B else a

    x_p = pad_rows(y_tilde)
    g_p = pad_rows(gumbel_noise)
    p_p = pad_rows(mod_probs)

    kernel = functools.partial(_selector_kernel, w_pad=w_pad,
                               inv_tau=1.0 / tau, hard=hard)

    # Explicit VMEM budget: double-buffered row tiles + resident weights + slack.
    tile_bytes = 4 * tm * (d_model + hidden + 128 + w_pad)
    weight_bytes = 4 * (d_model * hidden + hidden + hidden * 3 * w_pad + 3 * w_pad)
    scratch_bytes = 4 * tm * (hidden + 3 * w_pad)
    vmem_limit = int(min(max(2 * tile_bytes + weight_bytes + scratch_bytes
                             + (8 << 20), 32 << 20), 56 << 20))

    out = pl.pallas_call(
        kernel,
        out_shape=jax.ShapeDtypeStruct((rows_p, w_pad), y_tilde.dtype),
        grid_spec=pltpu.PrefetchScalarGridSpec(
            num_scalar_prefetch=0,
            grid=(rows_p // tm,),
            in_specs=[
                pl.BlockSpec((tm, d_model), lambda i: (i, 0)),        # y_tilde tile
                pl.BlockSpec((tm, hidden), lambda i: (i, 0)),         # gumbel noise
                pl.BlockSpec((tm, 3), lambda i: (i, 0)),              # mod_probs
                pl.BlockSpec((d_model, hidden), lambda i: (0, 0)),    # fused W
                pl.BlockSpec((1, hidden), lambda i: (0, 0)),          # fused bias
                pl.BlockSpec((hidden, 3 * w_pad), lambda i: (0, 0)),  # constellation map
                pl.BlockSpec((1, 3 * w_pad), lambda i: (0, 0)),       # constellation const
            ],
            out_specs=pl.BlockSpec((tm, w_pad), lambda i: (i, 0)),
        ),
        compiler_params=pltpu.CompilerParams(
            dimension_semantics=("parallel",),
            vmem_limit_bytes=vmem_limit,
        ),
    )(x_p, g_p, p_p, w_cat, b_cat, m_cat, c_cat)

    tx = out[:B, :out_w]
    return power_normalize(tx)


def init_encoder_params(key, d_model, n_s, dtype=jnp.float32):
    """nn.Linear-style init (uniform(+-1/sqrt(fan_in))); weights stored (in, out)."""
    params = []
    bound = 1.0 / math.sqrt(d_model)
    keys = jax.random.split(key, 2 * len(BPS_LIST))
    for i, bps in enumerate(BPS_LIST):
        out = bps * n_s
        w = jax.random.uniform(keys[2 * i], (d_model, out), dtype, -bound, bound)
        b = jax.random.uniform(keys[2 * i + 1], (out,), dtype, -bound, bound)
        params.append((w, b))
    return params


def reference_forward(y, p, params, g, n_s, tau=1.0, hard=False):
    """Plain-JAX port of the PyTorch forward for verification."""
    B = y.shape[0]
    txs = []
    off = 0
    for (w, b), bps in zip(params, BPS_LIST):
        logits = y @ w + b
        gk = g[:, off:off + bps * n_s]
        off += bps * n_s
        yk = jax.nn.sigmoid((logits + gk) / tau)
        bits = jnp.where(yk > 0.5, 1.0, 0.0) if hard else yk
        bits = bits.reshape(B, n_s, bps)
        bh = bps // 2
        pow2 = 2.0 ** jnp.arange(bh - 1, -1, -1, dtype=jnp.float32)
        i_int = bits[..., :bh] @ pow2
        q_int = bits[..., bh:] @ pow2
        L = 2 ** bh
        norm = math.sqrt((2 * L * L - 1) / 3.0)
        sym = jnp.stack([2 * i_int + 1 - L, 2 * q_int + 1 - L], axis=-1) / norm
        txs.append(sym.reshape(B, -1))
    tx_stack = jnp.stack(txs, axis=-1)           # (B, 2*N_s, 3)
    out = (tx_stack * p[:, None, :]).sum(-1)
    return power_normalize(out)


if __name__ == "__main__":
    key = jax.random.PRNGKey(0)
    k_x, k_p, k_w, k_g = jax.random.split(key, 4)

    # Small but lane/sublane-friendly sizes: output width 2*N_s = 128.
    B, d_model, n_s = 512, 128, 64
    hidden = sum(b * n_s for b in BPS_LIST)

    y_tilde = jax.random.normal(k_x, (B, d_model), jnp.float32)
    mod_probs = jax.nn.softmax(jax.random.normal(k_p, (B, 3), jnp.float32), axis=-1)
    params = init_encoder_params(k_w, d_model, n_s)

    u = jax.random.uniform(k_g, (B, hidden), jnp.float32)
    gumbel = -jnp.log(-jnp.log(u + 1e-20) + 1e-20)

    out = channel_encoder_selector(y_tilde, mod_probs, params, gumbel, n_s=n_s)
    out = jax.block_until_ready(out)

    ref = reference_forward(y_tilde, mod_probs, params, gumbel, n_s)
    assert out.shape == (B, 2 * n_s)
    assert jnp.allclose(out, ref, atol=1e-4, rtol=1e-4), float(
        jnp.max(jnp.abs(out - ref)))

    print("KERNEL_OK")
</pallas_src>

<mosaic_0001>
module attributes {stable_mosaic.version = 11 : i64} {
  func.func @_selector_kernel(%arg0: i32, %arg1: memref<256x128xf32, #tpu.memory_space<vmem>>, %arg2: memref<256x768xf32, #tpu.memory_space<vmem>>, %arg3: memref<256x3xf32, #tpu.memory_space<vmem>>, %arg4: memref<128x768xf32, #tpu.memory_space<vmem>>, %arg5: memref<1x768xf32, #tpu.memory_space<vmem>>, %arg6: memref<768x384xf32, #tpu.memory_space<vmem>>, %arg7: memref<1x384xf32, #tpu.memory_space<vmem>>, %arg8: memref<256x128xf32, #tpu.memory_space<vmem>>) attributes {dimension_semantics = [#tpu.dimension_semantics<parallel>], iteration_bounds = array<i64: 2>, scalar_prefetch = 0 : i64, scratch_operands = 0 : i64, tpu.core_type = #tpu.core_type<tc>, window_params = [{transform_indices = @transform_0, window_bounds = array<i64: 256, 128>}, {transform_indices = @transform_1, window_bounds = array<i64: 256, 768>}, {transform_indices = @transform_2, window_bounds = array<i64: 256, 3>}, {pipeline_mode = #tpu.pipeline_mode<synchronous>, transform_indices = @transform_3, window_bounds = array<i64: 128, 768>}, {pipeline_mode = #tpu.pipeline_mode<synchronous>, transform_indices = @transform_4, window_bounds = array<i64: 1, 768>}, {pipeline_mode = #tpu.pipeline_mode<synchronous>, transform_indices = @transform_5, window_bounds = array<i64: 768, 384>}, {pipeline_mode = #tpu.pipeline_mode<synchronous>, transform_indices = @transform_6, window_bounds = array<i64: 1, 384>}, {transform_indices = @transform_7, window_bounds = array<i64: 256, 128>}]} {
    %c0 = arith.constant 0 : index
    %c0_0 = arith.constant 0 : index
    %0 = vector.load %arg1[%c0, %c0_0] : memref<256x128xf32, #tpu.memory_space<vmem>>, vector<256x128xf32>
    %c0_1 = arith.constant 0 : index
    %c0_2 = arith.constant 0 : index
    %1 = vector.load %arg4[%c0_1, %c0_2] : memref<128x768xf32, #tpu.memory_space<vmem>>, vector<128x768xf32>
    %cst = arith.constant dense<0.000000e+00> : vector<256x768xf32>
    %2 = tpu.matmul %0, %1, %cst {dimension_numbers = #tpu.dot_dimension_numbers<[1], [0], [0], [1], [0, 0, 1, 1], [], []>} : vector<256x128xf32>, vector<128x768xf32>, vector<256x768xf32> -> vector<256x768xf32>
    %c0_3 = arith.constant 0 : index
    %c0_4 = arith.constant 0 : index
    %3 = vector.load %arg5[%c0_3, %c0_4] : memref<1x768xf32, #tpu.memory_space<vmem>>, vector<1x768xf32>
    %4 = vector.broadcast %3 : vector<1x768xf32> to vector<256x768xf32>
    %5 = arith.addf %2, %4 : vector<256x768xf32>
    %c0_5 = arith.constant 0 : index
    %c0_6 = arith.constant 0 : index
    %6 = vector.load %arg2[%c0_5, %c0_6] : memref<256x768xf32, #tpu.memory_space<vmem>>, vector<256x768xf32>
    %7 = arith.addf %5, %6 : vector<256x768xf32>
    %cst_7 = arith.constant 1.000000e+00 : f32
    %8 = vector.broadcast %cst_7 : f32 to vector<256x768xf32>
    %9 = arith.mulf %7, %8 : vector<256x768xf32>
    %cst_8 = arith.constant 0.000000e+00 : f32
    %10 = vector.broadcast %cst_8 : f32 to vector<256x768xf32>
    %11 = arith.subf %10, %9 : vector<256x768xf32>
    %12 = math.exp %11 : vector<256x768xf32>
    %cst_9 = arith.constant 1.000000e+00 : f32
    %13 = vector.broadcast %cst_9 : f32 to vector<256x768xf32>
    %14 = arith.addf %13, %12 : vector<256x768xf32>
    %cst_10 = arith.constant 1.000000e+00 : f32
    %15 = vector.broadcast %cst_10 : f32 to vector<256x768xf32>
    %16 = arith.divf %15, %14 : vector<256x768xf32>
    %c0_11 = arith.constant 0 : index
    %c0_12 = arith.constant 0 : index
    %17 = vector.load %arg6[%c0_11, %c0_12] : memref<768x384xf32, #tpu.memory_space<vmem>>, vector<768x384xf32>
    %cst_13 = arith.constant dense<0.000000e+00> : vector<256x384xf32>
    %18 = tpu.matmul %16, %17, %cst_13 {dimension_numbers = #tpu.dot_dimension_numbers<[1], [0], [0], [1], [0, 0, 1, 1], [], []>} : vector<256x768xf32>, vector<768x384xf32>, vector<256x384xf32> -> vector<256x384xf32>
    %c0_14 = arith.constant 0 : index
    %c0_15 = arith.constant 0 : index
    %19 = vector.load %arg7[%c0_14, %c0_15] : memref<1x384xf32, #tpu.memory_space<vmem>>, vector<1x384xf32>
    %20 = vector.broadcast %19 : vector<1x384xf32> to vector<256x384xf32>
    %21 = arith.addf %18, %20 : vector<256x384xf32>
    %c0_16 = arith.constant 0 : index
    %c0_17 = arith.constant 0 : index
    %22 = vector.load %arg3[%c0_16, %c0_17] : memref<256x3xf32, #tpu.memory_space<vmem>>, vector<256x3xf32>
    %23 = vector.extract_strided_slice %22 {offsets = [0, 0], sizes = [256, 1], strides = [1, 1]} : vector<256x3xf32> to vector<256x1xf32>
    %24 = vector.extract_strided_slice %21 {offsets = [0, 0], sizes = [256, 128], strides = [1, 1]} : vector<256x384xf32> to vector<256x128xf32>
    %25 = vector.broadcast %23 : vector<256x1xf32> to vector<256x128xf32>
    %26 = arith.mulf %25, %24 : vector<256x128xf32>
    %27 = vector.extract_strided_slice %22 {offsets = [0, 1], sizes = [256, 1], strides = [1, 1]} : vector<256x3xf32> to vector<256x1xf32>
    %28 = vector.extract_strided_slice %21 {offsets = [0, 128], sizes = [256, 128], strides = [1, 1]} : vector<256x384xf32> to vector<256x128xf32>
    %29 = vector.broadcast %27 : vector<256x1xf32> to vector<256x128xf32>
    %30 = arith.mulf %29, %28 : vector<256x128xf32>
    %31 = arith.addf %26, %30 : vector<256x128xf32>
    %32 = vector.extract_strided_slice %22 {offsets = [0, 2], sizes = [256, 1], strides = [1, 1]} : vector<256x3xf32> to vector<256x1xf32>
    %33 = vector.extract_strided_slice %21 {offsets = [0, 256], sizes = [256, 128], strides = [1, 1]} : vector<256x384xf32> to vector<256x128xf32>
    %34 = vector.broadcast %32 : vector<256x1xf32> to vector<256x128xf32>
    %35 = arith.mulf %34, %33 : vector<256x128xf32>
    %36 = arith.addf %31, %35 : vector<256x128xf32>
    %c0_18 = arith.constant 0 : index
    %c0_19 = arith.constant 0 : index
    %37 = vector.load %arg8[%c0_18, %c0_19] : memref<256x128xf32, #tpu.memory_space<vmem>>, vector<256x128xf32>
    tpu.vector_store %arg8[%c0_18, %c0_19], %36 {strides = array<i32>} : memref<256x128xf32, #tpu.memory_space<vmem>>, vector<256x128xf32>,
    return
  }
  func.func @transform_0(%arg0: i32) -> (i32, i32) {
    %c0_i32 = arith.constant 0 : i32
    %c0_i32_0 = arith.constant 0 : i32
    return %arg0, %c0_i32 : i32, i32
  }
  func.func @transform_1(%arg0: i32) -> (i32, i32) {
    %c0_i32 = arith.constant 0 : i32
    %c0_i32_0 = arith.constant 0 : i32
    return %arg0, %c0_i32 : i32, i32
  }
  func.func @transform_2(%arg0: i32) -> (i32, i32) {
    %c0_i32 = arith.constant 0 : i32
    %c0_i32_0 = arith.constant 0 : i32
    return %arg0, %c0_i32 : i32, i32
  }
  func.func @transform_3(%arg0: i32) -> (i32, i32) {
    %c0_i32 = arith.constant 0 : i32
    %c0_i32_0 = arith.constant 0 : i32
    %c0_i32_1 = arith.constant 0 : i32
    return %c0_i32, %c0_i32_0 : i32, i32
  }
  func.func @transform_4(%arg0: i32) -> (i32, i32) {
    %c0_i32 = arith.constant 0 : i32
    %c0_i32_0 = arith.constant 0 : i32
    %c0_i32_1 = arith.constant 0 : i32
    return %c0_i32, %c0_i32_0 : i32, i32
  }
  func.func @transform_5(%arg0: i32) -> (i32, i32) {
    %c0_i32 = arith.constant 0 : i32
    %c0_i32_0 = arith.constant 0 : i32
    %c0_i32_1 = arith.constant 0 : i32
    return %c0_i32, %c0_i32_0 : i32, i32
  }
  func.func @transform_6(%arg0: i32) -> (i32, i32) {
    %c0_i32 = arith.constant 0 : i32
    %c0_i32_0 = arith.constant 0 : i32
    %c0_i32_1 = arith.constant 0 : i32
    return %c0_i32, %c0_i32_0 : i32, i32
  }
  func.func @transform_7(%arg0: i32) -> (i32, i32) {
    %c0_i32 = arith.constant 0 : i32
    %c0_i32_0 = arith.constant 0 : i32
    return %arg0, %c0_i32 : i32, i32
  }
}

</mosaic_0001>

<llo_original>
// kernel: tpu_custom_call.1
$region0: #{tpu_custom_call.1}
  #allocation0 [shape = 'u32[]', space=smem, size = 0x4, offset = 0x4, fixed_abs, tag = 'smem constant byte address 0x4 - core index']
  #allocation1 [shape = 'u32[72,128]{1,0:T(1,128)}', space=vmem, size = 0x9000, scoped, tag = 'internal scratch']
  %s0 = inlined_call_operand.hbm [shape: f32[512,128], index: 0, kind: input, shape index: {}]
  %s1 = inlined_call_operand.hbm [shape: f32[512,768], index: 1, kind: input, shape index: {}]
  %s2 = inlined_call_operand.vmem [shape: f32[512,3], index: 2, kind: input, shape index: {}]
  %s3 = inlined_call_operand.hbm [shape: f32[128,768], index: 3, kind: input, shape index: {}]
  %s4 = inlined_call_operand.hbm [shape: f32[1,768], index: 4, kind: input, shape index: {}]
  %s5 = inlined_call_operand.hbm [shape: f32[768,384], index: 5, kind: input, shape index: {}]
  %s6 = inlined_call_operand.hbm [shape: f32[1,384], index: 6, kind: input, shape index: {}]
  %s7 = inlined_call_operand.hbm [shape: f32[512,128], index: 7, kind: output, shape index: {}]
  %s8 = sld [smem:[#allocation0]]
  $region85: #{tpu_custom_call.1} parent=0
    _
  %s10 = ssub.s32 1, %s8
  %s11 = scalar_select 0, %s10, %s8
  $region1: #{tpu_custom_call.1} parent=0
    #allocation2 [shape = 'u8[262144]{0}', space=vmem, size = 0x40000, scoped, tag = 'input window, operand 0']
    #allocation3 [shape = 's32[2]{0}', space=sflag, size = 0x8, scoped, tag = 'scoped memory for tpu_custom_call.1']
    #allocation4 [shape = 's32[2]{0}', space=sflag, size = 0x8, scoped, tag = 'scoped memory for tpu_custom_call.1']
    #allocation5 [shape = 'u8[1572864]{0}', space=vmem, size = 0x180000, scoped, tag = 'input window, operand 1']
    #allocation6 [shape = 's32[2]{0}', space=sflag, size = 0x8, scoped, tag = 'scoped memory for tpu_custom_call.1']
    #allocation7 [shape = 'u8[393216]{0}', space=vmem, size = 0x60000, scoped, tag = 'input window, operand 3, single buffered']
    #allocation8 [shape = 'u8[3072]{0}', space=vmem, size = 0xc00, scoped, tag = 'input window, operand 4, single buffered']
    #allocation9 [shape = 's32[1]{0}', space=sflag, size = 0x4, scoped, tag = 'scoped memory for tpu_custom_call.1']
    #allocation10 [shape = 'u8[1179648]{0}', space=vmem, size = 0x120000, scoped, tag = 'input window, operand 5, single buffered']
    #allocation11 [shape = 'u8[1536]{0}', space=vmem, size = 0x800, scoped, tag = 'input window, operand 6, single buffered']
    #allocation12 [shape = 's32[1]{0}', space=sflag, size = 0x4, scoped, tag = 'scoped memory for tpu_custom_call.1']
    #allocation13 [shape = 'u8[262144]{0}', space=vmem, size = 0x40000, scoped, tag = 'output window, operand 0']
    %12 = vsyncpa [#allocation3], 0
    %s13 = scalar_lea.sflag [#allocation3], 1
    %14 = vsyncpa %s13, 0
    %15 = vsyncpa [#allocation6], 0
    %s16 = scalar_lea.sflag [#allocation6], 1
    %17 = vsyncpa %s16, 0
    %18 = vsyncpa [#allocation9], 0
    %19 = vsyncpa [#allocation12], 0
    %20 = vsyncpa [#allocation4], 0
    %s21 = scalar_lea.sflag [#allocation4], 1
    %22 = vsyncpa %s21, 0
    loop: start=0, step=1, limit=4
    $region2: #{tpu_custom_call.1} parent=1 // loop_pre_header
      _
    $region3: #{tpu_custom_call.1} parent=1 // loop_header
      %s24 = sphi 0, %s28
      %p25 = scmp.ge.s32.totalorder %s24, 4
      %s34 = sphi 0, %s36
      %s37 = sphi 0, %s34
      %s38 = sphi 0, %s37
      %s54 = sphi 0, %s38
      %s60 = sphi 0, %s62
      %s63 = sphi 0, %s60
      %s64 = sphi 0, %s63
      %s80 = sphi 0, %s64
      %s86 = sphi 0, %s88
      %s89 = sphi 0, %s86
      %s90 = sphi 0, %s89
      %s106 = sphi 0, %s90
      %s110 = sphi 0, %s110
      %s112 = sphi 0, %s110
      %s113 = sphi 0, %s112
      %s127 = sphi 0, %s113
      %s131 = sphi 0, %s131
      %s133 = sphi 0, %s131
      %s134 = sphi 0, %s133
      %s148 = sphi 0, %s134
      %s152 = sphi 0, %s152
      %s154 = sphi 0, %s152
      %s155 = sphi 0, %s154
      %s169 = sphi 0, %s155
      %s173 = sphi 0, %s173
      %s175 = sphi 0, %s173
      %s176 = sphi 0, %s175
      %s190 = sphi 0, %s176
      %s196 = sphi 0, %s198
      %s199 = sphi 0, %s196
      %s200 = sphi 0, %s199
      %s216 = sphi 0, %s200
    $region4: #{tpu_custom_call.1} parent=1 // loop_header_branch
      %27 = sbr.rel (%p25) target = $region8
    $region5: #{tpu_custom_call.1} parent=1 // loop_body
      %s29 = ssub.s32 %s24, 1
      %s30 = ssub.s32 %s24, 2
      %s31 = sadd.s32 %s24, 1
      %s32 = ssub.s32 %s24, %s31
      %p33 = scmp.eq.s32.totalorder %s32, 0
      %s35 = sadd.s32 %s34, 1
      %s36 = scalar_select %p33, %s34, %s35
      %p39 = pneg %p33
      %p40 = scmp.eq.s32.totalorder %s24, 1
      %p41 = por %p39, %p40
      %p42 = scmp.ne.s32.totalorder %s34, %s37
      %p43 = scmp.eq.s32.totalorder %s24, 0
      %p44 = por %p42, %p43
      %p45 = scmp.ne.s32.totalorder %s34, %s37
      %p46 = scmp.eq.s32.totalorder %s29, 1
      %p47 = por %p45, %p46
      %p48 = scmp.ne.s32.totalorder %s37, %s38
      %p49 = scmp.eq.s32.totalorder %s29, 0
      %p50 = por %p48, %p49
      %p51 = scmp.ne.s32.totalorder %s37, %s38
      %p52 = scmp.eq.s32.totalorder %s30, 1
      %p53 = por %p51, %p52
      %p55 = scmp.ne.s32.totalorder %s38, %s54
      %p56 = scmp.eq.s32.totalorder %s30, 0
      %p57 = por %p55, %p56
      %s58 = ssub.s32 %s24, %s31
      %p59 = scmp.eq.s32.totalorder %s58, 0
      %s61 = sadd.s32 %s60, 1
      %s62 = scalar_select %p59, %s60, %s61
      %p65 = pneg %p59
      %p66 = scmp.eq.s32.totalorder %s24, 1
      %p67 = por %p65, %p66
      %p68 = scmp.ne.s32.totalorder %s60, %s63
      %p69 = scmp.eq.s32.totalorder %s24, 0
      %p70 = por %p68, %p69
      %p71 = scmp.ne.s32.totalorder %s60, %s63
      %p72 = scmp.eq.s32.totalorder %s29, 1
      %p73 = por %p71, %p72
      %p74 = scmp.ne.s32.totalorder %s63, %s64
      %p75 = scmp.eq.s32.totalorder %s29, 0
      %p76 = por %p74, %p75
      %p77 = scmp.ne.s32.totalorder %s63, %s64
      %p78 = scmp.eq.s32.totalorder %s30, 1
      %p79 = por %p77, %p78
      %p81 = scmp.ne.s32.totalorder %s64, %s80
      %p82 = scmp.eq.s32.totalorder %s30, 0
      %p83 = por %p81, %p82
      %s84 = ssub.s32 %s24, %s31
      %p85 = scmp.eq.s32.totalorder %s84, 0
      %s87 = sadd.s32 %s86, 1
      %s88 = scalar_select %p85, %s86, %s87
      %p91 = pneg %p85
      %p92 = scmp.eq.s32.totalorder %s24, 1
      %p93 = por %p91, %p92
      %p94 = scmp.ne.s32.totalorder %s86, %s89
      %p95 = scmp.eq.s32.totalorder %s24, 0
      %p96 = por %p94, %p95
      %p97 = scmp.ne.s32.totalorder %s86, %s89
      %p98 = scmp.eq.s32.totalorder %s29, 1
      %p99 = por %p97, %p98
      %p100 = scmp.ne.s32.totalorder %s89, %s90
      %p101 = scmp.eq.s32.totalorder %s29, 0
      %p102 = por %p100, %p101
      %p103 = scmp.ne.s32.totalorder %s89, %s90
      %p104 = scmp.eq.s32.totalorder %s30, 1
      %p105 = por %p103, %p104
      %p107 = scmp.ne.s32.totalorder %s90, %s106
      %p108 = scmp.eq.s32.totalorder %s30, 0
      %p109 = por %p107, %p108
      %s111 = sadd.s32 %s110, 1
      %p114 = scmp.eq.s32.totalorder %s24, 1
      %p115 = scmp.ne.s32.totalorder %s110, %s112
      %p116 = scmp.eq.s32.totalorder %s24, 0
      %p117 = por %p115, %p116
      %p118 = scmp.ne.s32.totalorder %s110, %s112
      %p119 = scmp.eq.s32.totalorder %s29, 1
      %p120 = por %p118, %p119
      %p121 = scmp.ne.s32.totalorder %s112, %s113
      %p122 = scmp.eq.s32.totalorder %s29, 0
      %p123 = por %p121, %p122
      %p124 = scmp.ne.s32.totalorder %s112, %s113
      %p125 = scmp.eq.s32.totalorder %s30, 1
      %p126 = por %p124, %p125
      %p128 = scmp.ne.s32.totalorder %s113, %s127
      %p129 = scmp.eq.s32.totalorder %s30, 0
      %p130 = por %p128, %p129
      %s132 = sadd.s32 %s131, 1
      %p135 = scmp.eq.s32.totalorder %s24, 1
      %p136 = scmp.ne.s32.totalorder %s131, %s133
      %p137 = scmp.eq.s32.totalorder %s24, 0
      %p138 = por %p136, %p137
      %p139 = scmp.ne.s32.totalorder %s131, %s133
      %p140 = scmp.eq.s32.totalorder %s29, 1
      %p141 = por %p139, %p140
      %p142 = scmp.ne.s32.totalorder %s133, %s134
      %p143 = scmp.eq.s32.totalorder %s29, 0
      %p144 = por %p142, %p143
      %p145 = scmp.ne.s32.totalorder %s133, %s134
      %p146 = scmp.eq.s32.totalorder %s30, 1
      %p147 = por %p145, %p146
      %p149 = scmp.ne.s32.totalorder %s134, %s148
      %p150 = scmp.eq.s32.totalorder %s30, 0
      %p151 = por %p149, %p150
      %s153 = sadd.s32 %s152, 1
      %p156 = scmp.eq.s32.totalorder %s24, 1
      %p157 = scmp.ne.s32.totalorder %s152, %s154
      %p158 = scmp.eq.s32.totalorder %s24, 0
      %p159 = por %p157, %p158
      %p160 = scmp.ne.s32.totalorder %s152, %s154
      %p161 = scmp.eq.s32.totalorder %s29, 1
      %p162 = por %p160, %p161
      %p163 = scmp.ne.s32.totalorder %s154, %s155
      %p164 = scmp.eq.s32.totalorder %s29, 0
      %p165 = por %p163, %p164
      %p166 = scmp.ne.s32.totalorder %s154, %s155
      %p167 = scmp.eq.s32.totalorder %s30, 1
      %p168 = por %p166, %p167
      %p170 = scmp.ne.s32.totalorder %s155, %s169
      %p171 = scmp.eq.s32.totalorder %s30, 0
      %p172 = por %p170, %p171
      %s174 = sadd.s32 %s173, 1
      %p177 = scmp.eq.s32.totalorder %s24, 1
      %p178 = scmp.ne.s32.totalorder %s173, %s175
      %p179 = scmp.eq.s32.totalorder %s24, 0
      %p180 = por %p178, %p179
      %p181 = scmp.ne.s32.totalorder %s173, %s175
      %p182 = scmp.eq.s32.totalorder %s29, 1
      %p183 = por %p181, %p182
      %p184 = scmp.ne.s32.totalorder %s175, %s176
      %p185 = scmp.eq.s32.totalorder %s29, 0
      %p186 = por %p184, %p185
      %p187 = scmp.ne.s32.totalorder %s175, %s176
      %p188 = scmp.eq.s32.totalorder %s30, 1
      %p189 = por %p187, %p188
      %p191 = scmp.ne.s32.totalorder %s176, %s190
      %p192 = scmp.eq.s32.totalorder %s30, 0
      %p193 = por %p191, %p192
      %s194 = ssub.s32 %s24, %s31
      %p195 = scmp.eq.s32.totalorder %s194, 0
      %s197 = sadd.s32 %s196, 1
      %s198 = scalar_select %p195, %s196, %s197
      %p201 = pneg %p195
      %p202 = scmp.eq.s32.totalorder %s24, 1
      %p203 = por %p201, %p202
      %p204 = scmp.ne.s32.totalorder %s196, %s199
      %p205 = scmp.eq.s32.totalorder %s24, 0
      %p206 = por %p204, %p205
      %p207 = scmp.ne.s32.totalorder %s196, %s199
      %p208 = scmp.eq.s32.totalorder %s29, 1
      %p209 = por %p207, %p208
      %p210 = scmp.ne.s32.totalorder %s199, %s200
      %p211 = scmp.eq.s32.totalorder %s29, 0
      %p212 = por %p210, %p211
      %p213 = scmp.ne.s32.totalorder %s199, %s200
      %p214 = scmp.eq.s32.totalorder %s30, 1
      %p215 = por %p213, %p214
      %p217 = scmp.ne.s32.totalorder %s200, %s216
      %p218 = scmp.eq.s32.totalorder %s30, 0
      %p219 = por %p217, %p218
      %p220 = scmp.le.s32.totalorder 1, %s24
      %p221 = scmp.lt.s32.totalorder %s24, 3
      %p222 = pnand %p220, %p221
      %p223 = pneg %p222
      // Predicated region
      $region9: #{tpu_custom_call.1} parent=5 // pred_check
        _
      $region10: #{tpu_custom_call.1} parent=5 // pred_check_branch
        %225 = sbr.rel (%p222) target = $region12
      $region11: #{tpu_custom_call.1} parent=5 // pred_region
        %s226 = ssub.s32 %s24, 1
        // Predicated region
        $region13: #{tpu_custom_call.1} parent=11 // pred_check
          %p227 = pneg %p123
        $region14: #{tpu_custom_call.1} parent=11 // pred_check_branch
          %229 = sbr.rel (%p227) target = $region16
        $region15: #{tpu_custom_call.1} parent=11 // pred_region
          %231 = vsyncadd [#allocation6], 0
          %s232 = sshll.u32 %s3, 4
          %s233 = int_to_ptr.hbm [resolvable:$true] %s232
          %s234 = sshll.u32 [#allocation7], 4
          %s235 = int_to_ptr.vmem [resolvable:$true] %s234
          %240 = dma.hbm_to_vmem [thread:$0]  %s233, 12288, %s235, [#allocation6], 768, 768, 48
        $region16: #{tpu_custom_call.1} parent=11 // pred_fallthru
          _
        // Predicated region
        $region17: #{tpu_custom_call.1} parent=11 // pred_check
          %p241 = pneg %p144
        $region18: #{tpu_custom_call.1} parent=11 // pred_check_branch
          %243 = sbr.rel (%p241) target = $region20
        $region19: #{tpu_custom_call.1} parent=11 // pred_region
          %245 = vsyncadd [#allocation9], 0
          %s247 = sshll.u32 %s4, 4
          %s248 = int_to_ptr.hbm [resolvable:$true] %s247
          %s249 = sshll.u32 [#allocation8], 4
          %s250 = int_to_ptr.vmem [resolvable:$true] %s249
          %252 = dma.hbm_to_vmem [thread:$0]  %s248, 96, %s250, [#allocation9]
        $region20: #{tpu_custom_call.1} parent=11 // pred_fallthru
          _
        // Predicated region
        $region21: #{tpu_custom_call.1} parent=11 // pred_check
          %p253 = pneg %p165
        $region22: #{tpu_custom_call.1} parent=11 // pred_check_branch
          %255 = sbr.rel (%p253) target = $region24
        $region23: #{tpu_custom_call.1} parent=11 // pred_region
          %257 = vsyncadd [#allocation9], 0
          %s258 = sshll.u32 %s5, 4
          %s259 = int_to_ptr.hbm [resolvable:$true] %s258
          %s260 = sshll.u32 [#allocation10], 4
          %s261 = int_to_ptr.vmem [resolvable:$true] %s260
          %266 = dma.hbm_to_vmem [thread:$0]  %s259, 36864, %s261, [#allocation9], 384, 384, 24
        $region24: #{tpu_custom_call.1} parent=11 // pred_fallthru
          _
        // Predicated region
        $region25: #{tpu_custom_call.1} parent=11 // pred_check
          %p267 = pneg %p186
        $region26: #{tpu_custom_call.1} parent=11 // pred_check_branch
          %269 = sbr.rel (%p267) target = $region28
        $region27: #{tpu_custom_call.1} parent=11 // pred_region
          %271 = vsyncadd [#allocation12], 0
          %s273 = sshll.u32 %s6, 4
          %s274 = int_to_ptr.hbm [resolvable:$true] %s273
          %s275 = sshll.u32 [#allocation11], 4
          %s276 = int_to_ptr.vmem [resolvable:$true] %s275
          %278 = dma.hbm_to_vmem [thread:$0]  %s274, 48, %s276, [#allocation12]
        $region28: #{tpu_custom_call.1} parent=11 // pred_fallthru
          _
      $region12: #{tpu_custom_call.1} parent=5 // pred_fallthru
        _
      %p279 = scmp.lt.s32.totalorder %s24, 2
      // Predicated region
      $region29: #{tpu_custom_call.1} parent=5 // pred_check
        %p280 = pneg %p279
      $region30: #{tpu_custom_call.1} parent=5 // pred_check_branch
        %282 = sbr.rel (%p280) target = $region32
      $region31: #{tpu_custom_call.1} parent=5 // pred_region
        // Predicated region
        $region33: #{tpu_custom_call.1} parent=31 // pred_check
          %p283 = pneg %p44
        $region34: #{tpu_custom_call.1} parent=31 // pred_check_branch
          %285 = sbr.rel (%p283) target = $region36
        $region35: #{tpu_custom_call.1} parent=31 // pred_region
          %s286 = sand.u32 %s34, 1
          %s287 = scalar_lea.sflag [#allocation3], %s286
          %s288 = sand.u32 %s34, 1
          %s289 = smul.addr %s288, 256
          %s290 = scalar_lea.vmem [#allocation2], %s289
          %s291 = smul.u32 32, %s24
          %293 = vsyncadd %s287, 0
          %s294 = smul.addr %s291, 8
          %s295 = scalar_lea.hbm %s0, %s294
          %s296 = sshll.u32 %s295, 4
          %s297 = int_to_ptr.hbm [resolvable:$true] %s296
          %s298 = sshll.u32 %s290, 4
          %s299 = int_to_ptr.vmem [resolvable:$true] %s298
          %304 = dma.hbm_to_vmem [thread:$0]  %s297, 4096, %s299, %s287, 128, 128, 8
        $region36: #{tpu_custom_call.1} parent=31 // pred_fallthru
          _
        // Predicated region
        $region37: #{tpu_custom_call.1} parent=31 // pred_check
          %p305 = pneg %p70
        $region38: #{tpu_custom_call.1} parent=31 // pred_check_branch
          %307 = sbr.rel (%p305) target = $region40
        $region39: #{tpu_custom_call.1} parent=31 // pred_region
          %s308 = sand.u32 %s24, 1
          %s309 = scalar_lea.sflag [#allocation6], %s308
          %s310 = sand.u32 %s60, 1
          %s311 = smul.addr %s310, 1536
          %s312 = scalar_lea.vmem [#allocation5], %s311
          %s313 = smul.u32 32, %s24
          %315 = vsyncadd %s309, 0
          %s316 = smul.addr %s313, 6
          %s317 = smul.addr %s316, 8
          %s318 = scalar_lea.hbm %s1, %s317
          %s319 = sshll.u32 %s318, 4
          %s320 = int_to_ptr.hbm [resolvable:$true] %s319
          %s321 = sshll.u32 %s312, 4
          %s322 = int_to_ptr.vmem [resolvable:$true] %s321
          %327 = dma.hbm_to_vmem [thread:$0]  %s320, 24576, %s322, %s309, 768, 768, 48
        $region40: #{tpu_custom_call.1} parent=31 // pred_fallthru
          _
        // Predicated region
        $region41: #{tpu_custom_call.1} parent=31 // pred_check
          %p328 = pneg %p96
        $region42: #{tpu_custom_call.1} parent=31 // pred_check_branch
          %330 = sbr.rel (%p328) target = $region44
        $region43: #{tpu_custom_call.1} parent=31 // pred_region
          %s331 = smul.u32 32, %s24
          %p332 = scmp.lt.s32.totalorder %s331, 63
          %s333 = scalar_select %p332, %s331, 63
          %s334 = smul.addr %s333, 8
          %s335 = scalar_lea.vmem %s2, %s334
          %s336 = smul.u32 32, %s24
        $region44: #{tpu_custom_call.1} parent=31 // pred_fallthru
          _
      $region32: #{tpu_custom_call.1} parent=5 // pred_fallthru
        _
      %p337 = scmp.le.s32.totalorder 1, %s24
      %p338 = scmp.lt.s32.totalorder %s24, 3
      %p339 = pnand %p337, %p338
      %p340 = pneg %p339
      // Predicated region
      $region45: #{tpu_custom_call.1} parent=5 // pred_check
        _
      $region46: #{tpu_custom_call.1} parent=5 // pred_check_branch
        %342 = sbr.rel (%p339) target = $region48
      $region47: #{tpu_custom_call.1} parent=5 // pred_region
        %s343 = ssub.s32 %s24, 1
        %s344 = sand.u32 %s37, 1
        %s345 = scalar_lea.sflag [#allocation3], %s344
        %s346 = sand.u32 %s37, 1
        %s347 = smul.addr %s346, 256
        %s348 = scalar_lea.vmem [#allocation2], %s347
        // Predicated region
        $region49: #{tpu_custom_call.1} parent=47 // pred_check
          %p349 = pneg %p50
        $region50: #{tpu_custom_call.1} parent=47 // pred_check_branch
          %351 = sbr.rel (%p349) target = $region52
        $region51: #{tpu_custom_call.1} parent=47 // pred_region
          %353 = dma.done %s345, 4096
        $region52: #{tpu_custom_call.1} parent=47 // pred_fallthru
          _
        %s354 = sand.u32 %s29, 1
        %s355 = scalar_lea.sflag [#allocation6], %s354
        %s356 = sand.u32 %s63, 1
        %s357 = smul.addr %s356, 1536
        %s358 = scalar_lea.vmem [#allocation5], %s357
        // Predicated region
        $region53: #{tpu_custom_call.1} parent=47 // pred_check
          %p359 = pneg %p76
        $region54: #{tpu_custom_call.1} parent=47 // pred_check_branch
          %361 = sbr.rel (%p359) target = $region56
        $region55: #{tpu_custom_call.1} parent=47 // pred_region
          %363 = dma.done %s355, 24576
        $region56: #{tpu_custom_call.1} parent=47 // pred_fallthru
          _
        // Predicated region
        $region57: #{tpu_custom_call.1} parent=47 // pred_check
          %p364 = pneg %p123
        $region58: #{tpu_custom_call.1} parent=47 // pred_check_branch
          %366 = sbr.rel (%p364) target = $region60
        $region59: #{tpu_custom_call.1} parent=47 // pred_region
          %368 = dma.done [#allocation6], 12288
        $region60: #{tpu_custom_call.1} parent=47 // pred_fallthru
          _
        // Predicated region
        $region61: #{tpu_custom_call.1} parent=47 // pred_check
          %p369 = pneg %p144
        $region62: #{tpu_custom_call.1} parent=47 // pred_check_branch
          %371 = sbr.rel (%p369) target = $region64
        $region63: #{tpu_custom_call.1} parent=47 // pred_region
          %373 = dma.done [#allocation9], 96
        $region64: #{tpu_custom_call.1} parent=47 // pred_fallthru
          _
        // Predicated region
        $region65: #{tpu_custom_call.1} parent=47 // pred_check
          %p374 = pneg %p165
        $region66: #{tpu_custom_call.1} parent=47 // pred_check_branch
          %376 = sbr.rel (%p374) target = $region68
        $region67: #{tpu_custom_call.1} parent=47 // pred_region
          %378 = dma.done [#allocation9], 36864
        $region68: #{tpu_custom_call.1} parent=47 // pred_fallthru
          _
        // Predicated region
        $region69: #{tpu_custom_call.1} parent=47 // pred_check
          %p379 = pneg %p186
        $region70: #{tpu_custom_call.1} parent=47 // pred_check_branch
          %381 = sbr.rel (%p379) target = $region72
        $region71: #{tpu_custom_call.1} parent=47 // pred_region
          %383 = dma.done [#allocation12], 48
        $region72: #{tpu_custom_call.1} parent=47 // pred_fallthru
          _
        %s384 = sand.u32 %s37, 1
        %s385 = scalar_lea.sflag [#allocation3], %s384
        %s386 = sand.u32 %s37, 1
        %s387 = smul.addr %s386, 256
        %s388 = scalar_lea.vmem [#allocation2], %s387
        %p389 = pneg %p50
        %p390 = pneg %p47
        %s391 = sand.u32 %s29, 1
        %s392 = scalar_lea.sflag [#allocation6], %s391
        %s393 = sand.u32 %s63, 1
        %s394 = smul.addr %s393, 1536
        %s395 = scalar_lea.vmem [#allocation5], %s394
        %p396 = pneg %p76
        %p397 = pneg %p73
        %s398 = smul.u32 32, %s29
        %p399 = scmp.lt.s32.totalorder %s398, 63
        %s400 = scalar_select %p399, %s398, 63
        %s401 = smul.addr %s400, 8
        %s402 = scalar_lea.vmem %s2, %s401
        %p403 = pneg %p102
        %p404 = pneg %p99
        %p405 = pneg %p123
        %p406 = pneg %p120
        %p407 = pneg %p144
        %p408 = pneg %p141
        %p409 = pneg %p165
        %p410 = pneg %p162
        %p411 = pneg %p186
        %p412 = pneg %p183
        %p413 = pneg %p212
        %p414 = pneg %p209
        %s415 = sand.u32 %s199, 1
        %s416 = scalar_lea.sflag [#allocation4], %s415
        %s417 = sand.u32 %s199, 1
        %s418 = smul.addr %s417, 256
        %s419 = scalar_lea.vmem [#allocation13], %s418
        %s420 = smul.u32 32, %s29
        %s421 = smul.u32 32, %s29
        %s422 = smul.u32 32, %s29
        %p423 = scmp.lt.s32.totalorder %s422, 63
        %s424 = scalar_select %p423, %s422, 63
        %s425 = smul.addr %s424, 8
        %s426 = scalar_lea.vmem %s2, %s425
        %s427 = smul.u32 32, %s29
        %s428 = smul.u32 32, %s29
        %v429 = vld [vmem:[%s348] sm:$0xff]
        %v430 = vld [vmem:[%s348 + $0x8] sm:$0xff]
        %v431 = vld [vmem:[%s348 + $0x10] sm:$0xff]
        %v432 = vld [vmem:[%s348 + $0x18] sm:$0xff]
        %v433 = vld [vmem:[%s348 + $0x20] sm:$0xff]
        %v434 = vld [vmem:[%s348 + $0x28] sm:$0xff]
        %v435 = vld [vmem:[%s348 + $0x30] sm:$0xff]
        %v436 = vld [vmem:[%s348 + $0x38] sm:$0xff]
        %v437 = vld [vmem:[%s348 + $0x40] sm:$0xff]
        %v438 = vld [vmem:[%s348 + $0x48] sm:$0xff]
        %v439 = vld [vmem:[%s348 + $0x50] sm:$0xff]
        %v440 = vld [vmem:[%s348 + $0x58] sm:$0xff]
        %v441 = vld [vmem:[%s348 + $0x60] sm:$0xff]
        %v442 = vld [vmem:[%s348 + $0x68] sm:$0xff]
        %v443 = vld [vmem:[%s348 + $0x70] sm:$0xff]
        %v444 = vld [vmem:[%s348 + $0x78] sm:$0xff]
        %v445 = vld [vmem:[%s348 + $0x80] sm:$0xff]
        %v446 = vld [vmem:[%s348 + $0x88] sm:$0xff]
        %v447 = vld [vmem:[%s348 + $0x90] sm:$0xff]
        %v448 = vld [vmem:[%s348 + $0x98] sm:$0xff]
        %v449 = vld [vmem:[%s348 + $0xa0] sm:$0xff]
        %v450 = vld [vmem:[%s348 + $0xa8] sm:$0xff]
        %v451 = vld [vmem:[%s348 + $0xb0] sm:$0xff]
        %v452 = vld [vmem:[%s348 + $0xb8] sm:$0xff]
        %v453 = vld [vmem:[%s348 + $0xc0] sm:$0xff]
        %v454 = vld [vmem:[%s348 + $0xc8] sm:$0xff]
        %v455 = vld [vmem:[%s348 + $0xd0] sm:$0xff]
        %v456 = vld [vmem:[%s348 + $0xd8] sm:$0xff]
        %v457 = vld [vmem:[%s348 + $0xe0] sm:$0xff]
        %v458 = vld [vmem:[%s348 + $0xe8] sm:$0xff]
        %v459 = vld [vmem:[%s348 + $0xf0] sm:$0xff]
        %v460 = vld [vmem:[%s348 + $0xf8] sm:$0xff]
        %v461 = vld [vmem:[#allocation7] sm:$0xff]
        %v462 = vld [vmem:[#allocation7 + $0x8] sm:$0xff]
        %v463 = vld [vmem:[#allocation7 + $0x10] sm:$0xff]
        %v464 = vld [vmem:[#allocation7 + $0x18] sm:$0xff]
        %v465 = vld [vmem:[#allocation7 + $0x20] sm:$0xff]
        %v466 = vld [vmem:[#allocation7 + $0x28] sm:$0xff]
        %v467 = vld [vmem:[#allocation7 + $0x30] sm:$0xff]
        %v468 = vld [vmem:[#allocation7 + $0x38] sm:$0xff]
        %v469 = vld [vmem:[#allocation7 + $0x40] sm:$0xff]
        %v470 = vld [vmem:[#allocation7 + $0x48] sm:$0xff]
        %v471 = vld [vmem:[#allocation7 + $0x50] sm:$0xff]
        %v472 = vld [vmem:[#allocation7 + $0x58] sm:$0xff]
        %v473 = vld [vmem:[#allocation7 + $0x60] sm:$0xff]
        %v474 = vld [vmem:[#allocation7 + $0x68] sm:$0xff]
        %v475 = vld [vmem:[#allocation7 + $0x70] sm:$0xff]
        %v476 = vld [vmem:[#allocation7 + $0x78] sm:$0xff]
        %v477 = vld [vmem:[#allocation7 + $0x80] sm:$0xff]
        %v478 = vld [vmem:[#allocation7 + $0x88] sm:$0xff]
        %v479 = vld [vmem:[#allocation7 + $0x90] sm:$0xff]
        %v480 = vld [vmem:[#allocation7 + $0x98] sm:$0xff]
        %v481 = vld [vmem:[#allocation7 + $0xa0] sm:$0xff]
        %v482 = vld [vmem:[#allocation7 + $0xa8] sm:$0xff]
        %v483 = vld [vmem:[#allocation7 + $0xb0] sm:$0xff]
        %v484 = vld [vmem:[#allocation7 + $0xb8] sm:$0xff]
        %v485 = vld [vmem:[#allocation7 + $0xc0] sm:$0xff]
        %v486 = vld [vmem:[#allocation7 + $0xc8] sm:$0xff]
        %v487 = vld [vmem:[#allocation7 + $0xd0] sm:$0xff]
        %v488 = vld [vmem:[#allocation7 + $0xd8] sm:$0xff]
        %v489 = vld [vmem:[#allocation7 + $0xe0] sm:$0xff]
        %v490 = vld [vmem:[#allocation7 + $0xe8] sm:$0xff]
        %v491 = vld [vmem:[#allocation7 + $0xf0] sm:$0xff]
        %v492 = vld [vmem:[#allocation7 + $0xf8] sm:$0xff]
        %v493 = vld [vmem:[#allocation7 + $0x100] sm:$0xff]
        %v494 = vld [vmem:[#allocation7 + $0x108] sm:$0xff]
        %v495 = vld [vmem:[#allocation7 + $0x110] sm:$0xff]
        %v496 = vld [vmem:[#allocation7 + $0x118] sm:$0xff]
        %v497 = vld [vmem:[#allocation7 + $0x120] sm:$0xff]
        %v498 = vld [vmem:[#allocation7 + $0x128] sm:$0xff]
        %v499 = vld [vmem:[#allocation7 + $0x130] sm:$0xff]
        %v500 = vld [vmem:[#allocation7 + $0x138] sm:$0xff]
        %v501 = vld [vmem:[#allocation7 + $0x140] sm:$0xff]
        %v502 = vld [vmem:[#allocation7 + $0x148] sm:$0xff]
        %v503 = vld [vmem:[#allocation7 + $0x150] sm:$0xff]
        %v504 = vld [vmem:[#allocation7 + $0x158] sm:$0xff]
        %v505 = vld [vmem:[#allocation7 + $0x160] sm:$0xff]
        %v506 = vld [vmem:[#allocation7 + $0x168] sm:$0xff]
        %v507 = vld [vmem:[#allocation7 + $0x170] sm:$0xff]
        %v508 = vld [vmem:[#allocation7 + $0x178] sm:$0xff]
        %v509 = vld [vmem:[#allocation7 + $0x180] sm:$0xff]
        %v510 = vld [vmem:[#allocation7 + $0x188] sm:$0xff]
        %v511 = vld [vmem:[#allocation7 + $0x190] sm:$0xff]
        %v512 = vld [vmem:[#allocation7 + $0x198] sm:$0xff]
        %v513 = vld [vmem:[#allocation7 + $0x1a0] sm:$0xff]
        %v514 = vld [vmem:[#allocation7 + $0x1a8] sm:$0xff]
        %v515 = vld [vmem:[#allocation7 + $0x1b0] sm:$0xff]
        %v516 = vld [vmem:[#allocation7 + $0x1b8] sm:$0xff]
        %v517 = vld [vmem:[#allocation7 + $0x1c0] sm:$0xff]
        %v518 = vld [vmem:[#allocation7 + $0x1c8] sm:$0xff]
        %v519 = vld [vmem:[#allocation7 + $0x1d0] sm:$0xff]
        %v520 = vld [vmem:[#allocation7 + $0x1d8] sm:$0xff]
        %v521 = vld [vmem:[#allocation7 + $0x1e0] sm:$0xff]
        %v522 = vld [vmem:[#allocation7 + $0x1e8] sm:$0xff]
        %v523 = vld [vmem:[#allocation7 + $0x1f0] sm:$0xff]
        %v524 = vld [vmem:[#allocation7 + $0x1f8] sm:$0xff]
        %v525 = vld [vmem:[#allocation7 + $0x200] sm:$0xff]
        %v526 = vld [vmem:[#allocation7 + $0x208] sm:$0xff]
        %v527 = vld [vmem:[#allocation7 + $0x210] sm:$0xff]
        %v528 = vld [vmem:[#allocation7 + $0x218] sm:$0xff]
        %v529 = vld [vmem:[#allocation7 + $0x220] sm:$0xff]
        %v530 = vld [vmem:[#allocation7 + $0x228] sm:$0xff]
        %v531 = vld [vmem:[#allocation7 + $0x230] sm:$0xff]
        %v532 = vld [vmem:[#allocation7 + $0x238] sm:$0xff]
        %v533 = vld [vmem:[#allocation7 + $0x240] sm:$0xff]
        %v534 = vld [vmem:[#allocation7 + $0x248] sm:$0xff]
        %v535 = vld [vmem:[#allocation7 + $0x250] sm:$0xff]
        %v536 = vld [vmem:[#allocation7 + $0x258] sm:$0xff]
        %v537 = vld [vmem:[#allocation7 + $0x260] sm:$0xff]
        %v538 = vld [vmem:[#allocation7 + $0x268] sm:$0xff]
        %v539 = vld [vmem:[#allocation7 + $0x270] sm:$0xff]
        %v540 = vld [vmem:[#allocation7 + $0x278] sm:$0xff]
        %v541 = vld [vmem:[#allocation7 + $0x280] sm:$0xff]
        %v542 = vld [vmem:[#allocation7 + $0x288] sm:$0xff]
        %v543 = vld [vmem:[#allocation7 + $0x290] sm:$0xff]
        %v544 = vld [vmem:[#allocation7 + $0x298] sm:$0xff]
        %v545 = vld [vmem:[#allocation7 + $0x2a0] sm:$0xff]
        %v546 = vld [vmem:[#allocation7 + $0x2a8] sm:$0xff]
        %v547 = vld [vmem:[#allocation7 + $0x2b0] sm:$0xff]
        %v548 = vld [vmem:[#allocation7 + $0x2b8] sm:$0xff]
        %v549 = vld [vmem:[#allocation7 + $0x2c0] sm:$0xff]
        %v550 = vld [vmem:[#allocation7 + $0x2c8] sm:$0xff]
        %v551 = vld [vmem:[#allocation7 + $0x2d0] sm:$0xff]
        %v552 = vld [vmem:[#allocation7 + $0x2d8] sm:$0xff]
        %v553 = vld [vmem:[#allocation7 + $0x2e0] sm:$0xff]
        %v554 = vld [vmem:[#allocation7 + $0x2e8] sm:$0xff]
        %v555 = vld [vmem:[#allocation7 + $0x2f0] sm:$0xff]
        %v556 = vld [vmem:[#allocation7 + $0x2f8] sm:$0xff]
        %v557 = vld [vmem:[#allocation8] sm:$0x3f]
        %v559 = vperm.slane %v557, 0
        %v560 = vperm.slane %v557, 1
        %v561 = vperm.slane %v557, 2
        %v562 = vperm.slane %v557, 3
        %v563 = vperm.slane %v557, 4
        %v564 = vperm.slane %v557, 5
        %571 = vmatpush.msra.mxu0 %v551
        %572 = vmatpush.msra.mxu0 %v545
        %573 = vmatpush.msra.mxu0 %v539
        %574 = vmatpush.msra.mxu0 %v533
        %575 = vmatpush.msra.mxu0 %v527
        %576 = vmatpush.msra.mxu0 %v521
        %577 = vmatpush.msra.mxu0 %v515
        %578 = vmatpush.msra.mxu0 %v509
        %579 = vmatpush.msra.mxu0 %v503
        %580 = vmatpush.msra.mxu0 %v497
        %581 = vmatpush.msra.mxu0 %v491
        %582 = vmatpush.msra.mxu0 %v485
        %583 = vmatpush.msra.mxu0 %v479
        %584 = vmatpush.msra.mxu0 %v473
        %585 = vmatpush.msra.mxu0 %v467
        %586 = vmatpush.msra.mxu0 %v461
        %587 = vmatmul.f32.gmra.mxu0 %v429
        %v588 = vpop.f32.mrf.mxu0
        %v589 = vadd.f32 %v559, %v588
        %590 = vmatmul.f32.gmra.mxu0 %v430
        %v591 = vpop.f32.mrf.mxu0
        %v592 = vadd.f32 %v559, %v591
        %593 = vmatmul.f32.gmra.mxu0 %v431
        %v594 = vpop.f32.mrf.mxu0
        %v595 = vadd.f32 %v559, %v594
        %596 = vmatmul.f32.gmra.mxu0 %v432
        %v597 = vpop.f32.mrf.mxu0
        %v598 = vadd.f32 %v559, %v597
        %599 = vmatmul.f32.gmra.mxu0 %v433
        %v600 = vpop.f32.mrf.mxu0
        %v601 = vadd.f32 %v559, %v600
        %602 = vmatmul.f32.gmra.mxu0 %v434
        %v603 = vpop.f32.mrf.mxu0
        %v604 = vadd.f32 %v559, %v603
        %605 = vmatmul.f32.gmra.mxu0 %v435
        %v606 = vpop.f32.mrf.mxu0
        %v607 = vadd.f32 %v559, %v606
        %608 = vmatmul.f32.gmra.mxu0 %v436
        %v609 = vpop.f32.mrf.mxu0
        %v610 = vadd.f32 %v559, %v609
        %611 = vmatmul.f32.gmra.mxu0 %v437
        %v612 = vpop.f32.mrf.mxu0
        %v613 = vadd.f32 %v559, %v612
        %614 = vmatmul.f32.gmra.mxu0 %v438
        %v615 = vpop.f32.mrf.mxu0
        %v616 = vadd.f32 %v559, %v615
        %617 = vmatmul.f32.gmra.mxu0 %v439
        %v618 = vpop.f32.mrf.mxu0
        %v619 = vadd.f32 %v559, %v618
        %620 = vmatmul.f32.gmra.mxu0 %v440
        %v621 = vpop.f32.mrf.mxu0
        %v622 = vadd.f32 %v559, %v621
        %623 = vmatmul.f32.gmra.mxu0 %v441
        %v624 = vpop.f32.mrf.mxu0
        %v625 = vadd.f32 %v559, %v624
        %626 = vmatmul.f32.gmra.mxu0 %v442
        %v627 = vpop.f32.mrf.mxu0
        %v628 = vadd.f32 %v559, %v627
        %629 = vmatmul.f32.gmra.mxu0 %v443
        %v630 = vpop.f32.mrf.mxu0
        %v631 = vadd.f32 %v559, %v630
        %632 = vmatmul.f32.gmra.mxu0 %v444
        %v633 = vpop.f32.mrf.mxu0
        %v634 = vadd.f32 %v559, %v633
        %635 = vmatmul.f32.gmra.mxu0 %v445
        %v636 = vpop.f32.mrf.mxu0
        %v637 = vadd.f32 %v559, %v636
        %638 = vmatmul.f32.gmra.mxu0 %v446
        %v639 = vpop.f32.mrf.mxu0
        %v640 = vadd.f32 %v559, %v639
        %641 = vmatmul.f32.gmra.mxu0 %v447
        %v642 = vpop.f32.mrf.mxu0
        %v643 = vadd.f32 %v559, %v642
        %644 = vmatmul.f32.gmra.mxu0 %v448
        %v645 = vpop.f32.mrf.mxu0
        %v646 = vadd.f32 %v559, %v645
        %647 = vmatmul.f32.gmra.mxu0 %v449
        %v648 = vpop.f32.mrf.mxu0
        %v649 = vadd.f32 %v559, %v648
        %650 = vmatmul.f32.gmra.mxu0 %v450
        %v651 = vpop.f32.mrf.mxu0
        %v652 = vadd.f32 %v559, %v651
        %653 = vmatmul.f32.gmra.mxu0 %v451
        %v654 = vpop.f32.mrf.mxu0
        %v655 = vadd.f32 %v559, %v654
        %656 = vmatmul.f32.gmra.mxu0 %v452
        %v657 = vpop.f32.mrf.mxu0
        %v658 = vadd.f32 %v559, %v657
        %659 = vmatmul.f32.gmra.mxu0 %v453
        %v660 = vpop.f32.mrf.mxu0
        %v661 = vadd.f32 %v559, %v660
        %662 = vmatmul.f32.gmra.mxu0 %v454
        %v663 = vpop.f32.mrf.mxu0
        %v664 = vadd.f32 %v559, %v663
        %665 = vmatmul.f32.gmra.mxu0 %v455
        %v666 = vpop.f32.mrf.mxu0
        %v667 = vadd.f32 %v559, %v666
        %668 = vmatmul.f32.gmra.mxu0 %v456
        %v669 = vpop.f32.mrf.mxu0
        %v670 = vadd.f32 %v559, %v669
        %671 = vmatmul.f32.gmra.mxu0 %v457
        %v672 = vpop.f32.mrf.mxu0
        %v673 = vadd.f32 %v559, %v672
        %674 = vmatmul.f32.gmra.mxu0 %v458
        %v675 = vpop.f32.mrf.mxu0
        %v676 = vadd.f32 %v559, %v675
        %677 = vmatmul.f32.gmra.mxu0 %v459
        %v678 = vpop.f32.mrf.mxu0
        %v679 = vadd.f32 %v559, %v678
        %680 = vmatmul.f32.gmra.mxu0 %v460
        %v681 = vpop.f32.mrf.mxu0
        %v682 = vadd.f32 %v559, %v681
        %683 = vdwg.mxu0
        %684 = vmatpush.msra.mxu0 %v552
        %685 = vmatpush.msra.mxu0 %v546
        %686 = vmatpush.msra.mxu0 %v540
        %687 = vmatpush.msra.mxu0 %v534
        %688 = vmatpush.msra.mxu0 %v528
        %689 = vmatpush.msra.mxu0 %v522
        %690 = vmatpush.msra.mxu0 %v516
        %691 = vmatpush.msra.mxu0 %v510
        %692 = vmatpush.msra.mxu0 %v504
        %693 = vmatpush.msra.mxu0 %v498
        %694 = vmatpush.msra.mxu0 %v492
        %695 = vmatpush.msra.mxu0 %v486
        %696 = vmatpush.msra.mxu0 %v480
        %697 = vmatpush.msra.mxu0 %v474
        %698 = vmatpush.msra.mxu0 %v468
        %699 = vmatpush.msra.mxu0 %v462
        %700 = vmatmul.f32.gmra.mxu0 %v429
        %v701 = vpop.f32.mrf.mxu0
        %v702 = vadd.f32 %v560, %v701
        %703 = vmatmul.f32.gmra.mxu0 %v430
        %v704 = vpop.f32.mrf.mxu0
        %v705 = vadd.f32 %v560, %v704
        %706 = vmatmul.f32.gmra.mxu0 %v431
        %v707 = vpop.f32.mrf.mxu0
        %v708 = vadd.f32 %v560, %v707
        %709 = vmatmul.f32.gmra.mxu0 %v432
        %v710 = vpop.f32.mrf.mxu0
        %v711 = vadd.f32 %v560, %v710
        %712 = vmatmul.f32.gmra.mxu0 %v433
        %v713 = vpop.f32.mrf.mxu0
        %v714 = vadd.f32 %v560, %v713
        %715 = vmatmul.f32.gmra.mxu0 %v434
        %v716 = vpop.f32.mrf.mxu0
        %v717 = vadd.f32 %v560, %v716
        %718 = vmatmul.f32.gmra.mxu0 %v435
        %v719 = vpop.f32.mrf.mxu0
        %v720 = vadd.f32 %v560, %v719
        %721 = vmatmul.f32.gmra.mxu0 %v436
        %v722 = vpop.f32.mrf.mxu0
        %v723 = vadd.f32 %v560, %v722
        %724 = vmatmul.f32.gmra.mxu0 %v437
        %v725 = vpop.f32.mrf.mxu0
        %v726 = vadd.f32 %v560, %v725
        %727 = vmatmul.f32.gmra.mxu0 %v438
        %v728 = vpop.f32.mrf.mxu0
        %v729 = vadd.f32 %v560, %v728
        %730 = vmatmul.f32.gmra.mxu0 %v439
        %v731 = vpop.f32.mrf.mxu0
        %v732 = vadd.f32 %v560, %v731
        %733 = vmatmul.f32.gmra.mxu0 %v440
        %v734 = vpop.f32.mrf.mxu0
        %v735 = vadd.f32 %v560, %v734
        %736 = vmatmul.f32.gmra.mxu0 %v441
        %v737 = vpop.f32.mrf.mxu0
        %v738 = vadd.f32 %v560, %v737
        %739 = vmatmul.f32.gmra.mxu0 %v442
        %v740 = vpop.f32.mrf.mxu0
        %v741 = vadd.f32 %v560, %v740
        %742 = vmatmul.f32.gmra.mxu0 %v443
        %v743 = vpop.f32.mrf.mxu0
        %v744 = vadd.f32 %v560, %v743
        %745 = vmatmul.f32.gmra.mxu0 %v444
        %v746 = vpop.f32.mrf.mxu0
        %v747 = vadd.f32 %v560, %v746
        %748 = vmatmul.f32.gmra.mxu0 %v445
        %v749 = vpop.f32.mrf.mxu0
        %v750 = vadd.f32 %v560, %v749
        %751 = vmatmul.f32.gmra.mxu0 %v446
        %v752 = vpop.f32.mrf.mxu0
        %v753 = vadd.f32 %v560, %v752
        %754 = vmatmul.f32.gmra.mxu0 %v447
        %v755 = vpop.f32.mrf.mxu0
        %v756 = vadd.f32 %v560, %v755
        %757 = vmatmul.f32.gmra.mxu0 %v448
        %v758 = vpop.f32.mrf.mxu0
        %v759 = vadd.f32 %v560, %v758
        %760 = vmatmul.f32.gmra.mxu0 %v449
        %v761 = vpop.f32.mrf.mxu0
        %v762 = vadd.f32 %v560, %v761
        %763 = vmatmul.f32.gmra.mxu0 %v450
        %v764 = vpop.f32.mrf.mxu0
        %v765 = vadd.f32 %v560, %v764
        %766 = vmatmul.f32.gmra.mxu0 %v451
        %v767 = vpop.f32.mrf.mxu0
        %v768 = vadd.f32 %v560, %v767
        %769 = vmatmul.f32.gmra.mxu0 %v452
        %v770 = vpop.f32.mrf.mxu0
        %v771 = vadd.f32 %v560, %v770
        %772 = vmatmul.f32.gmra.mxu0 %v453
        %v773 = vpop.f32.mrf.mxu0
        %v774 = vadd.f32 %v560, %v773
        %775 = vmatmul.f32.gmra.mxu0 %v454
        %v776 = vpop.f32.mrf.mxu0
        %v777 = vadd.f32 %v560, %v776
        %778 = vmatmul.f32.gmra.mxu0 %v455
        %v779 = vpop.f32.mrf.mxu0
        %v780 = vadd.f32 %v560, %v779
        %781 = vmatmul.f32.gmra.mxu0 %v456
        %v782 = vpop.f32.mrf.mxu0
        %v783 = vadd.f32 %v560, %v782
        %784 = vmatmul.f32.gmra.mxu0 %v457
        %v785 = vpop.f32.mrf.mxu0
        %v786 = vadd.f32 %v560, %v785
        %787 = vmatmul.f32.gmra.mxu0 %v458
        %v788 = vpop.f32.mrf.mxu0
        %v789 = vadd.f32 %v560, %v788
        %790 = vmatmul.f32.gmra.mxu0 %v459
        %v791 = vpop.f32.mrf.mxu0
        %v792 = vadd.f32 %v560, %v791
        %793 = vmatmul.f32.gmra.mxu0 %v460
        %v794 = vpop.f32.mrf.mxu0
        %v795 = vadd.f32 %v560, %v794
        %796 = vdwg.mxu0
        %797 = vmatpush.msra.mxu0 %v553
        %798 = vmatpush.msra.mxu0 %v547
        %799 = vmatpush.msra.mxu0 %v541
        %800 = vmatpush.msra.mxu0 %v535
        %801 = vmatpush.msra.mxu0 %v529
        %802 = vmatpush.msra.mxu0 %v523
        %803 = vmatpush.msra.mxu0 %v517
        %804 = vmatpush.msra.mxu0 %v511
        %805 = vmatpush.msra.mxu0 %v505
        %806 = vmatpush.msra.mxu0 %v499
        %807 = vmatpush.msra.mxu0 %v493
        %808 = vmatpush.msra.mxu0 %v487
        %809 = vmatpush.msra.mxu0 %v481
        %810 = vmatpush.msra.mxu0 %v475
        %811 = vmatpush.msra.mxu0 %v469
        %812 = vmatpush.msra.mxu0 %v463
        %813 = vmatmul.f32.gmra.mxu0 %v429
        %v814 = vpop.f32.mrf.mxu0
        %v815 = vadd.f32 %v561, %v814
        %816 = vmatmul.f32.gmra.mxu0 %v430
        %v817 = vpop.f32.mrf.mxu0
        %v818 = vadd.f32 %v561, %v817
        %819 = vmatmul.f32.gmra.mxu0 %v431
        %v820 = vpop.f32.mrf.mxu0
        %v821 = vadd.f32 %v561, %v820
        %822 = vmatmul.f32.gmra.mxu0 %v432
        %v823 = vpop.f32.mrf.mxu0
        %v824 = vadd.f32 %v561, %v823
        %825 = vmatmul.f32.gmra.mxu0 %v433
        %v826 = vpop.f32.mrf.mxu0
        %v827 = vadd.f32 %v561, %v826
        %828 = vmatmul.f32.gmra.mxu0 %v434
        %v829 = vpop.f32.mrf.mxu0
        %v830 = vadd.f32 %v561, %v829
        %831 = vmatmul.f32.gmra.mxu0 %v435
        %v832 = vpop.f32.mrf.mxu0
        %v833 = vadd.f32 %v561, %v832
        %834 = vmatmul.f32.gmra.mxu0 %v436
        %v835 = vpop.f32.mrf.mxu0
        %v836 = vadd.f32 %v561, %v835
        %837 = vmatmul.f32.gmra.mxu0 %v437
        %v838 = vpop.f32.mrf.mxu0
        %v839 = vadd.f32 %v561, %v838
        %840 = vmatmul.f32.gmra.mxu0 %v438
        %v841 = vpop.f32.mrf.mxu0
        %v842 = vadd.f32 %v561, %v841
        %843 = vmatmul.f32.gmra.mxu0 %v439
        %v844 = vpop.f32.mrf.mxu0
        %v845 = vadd.f32 %v561, %v844
        %846 = vmatmul.f32.gmra.mxu0 %v440
        %v847 = vpop.f32.mrf.mxu0
        %v848 = vadd.f32 %v561, %v847
        %849 = vmatmul.f32.gmra.mxu0 %v441
        %v850 = vpop.f32.mrf.mxu0
        %v851 = vadd.f32 %v561, %v850
        %852 = vmatmul.f32.gmra.mxu0 %v442
        %v853 = vpop.f32.mrf.mxu0
        %v854 = vadd.f32 %v561, %v853
        %855 = vmatmul.f32.gmra.mxu0 %v443
        %v856 = vpop.f32.mrf.mxu0
        %v857 = vadd.f32 %v561, %v856
        %858 = vmatmul.f32.gmra.mxu0 %v444
        %v859 = vpop.f32.mrf.mxu0
        %v860 = vadd.f32 %v561, %v859
        %861 = vmatmul.f32.gmra.mxu0 %v445
        %v862 = vpop.f32.mrf.mxu0
        %v863 = vadd.f32 %v561, %v862
        %864 = vmatmul.f32.gmra.mxu0 %v446
        %v865 = vpop.f32.mrf.mxu0
        %v866 = vadd.f32 %v561, %v865
        %867 = vmatmul.f32.gmra.mxu0 %v447
        %v868 = vpop.f32.mrf.mxu0
        %v869 = vadd.f32 %v561, %v868
        %870 = vmatmul.f32.gmra.mxu0 %v448
        %v871 = vpop.f32.mrf.mxu0
        %v872 = vadd.f32 %v561, %v871
        %873 = vmatmul.f32.gmra.mxu0 %v449
        %v874 = vpop.f32.mrf.mxu0
        %v875 = vadd.f32 %v561, %v874
        %876 = vmatmul.f32.gmra.mxu0 %v450
        %v877 = vpop.f32.mrf.mxu0
        %v878 = vadd.f32 %v561, %v877
        %879 = vmatmul.f32.gmra.mxu0 %v451
        %v880 = vpop.f32.mrf.mxu0
        %v881 = vadd.f32 %v561, %v880
        %882 = vmatmul.f32.gmra.mxu0 %v452
        %v883 = vpop.f32.mrf.mxu0
        %v884 = vadd.f32 %v561, %v883
        %885 = vmatmul.f32.gmra.mxu0 %v453
        %v886 = vpop.f32.mrf.mxu0
        %v887 = vadd.f32 %v561, %v886
        %888 = vmatmul.f32.gmra.mxu0 %v454
        %v889 = vpop.f32.mrf.mxu0
        %v890 = vadd.f32 %v561, %v889
        %891 = vmatmul.f32.gmra.mxu0 %v455
        %v892 = vpop.f32.mrf.mxu0
        %v893 = vadd.f32 %v561, %v892
        %894 = vmatmul.f32.gmra.mxu0 %v456
        %v895 = vpop.f32.mrf.mxu0
        %v896 = vadd.f32 %v561, %v895
        %897 = vmatmul.f32.gmra.mxu0 %v457
        %v898 = vpop.f32.mrf.mxu0
        %v899 = vadd.f32 %v561, %v898
        %900 = vmatmul.f32.gmra.mxu0 %v458
        %v901 = vpop.f32.mrf.mxu0
        %v902 = vadd.f32 %v561, %v901
        %903 = vmatmul.f32.gmra.mxu0 %v459
        %v904 = vpop.f32.mrf.mxu0
        %v905 = vadd.f32 %v561, %v904
        %906 = vmatmul.f32.gmra.mxu0 %v460
        %v907 = vpop.f32.mrf.mxu0
        %v908 = vadd.f32 %v561, %v907
        %909 = vdwg.mxu0
        %910 = vmatpush.msra.mxu0 %v554
        %911 = vmatpush.msra.mxu0 %v548
        %912 = vmatpush.msra.mxu0 %v542
        %913 = vmatpush.msra.mxu0 %v536
        %914 = vmatpush.msra.mxu0 %v530
        %915 = vmatpush.msra.mxu0 %v524
        %916 = vmatpush.msra.mxu0 %v518
        %917 = vmatpush.msra.mxu0 %v512
        %918 = vmatpush.msra.mxu0 %v506
        %919 = vmatpush.msra.mxu0 %v500
        %920 = vmatpush.msra.mxu0 %v494
        %921 = vmatpush.msra.mxu0 %v488
        %922 = vmatpush.msra.mxu0 %v482
        %923 = vmatpush.msra.mxu0 %v476
        %924 = vmatpush.msra.mxu0 %v470
        %925 = vmatpush.msra.mxu0 %v464
        %926 = vmatmul.f32.gmra.mxu0 %v429
        %v927 = vpop.f32.mrf.mxu0
        %v928 = vadd.f32 %v562, %v927
        %929 = vmatmul.f32.gmra.mxu0 %v430
        %v930 = vpop.f32.mrf.mxu0
        %v931 = vadd.f32 %v562, %v930
        %932 = vmatmul.f32.gmra.mxu0 %v431
        %v933 = vpop.f32.mrf.mxu0
        %v934 = vadd.f32 %v562, %v933
        %935 = vmatmul.f32.gmra.mxu0 %v432
        %v936 = vpop.f32.mrf.mxu0
        %v937 = vadd.f32 %v562, %v936
        %938 = vmatmul.f32.gmra.mxu0 %v433
        %v939 = vpop.f32.mrf.mxu0
        %v940 = vadd.f32 %v562, %v939
        %941 = vmatmul.f32.gmra.mxu0 %v434
        %v942 = vpop.f32.mrf.mxu0
        %v943 = vadd.f32 %v562, %v942
        %944 = vmatmul.f32.gmra.mxu0 %v435
        %v945 = vpop.f32.mrf.mxu0
        %v946 = vadd.f32 %v562, %v945
        %947 = vmatmul.f32.gmra.mxu0 %v436
        %v948 = vpop.f32.mrf.mxu0
        %v949 = vadd.f32 %v562, %v948
        %950 = vmatmul.f32.gmra.mxu0 %v437
        %v951 = vpop.f32.mrf.mxu0
        %v952 = vadd.f32 %v562, %v951
        %953 = vmatmul.f32.gmra.mxu0 %v438
        %v954 = vpop.f32.mrf.mxu0
        %v955 = vadd.f32 %v562, %v954
        %956 = vmatmul.f32.gmra.mxu0 %v439
        %v957 = vpop.f32.mrf.mxu0
        %v958 = vadd.f32 %v562, %v957
        %959 = vmatmul.f32.gmra.mxu0 %v440
        %v960 = vpop.f32.mrf.mxu0
        %v961 = vadd.f32 %v562, %v960
        %962 = vmatmul.f32.gmra.mxu0 %v441
        %v963 = vpop.f32.mrf.mxu0
        %v964 = vadd.f32 %v562, %v963
        %965 = vmatmul.f32.gmra.mxu0 %v442
        %v966 = vpop.f32.mrf.mxu0
        %v967 = vadd.f32 %v562, %v966
        %968 = vmatmul.f32.gmra.mxu0 %v443
        %v969 = vpop.f32.mrf.mxu0
        %v970 = vadd.f32 %v562, %v969
        %971 = vmatmul.f32.gmra.mxu0 %v444
        %v972 = vpop.f32.mrf.mxu0
        %v973 = vadd.f32 %v562, %v972
        %974 = vmatmul.f32.gmra.mxu0 %v445
        %v975 = vpop.f32.mrf.mxu0
        %v976 = vadd.f32 %v562, %v975
        %977 = vmatmul.f32.gmra.mxu0 %v446
        %v978 = vpop.f32.mrf.mxu0
        %v979 = vadd.f32 %v562, %v978
        %980 = vmatmul.f32.gmra.mxu0 %v447
        %v981 = vpop.f32.mrf.mxu0
        %v982 = vadd.f32 %v562, %v981
        %983 = vmatmul.f32.gmra.mxu0 %v448
        %v984 = vpop.f32.mrf.mxu0
        %v985 = vadd.f32 %v562, %v984
        %986 = vmatmul.f32.gmra.mxu0 %v449
        %v987 = vpop.f32.mrf.mxu0
        %v988 = vadd.f32 %v562, %v987
        %989 = vmatmul.f32.gmra.mxu0 %v450
        %v990 = vpop.f32.mrf.mxu0
        %v991 = vadd.f32 %v562, %v990
        %992 = vmatmul.f32.gmra.mxu0 %v451
        %v993 = vpop.f32.mrf.mxu0
        %v994 = vadd.f32 %v562, %v993
        %995 = vmatmul.f32.gmra.mxu0 %v452
        %v996 = vpop.f32.mrf.mxu0
        %v997 = vadd.f32 %v562, %v996
        %998 = vmatmul.f32.gmra.mxu0 %v453
        %v999 = vpop.f32.mrf.mxu0
        %v1000 = vadd.f32 %v562, %v999
        %1001 = vmatmul.f32.gmra.mxu0 %v454
        %v1002 = vpop.f32.mrf.mxu0
        %v1003 = vadd.f32 %v562, %v1002
        %1004 = vmatmul.f32.gmra.mxu0 %v455
        %v1005 = vpop.f32.mrf.mxu0
        %v1006 = vadd.f32 %v562, %v1005
        %1007 = vmatmul.f32.gmra.mxu0 %v456
        %v1008 = vpop.f32.mrf.mxu0
        %v1009 = vadd.f32 %v562, %v1008
        %1010 = vmatmul.f32.gmra.mxu0 %v457
        %v1011 = vpop.f32.mrf.mxu0
        %v1012 = vadd.f32 %v562, %v1011
        %1013 = vmatmul.f32.gmra.mxu0 %v458
        %v1014 = vpop.f32.mrf.mxu0
        %v1015 = vadd.f32 %v562, %v1014
        %1016 = vmatmul.f32.gmra.mxu0 %v459
        %v1017 = vpop.f32.mrf.mxu0
        %v1018 = vadd.f32 %v562, %v1017
        %1019 = vmatmul.f32.gmra.mxu0 %v460
        %v1020 = vpop.f32.mrf.mxu0
        %v1021 = vadd.f32 %v562, %v1020
        %1022 = vdwg.mxu0
        %1023 = vmatpush.msra.mxu0 %v555
        %1024 = vmatpush.msra.mxu0 %v549
        %1025 = vmatpush.msra.mxu0 %v543
        %1026 = vmatpush.msra.mxu0 %v537
        %1027 = vmatpush.msra.mxu0 %v531
        %1028 = vmatpush.msra.mxu0 %v525
        %1029 = vmatpush.msra.mxu0 %v519
        %1030 = vmatpush.msra.mxu0 %v513
        %1031 = vmatpush.msra.mxu0 %v507
        %1032 = vmatpush.msra.mxu0 %v501
        %1033 = vmatpush.msra.mxu0 %v495
        %1034 = vmatpush.msra.mxu0 %v489
        %1035 = vmatpush.msra.mxu0 %v483
        %1036 = vmatpush.msra.mxu0 %v477
        %1037 = vmatpush.msra.mxu0 %v471
        %1038 = vmatpush.msra.mxu0 %v465
        %1039 = vmatmul.f32.gmra.mxu0 %v429
        %v1040 = vpop.f32.mrf.mxu0
        %v1041 = vadd.f32 %v563, %v1040
        %1042 = vmatmul.f32.gmra.mxu0 %v430
        %v1043 = vpop.f32.mrf.mxu0
        %v1044 = vadd.f32 %v563, %v1043
        %1045 = vmatmul.f32.gmra.mxu0 %v431
        %v1046 = vpop.f32.mrf.mxu0
        %v1047 = vadd.f32 %v563, %v1046
        %1048 = vmatmul.f32.gmra.mxu0 %v432
        %v1049 = vpop.f32.mrf.mxu0
        %v1050 = vadd.f32 %v563, %v1049
        %1051 = vmatmul.f32.gmra.mxu0 %v433
        %v1052 = vpop.f32.mrf.mxu0
        %v1053 = vadd.f32 %v563, %v1052
        %1054 = vmatmul.f32.gmra.mxu0 %v434
        %v1055 = vpop.f32.mrf.mxu0
        %v1056 = vadd.f32 %v563, %v1055
        %1057 = vmatmul.f32.gmra.mxu0 %v435
        %v1058 = vpop.f32.mrf.mxu0
        %v1059 = vadd.f32 %v563, %v1058
        %1060 = vmatmul.f32.gmra.mxu0 %v436
        %v1061 = vpop.f32.mrf.mxu0
        %v1062 = vadd.f32 %v563, %v1061
        %1063 = vmatmul.f32.gmra.mxu0 %v437
        %v1064 = vpop.f32.mrf.mxu0
        %v1065 = vadd.f32 %v563, %v1064
        %1066 = vmatmul.f32.gmra.mxu0 %v438
        %v1067 = vpop.f32.mrf.mxu0
        %v1068 = vadd.f32 %v563, %v1067
        %1069 = vmatmul.f32.gmra.mxu0 %v439
        %v1070 = vpop.f32.mrf.mxu0
        %v1071 = vadd.f32 %v563, %v1070
        %1072 = vmatmul.f32.gmra.mxu0 %v440
        %v1073 = vpop.f32.mrf.mxu0
        %v1074 = vadd.f32 %v563, %v1073
        %1075 = vmatmul.f32.gmra.mxu0 %v441
        %v1076 = vpop.f32.mrf.mxu0
        %v1077 = vadd.f32 %v563, %v1076
        %1078 = vmatmul.f32.gmra.mxu0 %v442
        %v1079 = vpop.f32.mrf.mxu0
        %v1080 = vadd.f32 %v563, %v1079
        %1081 = vmatmul.f32.gmra.mxu0 %v443
        %v1082 = vpop.f32.mrf.mxu0
        %v1083 = vadd.f32 %v563, %v1082
        %1084 = vmatmul.f32.gmra.mxu0 %v444
        %v1085 = vpop.f32.mrf.mxu0
        %v1086 = vadd.f32 %v563, %v1085
        %1087 = vmatmul.f32.gmra.mxu0 %v445
        %v1088 = vpop.f32.mrf.mxu0
        %v1089 = vadd.f32 %v563, %v1088
        %1090 = vmatmul.f32.gmra.mxu0 %v446
        %v1091 = vpop.f32.mrf.mxu0
        %v1092 = vadd.f32 %v563, %v1091
        %1093 = vmatmul.f32.gmra.mxu0 %v447
        %v1094 = vpop.f32.mrf.mxu0
        %v1095 = vadd.f32 %v563, %v1094
        %1096 = vmatmul.f32.gmra.mxu0 %v448
        %v1097 = vpop.f32.mrf.mxu0
        %v1098 = vadd.f32 %v563, %v1097
        %1099 = vmatmul.f32.gmra.mxu0 %v449
        %v1100 = vpop.f32.mrf.mxu0
        %v1101 = vadd.f32 %v563, %v1100
        %1102 = vmatmul.f32.gmra.mxu0 %v450
        %v1103 = vpop.f32.mrf.mxu0
        %v1104 = vadd.f32 %v563, %v1103
        %1105 = vmatmul.f32.gmra.mxu0 %v451
        %v1106 = vpop.f32.mrf.mxu0
        %v1107 = vadd.f32 %v563, %v1106
        %1108 = vmatmul.f32.gmra.mxu0 %v452
        %v1109 = vpop.f32.mrf.mxu0
        %v1110 = vadd.f32 %v563, %v1109
        %1111 = vmatmul.f32.gmra.mxu0 %v453
        %v1112 = vpop.f32.mrf.mxu0
        %v1113 = vadd.f32 %v563, %v1112
        %1114 = vmatmul.f32.gmra.mxu0 %v454
        %v1115 = vpop.f32.mrf.mxu0
        %v1116 = vadd.f32 %v563, %v1115
        %1117 = vmatmul.f32.gmra.mxu0 %v455
        %v1118 = vpop.f32.mrf.mxu0
        %v1119 = vadd.f32 %v563, %v1118
        %1120 = vmatmul.f32.gmra.mxu0 %v456
        %v1121 = vpop.f32.mrf.mxu0
        %v1122 = vadd.f32 %v563, %v1121
        %1123 = vmatmul.f32.gmra.mxu0 %v457
        %v1124 = vpop.f32.mrf.mxu0
        %v1125 = vadd.f32 %v563, %v1124
        %1126 = vmatmul.f32.gmra.mxu0 %v458
        %v1127 = vpop.f32.mrf.mxu0
        %v1128 = vadd.f32 %v563, %v1127
        %1129 = vmatmul.f32.gmra.mxu0 %v459
        %v1130 = vpop.f32.mrf.mxu0
        %v1131 = vadd.f32 %v563, %v1130
        %1132 = vmatmul.f32.gmra.mxu0 %v460
        %v1133 = vpop.f32.mrf.mxu0
        %v1134 = vadd.f32 %v563, %v1133
        %1135 = vdwg.mxu0
        %1136 = vmatpush.msra.mxu0 %v556
        %1137 = vmatpush.msra.mxu0 %v550
        %1138 = vmatpush.msra.mxu0 %v544
        %1139 = vmatpush.msra.mxu0 %v538
        %1140 = vmatpush.msra.mxu0 %v532
        %1141 = vmatpush.msra.mxu0 %v526
        %1142 = vmatpush.msra.mxu0 %v520
        %1143 = vmatpush.msra.mxu0 %v514
        %1144 = vmatpush.msra.mxu0 %v508
        %1145 = vmatpush.msra.mxu0 %v502
        %1146 = vmatpush.msra.mxu0 %v496
        %1147 = vmatpush.msra.mxu0 %v490
        %1148 = vmatpush.msra.mxu0 %v484
        %1149 = vmatpush.msra.mxu0 %v478
        %1150 = vmatpush.msra.mxu0 %v472
        %1151 = vmatpush.msra.mxu0 %v466
        %1152 = vmatmul.f32.gmra.mxu0 %v429
        %v1153 = vpop.f32.mrf.mxu0
        %v1154 = vadd.f32 %v564, %v1153
        %1155 = vmatmul.f32.gmra.mxu0 %v430
        %v1156 = vpop.f32.mrf.mxu0
        %v1157 = vadd.f32 %v564, %v1156
        %1158 = vmatmul.f32.gmra.mxu0 %v431
        %v1159 = vpop.f32.mrf.mxu0
        %v1160 = vadd.f32 %v564, %v1159
        %1161 = vmatmul.f32.gmra.mxu0 %v432
        %v1162 = vpop.f32.mrf.mxu0
        %v1163 = vadd.f32 %v564, %v1162
        %1164 = vmatmul.f32.gmra.mxu0 %v433
        %v1165 = vpop.f32.mrf.mxu0
        %v1166 = vadd.f32 %v564, %v1165
        %1167 = vmatmul.f32.gmra.mxu0 %v434
        %v1168 = vpop.f32.mrf.mxu0
        %v1169 = vadd.f32 %v564, %v1168
        %1170 = vmatmul.f32.gmra.mxu0 %v435
        %v1171 = vpop.f32.mrf.mxu0
        %v1172 = vadd.f32 %v564, %v1171
        %1173 = vmatmul.f32.gmra.mxu0 %v436
        %v1174 = vpop.f32.mrf.mxu0
        %v1175 = vadd.f32 %v564, %v1174
        %1176 = vmatmul.f32.gmra.mxu0 %v437
        %v1177 = vpop.f32.mrf.mxu0
        %v1178 = vadd.f32 %v564, %v1177
        %1179 = vmatmul.f32.gmra.mxu0 %v438
        %v1180 = vpop.f32.mrf.mxu0
        %v1181 = vadd.f32 %v564, %v1180
        %1182 = vmatmul.f32.gmra.mxu0 %v439
        %v1183 = vpop.f32.mrf.mxu0
        %v1184 = vadd.f32 %v564, %v1183
        %1185 = vmatmul.f32.gmra.mxu0 %v440
        %v1186 = vpop.f32.mrf.mxu0
        %v1187 = vadd.f32 %v564, %v1186
        %1188 = vmatmul.f32.gmra.mxu0 %v441
        %v1189 = vpop.f32.mrf.mxu0
        %v1190 = vadd.f32 %v564, %v1189
        %1191 = vmatmul.f32.gmra.mxu0 %v442
        %v1192 = vpop.f32.mrf.mxu0
        %v1193 = vadd.f32 %v564, %v1192
        %1194 = vmatmul.f32.gmra.mxu0 %v443
        %v1195 = vpop.f32.mrf.mxu0
        %v1196 = vadd.f32 %v564, %v1195
        %1197 = vmatmul.f32.gmra.mxu0 %v444
        %v1198 = vpop.f32.mrf.mxu0
        %v1199 = vadd.f32 %v564, %v1198
        %1200 = vmatmul.f32.gmra.mxu0 %v445
        %v1201 = vpop.f32.mrf.mxu0
        %v1202 = vadd.f32 %v564, %v1201
        %1203 = vmatmul.f32.gmra.mxu0 %v446
        %v1204 = vpop.f32.mrf.mxu0
        %v1205 = vadd.f32 %v564, %v1204
        %1206 = vmatmul.f32.gmra.mxu0 %v447
        %v1207 = vpop.f32.mrf.mxu0
        %v1208 = vadd.f32 %v564, %v1207
        %1209 = vmatmul.f32.gmra.mxu0 %v448
        %v1210 = vpop.f32.mrf.mxu0
        %v1211 = vadd.f32 %v564, %v1210
        %1212 = vmatmul.f32.gmra.mxu0 %v449
        %v1213 = vpop.f32.mrf.mxu0
        %v1214 = vadd.f32 %v564, %v1213
        %1215 = vmatmul.f32.gmra.mxu0 %v450
        %v1216 = vpop.f32.mrf.mxu0
        %v1217 = vadd.f32 %v564, %v1216
        %1218 = vmatmul.f32.gmra.mxu0 %v451
        %v1219 = vpop.f32.mrf.mxu0
        %v1220 = vadd.f32 %v564, %v1219
        %1221 = vmatmul.f32.gmra.mxu0 %v452
        %v1222 = vpop.f32.mrf.mxu0
        %v1223 = vadd.f32 %v564, %v1222
        %1224 = vmatmul.f32.gmra.mxu0 %v453
        %v1225 = vpop.f32.mrf.mxu0
        %v1226 = vadd.f32 %v564, %v1225
        %1227 = vmatmul.f32.gmra.mxu0 %v454
        %v1228 = vpop.f32.mrf.mxu0
        %v1229 = vadd.f32 %v564, %v1228
        %1230 = vmatmul.f32.gmra.mxu0 %v455
        %v1231 = vpop.f32.mrf.mxu0
        %v1232 = vadd.f32 %v564, %v1231
        %1233 = vmatmul.f32.gmra.mxu0 %v456
        %v1234 = vpop.f32.mrf.mxu0
        %v1235 = vadd.f32 %v564, %v1234
        %1236 = vmatmul.f32.gmra.mxu0 %v457
        %v1237 = vpop.f32.mrf.mxu0
        %v1238 = vadd.f32 %v564, %v1237
        %1239 = vmatmul.f32.gmra.mxu0 %v458
        %v1240 = vpop.f32.mrf.mxu0
        %v1241 = vadd.f32 %v564, %v1240
        %1242 = vmatmul.f32.gmra.mxu0 %v459
        %v1243 = vpop.f32.mrf.mxu0
        %v1244 = vadd.f32 %v564, %v1243
        %1245 = vmatmul.f32.gmra.mxu0 %v460
        %v1246 = vpop.f32.mrf.mxu0
        %v1247 = vadd.f32 %v564, %v1246
        %1248 = vdwg.mxu0
        %v1249 = vld [vmem:[%s358] sm:$0xff]
        %v1250 = vld [vmem:[%s358 + $0x8] sm:$0xff]
        %v1251 = vld [vmem:[%s358 + $0x10] sm:$0xff]
        %v1252 = vld [vmem:[%s358 + $0x18] sm:$0xff]
        %v1253 = vld [vmem:[%s358 + $0x20] sm:$0xff]
        %v1254 = vld [vmem:[%s358 + $0x28] sm:$0xff]
        %v1255 = vld [vmem:[%s358 + $0x30] sm:$0xff]
        %v1256 = vld [vmem:[%s358 + $0x38] sm:$0xff]
        %v1257 = vld [vmem:[%s358 + $0x40] sm:$0xff]
        %v1258 = vld [vmem:[%s358 + $0x48] sm:$0xff]
        %v1259 = vld [vmem:[%s358 + $0x50] sm:$0xff]
        %v1260 = vld [vmem:[%s358 + $0x58] sm:$0xff]
        %v1261 = vld [vmem:[%s358 + $0x60] sm:$0xff]
        %v1262 = vld [vmem:[%s358 + $0x68] sm:$0xff]
        %v1263 = vld [vmem:[%s358 + $0x70] sm:$0xff]
        %v1264 = vld [vmem:[%s358 + $0x78] sm:$0xff]
        %v1265 = vld [vmem:[%s358 + $0x80] sm:$0xff]
        %v1266 = vld [vmem:[%s358 + $0x88] sm:$0xff]
        %v1267 = vld [vmem:[%s358 + $0x90] sm:$0xff]
        %v1268 = vld [vmem:[%s358 + $0x98] sm:$0xff]
        %v1269 = vld [vmem:[%s358 + $0xa0] sm:$0xff]
        %v1270 = vld [vmem:[%s358 + $0xa8] sm:$0xff]
        %v1271 = vld [vmem:[%s358 + $0xb0] sm:$0xff]
        %v1272 = vld [vmem:[%s358 + $0xb8] sm:$0xff]
        %v1273 = vld [vmem:[%s358 + $0xc0] sm:$0xff]
        %v1274 = vld [vmem:[%s358 + $0xc8] sm:$0xff]
        %v1275 = vld [vmem:[%s358 + $0xd0] sm:$0xff]
        %v1276 = vld [vmem:[%s358 + $0xd8] sm:$0xff]
        %v1277 = vld [vmem:[%s358 + $0xe0] sm:$0xff]
        %v1278 = vld [vmem:[%s358 + $0xe8] sm:$0xff]
        %v1279 = vld [vmem:[%s358 + $0xf0] sm:$0xff]
        %v1280 = vld [vmem:[%s358 + $0xf8] sm:$0xff]
        %v1281 = vld [vmem:[%s358 + $0x100] sm:$0xff]
        %v1282 = vld [vmem:[%s358 + $0x108] sm:$0xff]
        %v1283 = vld [vmem:[%s358 + $0x110] sm:$0xff]
        %v1284 = vld [vmem:[%s358 + $0x118] sm:$0xff]
        %v1285 = vld [vmem:[%s358 + $0x120] sm:$0xff]
        %v1286 = vld [vmem:[%s358 + $0x128] sm:$0xff]
        %v1287 = vld [vmem:[%s358 + $0x130] sm:$0xff]
        %v1288 = vld [vmem:[%s358 + $0x138] sm:$0xff]
        %v1289 = vld [vmem:[%s358 + $0x140] sm:$0xff]
        %v1290 = vld [vmem:[%s358 + $0x148] sm:$0xff]
        %v1291 = vld [vmem:[%s358 + $0x150] sm:$0xff]
        %v1292 = vld [vmem:[%s358 + $0x158] sm:$0xff]
        %v1293 = vld [vmem:[%s358 + $0x160] sm:$0xff]
        %v1294 = vld [vmem:[%s358 + $0x168] sm:$0xff]
        %v1295 = vld [vmem:[%s358 + $0x170] sm:$0xff]
        %v1296 = vld [vmem:[%s358 + $0x178] sm:$0xff]
        %v1297 = vld [vmem:[%s358 + $0x180] sm:$0xff]
        %v1298 = vld [vmem:[%s358 + $0x188] sm:$0xff]
        %v1299 = vld [vmem:[%s358 + $0x190] sm:$0xff]
        %v1300 = vld [vmem:[%s358 + $0x198] sm:$0xff]
        %v1301 = vld [vmem:[%s358 + $0x1a0] sm:$0xff]
        %v1302 = vld [vmem:[%s358 + $0x1a8] sm:$0xff]
        %v1303 = vld [vmem:[%s358 + $0x1b0] sm:$0xff]
        %v1304 = vld [vmem:[%s358 + $0x1b8] sm:$0xff]
        %v1305 = vld [vmem:[%s358 + $0x1c0] sm:$0xff]
        %v1306 = vld [vmem:[%s358 + $0x1c8] sm:$0xff]
        %v1307 = vld [vmem:[%s358 + $0x1d0] sm:$0xff]
        %v1308 = vld [vmem:[%s358 + $0x1d8] sm:$0xff]
        %v1309 = vld [vmem:[%s358 + $0x1e0] sm:$0xff]
        %v1310 = vld [vmem:[%s358 + $0x1e8] sm:$0xff]
        %v1311 = vld [vmem:[%s358 + $0x1f0] sm:$0xff]
        %v1312 = vld [vmem:[%s358 + $0x1f8] sm:$0xff]
        %v1313 = vld [vmem:[%s358 + $0x200] sm:$0xff]
        %v1314 = vld [vmem:[%s358 + $0x208] sm:$0xff]
        %v1315 = vld [vmem:[%s358 + $0x210] sm:$0xff]
        %v1316 = vld [vmem:[%s358 + $0x218] sm:$0xff]
        %v1317 = vld [vmem:[%s358 + $0x220] sm:$0xff]
        %v1318 = vld [vmem:[%s358 + $0x228] sm:$0xff]
        %v1319 = vld [vmem:[%s358 + $0x230] sm:$0xff]
        %v1320 = vld [vmem:[%s358 + $0x238] sm:$0xff]
        %v1321 = vld [vmem:[%s358 + $0x240] sm:$0xff]
        %v1322 = vld [vmem:[%s358 + $0x248] sm:$0xff]
        %v1323 = vld [vmem:[%s358 + $0x250] sm:$0xff]
        %v1324 = vld [vmem:[%s358 + $0x258] sm:$0xff]
        %v1325 = vld [vmem:[%s358 + $0x260] sm:$0xff]
        %v1326 = vld [vmem:[%s358 + $0x268] sm:$0xff]
        %v1327 = vld [vmem:[%s358 + $0x270] sm:$0xff]
        %v1328 = vld [vmem:[%s358 + $0x278] sm:$0xff]
        %v1329 = vld [vmem:[%s358 + $0x280] sm:$0xff]
        %v1330 = vld [vmem:[%s358 + $0x288] sm:$0xff]
        %v1331 = vld [vmem:[%s358 + $0x290] sm:$0xff]
        %v1332 = vld [vmem:[%s358 + $0x298] sm:$0xff]
        %v1333 = vld [vmem:[%s358 + $0x2a0] sm:$0xff]
        %v1334 = vld [vmem:[%s358 + $0x2a8] sm:$0xff]
        %v1335 = vld [vmem:[%s358 + $0x2b0] sm:$0xff]
        %v1336 = vld [vmem:[%s358 + $0x2b8] sm:$0xff]
        %v1337 = vld [vmem:[%s358 + $0x2c0] sm:$0xff]
        %v1338 = vld [vmem:[%s358 + $0x2c8] sm:$0xff]
        %v1339 = vld [vmem:[%s358 + $0x2d0] sm:$0xff]
        %v1340 = vld [vmem:[%s358 + $0x2d8] sm:$0xff]
        %v1341 = vld [vmem:[%s358 + $0x2e0] sm:$0xff]
        %v1342 = vld [vmem:[%s358 + $0x2e8] sm:$0xff]
        %v1343 = vld [vmem:[%s358 + $0x2f0] sm:$0xff]
        %v1344 = vld [vmem:[%s358 + $0x2f8] sm:$0xff]
        %v1345 = vld [vmem:[%s358 + $0x300] sm:$0xff]
        %v1346 = vld [vmem:[%s358 + $0x308] sm:$0xff]
        %v1347 = vld [vmem:[%s358 + $0x310] sm:$0xff]
        %v1348 = vld [vmem:[%s358 + $0x318] sm:$0xff]
        %v1349 = vld [vmem:[%s358 + $0x320] sm:$0xff]
        %v1350 = vld [vmem:[%s358 + $0x328] sm:$0xff]
        %v1351 = vld [vmem:[%s358 + $0x330] sm:$0xff]
        %v1352 = vld [vmem:[%s358 + $0x338] sm:$0xff]
        %v1353 = vld [vmem:[%s358 + $0x340] sm:$0xff]
        %v1354 = vld [vmem:[%s358 + $0x348] sm:$0xff]
        %v1355 = vld [vmem:[%s358 + $0x350] sm:$0xff]
        %v1356 = vld [vmem:[%s358 + $0x358] sm:$0xff]
        %v1357 = vld [vmem:[%s358 + $0x360] sm:$0xff]
        %v1358 = vld [vmem:[%s358 + $0x368] sm:$0xff]
        %v1359 = vld [vmem:[%s358 + $0x370] sm:$0xff]
        %v1360 = vld [vmem:[%s358 + $0x378] sm:$0xff]
        %v1361 = vld [vmem:[%s358 + $0x380] sm:$0xff]
        %v1362 = vld [vmem:[%s358 + $0x388] sm:$0xff]
        %v1363 = vld [vmem:[%s358 + $0x390] sm:$0xff]
        %v1364 = vld [vmem:[%s358 + $0x398] sm:$0xff]
        %v1365 = vld [vmem:[%s358 + $0x3a0] sm:$0xff]
        %v1366 = vld [vmem:[%s358 + $0x3a8] sm:$0xff]
        %v1367 = vld [vmem:[%s358 + $0x3b0] sm:$0xff]
        %v1368 = vld [vmem:[%s358 + $0x3b8] sm:$0xff]
        %v1369 = vld [vmem:[%s358 + $0x3c0] sm:$0xff]
        %v1370 = vld [vmem:[%s358 + $0x3c8] sm:$0xff]
        %v1371 = vld [vmem:[%s358 + $0x3d0] sm:$0xff]
        %v1372 = vld [vmem:[%s358 + $0x3d8] sm:$0xff]
        %v1373 = vld [vmem:[%s358 + $0x3e0] sm:$0xff]
        %v1374 = vld [vmem:[%s358 + $0x3e8] sm:$0xff]
        %v1375 = vld [vmem:[%s358 + $0x3f0] sm:$0xff]
        %v1376 = vld [vmem:[%s358 + $0x3f8] sm:$0xff]
        %v1377 = vld [vmem:[%s358 + $0x400] sm:$0xff]
        %v1378 = vld [vmem:[%s358 + $0x408] sm:$0xff]
        %v1379 = vld [vmem:[%s358 + $0x410] sm:$0xff]
        %v1380 = vld [vmem:[%s358 + $0x418] sm:$0xff]
        %v1381 = vld [vmem:[%s358 + $0x420] sm:$0xff]
        %v1382 = vld [vmem:[%s358 + $0x428] sm:$0xff]
        %v1383 = vld [vmem:[%s358 + $0x430] sm:$0xff]
        %v1384 = vld [vmem:[%s358 + $0x438] sm:$0xff]
        %v1385 = vld [vmem:[%s358 + $0x440] sm:$0xff]
        %v1386 = vld [vmem:[%s358 + $0x448] sm:$0xff]
        %v1387 = vld [vmem:[%s358 + $0x450] sm:$0xff]
        %v1388 = vld [vmem:[%s358 + $0x458] sm:$0xff]
        %v1389 = vld [vmem:[%s358 + $0x460] sm:$0xff]
        %v1390 = vld [vmem:[%s358 + $0x468] sm:$0xff]
        %v1391 = vld [vmem:[%s358 + $0x470] sm:$0xff]
        %v1392 = vld [vmem:[%s358 + $0x478] sm:$0xff]
        %v1393 = vld [vmem:[%s358 + $0x480] sm:$0xff]
        %v1394 = vld [vmem:[%s358 + $0x488] sm:$0xff]
        %v1395 = vld [vmem:[%s358 + $0x490] sm:$0xff]
        %v1396 = vld [vmem:[%s358 + $0x498] sm:$0xff]
        %v1397 = vld [vmem:[%s358 + $0x4a0] sm:$0xff]
        %v1398 = vld [vmem:[%s358 + $0x4a8] sm:$0xff]
        %v1399 = vld [vmem:[%s358 + $0x4b0] sm:$0xff]
        %v1400 = vld [vmem:[%s358 + $0x4b8] sm:$0xff]
        %v1401 = vld [vmem:[%s358 + $0x4c0] sm:$0xff]
        %v1402 = vld [vmem:[%s358 + $0x4c8] sm:$0xff]
        %v1403 = vld [vmem:[%s358 + $0x4d0] sm:$0xff]
        %v1404 = vld [vmem:[%s358 + $0x4d8] sm:$0xff]
        %v1405 = vld [vmem:[%s358 + $0x4e0] sm:$0xff]
        %v1406 = vld [vmem:[%s358 + $0x4e8] sm:$0xff]
        %v1407 = vld [vmem:[%s358 + $0x4f0] sm:$0xff]
        %v1408 = vld [vmem:[%s358 + $0x4f8] sm:$0xff]
        %v1409 = vld [vmem:[%s358 + $0x500] sm:$0xff]
        %v1410 = vld [vmem:[%s358 + $0x508] sm:$0xff]
        %v1411 = vld [vmem:[%s358 + $0x510] sm:$0xff]
        %v1412 = vld [vmem:[%s358 + $0x518] sm:$0xff]
        %v1413 = vld [vmem:[%s358 + $0x520] sm:$0xff]
        %v1414 = vld [vmem:[%s358 + $0x528] sm:$0xff]
        %v1415 = vld [vmem:[%s358 + $0x530] sm:$0xff]
        %v1416 = vld [vmem:[%s358 + $0x538] sm:$0xff]
        %v1417 = vld [vmem:[%s358 + $0x540] sm:$0xff]
        %v1418 = vld [vmem:[%s358 + $0x548] sm:$0xff]
        %v1419 = vld [vmem:[%s358 + $0x550] sm:$0xff]
        %v1420 = vld [vmem:[%s358 + $0x558] sm:$0xff]
        %v1421 = vld [vmem:[%s358 + $0x560] sm:$0xff]
        %v1422 = vld [vmem:[%s358 + $0x568] sm:$0xff]
        %v1423 = vld [vmem:[%s358 + $0x570] sm:$0xff]
        %v1424 = vld [vmem:[%s358 + $0x578] sm:$0xff]
        %v1425 = vld [vmem:[%s358 + $0x580] sm:$0xff]
        %v1426 = vld [vmem:[%s358 + $0x588] sm:$0xff]
        %v1427 = vld [vmem:[%s358 + $0x590] sm:$0xff]
        %v1428 = vld [vmem:[%s358 + $0x598] sm:$0xff]
        %v1429 = vld [vmem:[%s358 + $0x5a0] sm:$0xff]
        %v1430 = vld [vmem:[%s358 + $0x5a8] sm:$0xff]
        %v1431 = vld [vmem:[%s358 + $0x5b0] sm:$0xff]
        %v1432 = vld [vmem:[%s358 + $0x5b8] sm:$0xff]
        %v1433 = vld [vmem:[%s358 + $0x5c0] sm:$0xff]
        %v1434 = vld [vmem:[%s358 + $0x5c8] sm:$0xff]
        %v1435 = vld [vmem:[%s358 + $0x5d0] sm:$0xff]
        %v1436 = vld [vmem:[%s358 + $0x5d8] sm:$0xff]
        %v1437 = vld [vmem:[%s358 + $0x5e0] sm:$0xff]
        %v1438 = vld [vmem:[%s358 + $0x5e8] sm:$0xff]
        %v1439 = vld [vmem:[%s358 + $0x5f0] sm:$0xff]
        %v1440 = vld [vmem:[%s358 + $0x5f8] sm:$0xff]
        %v1441 = vadd.f32 %v589, %v1249
        %v1442 = vadd.f32 %v702, %v1250
        %v1443 = vadd.f32 %v815, %v1251
        %v1444 = vadd.f32 %v928, %v1252
        %v1445 = vadd.f32 %v1041, %v1253
        %v1446 = vadd.f32 %v1154, %v1254
        %v1447 = vadd.f32 %v592, %v1255
        %v1448 = vadd.f32 %v705, %v1256
        %v1449 = vadd.f32 %v818, %v1257
        %v1450 = vadd.f32 %v931, %v1258
        %v1451 = vadd.f32 %v1044, %v1259
        %v1452 = vadd.f32 %v1157, %v1260
        %v1453 = vadd.f32 %v595, %v1261
        %v1454 = vadd.f32 %v708, %v1262
        %v1455 = vadd.f32 %v821, %v1263
        %v1456 = vadd.f32 %v934, %v1264
        %v1457 = vadd.f32 %v1047, %v1265
        %v1458 = vadd.f32 %v1160, %v1266
        %v1459 = vadd.f32 %v598, %v1267
        %v1460 = vadd.f32 %v711, %v1268
        %v1461 = vadd.f32 %v824, %v1269
        %v1462 = vadd.f32 %v937, %v1270
        %v1463 = vadd.f32 %v1050, %v1271
        %v1464 = vadd.f32 %v1163, %v1272
        %v1465 = vadd.f32 %v601, %v1273
        %v1466 = vadd.f32 %v714, %v1274
        %v1467 = vadd.f32 %v827, %v1275
        %v1468 = vadd.f32 %v940, %v1276
        %v1469 = vadd.f32 %v1053, %v1277
        %v1470 = vadd.f32 %v1166, %v1278
        %v1471 = vadd.f32 %v604, %v1279
        %v1472 = vadd.f32 %v717, %v1280
        %v1473 = vadd.f32 %v830, %v1281
        %v1474 = vadd.f32 %v943, %v1282
        %v1475 = vadd.f32 %v1056, %v1283
        %v1476 = vadd.f32 %v1169, %v1284
        %v1477 = vadd.f32 %v607, %v1285
        %v1478 = vadd.f32 %v720, %v1286
        %v1479 = vadd.f32 %v833, %v1287
        %v1480 = vadd.f32 %v946, %v1288
        %v1481 = vadd.f32 %v1059, %v1289
        %v1482 = vadd.f32 %v1172, %v1290
        %v1483 = vadd.f32 %v610, %v1291
        %v1484 = vadd.f32 %v723, %v1292
        %v1485 = vadd.f32 %v836, %v1293
        %v1486 = vadd.f32 %v949, %v1294
        %v1487 = vadd.f32 %v1062, %v1295
        %v1488 = vadd.f32 %v1175, %v1296
        %v1489 = vadd.f32 %v613, %v1297
        %v1490 = vadd.f32 %v726, %v1298
        %v1491 = vadd.f32 %v839, %v1299
        %v1492 = vadd.f32 %v952, %v1300
        %v1493 = vadd.f32 %v1065, %v1301
        %v1494 = vadd.f32 %v1178, %v1302
        %v1495 = vadd.f32 %v616, %v1303
        %v1496 = vadd.f32 %v729, %v1304
        %v1497 = vadd.f32 %v842, %v1305
        %v1498 = vadd.f32 %v955, %v1306
        %v1499 = vadd.f32 %v1068, %v1307
        %v1500 = vadd.f32 %v1181, %v1308
        %v1501 = vadd.f32 %v619, %v1309
        %v1502 = vadd.f32 %v732, %v1310
        %v1503 = vadd.f32 %v845, %v1311
        %v1504 = vadd.f32 %v958, %v1312
        %v1505 = vadd.f32 %v1071, %v1313
        %v1506 = vadd.f32 %v1184, %v1314
        %v1507 = vadd.f32 %v622, %v1315
        %v1508 = vadd.f32 %v735, %v1316
        %v1509 = vadd.f32 %v848, %v1317
        %v1510 = vadd.f32 %v961, %v1318
        %v1511 = vadd.f32 %v1074, %v1319
        %v1512 = vadd.f32 %v1187, %v1320
        %v1513 = vadd.f32 %v625, %v1321
        %v1514 = vadd.f32 %v738, %v1322
        %v1515 = vadd.f32 %v851, %v1323
        %v1516 = vadd.f32 %v964, %v1324
        %v1517 = vadd.f32 %v1077, %v1325
        %v1518 = vadd.f32 %v1190, %v1326
        %v1519 = vadd.f32 %v628, %v1327
        %v1520 = vadd.f32 %v741, %v1328
        %v1521 = vadd.f32 %v854, %v1329
        %v1522 = vadd.f32 %v967, %v1330
        %v1523 = vadd.f32 %v1080, %v1331
        %v1524 = vadd.f32 %v1193, %v1332
        %v1525 = vadd.f32 %v631, %v1333
        %v1526 = vadd.f32 %v744, %v1334
        %v1527 = vadd.f32 %v857, %v1335
        %v1528 = vadd.f32 %v970, %v1336
        %v1529 = vadd.f32 %v1083, %v1337
        %v1530 = vadd.f32 %v1196, %v1338
        %v1531 = vadd.f32 %v634, %v1339
        %v1532 = vadd.f32 %v747, %v1340
        %v1533 = vadd.f32 %v860, %v1341
        %v1534 = vadd.f32 %v973, %v1342
        %v1535 = vadd.f32 %v1086, %v1343
        %v1536 = vadd.f32 %v1199, %v1344
        %v1537 = vadd.f32 %v637, %v1345
        %v1538 = vadd.f32 %v750, %v1346
        %v1539 = vadd.f32 %v863, %v1347
        %v1540 = vadd.f32 %v976, %v1348
        %v1541 = vadd.f32 %v1089, %v1349
        %v1542 = vadd.f32 %v1202, %v1350
        %v1543 = vadd.f32 %v640, %v1351
        %v1544 = vadd.f32 %v753, %v1352
        %v1545 = vadd.f32 %v866, %v1353
        %v1546 = vadd.f32 %v979, %v1354
        %v1547 = vadd.f32 %v1092, %v1355
        %v1548 = vadd.f32 %v1205, %v1356
        %v1549 = vadd.f32 %v643, %v1357
        %v1550 = vadd.f32 %v756, %v1358
        %v1551 = vadd.f32 %v869, %v1359
        %v1552 = vadd.f32 %v982, %v1360
        %v1553 = vadd.f32 %v1095, %v1361
        %v1554 = vadd.f32 %v1208, %v1362
        %v1555 = vadd.f32 %v646, %v1363
        %v1556 = vadd.f32 %v759, %v1364
        %v1557 = vadd.f32 %v872, %v1365
        %v1558 = vadd.f32 %v985, %v1366
        %v1559 = vadd.f32 %v1098, %v1367
        %v1560 = vadd.f32 %v1211, %v1368
        %v1561 = vadd.f32 %v649, %v1369
        %v1562 = vadd.f32 %v762, %v1370
        %v1563 = vadd.f32 %v875, %v1371
        %v1564 = vadd.f32 %v988, %v1372
        %v1565 = vadd.f32 %v1101, %v1373
        %v1566 = vadd.f32 %v1214, %v1374
        %v1567 = vadd.f32 %v652, %v1375
        %v1568 = vadd.f32 %v765, %v1376
        %v1569 = vadd.f32 %v878, %v1377
        %v1570 = vadd.f32 %v991, %v1378
        %v1571 = vadd.f32 %v1104, %v1379
        %v1572 = vadd.f32 %v1217, %v1380
        %v1573 = vadd.f32 %v655, %v1381
        %v1574 = vadd.f32 %v768, %v1382
        %v1575 = vadd.f32 %v881, %v1383
        %v1576 = vadd.f32 %v994, %v1384
        %v1577 = vadd.f32 %v1107, %v1385
        %v1578 = vadd.f32 %v1220, %v1386
        %v1579 = vadd.f32 %v658, %v1387
        %v1580 = vadd.f32 %v771, %v1388
        %v1581 = vadd.f32 %v884, %v1389
        %v1582 = vadd.f32 %v997, %v1390
        %v1583 = vadd.f32 %v1110, %v1391
        %v1584 = vadd.f32 %v1223, %v1392
        %v1585 = vadd.f32 %v661, %v1393
        %v1586 = vadd.f32 %v774, %v1394
        %v1587 = vadd.f32 %v887, %v1395
        %v1588 = vadd.f32 %v1000, %v1396
        %v1589 = vadd.f32 %v1113, %v1397
        %v1590 = vadd.f32 %v1226, %v1398
        %v1591 = vadd.f32 %v664, %v1399
        %v1592 = vadd.f32 %v777, %v1400
        %v1593 = vadd.f32 %v890, %v1401
        %v1594 = vadd.f32 %v1003, %v1402
        %v1595 = vadd.f32 %v1116, %v1403
        %v1596 = vadd.f32 %v1229, %v1404
        %v1597 = vadd.f32 %v667, %v1405
        %v1598 = vadd.f32 %v780, %v1406
        %v1599 = vadd.f32 %v893, %v1407
        %v1600 = vadd.f32 %v1006, %v1408
        %v1601 = vadd.f32 %v1119, %v1409
        %v1602 = vadd.f32 %v1232, %v1410
        %v1603 = vadd.f32 %v670, %v1411
        %v1604 = vadd.f32 %v783, %v1412
        %v1605 = vadd.f32 %v896, %v1413
        %v1606 = vadd.f32 %v1009, %v1414
        %v1607 = vadd.f32 %v1122, %v1415
        %v1608 = vadd.f32 %v1235, %v1416
        %v1609 = vadd.f32 %v673, %v1417
        %v1610 = vadd.f32 %v786, %v1418
        %v1611 = vadd.f32 %v899, %v1419
        %v1612 = vadd.f32 %v1012, %v1420
        %v1613 = vadd.f32 %v1125, %v1421
        %v1614 = vadd.f32 %v1238, %v1422
        %v1615 = vadd.f32 %v676, %v1423
        %v1616 = vadd.f32 %v789, %v1424
        %v1617 = vadd.f32 %v902, %v1425
        %v1618 = vadd.f32 %v1015, %v1426
        %v1619 = vadd.f32 %v1128, %v1427
        %v1620 = vadd.f32 %v1241, %v1428
        %v1621 = vadd.f32 %v679, %v1429
        %v1622 = vadd.f32 %v792, %v1430
        %v1623 = vadd.f32 %v905, %v1431
        %v1624 = vadd.f32 %v1018, %v1432
        %v1625 = vadd.f32 %v1131, %v1433
        %v1626 = vadd.f32 %v1244, %v1434
        %v1627 = vadd.f32 %v682, %v1435
        %v1628 = vadd.f32 %v795, %v1436
        %v1629 = vadd.f32 %v908, %v1437
        %v1630 = vadd.f32 %v1021, %v1438
        %v1631 = vadd.f32 %v1134, %v1439
        %v1632 = vadd.f32 %v1247, %v1440
        %v1633 = vsub.f32 0.0, %v1441
        %v1634 = vsub.f32 0.0, %v1442
        %v1635 = vsub.f32 0.0, %v1443
        %v1636 = vsub.f32 0.0, %v1444
        %v1637 = vsub.f32 0.0, %v1445
        %v1638 = vsub.f32 0.0, %v1446
        %v1639 = vsub.f32 0.0, %v1447
        %v1640 = vsub.f32 0.0, %v1448
        %v1641 = vsub.f32 0.0, %v1449
        %v1642 = vsub.f32 0.0, %v1450
        %v1643 = vsub.f32 0.0, %v1451
        %v1644 = vsub.f32 0.0, %v1452
        %v1645 = vsub.f32 0.0, %v1453
        %v1646 = vsub.f32 0.0, %v1454
        %v1647 = vsub.f32 0.0, %v1455
        %v1648 = vsub.f32 0.0, %v1456
        %v1649 = vsub.f32 0.0, %v1457
        %v1650 = vsub.f32 0.0, %v1458
        %v1651 = vsub.f32 0.0, %v1459
        %v1652 = vsub.f32 0.0, %v1460
        %v1653 = vsub.f32 0.0, %v1461
        %v1654 = vsub.f32 0.0, %v1462
        %v1655 = vsub.f32 0.0, %v1463
        %v1656 = vsub.f32 0.0, %v1464
        %v1657 = vsub.f32 0.0, %v1465
        %v1658 = vsub.f32 0.0, %v1466
        %v1659 = vsub.f32 0.0, %v1467
        %v1660 = vsub.f32 0.0, %v1468
        %v1661 = vsub.f32 0.0, %v1469
        %v1662 = vsub.f32 0.0, %v1470
        %v1663 = vsub.f32 0.0, %v1471
        %v1664 = vsub.f32 0.0, %v1472
        %v1665 = vsub.f32 0.0, %v1473
        %v1666 = vsub.f32 0.0, %v1474
        %v1667 = vsub.f32 0.0, %v1475
        %v1668 = vsub.f32 0.0, %v1476
        %v1669 = vsub.f32 0.0, %v1477
        %v1670 = vsub.f32 0.0, %v1478
        %v1671 = vsub.f32 0.0, %v1479
        %v1672 = vsub.f32 0.0, %v1480
        %v1673 = vsub.f32 0.0, %v1481
        %v1674 = vsub.f32 0.0, %v1482
        %v1675 = vsub.f32 0.0, %v1483
        %v1676 = vsub.f32 0.0, %v1484
        %v1677 = vsub.f32 0.0, %v1485
        %v1678 = vsub.f32 0.0, %v1486
        %v1679 = vsub.f32 0.0, %v1487
        %v1680 = vsub.f32 0.0, %v1488
        %v1681 = vsub.f32 0.0, %v1489
        %v1682 = vsub.f32 0.0, %v1490
        %v1683 = vsub.f32 0.0, %v1491
        %v1684 = vsub.f32 0.0, %v1492
        %v1685 = vsub.f32 0.0, %v1493
        %v1686 = vsub.f32 0.0, %v1494
        %v1687 = vsub.f32 0.0, %v1495
        %v1688 = vsub.f32 0.0, %v1496
        %v1689 = vsub.f32 0.0, %v1497
        %v1690 = vsub.f32 0.0, %v1498
        %v1691 = vsub.f32 0.0, %v1499
        %v1692 = vsub.f32 0.0, %v1500
        %v1693 = vsub.f32 0.0, %v1501
        %v1694 = vsub.f32 0.0, %v1502
        %v1695 = vsub.f32 0.0, %v1503
        %v1696 = vsub.f32 0.0, %v1504
        %v1697 = vsub.f32 0.0, %v1505
        %v1698 = vsub.f32 0.0, %v1506
        %v1699 = vsub.f32 0.0, %v1507
        %v1700 = vsub.f32 0.0, %v1508
        %v1701 = vsub.f32 0.0, %v1509
        %v1702 = vsub.f32 0.0, %v1510
        %v1703 = vsub.f32 0.0, %v1511
        %v1704 = vsub.f32 0.0, %v1512
        %v1705 = vsub.f32 0.0, %v1513
        %v1706 = vsub.f32 0.0, %v1514
        %v1707 = vsub.f32 0.0, %v1515
        %v1708 = vsub.f32 0.0, %v1516
        %v1709 = vsub.f32 0.0, %v1517
        %v1710 = vsub.f32 0.0, %v1518
        %v1711 = vsub.f32 0.0, %v1519
        %v1712 = vsub.f32 0.0, %v1520
        %v1713 = vsub.f32 0.0, %v1521
        %v1714 = vsub.f32 0.0, %v1522
        %v1715 = vsub.f32 0.0, %v1523
        %v1716 = vsub.f32 0.0, %v1524
        %v1717 = vsub.f32 0.0, %v1525
        %v1718 = vsub.f32 0.0, %v1526
        %v1719 = vsub.f32 0.0, %v1527
        %v1720 = vsub.f32 0.0, %v1528
        %v1721 = vsub.f32 0.0, %v1529
        %v1722 = vsub.f32 0.0, %v1530
        %v1723 = vsub.f32 0.0, %v1531
        %v1724 = vsub.f32 0.0, %v1532
        %v1725 = vsub.f32 0.0, %v1533
        %v1726 = vsub.f32 0.0, %v1534
        %v1727 = vsub.f32 0.0, %v1535
        %v1728 = vsub.f32 0.0, %v1536
        %v1729 = vsub.f32 0.0, %v1537
        %v1730 = vsub.f32 0.0, %v1538
        %v1731 = vsub.f32 0.0, %v1539
        %v1732 = vsub.f32 0.0, %v1540
        %v1733 = vsub.f32 0.0, %v1541
        %v1734 = vsub.f32 0.0, %v1542
        %v1735 = vsub.f32 0.0, %v1543
        %v1736 = vsub.f32 0.0, %v1544
        %v1737 = vsub.f32 0.0, %v1545
        %v1738 = vsub.f32 0.0, %v1546
        %v1739 = vsub.f32 0.0, %v1547
        %v1740 = vsub.f32 0.0, %v1548
        %v1741 = vsub.f32 0.0, %v1549
        %v1742 = vsub.f32 0.0, %v1550
        %v1743 = vsub.f32 0.0, %v1551
        %v1744 = vsub.f32 0.0, %v1552
        %v1745 = vsub.f32 0.0, %v1553
        %v1746 = vsub.f32 0.0, %v1554
        %v1747 = vsub.f32 0.0, %v1555
        %v1748 = vsub.f32 0.0, %v1556
        %v1749 = vsub.f32 0.0, %v1557
        %v1750 = vsub.f32 0.0, %v1558
        %v1751 = vsub.f32 0.0, %v1559
        %v1752 = vsub.f32 0.0, %v1560
        %v1753 = vsub.f32 0.0, %v1561
        %v1754 = vsub.f32 0.0, %v1562
        %v1755 = vsub.f32 0.0, %v1563
        %v1756 = vsub.f32 0.0, %v1564
        %v1757 = vsub.f32 0.0, %v1565
        %v1758 = vsub.f32 0.0, %v1566
        %v1759 = vsub.f32 0.0, %v1567
        %v1760 = vsub.f32 0.0, %v1568
        %v1761 = vsub.f32 0.0, %v1569
        %v1762 = vsub.f32 0.0, %v1570
        %v1763 = vsub.f32 0.0, %v1571
        %v1764 = vsub.f32 0.0, %v1572
        %v1765 = vsub.f32 0.0, %v1573
        %v1766 = vsub.f32 0.0, %v1574
        %v1767 = vsub.f32 0.0, %v1575
        %v1768 = vsub.f32 0.0, %v1576
        %v1769 = vsub.f32 0.0, %v1577
        %v1770 = vsub.f32 0.0, %v1578
        %v1771 = vsub.f32 0.0, %v1579
        %v1772 = vsub.f32 0.0, %v1580
        %v1773 = vsub.f32 0.0, %v1581
        %v1774 = vsub.f32 0.0, %v1582
        %v1775 = vsub.f32 0.0, %v1583
        %v1776 = vsub.f32 0.0, %v1584
        %v1777 = vsub.f32 0.0, %v1585
        %v1778 = vsub.f32 0.0, %v1586
        %v1779 = vsub.f32 0.0, %v1587
        %v1780 = vsub.f32 0.0, %v1588
        %v1781 = vsub.f32 0.0, %v1589
        %v1782 = vsub.f32 0.0, %v1590
        %v1783 = vsub.f32 0.0, %v1591
        %v1784 = vsub.f32 0.0, %v1592
        %v1785 = vsub.f32 0.0, %v1593
        %v1786 = vsub.f32 0.0, %v1594
        %v1787 = vsub.f32 0.0, %v1595
        %v1788 = vsub.f32 0.0, %v1596
        %v1789 = vsub.f32 0.0, %v1597
        %v1790 = vsub.f32 0.0, %v1598
        %v1791 = vsub.f32 0.0, %v1599
        %v1792 = vsub.f32 0.0, %v1600
        %v1793 = vsub.f32 0.0, %v1601
        %v1794 = vsub.f32 0.0, %v1602
        %v1795 = vsub.f32 0.0, %v1603
        %v1796 = vsub.f32 0.0, %v1604
        %v1797 = vsub.f32 0.0, %v1605
        %v1798 = vsub.f32 0.0, %v1606
        %v1799 = vsub.f32 0.0, %v1607
        %v1800 = vsub.f32 0.0, %v1608
        %v1801 = vsub.f32 0.0, %v1609
        %v1802 = vsub.f32 0.0, %v1610
        %v1803 = vsub.f32 0.0, %v1611
        %v1804 = vsub.f32 0.0, %v1612
        %v1805 = vsub.f32 0.0, %v1613
        %v1806 = vsub.f32 0.0, %v1614
        %v1807 = vsub.f32 0.0, %v1615
        %v1808 = vsub.f32 0.0, %v1616
        %v1809 = vsub.f32 0.0, %v1617
        %v1810 = vsub.f32 0.0, %v1618
        %v1811 = vsub.f32 0.0, %v1619
        %v1812 = vsub.f32 0.0, %v1620
        %v1813 = vsub.f32 0.0, %v1621
        %v1814 = vsub.f32 0.0, %v1622
        %v1815 = vsub.f32 0.0, %v1623
        %v1816 = vsub.f32 0.0, %v1624
        %v1817 = vsub.f32 0.0, %v1625
        %v1818 = vsub.f32 0.0, %v1626
        %v1819 = vsub.f32 0.0, %v1627
        %v1820 = vsub.f32 0.0, %v1628
        %v1821 = vsub.f32 0.0, %v1629
        %v1822 = vsub.f32 0.0, %v1630
        %v1823 = vsub.f32 0.0, %v1631
        %v1824 = vsub.f32 0.0, %v1632
        %v1825 = vmul.f32 %v1633, 1.442695
        %v1826 = vpow.pop %v1825
        %v1827 = vmul.f32 %v1634, 1.442695
        %v1828 = vpow.pop %v1827
        %v1829 = vmul.f32 %v1635, 1.442695
        %v1830 = vpow.pop %v1829
        %v1831 = vmul.f32 %v1636, 1.442695
        %v1832 = vpow.pop %v1831
        %v1833 = vmul.f32 %v1637, 1.442695
        %v1834 = vpow.pop %v1833
        %v1835 = vmul.f32 %v1638, 1.442695
        %v1836 = vpow.pop %v1835
        %v1837 = vmul.f32 %v1639, 1.442695
        %v1838 = vpow.pop %v1837
        %v1839 = vmul.f32 %v1640, 1.442695
        %v1840 = vpow.pop %v1839
        %v1841 = vmul.f32 %v1641, 1.442695
        %v1842 = vpow.pop %v1841
        %v1843 = vmul.f32 %v1642, 1.442695
        %v1844 = vpow.pop %v1843
        %v1845 = vmul.f32 %v1643, 1.442695
        %v1846 = vpow.pop %v1845
        %v1847 = vmul.f32 %v1644, 1.442695
        %v1848 = vpow.pop %v1847
        %v1849 = vmul.f32 %v1645, 1.442695
        %v1850 = vpow.pop %v1849
        %v1851 = vmul.f32 %v1646, 1.442695
        %v1852 = vpow.pop %v1851
        %v1853 = vmul.f32 %v1647, 1.442695
        %v1854 = vpow.pop %v1853
        %v1855 = vmul.f32 %v1648, 1.442695
        %v1856 = vpow.pop %v1855
        %v1857 = vmul.f32 %v1649, 1.442695
        %v1858 = vpow.pop %v1857
        %v1859 = vmul.f32 %v1650, 1.442695
        %v1860 = vpow.pop %v1859
        %v1861 = vmul.f32 %v1651, 1.442695
        %v1862 = vpow.pop %v1861
        %v1863 = vmul.f32 %v1652, 1.442695
        %v1864 = vpow.pop %v1863
        %v1865 = vmul.f32 %v1653, 1.442695
        %v1866 = vpow.pop %v1865
        %v1867 = vmul.f32 %v1654, 1.442695
        %v1868 = vpow.pop %v1867
        %v1869 = vmul.f32 %v1655, 1.442695
        %v1870 = vpow.pop %v1869
        %v1871 = vmul.f32 %v1656, 1.442695
        %v1872 = vpow.pop %v1871
        %v1873 = vmul.f32 %v1657, 1.442695
        %v1874 = vpow.pop %v1873
        %v1875 = vmul.f32 %v1658, 1.442695
        %v1876 = vpow.pop %v1875
        %v1877 = vmul.f32 %v1659, 1.442695
        %v1878 = vpow.pop %v1877
        %v1879 = vmul.f32 %v1660, 1.442695
        %v1880 = vpow.pop %v1879
        %v1881 = vmul.f32 %v1661, 1.442695
        %v1882 = vpow.pop %v1881
        %v1883 = vmul.f32 %v1662, 1.442695
        %v1884 = vpow.pop %v1883
        %v1885 = vmul.f32 %v1663, 1.442695
        %v1886 = vpow.pop %v1885
        %v1887 = vmul.f32 %v1664, 1.442695
        %v1888 = vpow.pop %v1887
        %v1889 = vmul.f32 %v1665, 1.442695
        %v1890 = vpow.pop %v1889
        %v1891 = vmul.f32 %v1666, 1.442695
        %v1892 = vpow.pop %v1891
        %v1893 = vmul.f32 %v1667, 1.442695
        %v1894 = vpow.pop %v1893
        %v1895 = vmul.f32 %v1668, 1.442695
        %v1896 = vpow.pop %v1895
        %v1897 = vmul.f32 %v1669, 1.442695
        %v1898 = vpow.pop %v1897
        %v1899 = vmul.f32 %v1670, 1.442695
        %v1900 = vpow.pop %v1899
        %v1901 = vmul.f32 %v1671, 1.442695
        %v1902 = vpow.pop %v1901
        %v1903 = vmul.f32 %v1672, 1.442695
        %v1904 = vpow.pop %v1903
        %v1905 = vmul.f32 %v1673, 1.442695
        %v1906 = vpow.pop %v1905
        %v1907 = vmul.f32 %v1674, 1.442695
        %v1908 = vpow.pop %v1907
        %v1909 = vmul.f32 %v1675, 1.442695
        %v1910 = vpow.pop %v1909
        %v1911 = vmul.f32 %v1676, 1.442695
        %v1912 = vpow.pop %v1911
        %v1913 = vmul.f32 %v1677, 1.442695
        %v1914 = vpow.pop %v1913
        %v1915 = vmul.f32 %v1678, 1.442695
        %v1916 = vpow.pop %v1915
        %v1917 = vmul.f32 %v1679, 1.442695
        %v1918 = vpow.pop %v1917
        %v1919 = vmul.f32 %v1680, 1.442695
        %v1920 = vpow.pop %v1919
        %v1921 = vmul.f32 %v1681, 1.442695
        %v1922 = vpow.pop %v1921
        %v1923 = vmul.f32 %v1682, 1.442695
        %v1924 = vpow.pop %v1923
        %v1925 = vmul.f32 %v1683, 1.442695
        %v1926 = vpow.pop %v1925
        %v1927 = vmul.f32 %v1684, 1.442695
        %v1928 = vpow.pop %v1927
        %v1929 = vmul.f32 %v1685, 1.442695
        %v1930 = vpow.pop %v1929
        %v1931 = vmul.f32 %v1686, 1.442695
        %v1932 = vpow.pop %v1931
        %v1933 = vmul.f32 %v1687, 1.442695
        %v1934 = vpow.pop %v1933
        %v1935 = vmul.f32 %v1688, 1.442695
        %v1936 = vpow.pop %v1935
        %v1937 = vmul.f32 %v1689, 1.442695
        %v1938 = vpow.pop %v1937
        %v1939 = vmul.f32 %v1690, 1.442695
        %v1940 = vpow.pop %v1939
        %v1941 = vmul.f32 %v1691, 1.442695
        %v1942 = vpow.pop %v1941
        %v1943 = vmul.f32 %v1692, 1.442695
        %v1944 = vpow.pop %v1943
        %v1945 = vmul.f32 %v1693, 1.442695
        %v1946 = vpow.pop %v1945
        %v1947 = vmul.f32 %v1694, 1.442695
        %v1948 = vpow.pop %v1947
        %v1949 = vmul.f32 %v1695, 1.442695
        %v1950 = vpow.pop %v1949
        %v1951 = vmul.f32 %v1696, 1.442695
        %v1952 = vpow.pop %v1951
        %v1953 = vmul.f32 %v1697, 1.442695
        %v1954 = vpow.pop %v1953
        %v1955 = vmul.f32 %v1698, 1.442695
        %v1956 = vpow.pop %v1955
        %v1957 = vmul.f32 %v1699, 1.442695
        %v1958 = vpow.pop %v1957
        %v1959 = vmul.f32 %v1700, 1.442695
        %v1960 = vpow.pop %v1959
        %v1961 = vmul.f32 %v1701, 1.442695
        %v1962 = vpow.pop %v1961
        %v1963 = vmul.f32 %v1702, 1.442695
        %v1964 = vpow.pop %v1963
        %v1965 = vmul.f32 %v1703, 1.442695
        %v1966 = vpow.pop %v1965
        %v1967 = vmul.f32 %v1704, 1.442695
        %v1968 = vpow.pop %v1967
        %v1969 = vmul.f32 %v1705, 1.442695
        %v1970 = vpow.pop %v1969
        %v1971 = vmul.f32 %v1706, 1.442695
        %v1972 = vpow.pop %v1971
        %v1973 = vmul.f32 %v1707, 1.442695
        %v1974 = vpow.pop %v1973
        %v1975 = vmul.f32 %v1708, 1.442695
        %v1976 = vpow.pop %v1975
        %v1977 = vmul.f32 %v1709, 1.442695
        %v1978 = vpow.pop %v1977
        %v1979 = vmul.f32 %v1710, 1.442695
        %v1980 = vpow.pop %v1979
        %v1981 = vmul.f32 %v1711, 1.442695
        %v1982 = vpow.pop %v1981
        %v1983 = vmul.f32 %v1712, 1.442695
        %v1984 = vpow.pop %v1983
        %v1985 = vmul.f32 %v1713, 1.442695
        %v1986 = vpow.pop %v1985
        %v1987 = vmul.f32 %v1714, 1.442695
        %v1988 = vpow.pop %v1987
        %v1989 = vmul.f32 %v1715, 1.442695
        %v1990 = vpow.pop %v1989
        %v1991 = vmul.f32 %v1716, 1.442695
        %v1992 = vpow.pop %v1991
        %v1993 = vmul.f32 %v1717, 1.442695
        %v1994 = vpow.pop %v1993
        %v1995 = vmul.f32 %v1718, 1.442695
        %v1996 = vpow.pop %v1995
        %v1997 = vmul.f32 %v1719, 1.442695
        %v1998 = vpow.pop %v1997
        %v1999 = vmul.f32 %v1720, 1.442695
        %v2000 = vpow.pop %v1999
        %v2001 = vmul.f32 %v1721, 1.442695
        %v2002 = vpow.pop %v2001
        %v2003 = vmul.f32 %v1722, 1.442695
        %v2004 = vpow.pop %v2003
        %v2005 = vmul.f32 %v1723, 1.442695
        %v2006 = vpow.pop %v2005
        %v2007 = vmul.f32 %v1724, 1.442695
        %v2008 = vpow.pop %v2007
        %v2009 = vmul.f32 %v1725, 1.442695
        %v2010 = vpow.pop %v2009
        %v2011 = vmul.f32 %v1726, 1.442695
        %v2012 = vpow.pop %v2011
        %v2013 = vmul.f32 %v1727, 1.442695
        %v2014 = vpow.pop %v2013
        %v2015 = vmul.f32 %v1728, 1.442695
        %v2016 = vpow.pop %v2015
        %v2017 = vmul.f32 %v1729, 1.442695
        %v2018 = vpow.pop %v2017
        %v2019 = vmul.f32 %v1730, 1.442695
        %v2020 = vpow.pop %v2019
        %v2021 = vmul.f32 %v1731, 1.442695
        %v2022 = vpow.pop %v2021
        %v2023 = vmul.f32 %v1732, 1.442695
        %v2024 = vpow.pop %v2023
        %v2025 = vmul.f32 %v1733, 1.442695
        %v2026 = vpow.pop %v2025
        %v2027 = vmul.f32 %v1734, 1.442695
        %v2028 = vpow.pop %v2027
        %v2029 = vmul.f32 %v1735, 1.442695
        %v2030 = vpow.pop %v2029
        %v2031 = vmul.f32 %v1736, 1.442695
        %v2032 = vpow.pop %v2031
        %v2033 = vmul.f32 %v1737, 1.442695
        %v2034 = vpow.pop %v2033
        %v2035 = vmul.f32 %v1738, 1.442695
        %v2036 = vpow.pop %v2035
        %v2037 = vmul.f32 %v1739, 1.442695
        %v2038 = vpow.pop %v2037
        %v2039 = vmul.f32 %v1740, 1.442695
        %v2040 = vpow.pop %v2039
        %v2041 = vmul.f32 %v1741, 1.442695
        %v2042 = vpow.pop %v2041
        %v2043 = vmul.f32 %v1742, 1.442695
        %v2044 = vpow.pop %v2043
        %v2045 = vmul.f32 %v1743, 1.442695
        %v2046 = vpow.pop %v2045
        %v2047 = vmul.f32 %v1744, 1.442695
        %v2048 = vpow.pop %v2047
        %v2049 = vmul.f32 %v1745, 1.442695
        %v2050 = vpow.pop %v2049
        %v2051 = vmul.f32 %v1746, 1.442695
        %v2052 = vpow.pop %v2051
        %v2053 = vmul.f32 %v1747, 1.442695
        %v2054 = vpow.pop %v2053
        %v2055 = vmul.f32 %v1748, 1.442695
        %v2056 = vpow.pop %v2055
        %v2057 = vmul.f32 %v1749, 1.442695
        %v2058 = vpow.pop %v2057
        %v2059 = vmul.f32 %v1750, 1.442695
        %v2060 = vpow.pop %v2059
        %v2061 = vmul.f32 %v1751, 1.442695
        %v2062 = vpow.pop %v2061
        %v2063 = vmul.f32 %v1752, 1.442695
        %v2064 = vpow.pop %v2063
        %v2065 = vmul.f32 %v1753, 1.442695
        %v2066 = vpow.pop %v2065
        %v2067 = vmul.f32 %v1754, 1.442695
        %v2068 = vpow.pop %v2067
        %v2069 = vmul.f32 %v1755, 1.442695
        %v2070 = vpow.pop %v2069
        %v2071 = vmul.f32 %v1756, 1.442695
        %v2072 = vpow.pop %v2071
        %v2073 = vmul.f32 %v1757, 1.442695
        %v2074 = vpow.pop %v2073
        %v2075 = vmul.f32 %v1758, 1.442695
        %v2076 = vpow.pop %v2075
        %v2077 = vmul.f32 %v1759, 1.442695
        %v2078 = vpow.pop %v2077
        %v2079 = vmul.f32 %v1760, 1.442695
        %v2080 = vpow.pop %v2079
        %v2081 = vmul.f32 %v1761, 1.442695
        %v2082 = vpow.pop %v2081
        %v2083 = vmul.f32 %v1762, 1.442695
        %v2084 = vpow.pop %v2083
        %v2085 = vmul.f32 %v1763, 1.442695
        %v2086 = vpow.pop %v2085
        %v2087 = vmul.f32 %v1764, 1.442695
        %v2088 = vpow.pop %v2087
        %v2089 = vmul.f32 %v1765, 1.442695
        %v2090 = vpow.pop %v2089
        %v2091 = vmul.f32 %v1766, 1.442695
        %v2092 = vpow.pop %v2091
        %v2093 = vmul.f32 %v1767, 1.442695
        %v2094 = vpow.pop %v2093
        %v2095 = vmul.f32 %v1768, 1.442695
        %v2096 = vpow.pop %v2095
        %v2097 = vmul.f32 %v1769, 1.442695
        %v2098 = vpow.pop %v2097
        %v2099 = vmul.f32 %v1770, 1.442695
        %v2100 = vpow.pop %v2099
        %v2101 = vmul.f32 %v1771, 1.442695
        %v2102 = vpow.pop %v2101
        %v2103 = vmul.f32 %v1772, 1.442695
        %v2104 = vpow.pop %v2103
        %v2105 = vmul.f32 %v1773, 1.442695
        %v2106 = vpow.pop %v2105
        %v2107 = vmul.f32 %v1774, 1.442695
        %v2108 = vpow.pop %v2107
        %v2109 = vmul.f32 %v1775, 1.442695
        %v2110 = vpow.pop %v2109
        %v2111 = vmul.f32 %v1776, 1.442695
        %v2112 = vpow.pop %v2111
        %v2113 = vmul.f32 %v1777, 1.442695
        %v2114 = vpow.pop %v2113
        %v2115 = vmul.f32 %v1778, 1.442695
        %v2116 = vpow.pop %v2115
        %v2117 = vmul.f32 %v1779, 1.442695
        %v2118 = vpow.pop %v2117
        %v2119 = vmul.f32 %v1780, 1.442695
        %v2120 = vpow.pop %v2119
        %v2121 = vmul.f32 %v1781, 1.442695
        %v2122 = vpow.pop %v2121
        %v2123 = vmul.f32 %v1782, 1.442695
        %v2124 = vpow.pop %v2123
        %v2125 = vmul.f32 %v1783, 1.442695
        %v2126 = vpow.pop %v2125
        %v2127 = vmul.f32 %v1784, 1.442695
        %v2128 = vpow.pop %v2127
        %v2129 = vmul.f32 %v1785, 1.442695
        %v2130 = vpow.pop %v2129
        %v2131 = vmul.f32 %v1786, 1.442695
        %v2132 = vpow.pop %v2131
        %v2133 = vmul.f32 %v1787, 1.442695
        %v2134 = vpow.pop %v2133
        %v2135 = vmul.f32 %v1788, 1.442695
        %v2136 = vpow.pop %v2135
        %v2137 = vmul.f32 %v1789, 1.442695
        %v2138 = vpow.pop %v2137
        %v2139 = vmul.f32 %v1790, 1.442695
        %v2140 = vpow.pop %v2139
        %v2141 = vmul.f32 %v1791, 1.442695
        %v2142 = vpow.pop %v2141
        %v2143 = vmul.f32 %v1792, 1.442695
        %v2144 = vpow.pop %v2143
        %v2145 = vmul.f32 %v1793, 1.442695
        %v2146 = vpow.pop %v2145
        %v2147 = vmul.f32 %v1794, 1.442695
        %v2148 = vpow.pop %v2147
        %v2149 = vmul.f32 %v1795, 1.442695
        %v2150 = vpow.pop %v2149
        %v2151 = vmul.f32 %v1796, 1.442695
        %v2152 = vpow.pop %v2151
        %v2153 = vmul.f32 %v1797, 1.442695
        %v2154 = vpow.pop %v2153
        %v2155 = vmul.f32 %v1798, 1.442695
        %v2156 = vpow.pop %v2155
        %v2157 = vmul.f32 %v1799, 1.442695
        %v2158 = vpow.pop %v2157
        %v2159 = vmul.f32 %v1800, 1.442695
        %v2160 = vpow.pop %v2159
        %v2161 = vmul.f32 %v1801, 1.442695
        %v2162 = vpow.pop %v2161
        %v2163 = vmul.f32 %v1802, 1.442695
        %v2164 = vpow.pop %v2163
        %v2165 = vmul.f32 %v1803, 1.442695
        %v2166 = vpow.pop %v2165
        %v2167 = vmul.f32 %v1804, 1.442695
        %v2168 = vpow.pop %v2167
        %v2169 = vmul.f32 %v1805, 1.442695
        %v2170 = vpow.pop %v2169
        %v2171 = vmul.f32 %v1806, 1.442695
        %v2172 = vpow.pop %v2171
        %v2173 = vmul.f32 %v1807, 1.442695
        %v2174 = vpow.pop %v2173
        %v2175 = vmul.f32 %v1808, 1.442695
        %v2176 = vpow.pop %v2175
        %v2177 = vmul.f32 %v1809, 1.442695
        %v2178 = vpow.pop %v2177
        %v2179 = vmul.f32 %v1810, 1.442695
        %v2180 = vpow.pop %v2179
        %v2181 = vmul.f32 %v1811, 1.442695
        %v2182 = vpow.pop %v2181
        %v2183 = vmul.f32 %v1812, 1.442695
        %v2184 = vpow.pop %v2183
        %v2185 = vmul.f32 %v1813, 1.442695
        %v2186 = vpow.pop %v2185
        %v2187 = vmul.f32 %v1814, 1.442695
        %v2188 = vpow.pop %v2187
        %v2189 = vmul.f32 %v1815, 1.442695
        %v2190 = vpow.pop %v2189
        %v2191 = vmul.f32 %v1816, 1.442695
        %v2192 = vpow.pop %v2191
        %v2193 = vmul.f32 %v1817, 1.442695
        %v2194 = vpow.pop %v2193
        %v2195 = vmul.f32 %v1818, 1.442695
        %v2196 = vpow.pop %v2195
        %v2197 = vmul.f32 %v1819, 1.442695
        %v2198 = vpow.pop %v2197
        %v2199 = vmul.f32 %v1820, 1.442695
        %v2200 = vpow.pop %v2199
        %v2201 = vmul.f32 %v1821, 1.442695
        %v2202 = vpow.pop %v2201
        %v2203 = vmul.f32 %v1822, 1.442695
        %v2204 = vpow.pop %v2203
        %v2205 = vmul.f32 %v1823, 1.442695
        %v2206 = vpow.pop %v2205
        %v2207 = vmul.f32 %v1824, 1.442695
        %v2208 = vpow.pop %v2207
        %v2209 = vadd.f32 %v1826, 1.0
        %v2210 = vadd.f32 %v1828, 1.0
        %v2211 = vadd.f32 %v1830, 1.0
        %v2212 = vadd.f32 %v1832, 1.0
        %v2213 = vadd.f32 %v1834, 1.0
        %v2214 = vadd.f32 %v1836, 1.0
        %v2215 = vadd.f32 %v1838, 1.0
        %v2216 = vadd.f32 %v1840, 1.0
        %v2217 = vadd.f32 %v1842, 1.0
        %v2218 = vadd.f32 %v1844, 1.0
        %v2219 = vadd.f32 %v1846, 1.0
        %v2220 = vadd.f32 %v1848, 1.0
        %v2221 = vadd.f32 %v1850, 1.0
        %v2222 = vadd.f32 %v1852, 1.0
        %v2223 = vadd.f32 %v1854, 1.0
        %v2224 = vadd.f32 %v1856, 1.0
        %v2225 = vadd.f32 %v1858, 1.0
        %v2226 = vadd.f32 %v1860, 1.0
        %v2227 = vadd.f32 %v1862, 1.0
        %v2228 = vadd.f32 %v1864, 1.0
        %v2229 = vadd.f32 %v1866, 1.0
        %v2230 = vadd.f32 %v1868, 1.0
        %v2231 = vadd.f32 %v1870, 1.0
        %v2232 = vadd.f32 %v1872, 1.0
        %v2233 = vadd.f32 %v1874, 1.0
        %v2234 = vadd.f32 %v1876, 1.0
        %v2235 = vadd.f32 %v1878, 1.0
        %v2236 = vadd.f32 %v1880, 1.0
        %v2237 = vadd.f32 %v1882, 1.0
        %v2238 = vadd.f32 %v1884, 1.0
        %v2239 = vadd.f32 %v1886, 1.0
        %v2240 = vadd.f32 %v1888, 1.0
        %v2241 = vadd.f32 %v1890, 1.0
        %v2242 = vadd.f32 %v1892, 1.0
        %v2243 = vadd.f32 %v1894, 1.0
        %v2244 = vadd.f32 %v1896, 1.0
        %v2245 = vadd.f32 %v1898, 1.0
        %v2246 = vadd.f32 %v1900, 1.0
        %v2247 = vadd.f32 %v1902, 1.0
        %v2248 = vadd.f32 %v1904, 1.0
        %v2249 = vadd.f32 %v1906, 1.0
        %v2250 = vadd.f32 %v1908, 1.0
        %v2251 = vadd.f32 %v1910, 1.0
        %v2252 = vadd.f32 %v1912, 1.0
        %v2253 = vadd.f32 %v1914, 1.0
        %v2254 = vadd.f32 %v1916, 1.0
        %v2255 = vadd.f32 %v1918, 1.0
        %v2256 = vadd.f32 %v1920, 1.0
        %v2257 = vadd.f32 %v1922, 1.0
        %v2258 = vadd.f32 %v1924, 1.0
        %v2259 = vadd.f32 %v1926, 1.0
        %v2260 = vadd.f32 %v1928, 1.0
        %v2261 = vadd.f32 %v1930, 1.0
        %v2262 = vadd.f32 %v1932, 1.0
        %v2263 = vadd.f32 %v1934, 1.0
        %v2264 = vadd.f32 %v1936, 1.0
        %v2265 = vadd.f32 %v1938, 1.0
        %v2266 = vadd.f32 %v1940, 1.0
        %v2267 = vadd.f32 %v1942, 1.0
        %v2268 = vadd.f32 %v1944, 1.0
        %v2269 = vadd.f32 %v1946, 1.0
        %v2270 = vadd.f32 %v1948, 1.0
        %v2271 = vadd.f32 %v1950, 1.0
        %v2272 = vadd.f32 %v1952, 1.0
        %v2273 = vadd.f32 %v1954, 1.0
        %v2274 = vadd.f32 %v1956, 1.0
        %v2275 = vadd.f32 %v1958, 1.0
        %v2276 = vadd.f32 %v1960, 1.0
        %v2277 = vadd.f32 %v1962, 1.0
        %v2278 = vadd.f32 %v1964, 1.0
        %v2279 = vadd.f32 %v1966, 1.0
        %v2280 = vadd.f32 %v1968, 1.0
        %v2281 = vadd.f32 %v1970, 1.0
        %v2282 = vadd.f32 %v1972, 1.0
        %v2283 = vadd.f32 %v1974, 1.0
        %v2284 = vadd.f32 %v1976, 1.0
        %v2285 = vadd.f32 %v1978, 1.0
        %v2286 = vadd.f32 %v1980, 1.0
        %v2287 = vadd.f32 %v1982, 1.0
        %v2288 = vadd.f32 %v1984, 1.0
        %v2289 = vadd.f32 %v1986, 1.0
        %v2290 = vadd.f32 %v1988, 1.0
        %v2291 = vadd.f32 %v1990, 1.0
        %v2292 = vadd.f32 %v1992, 1.0
        %v2293 = vadd.f32 %v1994, 1.0
        %v2294 = vadd.f32 %v1996, 1.0
        %v2295 = vadd.f32 %v1998, 1.0
        %v2296 = vadd.f32 %v2000, 1.0
        %v2297 = vadd.f32 %v2002, 1.0
        %v2298 = vadd.f32 %v2004, 1.0
        %v2299 = vadd.f32 %v2006, 1.0
        %v2300 = vadd.f32 %v2008, 1.0
        %v2301 = vadd.f32 %v2010, 1.0
        %v2302 = vadd.f32 %v2012, 1.0
        %v2303 = vadd.f32 %v2014, 1.0
        %v2304 = vadd.f32 %v2016, 1.0
        %v2305 = vadd.f32 %v2018, 1.0
        %v2306 = vadd.f32 %v2020, 1.0
        %v2307 = vadd.f32 %v2022, 1.0
        %v2308 = vadd.f32 %v2024, 1.0
        %v2309 = vadd.f32 %v2026, 1.0
        %v2310 = vadd.f32 %v2028, 1.0
        %v2311 = vadd.f32 %v2030, 1.0
        %v2312 = vadd.f32 %v2032, 1.0
        %v2313 = vadd.f32 %v2034, 1.0
        %v2314 = vadd.f32 %v2036, 1.0
        %v2315 = vadd.f32 %v2038, 1.0
        %v2316 = vadd.f32 %v2040, 1.0
        %v2317 = vadd.f32 %v2042, 1.0
        %v2318 = vadd.f32 %v2044, 1.0
        %v2319 = vadd.f32 %v2046, 1.0
        %v2320 = vadd.f32 %v2048, 1.0
        %v2321 = vadd.f32 %v2050, 1.0
        %v2322 = vadd.f32 %v2052, 1.0
        %v2323 = vadd.f32 %v2054, 1.0
        %v2324 = vadd.f32 %v2056, 1.0
        %v2325 = vadd.f32 %v2058, 1.0
        %v2326 = vadd.f32 %v2060, 1.0
        %v2327 = vadd.f32 %v2062, 1.0
        %v2328 = vadd.f32 %v2064, 1.0
        %v2329 = vadd.f32 %v2066, 1.0
        %v2330 = vadd.f32 %v2068, 1.0
        %v2331 = vadd.f32 %v2070, 1.0
        %v2332 = vadd.f32 %v2072, 1.0
        %v2333 = vadd.f32 %v2074, 1.0
        %v2334 = vadd.f32 %v2076, 1.0
        %v2335 = vadd.f32 %v2078, 1.0
        %v2336 = vadd.f32 %v2080, 1.0
        %v2337 = vadd.f32 %v2082, 1.0
        %v2338 = vadd.f32 %v2084, 1.0
        %v2339 = vadd.f32 %v2086, 1.0
        %v2340 = vadd.f32 %v2088, 1.0
        %v2341 = vadd.f32 %v2090, 1.0
        %v2342 = vadd.f32 %v2092, 1.0
        %v2343 = vadd.f32 %v2094, 1.0
        %v2344 = vadd.f32 %v2096, 1.0
        %v2345 = vadd.f32 %v2098, 1.0
        %v2346 = vadd.f32 %v2100, 1.0
        %v2347 = vadd.f32 %v2102, 1.0
        %v2348 = vadd.f32 %v2104, 1.0
        %v2349 = vadd.f32 %v2106, 1.0
        %v2350 = vadd.f32 %v2108, 1.0
        %v2351 = vadd.f32 %v2110, 1.0
        %v2352 = vadd.f32 %v2112, 1.0
        %v2353 = vadd.f32 %v2114, 1.0
        %v2354 = vadd.f32 %v2116, 1.0
        %v2355 = vadd.f32 %v2118, 1.0
        %v2356 = vadd.f32 %v2120, 1.0
        %v2357 = vadd.f32 %v2122, 1.0
        %v2358 = vadd.f32 %v2124, 1.0
        %v2359 = vadd.f32 %v2126, 1.0
        %v2360 = vadd.f32 %v2128, 1.0
        %v2361 = vadd.f32 %v2130, 1.0
        %v2362 = vadd.f32 %v2132, 1.0
        %v2363 = vadd.f32 %v2134, 1.0
        %v2364 = vadd.f32 %v2136, 1.0
        %v2365 = vadd.f32 %v2138, 1.0
        %v2366 = vadd.f32 %v2140, 1.0
        %v2367 = vadd.f32 %v2142, 1.0
        %v2368 = vadd.f32 %v2144, 1.0
        %v2369 = vadd.f32 %v2146, 1.0
        %v2370 = vadd.f32 %v2148, 1.0
        %v2371 = vadd.f32 %v2150, 1.0
        %v2372 = vadd.f32 %v2152, 1.0
        %v2373 = vadd.f32 %v2154, 1.0
        %v2374 = vadd.f32 %v2156, 1.0
        %v2375 = vadd.f32 %v2158, 1.0
        %v2376 = vadd.f32 %v2160, 1.0
        %v2377 = vadd.f32 %v2162, 1.0
        %v2378 = vadd.f32 %v2164, 1.0
        %v2379 = vadd.f32 %v2166, 1.0
        %v2380 = vadd.f32 %v2168, 1.0
        %v2381 = vadd.f32 %v2170, 1.0
        %v2382 = vadd.f32 %v2172, 1.0
        %v2383 = vadd.f32 %v2174, 1.0
        %v2384 = vadd.f32 %v2176, 1.0
        %v2385 = vadd.f32 %v2178, 1.0
        %v2386 = vadd.f32 %v2180, 1.0
        %v2387 = vadd.f32 %v2182, 1.0
        %v2388 = vadd.f32 %v2184, 1.0
        %v2389 = vadd.f32 %v2186, 1.0
        %v2390 = vadd.f32 %v2188, 1.0
        %v2391 = vadd.f32 %v2190, 1.0
        %v2392 = vadd.f32 %v2192, 1.0
        %v2393 = vadd.f32 %v2194, 1.0
        %v2394 = vadd.f32 %v2196, 1.0
        %v2395 = vadd.f32 %v2198, 1.0
        %v2396 = vadd.f32 %v2200, 1.0
        %v2397 = vadd.f32 %v2202, 1.0
        %v2398 = vadd.f32 %v2204, 1.0
        %v2399 = vadd.f32 %v2206, 1.0
        %v2400 = vadd.f32 %v2208, 1.0
        %v2401 = vrcp.pop %v2209
        %v2402 = vmul.f32 %v2209, %v2401
        %v2403 = vsub.f32 1.0, %v2402
        %v2404 = vmul.f32 %v2401, %v2403
        %v2405 = vadd.f32 %v2401, %v2404
        %vm2406 = vweird.f32 %v2209
        %vm2407 = vweird.f32 %v2401
        %vm2408 = vmor %vm2406, %vm2407
        %v2409 = vsel %vm2408, %v2401, %v2405
        %v2410 = vand.u32 2147483647, %v2209
        %vm2411 = vcmp.eq.f32.partialorder %v2410, 8.507059e+37
        %v2412 = vand.u32 %v2209, 2147483648
        %v2413 = vor.u32 1.1754944e-38, %v2412
        %v2414 = vsel %vm2411, %v2413, %v2409
        %v2415 = vmul.f32 1.0, %v2414
        %v2416 = vrcp.pop %v2210
        %v2417 = vmul.f32 %v2210, %v2416
        %v2418 = vsub.f32 1.0, %v2417
        %v2419 = vmul.f32 %v2416, %v2418
        %v2420 = vadd.f32 %v2416, %v2419
        %vm2421 = vweird.f32 %v2210
        %vm2422 = vweird.f32 %v2416
        %vm2423 = vmor %vm2421, %vm2422
        %v2424 = vsel %vm2423, %v2416, %v2420
        %v2425 = vand.u32 2147483647, %v2210
        %vm2426 = vcmp.eq.f32.partialorder %v2425, 8.507059e+37
        %v2427 = vand.u32 %v2210, 2147483648
        %v2428 = vor.u32 1.1754944e-38, %v2427
        %v2429 = vsel %vm2426, %v2428, %v2424
        %v2430 = vmul.f32 1.0, %v2429
        %v2431 = vrcp.pop %v2211
        %v2432 = vmul.f32 %v2211, %v2431
        %v2433 = vsub.f32 1.0, %v2432
        %v2434 = vmul.f32 %v2431, %v2433
        %v2435 = vadd.f32 %v2431, %v2434
        %vm2436 = vweird.f32 %v2211
        %vm2437 = vweird.f32 %v2431
        %vm2438 = vmor %vm2436, %vm2437
        %v2439 = vsel %vm2438, %v2431, %v2435
        %v2440 = vand.u32 2147483647, %v2211
        %vm2441 = vcmp.eq.f32.partialorder %v2440, 8.507059e+37
        %v2442 = vand.u32 %v2211, 2147483648
        %v2443 = vor.u32 1.1754944e-38, %v2442
        %v2444 = vsel %vm2441, %v2443, %v2439
        %v2445 = vmul.f32 1.0, %v2444
        %v2446 = vrcp.pop %v2212
        %v2447 = vmul.f32 %v2212, %v2446
        %v2448 = vsub.f32 1.0, %v2447
        %v2449 = vmul.f32 %v2446, %v2448
        %v2450 = vadd.f32 %v2446, %v2449
        %vm2451 = vweird.f32 %v2212
        %vm2452 = vweird.f32 %v2446
        %vm2453 = vmor %vm2451, %vm2452
        %v2454 = vsel %vm2453, %v2446, %v2450
        %v2455 = vand.u32 2147483647, %v2212
        %vm2456 = vcmp.eq.f32.partialorder %v2455, 8.507059e+37
        %v2457 = vand.u32 %v2212, 2147483648
        %v2458 = vor.u32 1.1754944e-38, %v2457
        %v2459 = vsel %vm2456, %v2458, %v2454
        %v2460 = vmul.f32 1.0, %v2459
        %v2461 = vrcp.pop %v2213
        %v2462 = vmul.f32 %v2213, %v2461
        %v2463 = vsub.f32 1.0, %v2462
        %v2464 = vmul.f32 %v2461, %v2463
        %v2465 = vadd.f32 %v2461, %v2464
        %vm2466 = vweird.f32 %v2213
        %vm2467 = vweird.f32 %v2461
        %vm2468 = vmor %vm2466, %vm2467
        %v2469 = vsel %vm2468, %v2461, %v2465
        %v2470 = vand.u32 2147483647, %v2213
        %vm2471 = vcmp.eq.f32.partialorder %v2470, 8.507059e+37
        %v2472 = vand.u32 %v2213, 2147483648
        %v2473 = vor.u32 1.1754944e-38, %v2472
        %v2474 = vsel %vm2471, %v2473, %v2469
        %v2475 = vmul.f32 1.0, %v2474
        %v2476 = vrcp.pop %v2214
        %v2477 = vmul.f32 %v2214, %v2476
        %v2478 = vsub.f32 1.0, %v2477
        %v2479 = vmul.f32 %v2476, %v2478
        %v2480 = vadd.f32 %v2476, %v2479
        %vm2481 = vweird.f32 %v2214
        %vm2482 = vweird.f32 %v2476
        %vm2483 = vmor %vm2481, %vm2482
        %v2484 = vsel %vm2483, %v2476, %v2480
        %v2485 = vand.u32 2147483647, %v2214
        %vm2486 = vcmp.eq.f32.partialorder %v2485, 8.507059e+37
        %v2487 = vand.u32 %v2214, 2147483648
        %v2488 = vor.u32 1.1754944e-38, %v2487
        %v2489 = vsel %vm2486, %v2488, %v2484
        %v2490 = vmul.f32 1.0, %v2489
        %v2491 = vrcp.pop %v2215
        %v2492 = vmul.f32 %v2215, %v2491
        %v2493 = vsub.f32 1.0, %v2492
        %v2494 = vmul.f32 %v2491, %v2493
        %v2495 = vadd.f32 %v2491, %v2494
        %vm2496 = vweird.f32 %v2215
        %vm2497 = vweird.f32 %v2491
        %vm2498 = vmor %vm2496, %vm2497
        %v2499 = vsel %vm2498, %v2491, %v2495
        %v2500 = vand.u32 2147483647, %v2215
        %vm2501 = vcmp.eq.f32.partialorder %v2500, 8.507059e+37
        %v2502 = vand.u32 %v2215, 2147483648
        %v2503 = vor.u32 1.1754944e-38, %v2502
        %v2504 = vsel %vm2501, %v2503, %v2499
        %v2505 = vmul.f32 1.0, %v2504
        %v2506 = vrcp.pop %v2216
        %v2507 = vmul.f32 %v2216, %v2506
        %v2508 = vsub.f32 1.0, %v2507
        %v2509 = vmul.f32 %v2506, %v2508
        %v2510 = vadd.f32 %v2506, %v2509
        %vm2511 = vweird.f32 %v2216
        %vm2512 = vweird.f32 %v2506
        %vm2513 = vmor %vm2511, %vm2512
        %v2514 = vsel %vm2513, %v2506, %v2510
        %v2515 = vand.u32 2147483647, %v2216
        %vm2516 = vcmp.eq.f32.partialorder %v2515, 8.507059e+37
        %v2517 = vand.u32 %v2216, 2147483648
        %v2518 = vor.u32 1.1754944e-38, %v2517
        %v2519 = vsel %vm2516, %v2518, %v2514
        %v2520 = vmul.f32 1.0, %v2519
        %v2521 = vrcp.pop %v2217
        %v2522 = vmul.f32 %v2217, %v2521
        %v2523 = vsub.f32 1.0, %v2522
        %v2524 = vmul.f32 %v2521, %v2523
        %v2525 = vadd.f32 %v2521, %v2524
        %vm2526 = vweird.f32 %v2217
        %vm2527 = vweird.f32 %v2521
        %vm2528 = vmor %vm2526, %vm2527
        %v2529 = vsel %vm2528, %v2521, %v2525
        %v2530 = vand.u32 2147483647, %v2217
        %vm2531 = vcmp.eq.f32.partialorder %v2530, 8.507059e+37
        %v2532 = vand.u32 %v2217, 2147483648
        %v2533 = vor.u32 1.1754944e-38, %v2532
        %v2534 = vsel %vm2531, %v2533, %v2529
        %v2535 = vmul.f32 1.0, %v2534
        %v2536 = vrcp.pop %v2218
        %v2537 = vmul.f32 %v2218, %v2536
        %v2538 = vsub.f32 1.0, %v2537
        %v2539 = vmul.f32 %v2536, %v2538
        %v2540 = vadd.f32 %v2536, %v2539
        %vm2541 = vweird.f32 %v2218
        %vm2542 = vweird.f32 %v2536
        %vm2543 = vmor %vm2541, %vm2542
        %v2544 = vsel %vm2543, %v2536, %v2540
        %v2545 = vand.u32 2147483647, %v2218
        %vm2546 = vcmp.eq.f32.partialorder %v2545, 8.507059e+37
        %v2547 = vand.u32 %v2218, 2147483648
        %v2548 = vor.u32 1.1754944e-38, %v2547
        %v2549 = vsel %vm2546, %v2548, %v2544
        %v2550 = vmul.f32 1.0, %v2549
        %v2551 = vrcp.pop %v2219
        %v2552 = vmul.f32 %v2219, %v2551
        %v2553 = vsub.f32 1.0, %v2552
        %v2554 = vmul.f32 %v2551, %v2553
        %v2555 = vadd.f32 %v2551, %v2554
        %vm2556 = vweird.f32 %v2219
        %vm2557 = vweird.f32 %v2551
        %vm2558 = vmor %vm2556, %vm2557
        %v2559 = vsel %vm2558, %v2551, %v2555
        %v2560 = vand.u32 2147483647, %v2219
        %vm2561 = vcmp.eq.f32.partialorder %v2560, 8.507059e+37
        %v2562 = vand.u32 %v2219, 2147483648
        %v2563 = vor.u32 1.1754944e-38, %v2562
        %v2564 = vsel %vm2561, %v2563, %v2559
        %v2565 = vmul.f32 1.0, %v2564
        %v2566 = vrcp.pop %v2220
        %v2567 = vmul.f32 %v2220, %v2566
        %v2568 = vsub.f32 1.0, %v2567
        %v2569 = vmul.f32 %v2566, %v2568
        %v2570 = vadd.f32 %v2566, %v2569
        %vm2571 = vweird.f32 %v2220
        %vm2572 = vweird.f32 %v2566
        %vm2573 = vmor %vm2571, %vm2572
        %v2574 = vsel %vm2573, %v2566, %v2570
        %v2575 = vand.u32 2147483647, %v2220
        %vm2576 = vcmp.eq.f32.partialorder %v2575, 8.507059e+37
        %v2577 = vand.u32 %v2220, 2147483648
        %v2578 = vor.u32 1.1754944e-38, %v2577
        %v2579 = vsel %vm2576, %v2578, %v2574
        %v2580 = vmul.f32 1.0, %v2579
        %v2581 = vrcp.pop %v2221
        %v2582 = vmul.f32 %v2221, %v2581
        %v2583 = vsub.f32 1.0, %v2582
        %v2584 = vmul.f32 %v2581, %v2583
        %v2585 = vadd.f32 %v2581, %v2584
        %vm2586 = vweird.f32 %v2221
        %vm2587 = vweird.f32 %v2581
        %vm2588 = vmor %vm2586, %vm2587
        %v2589 = vsel %vm2588, %v2581, %v2585
        %v2590 = vand.u32 2147483647, %v2221
        %vm2591 = vcmp.eq.f32.partialorder %v2590, 8.507059e+37
        %v2592 = vand.u32 %v2221, 2147483648
        %v2593 = vor.u32 1.1754944e-38, %v2592
        %v2594 = vsel %vm2591, %v2593, %v2589
        %v2595 = vmul.f32 1.0, %v2594
        %v2596 = vrcp.pop %v2222
        %v2597 = vmul.f32 %v2222, %v2596
        %v2598 = vsub.f32 1.0, %v2597
        %v2599 = vmul.f32 %v2596, %v2598
        %v2600 = vadd.f32 %v2596, %v2599
        %vm2601 = vweird.f32 %v2222
        %vm2602 = vweird.f32 %v2596
        %vm2603 = vmor %vm2601, %vm2602
        %v2604 = vsel %vm2603, %v2596, %v2600
        %v2605 = vand.u32 2147483647, %v2222
        %vm2606 = vcmp.eq.f32.partialorder %v2605, 8.507059e+37
        %v2607 = vand.u32 %v2222, 2147483648
        %v2608 = vor.u32 1.1754944e-38, %v2607
        %v2609 = vsel %vm2606, %v2608, %v2604
        %v2610 = vmul.f32 1.0, %v2609
        %v2611 = vrcp.pop %v2223
        %v2612 = vmul.f32 %v2223, %v2611
        %v2613 = vsub.f32 1.0, %v2612
        %v2614 = vmul.f32 %v2611, %v2613
        %v2615 = vadd.f32 %v2611, %v2614
        %vm2616 = vweird.f32 %v2223
        %vm2617 = vweird.f32 %v2611
        %vm2618 = vmor %vm2616, %vm2617
        %v2619 = vsel %vm2618, %v2611, %v2615
        %v2620 = vand.u32 2147483647, %v2223
        %vm2621 = vcmp.eq.f32.partialorder %v2620, 8.507059e+37
        %v2622 = vand.u32 %v2223, 2147483648
        %v2623 = vor.u32 1.1754944e-38, %v2622
        %v2624 = vsel %vm2621, %v2623, %v2619
        %v2625 = vmul.f32 1.0, %v2624
        %v2626 = vrcp.pop %v2224
        %v2627 = vmul.f32 %v2224, %v2626
        %v2628 = vsub.f32 1.0, %v2627
        %v2629 = vmul.f32 %v2626, %v2628
        %v2630 = vadd.f32 %v2626, %v2629
        %vm2631 = vweird.f32 %v2224
        %vm2632 = vweird.f32 %v2626
        %vm2633 = vmor %vm2631, %vm2632
        %v2634 = vsel %vm2633, %v2626, %v2630
        %v2635 = vand.u32 2147483647, %v2224
        %vm2636 = vcmp.eq.f32.partialorder %v2635, 8.507059e+37
        %v2637 = vand.u32 %v2224, 2147483648
        %v2638 = vor.u32 1.1754944e-38, %v2637
        %v2639 = vsel %vm2636, %v2638, %v2634
        %v2640 = vmul.f32 1.0, %v2639
        %v2641 = vrcp.pop %v2225
        %v2642 = vmul.f32 %v2225, %v2641
        %v2643 = vsub.f32 1.0, %v2642
        %v2644 = vmul.f32 %v2641, %v2643
        %v2645 = vadd.f32 %v2641, %v2644
        %vm2646 = vweird.f32 %v2225
        %vm2647 = vweird.f32 %v2641
        %vm2648 = vmor %vm2646, %vm2647
        %v2649 = vsel %vm2648, %v2641, %v2645
        %v2650 = vand.u32 2147483647, %v2225
        %vm2651 = vcmp.eq.f32.partialorder %v2650, 8.507059e+37
        %v2652 = vand.u32 %v2225, 2147483648
        %v2653 = vor.u32 1.1754944e-38, %v2652
        %v2654 = vsel %vm2651, %v2653, %v2649
        %v2655 = vmul.f32 1.0, %v2654
        %v2656 = vrcp.pop %v2226
        %v2657 = vmul.f32 %v2226, %v2656
        %v2658 = vsub.f32 1.0, %v2657
        %v2659 = vmul.f32 %v2656, %v2658
        %v2660 = vadd.f32 %v2656, %v2659
        %vm2661 = vweird.f32 %v2226
        %vm2662 = vweird.f32 %v2656
        %vm2663 = vmor %vm2661, %vm2662
        %v2664 = vsel %vm2663, %v2656, %v2660
        %v2665 = vand.u32 2147483647, %v2226
        %vm2666 = vcmp.eq.f32.partialorder %v2665, 8.507059e+37
        %v2667 = vand.u32 %v2226, 2147483648
        %v2668 = vor.u32 1.1754944e-38, %v2667
        %v2669 = vsel %vm2666, %v2668, %v2664
        %v2670 = vmul.f32 1.0, %v2669
        %v2671 = vrcp.pop %v2227
        %v2672 = vmul.f32 %v2227, %v2671
        %v2673 = vsub.f32 1.0, %v2672
        %v2674 = vmul.f32 %v2671, %v2673
        %v2675 = vadd.f32 %v2671, %v2674
        %vm2676 = vweird.f32 %v2227
        %vm2677 = vweird.f32 %v2671
        %vm2678 = vmor %vm2676, %vm2677
        %v2679 = vsel %vm2678, %v2671, %v2675
        %v2680 = vand.u32 2147483647, %v2227
        %vm2681 = vcmp.eq.f32.partialorder %v2680, 8.507059e+37
        %v2682 = vand.u32 %v2227, 2147483648
        %v2683 = vor.u32 1.1754944e-38, %v2682
        %v2684 = vsel %vm2681, %v2683, %v2679
        %v2685 = vmul.f32 1.0, %v2684
        %v2686 = vrcp.pop %v2228
        %v2687 = vmul.f32 %v2228, %v2686
        %v2688 = vsub.f32 1.0, %v2687
        %v2689 = vmul.f32 %v2686, %v2688
        %v2690 = vadd.f32 %v2686, %v2689
        %vm2691 = vweird.f32 %v2228
        %vm2692 = vweird.f32 %v2686
        %vm2693 = vmor %vm2691, %vm2692
        %v2694 = vsel %vm2693, %v2686, %v2690
        %v2695 = vand.u32 2147483647, %v2228
        %vm2696 = vcmp.eq.f32.partialorder %v2695, 8.507059e+37
        %v2697 = vand.u32 %v2228, 2147483648
        %v2698 = vor.u32 1.1754944e-38, %v2697
        %v2699 = vsel %vm2696, %v2698, %v2694
        %v2700 = vmul.f32 1.0, %v2699
        %v2701 = vrcp.pop %v2229
        %v2702 = vmul.f32 %v2229, %v2701
        %v2703 = vsub.f32 1.0, %v2702
        %v2704 = vmul.f32 %v2701, %v2703
        %v2705 = vadd.f32 %v2701, %v2704
        %vm2706 = vweird.f32 %v2229
        %vm2707 = vweird.f32 %v2701
        %vm2708 = vmor %vm2706, %vm2707
        %v2709 = vsel %vm2708, %v2701, %v2705
        %v2710 = vand.u32 2147483647, %v2229
        %vm2711 = vcmp.eq.f32.partialorder %v2710, 8.507059e+37
        %v2712 = vand.u32 %v2229, 2147483648
        %v2713 = vor.u32 1.1754944e-38, %v2712
        %v2714 = vsel %vm2711, %v2713, %v2709
        %v2715 = vmul.f32 1.0, %v2714
        %v2716 = vrcp.pop %v2230
        %v2717 = vmul.f32 %v2230, %v2716
        %v2718 = vsub.f32 1.0, %v2717
        %v2719 = vmul.f32 %v2716, %v2718
        %v2720 = vadd.f32 %v2716, %v2719
        %vm2721 = vweird.f32 %v2230
        %vm2722 = vweird.f32 %v2716
        %vm2723 = vmor %vm2721, %vm2722
        %v2724 = vsel %vm2723, %v2716, %v2720
        %v2725 = vand.u32 2147483647, %v2230
        %vm2726 = vcmp.eq.f32.partialorder %v2725, 8.507059e+37
        %v2727 = vand.u32 %v2230, 2147483648
        %v2728 = vor.u32 1.1754944e-38, %v2727
        %v2729 = vsel %vm2726, %v2728, %v2724
        %v2730 = vmul.f32 1.0, %v2729
        %v2731 = vrcp.pop %v2231
        %v2732 = vmul.f32 %v2231, %v2731
        %v2733 = vsub.f32 1.0, %v2732
        %v2734 = vmul.f32 %v2731, %v2733
        %v2735 = vadd.f32 %v2731, %v2734
        %vm2736 = vweird.f32 %v2231
        %vm2737 = vweird.f32 %v2731
        %vm2738 = vmor %vm2736, %vm2737
        %v2739 = vsel %vm2738, %v2731, %v2735
        %v2740 = vand.u32 2147483647, %v2231
        %vm2741 = vcmp.eq.f32.partialorder %v2740, 8.507059e+37
        %v2742 = vand.u32 %v2231, 2147483648
        %v2743 = vor.u32 1.1754944e-38, %v2742
        %v2744 = vsel %vm2741, %v2743, %v2739
        %v2745 = vmul.f32 1.0, %v2744
        %v2746 = vrcp.pop %v2232
        %v2747 = vmul.f32 %v2232, %v2746
        %v2748 = vsub.f32 1.0, %v2747
        %v2749 = vmul.f32 %v2746, %v2748
        %v2750 = vadd.f32 %v2746, %v2749
        %vm2751 = vweird.f32 %v2232
        %vm2752 = vweird.f32 %v2746
        %vm2753 = vmor %vm2751, %vm2752
        %v2754 = vsel %vm2753, %v2746, %v2750
        %v2755 = vand.u32 2147483647, %v2232
        %vm2756 = vcmp.eq.f32.partialorder %v2755, 8.507059e+37
        %v2757 = vand.u32 %v2232, 2147483648
        %v2758 = vor.u32 1.1754944e-38, %v2757
        %v2759 = vsel %vm2756, %v2758, %v2754
        %v2760 = vmul.f32 1.0, %v2759
        %v2761 = vrcp.pop %v2233
        %v2762 = vmul.f32 %v2233, %v2761
        %v2763 = vsub.f32 1.0, %v2762
        %v2764 = vmul.f32 %v2761, %v2763
        %v2765 = vadd.f32 %v2761, %v2764
        %vm2766 = vweird.f32 %v2233
        %vm2767 = vweird.f32 %v2761
        %vm2768 = vmor %vm2766, %vm2767
        %v2769 = vsel %vm2768, %v2761, %v2765
        %v2770 = vand.u32 2147483647, %v2233
        %vm2771 = vcmp.eq.f32.partialorder %v2770, 8.507059e+37
        %v2772 = vand.u32 %v2233, 2147483648
        %v2773 = vor.u32 1.1754944e-38, %v2772
        %v2774 = vsel %vm2771, %v2773, %v2769
        %v2775 = vmul.f32 1.0, %v2774
        %v2776 = vrcp.pop %v2234
        %v2777 = vmul.f32 %v2234, %v2776
        %v2778 = vsub.f32 1.0, %v2777
        %v2779 = vmul.f32 %v2776, %v2778
        %v2780 = vadd.f32 %v2776, %v2779
        %vm2781 = vweird.f32 %v2234
        %vm2782 = vweird.f32 %v2776
        %vm2783 = vmor %vm2781, %vm2782
        %v2784 = vsel %vm2783, %v2776, %v2780
        %v2785 = vand.u32 2147483647, %v2234
        %vm2786 = vcmp.eq.f32.partialorder %v2785, 8.507059e+37
        %v2787 = vand.u32 %v2234, 2147483648
        %v2788 = vor.u32 1.1754944e-38, %v2787
        %v2789 = vsel %vm2786, %v2788, %v2784
        %v2790 = vmul.f32 1.0, %v2789
        %v2791 = vrcp.pop %v2235
        %v2792 = vmul.f32 %v2235, %v2791
        %v2793 = vsub.f32 1.0, %v2792
        %v2794 = vmul.f32 %v2791, %v2793
        %v2795 = vadd.f32 %v2791, %v2794
        %vm2796 = vweird.f32 %v2235
        %vm2797 = vweird.f32 %v2791
        %vm2798 = vmor %vm2796, %vm2797
        %v2799 = vsel %vm2798, %v2791, %v2795
        %v2800 = vand.u32 2147483647, %v2235
        %vm2801 = vcmp.eq.f32.partialorder %v2800, 8.507059e+37
        %v2802 = vand.u32 %v2235, 2147483648
        %v2803 = vor.u32 1.1754944e-38, %v2802
        %v2804 = vsel %vm2801, %v2803, %v2799
        %v2805 = vmul.f32 1.0, %v2804
        %v2806 = vrcp.pop %v2236
        %v2807 = vmul.f32 %v2236, %v2806
        %v2808 = vsub.f32 1.0, %v2807
        %v2809 = vmul.f32 %v2806, %v2808
        %v2810 = vadd.f32 %v2806, %v2809
        %vm2811 = vweird.f32 %v2236
        %vm2812 = vweird.f32 %v2806
        %vm2813 = vmor %vm2811, %vm2812
        %v2814 = vsel %vm2813, %v2806, %v2810
        %v2815 = vand.u32 2147483647, %v2236
        %vm2816 = vcmp.eq.f32.partialorder %v2815, 8.507059e+37
        %v2817 = vand.u32 %v2236, 2147483648
        %v2818 = vor.u32 1.1754944e-38, %v2817
        %v2819 = vsel %vm2816, %v2818, %v2814
        %v2820 = vmul.f32 1.0, %v2819
        %v2821 = vrcp.pop %v2237
        %v2822 = vmul.f32 %v2237, %v2821
        %v2823 = vsub.f32 1.0, %v2822
        %v2824 = vmul.f32 %v2821, %v2823
        %v2825 = vadd.f32 %v2821, %v2824
        %vm2826 = vweird.f32 %v2237
        %vm2827 = vweird.f32 %v2821
        %vm2828 = vmor %vm2826, %vm2827
        %v2829 = vsel %vm2828, %v2821, %v2825
        %v2830 = vand.u32 2147483647, %v2237
        %vm2831 = vcmp.eq.f32.partialorder %v2830, 8.507059e+37
        %v2832 = vand.u32 %v2237, 2147483648
        %v2833 = vor.u32 1.1754944e-38, %v2832
        %v2834 = vsel %vm2831, %v2833, %v2829
        %v2835 = vmul.f32 1.0, %v2834
        %v2836 = vrcp.pop %v2238
        %v2837 = vmul.f32 %v2238, %v2836
        %v2838 = vsub.f32 1.0, %v2837
        %v2839 = vmul.f32 %v2836, %v2838
        %v2840 = vadd.f32 %v2836, %v2839
        %vm2841 = vweird.f32 %v2238
        %vm2842 = vweird.f32 %v2836
        %vm2843 = vmor %vm2841, %vm2842
        %v2844 = vsel %vm2843, %v2836, %v2840
        %v2845 = vand.u32 2147483647, %v2238
        %vm2846 = vcmp.eq.f32.partialorder %v2845, 8.507059e+37
        %v2847 = vand.u32 %v2238, 2147483648
        %v2848 = vor.u32 1.1754944e-38, %v2847
        %v2849 = vsel %vm2846, %v2848, %v2844
        %v2850 = vmul.f32 1.0, %v2849
        %v2851 = vrcp.pop %v2239
        %v2852 = vmul.f32 %v2239, %v2851
        %v2853 = vsub.f32 1.0, %v2852
        %v2854 = vmul.f32 %v2851, %v2853
        %v2855 = vadd.f32 %v2851, %v2854
        %vm2856 = vweird.f32 %v2239
        %vm2857 = vweird.f32 %v2851
        %vm2858 = vmor %vm2856, %vm2857
        %v2859 = vsel %vm2858, %v2851, %v2855
        %v2860 = vand.u32 2147483647, %v2239
        %vm2861 = vcmp.eq.f32.partialorder %v2860, 8.507059e+37
        %v2862 = vand.u32 %v2239, 2147483648
        %v2863 = vor.u32 1.1754944e-38, %v2862
        %v2864 = vsel %vm2861, %v2863, %v2859
        %v2865 = vmul.f32 1.0, %v2864
        %v2866 = vrcp.pop %v2240
        %v2867 = vmul.f32 %v2240, %v2866
        %v2868 = vsub.f32 1.0, %v2867
        %v2869 = vmul.f32 %v2866, %v2868
        %v2870 = vadd.f32 %v2866, %v2869
        %vm2871 = vweird.f32 %v2240
        %vm2872 = vweird.f32 %v2866
        %vm2873 = vmor %vm2871, %vm2872
        %v2874 = vsel %vm2873, %v2866, %v2870
        %v2875 = vand.u32 2147483647, %v2240
        %vm2876 = vcmp.eq.f32.partialorder %v2875, 8.507059e+37
        %v2877 = vand.u32 %v2240, 2147483648
        %v2878 = vor.u32 1.1754944e-38, %v2877
        %v2879 = vsel %vm2876, %v2878, %v2874
        %v2880 = vmul.f32 1.0, %v2879
        %v2881 = vrcp.pop %v2241
        %v2882 = vmul.f32 %v2241, %v2881
        %v2883 = vsub.f32 1.0, %v2882
        %v2884 = vmul.f32 %v2881, %v2883
        %v2885 = vadd.f32 %v2881, %v2884
        %vm2886 = vweird.f32 %v2241
        %vm2887 = vweird.f32 %v2881
        %vm2888 = vmor %vm2886, %vm2887
        %v2889 = vsel %vm2888, %v2881, %v2885
        %v2890 = vand.u32 2147483647, %v2241
        %vm2891 = vcmp.eq.f32.partialorder %v2890, 8.507059e+37
        %v2892 = vand.u32 %v2241, 2147483648
        %v2893 = vor.u32 1.1754944e-38, %v2892
        %v2894 = vsel %vm2891, %v2893, %v2889
        %v2895 = vmul.f32 1.0, %v2894
        %v2896 = vrcp.pop %v2242
        %v2897 = vmul.f32 %v2242, %v2896
        %v2898 = vsub.f32 1.0, %v2897
        %v2899 = vmul.f32 %v2896, %v2898
        %v2900 = vadd.f32 %v2896, %v2899
        %vm2901 = vweird.f32 %v2242
        %vm2902 = vweird.f32 %v2896
        %vm2903 = vmor %vm2901, %vm2902
        %v2904 = vsel %vm2903, %v2896, %v2900
        %v2905 = vand.u32 2147483647, %v2242
        %vm2906 = vcmp.eq.f32.partialorder %v2905, 8.507059e+37
        %v2907 = vand.u32 %v2242, 2147483648
        %v2908 = vor.u32 1.1754944e-38, %v2907
        %v2909 = vsel %vm2906, %v2908, %v2904
        %v2910 = vmul.f32 1.0, %v2909
        %v2911 = vrcp.pop %v2243
        %v2912 = vmul.f32 %v2243, %v2911
        %v2913 = vsub.f32 1.0, %v2912
        %v2914 = vmul.f32 %v2911, %v2913
        %v2915 = vadd.f32 %v2911, %v2914
        %vm2916 = vweird.f32 %v2243
        %vm2917 = vweird.f32 %v2911
        %vm2918 = vmor %vm2916, %vm2917
        %v2919 = vsel %vm2918, %v2911, %v2915
        %v2920 = vand.u32 2147483647, %v2243
        %vm2921 = vcmp.eq.f32.partialorder %v2920, 8.507059e+37
        %v2922 = vand.u32 %v2243, 2147483648
        %v2923 = vor.u32 1.1754944e-38, %v2922
        %v2924 = vsel %vm2921, %v2923, %v2919
        %v2925 = vmul.f32 1.0, %v2924
        %v2926 = vrcp.pop %v2244
        %v2927 = vmul.f32 %v2244, %v2926
        %v2928 = vsub.f32 1.0, %v2927
        %v2929 = vmul.f32 %v2926, %v2928
        %v2930 = vadd.f32 %v2926, %v2929
        %vm2931 = vweird.f32 %v2244
        %vm2932 = vweird.f32 %v2926
        %vm2933 = vmor %vm2931, %vm2932
        %v2934 = vsel %vm2933, %v2926, %v2930
        %v2935 = vand.u32 2147483647, %v2244
        %vm2936 = vcmp.eq.f32.partialorder %v2935, 8.507059e+37
        %v2937 = vand.u32 %v2244, 2147483648
        %v2938 = vor.u32 1.1754944e-38, %v2937
        %v2939 = vsel %vm2936, %v2938, %v2934
        %v2940 = vmul.f32 1.0, %v2939
        %v2941 = vrcp.pop %v2245
        %v2942 = vmul.f32 %v2245, %v2941
        %v2943 = vsub.f32 1.0, %v2942
        %v2944 = vmul.f32 %v2941, %v2943
        %v2945 = vadd.f32 %v2941, %v2944
        %vm2946 = vweird.f32 %v2245
        %vm2947 = vweird.f32 %v2941
        %vm2948 = vmor %vm2946, %vm2947
        %v2949 = vsel %vm2948, %v2941, %v2945
        %v2950 = vand.u32 2147483647, %v2245
        %vm2951 = vcmp.eq.f32.partialorder %v2950, 8.507059e+37
        %v2952 = vand.u32 %v2245, 2147483648
        %v2953 = vor.u32 1.1754944e-38, %v2952
        %v2954 = vsel %vm2951, %v2953, %v2949
        %v2955 = vmul.f32 1.0, %v2954
        %v2956 = vrcp.pop %v2246
        %v2957 = vmul.f32 %v2246, %v2956
        %v2958 = vsub.f32 1.0, %v2957
        %v2959 = vmul.f32 %v2956, %v2958
        %v2960 = vadd.f32 %v2956, %v2959
        %vm2961 = vweird.f32 %v2246
        %vm2962 = vweird.f32 %v2956
        %vm2963 = vmor %vm2961, %vm2962
        %v2964 = vsel %vm2963, %v2956, %v2960
        %v2965 = vand.u32 2147483647, %v2246
        %vm2966 = vcmp.eq.f32.partialorder %v2965, 8.507059e+37
        %v2967 = vand.u32 %v2246, 2147483648
        %v2968 = vor.u32 1.1754944e-38, %v2967
        %v2969 = vsel %vm2966, %v2968, %v2964
        %v2970 = vmul.f32 1.0, %v2969
        %v2971 = vrcp.pop %v2247
        %v2972 = vmul.f32 %v2247, %v2971
        %v2973 = vsub.f32 1.0, %v2972
        %v2974 = vmul.f32 %v2971, %v2973
        %v2975 = vadd.f32 %v2971, %v2974
        %vm2976 = vweird.f32 %v2247
        %vm2977 = vweird.f32 %v2971
        %vm2978 = vmor %vm2976, %vm2977
        %v2979 = vsel %vm2978, %v2971, %v2975
        %v2980 = vand.u32 2147483647, %v2247
        %vm2981 = vcmp.eq.f32.partialorder %v2980, 8.507059e+37
        %v2982 = vand.u32 %v2247, 2147483648
        %v2983 = vor.u32 1.1754944e-38, %v2982
        %v2984 = vsel %vm2981, %v2983, %v2979
        %v2985 = vmul.f32 1.0, %v2984
        %v2986 = vrcp.pop %v2248
        %v2987 = vmul.f32 %v2248, %v2986
        %v2988 = vsub.f32 1.0, %v2987
        %v2989 = vmul.f32 %v2986, %v2988
        %v2990 = vadd.f32 %v2986, %v2989
        %vm2991 = vweird.f32 %v2248
        %vm2992 = vweird.f32 %v2986
        %vm2993 = vmor %vm2991, %vm2992
        %v2994 = vsel %vm2993, %v2986, %v2990
        %v2995 = vand.u32 2147483647, %v2248
        %vm2996 = vcmp.eq.f32.partialorder %v2995, 8.507059e+37
        %v2997 = vand.u32 %v2248, 2147483648
        %v2998 = vor.u32 1.1754944e-38, %v2997
        %v2999 = vsel %vm2996, %v2998, %v2994
        %v3000 = vmul.f32 1.0, %v2999
        %v3001 = vrcp.pop %v2249
        %v3002 = vmul.f32 %v2249, %v3001
        %v3003 = vsub.f32 1.0, %v3002
        %v3004 = vmul.f32 %v3001, %v3003
        %v3005 = vadd.f32 %v3001, %v3004
        %vm3006 = vweird.f32 %v2249
        %vm3007 = vweird.f32 %v3001
        %vm3008 = vmor %vm3006, %vm3007
        %v3009 = vsel %vm3008, %v3001, %v3005
        %v3010 = vand.u32 2147483647, %v2249
        %vm3011 = vcmp.eq.f32.partialorder %v3010, 8.507059e+37
        %v3012 = vand.u32 %v2249, 2147483648
        %v3013 = vor.u32 1.1754944e-38, %v3012
        %v3014 = vsel %vm3011, %v3013, %v3009
        %v3015 = vmul.f32 1.0, %v3014
        %v3016 = vrcp.pop %v2250
        %v3017 = vmul.f32 %v2250, %v3016
        %v3018 = vsub.f32 1.0, %v3017
        %v3019 = vmul.f32 %v3016, %v3018
        %v3020 = vadd.f32 %v3016, %v3019
        %vm3021 = vweird.f32 %v2250
        %vm3022 = vweird.f32 %v3016
        %vm3023 = vmor %vm3021, %vm3022
        %v3024 = vsel %vm3023, %v3016, %v3020
        %v3025 = vand.u32 2147483647, %v2250
        %vm3026 = vcmp.eq.f32.partialorder %v3025, 8.507059e+37
        %v3027 = vand.u32 %v2250, 2147483648
        %v3028 = vor.u32 1.1754944e-38, %v3027
        %v3029 = vsel %vm3026, %v3028, %v3024
        %v3030 = vmul.f32 1.0, %v3029
        %v3031 = vrcp.pop %v2251
        %v3032 = vmul.f32 %v2251, %v3031
        %v3033 = vsub.f32 1.0, %v3032
        %v3034 = vmul.f32 %v3031, %v3033
        %v3035 = vadd.f32 %v3031, %v3034
        %vm3036 = vweird.f32 %v2251
        %vm3037 = vweird.f32 %v3031
        %vm3038 = vmor %vm3036, %vm3037
        %v3039 = vsel %vm3038, %v3031, %v3035
        %v3040 = vand.u32 2147483647, %v2251
        %vm3041 = vcmp.eq.f32.partialorder %v3040, 8.507059e+37
        %v3042 = vand.u32 %v2251, 2147483648
        %v3043 = vor.u32 1.1754944e-38, %v3042
        %v3044 = vsel %vm3041, %v3043, %v3039
        %v3045 = vmul.f32 1.0, %v3044
        %v3046 = vrcp.pop %v2252
        %v3047 = vmul.f32 %v2252, %v3046
        %v3048 = vsub.f32 1.0, %v3047
        %v3049 = vmul.f32 %v3046, %v3048
        %v3050 = vadd.f32 %v3046, %v3049
        %vm3051 = vweird.f32 %v2252
        %vm3052 = vweird.f32 %v3046
        %vm3053 = vmor %vm3051, %vm3052
        %v3054 = vsel %vm3053, %v3046, %v3050
        %v3055 = vand.u32 2147483647, %v2252
        %vm3056 = vcmp.eq.f32.partialorder %v3055, 8.507059e+37
        %v3057 = vand.u32 %v2252, 2147483648
        %v3058 = vor.u32 1.1754944e-38, %v3057
        %v3059 = vsel %vm3056, %v3058, %v3054
        %v3060 = vmul.f32 1.0, %v3059
        %v3061 = vrcp.pop %v2253
        %v3062 = vmul.f32 %v2253, %v3061
        %v3063 = vsub.f32 1.0, %v3062
        %v3064 = vmul.f32 %v3061, %v3063
        %v3065 = vadd.f32 %v3061, %v3064
        %vm3066 = vweird.f32 %v2253
        %vm3067 = vweird.f32 %v3061
        %vm3068 = vmor %vm3066, %vm3067
        %v3069 = vsel %vm3068, %v3061, %v3065
        %v3070 = vand.u32 2147483647, %v2253
        %vm3071 = vcmp.eq.f32.partialorder %v3070, 8.507059e+37
        %v3072 = vand.u32 %v2253, 2147483648
        %v3073 = vor.u32 1.1754944e-38, %v3072
        %v3074 = vsel %vm3071, %v3073, %v3069
        %v3075 = vmul.f32 1.0, %v3074
        %v3076 = vrcp.pop %v2254
        %v3077 = vmul.f32 %v2254, %v3076
        %v3078 = vsub.f32 1.0, %v3077
        %v3079 = vmul.f32 %v3076, %v3078
        %v3080 = vadd.f32 %v3076, %v3079
        %vm3081 = vweird.f32 %v2254
        %vm3082 = vweird.f32 %v3076
        %vm3083 = vmor %vm3081, %vm3082
        %v3084 = vsel %vm3083, %v3076, %v3080
        %v3085 = vand.u32 2147483647, %v2254
        %vm3086 = vcmp.eq.f32.partialorder %v3085, 8.507059e+37
        %v3087 = vand.u32 %v2254, 2147483648
        %v3088 = vor.u32 1.1754944e-38, %v3087
        %v3089 = vsel %vm3086, %v3088, %v3084
        %v3090 = vmul.f32 1.0, %v3089
        %v3091 = vrcp.pop %v2255
        %v3092 = vmul.f32 %v2255, %v3091
        %v3093 = vsub.f32 1.0, %v3092
        %v3094 = vmul.f32 %v3091, %v3093
        %v3095 = vadd.f32 %v3091, %v3094
        %vm3096 = vweird.f32 %v2255
        %vm3097 = vweird.f32 %v3091
        %vm3098 = vmor %vm3096, %vm3097
        %v3099 = vsel %vm3098, %v3091, %v3095
        %v3100 = vand.u32 2147483647, %v2255
        %vm3101 = vcmp.eq.f32.partialorder %v3100, 8.507059e+37
        %v3102 = vand.u32 %v2255, 2147483648
        %v3103 = vor.u32 1.1754944e-38, %v3102
        %v3104 = vsel %vm3101, %v3103, %v3099
        %v3105 = vmul.f32 1.0, %v3104
        %v3106 = vrcp.pop %v2256
        %v3107 = vmul.f32 %v2256, %v3106
        %v3108 = vsub.f32 1.0, %v3107
        %v3109 = vmul.f32 %v3106, %v3108
        %v3110 = vadd.f32 %v3106, %v3109
        %vm3111 = vweird.f32 %v2256
        %vm3112 = vweird.f32 %v3106
        %vm3113 = vmor %vm3111, %vm3112
        %v3114 = vsel %vm3113, %v3106, %v3110
        %v3115 = vand.u32 2147483647, %v2256
        %vm3116 = vcmp.eq.f32.partialorder %v3115, 8.507059e+37
        %v3117 = vand.u32 %v2256, 2147483648
        %v3118 = vor.u32 1.1754944e-38, %v3117
        %v3119 = vsel %vm3116, %v3118, %v3114
        %v3120 = vmul.f32 1.0, %v3119
        %v3121 = vrcp.pop %v2257
        %v3122 = vmul.f32 %v2257, %v3121
        %v3123 = vsub.f32 1.0, %v3122
        %v3124 = vmul.f32 %v3121, %v3123
        %v3125 = vadd.f32 %v3121, %v3124
        %vm3126 = vweird.f32 %v2257
        %vm3127 = vweird.f32 %v3121
        %vm3128 = vmor %vm3126, %vm3127
        %v3129 = vsel %vm3128, %v3121, %v3125
        %v3130 = vand.u32 2147483647, %v2257
        %vm3131 = vcmp.eq.f32.partialorder %v3130, 8.507059e+37
        %v3132 = vand.u32 %v2257, 2147483648
        %v3133 = vor.u32 1.1754944e-38, %v3132
        %v3134 = vsel %vm3131, %v3133, %v3129
        %v3135 = vmul.f32 1.0, %v3134
        %v3136 = vrcp.pop %v2258
        %v3137 = vmul.f32 %v2258, %v3136
        %v3138 = vsub.f32 1.0, %v3137
        %v3139 = vmul.f32 %v3136, %v3138
        %v3140 = vadd.f32 %v3136, %v3139
        %vm3141 = vweird.f32 %v2258
        %vm3142 = vweird.f32 %v3136
        %vm3143 = vmor %vm3141, %vm3142
        %v3144 = vsel %vm3143, %v3136, %v3140
        %v3145 = vand.u32 2147483647, %v2258
        %vm3146 = vcmp.eq.f32.partialorder %v3145, 8.507059e+37
        %v3147 = vand.u32 %v2258, 2147483648
        %v3148 = vor.u32 1.1754944e-38, %v3147
        %v3149 = vsel %vm3146, %v3148, %v3144
        %v3150 = vmul.f32 1.0, %v3149
        %v3151 = vrcp.pop %v2259
        %v3152 = vmul.f32 %v2259, %v3151
        %v3153 = vsub.f32 1.0, %v3152
        %v3154 = vmul.f32 %v3151, %v3153
        %v3155 = vadd.f32 %v3151, %v3154
        %vm3156 = vweird.f32 %v2259
        %vm3157 = vweird.f32 %v3151
        %vm3158 = vmor %vm3156, %vm3157
        %v3159 = vsel %vm3158, %v3151, %v3155
        %v3160 = vand.u32 2147483647, %v2259
        %vm3161 = vcmp.eq.f32.partialorder %v3160, 8.507059e+37
        %v3162 = vand.u32 %v2259, 2147483648
        %v3163 = vor.u32 1.1754944e-38, %v3162
        %v3164 = vsel %vm3161, %v3163, %v3159
        %v3165 = vmul.f32 1.0, %v3164
        %v3166 = vrcp.pop %v2260
        %v3167 = vmul.f32 %v2260, %v3166
        %v3168 = vsub.f32 1.0, %v3167
        %v3169 = vmul.f32 %v3166, %v3168
        %v3170 = vadd.f32 %v3166, %v3169
        %vm3171 = vweird.f32 %v2260
        %vm3172 = vweird.f32 %v3166
        %vm3173 = vmor %vm3171, %vm3172
        %v3174 = vsel %vm3173, %v3166, %v3170
        %v3175 = vand.u32 2147483647, %v2260
        %vm3176 = vcmp.eq.f32.partialorder %v3175, 8.507059e+37
        %v3177 = vand.u32 %v2260, 2147483648
        %v3178 = vor.u32 1.1754944e-38, %v3177
        %v3179 = vsel %vm3176, %v3178, %v3174
        %v3180 = vmul.f32 1.0, %v3179
        %v3181 = vrcp.pop %v2261
        %v3182 = vmul.f32 %v2261, %v3181
        %v3183 = vsub.f32 1.0, %v3182
        %v3184 = vmul.f32 %v3181, %v3183
        %v3185 = vadd.f32 %v3181, %v3184
        %vm3186 = vweird.f32 %v2261
        %vm3187 = vweird.f32 %v3181
        %vm3188 = vmor %vm3186, %vm3187
        %v3189 = vsel %vm3188, %v3181, %v3185
        %v3190 = vand.u32 2147483647, %v2261
        %vm3191 = vcmp.eq.f32.partialorder %v3190, 8.507059e+37
        %v3192 = vand.u32 %v2261, 2147483648
        %v3193 = vor.u32 1.1754944e-38, %v3192
        %v3194 = vsel %vm3191, %v3193, %v3189
        %v3195 = vmul.f32 1.0, %v3194
        %v3196 = vrcp.pop %v2262
        %v3197 = vmul.f32 %v2262, %v3196
        %v3198 = vsub.f32 1.0, %v3197
        %v3199 = vmul.f32 %v3196, %v3198
        %v3200 = vadd.f32 %v3196, %v3199
        %vm3201 = vweird.f32 %v2262
        %vm3202 = vweird.f32 %v3196
        %vm3203 = vmor %vm3201, %vm3202
        %v3204 = vsel %vm3203, %v3196, %v3200
        %v3205 = vand.u32 2147483647, %v2262
        %vm3206 = vcmp.eq.f32.partialorder %v3205, 8.507059e+37
        %v3207 = vand.u32 %v2262, 2147483648
        %v3208 = vor.u32 1.1754944e-38, %v3207
        %v3209 = vsel %vm3206, %v3208, %v3204
        %v3210 = vmul.f32 1.0, %v3209
        %v3211 = vrcp.pop %v2263
        %v3212 = vmul.f32 %v2263, %v3211
        %v3213 = vsub.f32 1.0, %v3212
        %v3214 = vmul.f32 %v3211, %v3213
        %v3215 = vadd.f32 %v3211, %v3214
        %vm3216 = vweird.f32 %v2263
        %vm3217 = vweird.f32 %v3211
        %vm3218 = vmor %vm3216, %vm3217
        %v3219 = vsel %vm3218, %v3211, %v3215
        %v3220 = vand.u32 2147483647, %v2263
        %vm3221 = vcmp.eq.f32.partialorder %v3220, 8.507059e+37
        %v3222 = vand.u32 %v2263, 2147483648
        %v3223 = vor.u32 1.1754944e-38, %v3222
        %v3224 = vsel %vm3221, %v3223, %v3219
        %v3225 = vmul.f32 1.0, %v3224
        %v3226 = vrcp.pop %v2264
        %v3227 = vmul.f32 %v2264, %v3226
        %v3228 = vsub.f32 1.0, %v3227
        %v3229 = vmul.f32 %v3226, %v3228
        %v3230 = vadd.f32 %v3226, %v3229
        %vm3231 = vweird.f32 %v2264
        %vm3232 = vweird.f32 %v3226
        %vm3233 = vmor %vm3231, %vm3232
        %v3234 = vsel %vm3233, %v3226, %v3230
        %v3235 = vand.u32 2147483647, %v2264
        %vm3236 = vcmp.eq.f32.partialorder %v3235, 8.507059e+37
        %v3237 = vand.u32 %v2264, 2147483648
        %v3238 = vor.u32 1.1754944e-38, %v3237
        %v3239 = vsel %vm3236, %v3238, %v3234
        %v3240 = vmul.f32 1.0, %v3239
        %v3241 = vrcp.pop %v2265
        %v3242 = vmul.f32 %v2265, %v3241
        %v3243 = vsub.f32 1.0, %v3242
        %v3244 = vmul.f32 %v3241, %v3243
        %v3245 = vadd.f32 %v3241, %v3244
        %vm3246 = vweird.f32 %v2265
        %vm3247 = vweird.f32 %v3241
        %vm3248 = vmor %vm3246, %vm3247
        %v3249 = vsel %vm3248, %v3241, %v3245
        %v3250 = vand.u32 2147483647, %v2265
        %vm3251 = vcmp.eq.f32.partialorder %v3250, 8.507059e+37
        %v3252 = vand.u32 %v2265, 2147483648
        %v3253 = vor.u32 1.1754944e-38, %v3252
        %v3254 = vsel %vm3251, %v3253, %v3249
        %v3255 = vmul.f32 1.0, %v3254
        %v3256 = vrcp.pop %v2266
        %v3257 = vmul.f32 %v2266, %v3256
        %v3258 = vsub.f32 1.0, %v3257
        %v3259 = vmul.f32 %v3256, %v3258
        %v3260 = vadd.f32 %v3256, %v3259
        %vm3261 = vweird.f32 %v2266
        %vm3262 = vweird.f32 %v3256
        %vm3263 = vmor %vm3261, %vm3262
        %v3264 = vsel %vm3263, %v3256, %v3260
        %v3265 = vand.u32 2147483647, %v2266
        %vm3266 = vcmp.eq.f32.partialorder %v3265, 8.507059e+37
        %v3267 = vand.u32 %v2266, 2147483648
        %v3268 = vor.u32 1.1754944e-38, %v3267
        %v3269 = vsel %vm3266, %v3268, %v3264
        %v3270 = vmul.f32 1.0, %v3269
        %v3271 = vrcp.pop %v2267
        %v3272 = vmul.f32 %v2267, %v3271
        %v3273 = vsub.f32 1.0, %v3272
        %v3274 = vmul.f32 %v3271, %v3273
        %v3275 = vadd.f32 %v3271, %v3274
        %vm3276 = vweird.f32 %v2267
        %vm3277 = vweird.f32 %v3271
        %vm3278 = vmor %vm3276, %vm3277
        %v3279 = vsel %vm3278, %v3271, %v3275
        %v3280 = vand.u32 2147483647, %v2267
        %vm3281 = vcmp.eq.f32.partialorder %v3280, 8.507059e+37
        %v3282 = vand.u32 %v2267, 2147483648
        %v3283 = vor.u32 1.1754944e-38, %v3282
        %v3284 = vsel %vm3281, %v3283, %v3279
        %v3285 = vmul.f32 1.0, %v3284
        %v3286 = vrcp.pop %v2268
        %v3287 = vmul.f32 %v2268, %v3286
        %v3288 = vsub.f32 1.0, %v3287
        %v3289 = vmul.f32 %v3286, %v3288
        %v3290 = vadd.f32 %v3286, %v3289
        %vm3291 = vweird.f32 %v2268
        %vm3292 = vweird.f32 %v3286
        %vm3293 = vmor %vm3291, %vm3292
        %v3294 = vsel %vm3293, %v3286, %v3290
        %v3295 = vand.u32 2147483647, %v2268
        %vm3296 = vcmp.eq.f32.partialorder %v3295, 8.507059e+37
        %v3297 = vand.u32 %v2268, 2147483648
        %v3298 = vor.u32 1.1754944e-38, %v3297
        %v3299 = vsel %vm3296, %v3298, %v3294
        %v3300 = vmul.f32 1.0, %v3299
        %v3301 = vrcp.pop %v2269
        %v3302 = vmul.f32 %v2269, %v3301
        %v3303 = vsub.f32 1.0, %v3302
        %v3304 = vmul.f32 %v3301, %v3303
        %v3305 = vadd.f32 %v3301, %v3304
        %vm3306 = vweird.f32 %v2269
        %vm3307 = vweird.f32 %v3301
        %vm3308 = vmor %vm3306, %vm3307
        %v3309 = vsel %vm3308, %v3301, %v3305
        %v3310 = vand.u32 2147483647, %v2269
        %vm3311 = vcmp.eq.f32.partialorder %v3310, 8.507059e+37
        %v3312 = vand.u32 %v2269, 2147483648
        %v3313 = vor.u32 1.1754944e-38, %v3312
        %v3314 = vsel %vm3311, %v3313, %v3309
        %v3315 = vmul.f32 1.0, %v3314
        %v3316 = vrcp.pop %v2270
        %v3317 = vmul.f32 %v2270, %v3316
        %v3318 = vsub.f32 1.0, %v3317
        %v3319 = vmul.f32 %v3316, %v3318
        %v3320 = vadd.f32 %v3316, %v3319
        %vm3321 = vweird.f32 %v2270
        %vm3322 = vweird.f32 %v3316
        %vm3323 = vmor %vm3321, %vm3322
        %v3324 = vsel %vm3323, %v3316, %v3320
        %v3325 = vand.u32 2147483647, %v2270
        %vm3326 = vcmp.eq.f32.partialorder %v3325, 8.507059e+37
        %v3327 = vand.u32 %v2270, 2147483648
        %v3328 = vor.u32 1.1754944e-38, %v3327
        %v3329 = vsel %vm3326, %v3328, %v3324
        %v3330 = vmul.f32 1.0, %v3329
        %v3331 = vrcp.pop %v2271
        %v3332 = vmul.f32 %v2271, %v3331
        %v3333 = vsub.f32 1.0, %v3332
        %v3334 = vmul.f32 %v3331, %v3333
        %v3335 = vadd.f32 %v3331, %v3334
        %vm3336 = vweird.f32 %v2271
        %vm3337 = vweird.f32 %v3331
        %vm3338 = vmor %vm3336, %vm3337
        %v3339 = vsel %vm3338, %v3331, %v3335
        %v3340 = vand.u32 2147483647, %v2271
        %vm3341 = vcmp.eq.f32.partialorder %v3340, 8.507059e+37
        %v3342 = vand.u32 %v2271, 2147483648
        %v3343 = vor.u32 1.1754944e-38, %v3342
        %v3344 = vsel %vm3341, %v3343, %v3339
        %v3345 = vmul.f32 1.0, %v3344
        %v3346 = vrcp.pop %v2272
        %v3347 = vmul.f32 %v2272, %v3346
        %v3348 = vsub.f32 1.0, %v3347
        %v3349 = vmul.f32 %v3346, %v3348
        %v3350 = vadd.f32 %v3346, %v3349
        %vm3351 = vweird.f32 %v2272
        %vm3352 = vweird.f32 %v3346
        %vm3353 = vmor %vm3351, %vm3352
        %v3354 = vsel %vm3353, %v3346, %v3350
        %v3355 = vand.u32 2147483647, %v2272
        %vm3356 = vcmp.eq.f32.partialorder %v3355, 8.507059e+37
        %v3357 = vand.u32 %v2272, 2147483648
        %v3358 = vor.u32 1.1754944e-38, %v3357
        %v3359 = vsel %vm3356, %v3358, %v3354
        %v3360 = vmul.f32 1.0, %v3359
        %v3361 = vrcp.pop %v2273
        %v3362 = vmul.f32 %v2273, %v3361
        %v3363 = vsub.f32 1.0, %v3362
        %v3364 = vmul.f32 %v3361, %v3363
        %v3365 = vadd.f32 %v3361, %v3364
        %vm3366 = vweird.f32 %v2273
        %vm3367 = vweird.f32 %v3361
        %vm3368 = vmor %vm3366, %vm3367
        %v3369 = vsel %vm3368, %v3361, %v3365
        %v3370 = vand.u32 2147483647, %v2273
        %vm3371 = vcmp.eq.f32.partialorder %v3370, 8.507059e+37
        %v3372 = vand.u32 %v2273, 2147483648
        %v3373 = vor.u32 1.1754944e-38, %v3372
        %v3374 = vsel %vm3371, %v3373, %v3369
        %v3375 = vmul.f32 1.0, %v3374
        %v3376 = vrcp.pop %v2274
        %v3377 = vmul.f32 %v2274, %v3376
        %v3378 = vsub.f32 1.0, %v3377
        %v3379 = vmul.f32 %v3376, %v3378
        %v3380 = vadd.f32 %v3376, %v3379
        %vm3381 = vweird.f32 %v2274
        %vm3382 = vweird.f32 %v3376
        %vm3383 = vmor %vm3381, %vm3382
        %v3384 = vsel %vm3383, %v3376, %v3380
        %v3385 = vand.u32 2147483647, %v2274
        %vm3386 = vcmp.eq.f32.partialorder %v3385, 8.507059e+37
        %v3387 = vand.u32 %v2274, 2147483648
        %v3388 = vor.u32 1.1754944e-38, %v3387
        %v3389 = vsel %vm3386, %v3388, %v3384
        %v3390 = vmul.f32 1.0, %v3389
        %v3391 = vrcp.pop %v2275
        %v3392 = vmul.f32 %v2275, %v3391
        %v3393 = vsub.f32 1.0, %v3392
        %v3394 = vmul.f32 %v3391, %v3393
        %v3395 = vadd.f32 %v3391, %v3394
        %vm3396 = vweird.f32 %v2275
        %vm3397 = vweird.f32 %v3391
        %vm3398 = vmor %vm3396, %vm3397
        %v3399 = vsel %vm3398, %v3391, %v3395
        %v3400 = vand.u32 2147483647, %v2275
        %vm3401 = vcmp.eq.f32.partialorder %v3400, 8.507059e+37
        %v3402 = vand.u32 %v2275, 2147483648
        %v3403 = vor.u32 1.1754944e-38, %v3402
        %v3404 = vsel %vm3401, %v3403, %v3399
        %v3405 = vmul.f32 1.0, %v3404
        %v3406 = vrcp.pop %v2276
        %v3407 = vmul.f32 %v2276, %v3406
        %v3408 = vsub.f32 1.0, %v3407
        %v3409 = vmul.f32 %v3406, %v3408
        %v3410 = vadd.f32 %v3406, %v3409
        %vm3411 = vweird.f32 %v2276
        %vm3412 = vweird.f32 %v3406
        %vm3413 = vmor %vm3411, %vm3412
        %v3414 = vsel %vm3413, %v3406, %v3410
        %v3415 = vand.u32 2147483647, %v2276
        %vm3416 = vcmp.eq.f32.partialorder %v3415, 8.507059e+37
        %v3417 = vand.u32 %v2276, 2147483648
        %v3418 = vor.u32 1.1754944e-38, %v3417
        %v3419 = vsel %vm3416, %v3418, %v3414
        %v3420 = vmul.f32 1.0, %v3419
        %v3421 = vrcp.pop %v2277
        %v3422 = vmul.f32 %v2277, %v3421
        %v3423 = vsub.f32 1.0, %v3422
        %v3424 = vmul.f32 %v3421, %v3423
        %v3425 = vadd.f32 %v3421, %v3424
        %vm3426 = vweird.f32 %v2277
        %vm3427 = vweird.f32 %v3421
        %vm3428 = vmor %vm3426, %vm3427
        %v3429 = vsel %vm3428, %v3421, %v3425
        %v3430 = vand.u32 2147483647, %v2277
        %vm3431 = vcmp.eq.f32.partialorder %v3430, 8.507059e+37
        %v3432 = vand.u32 %v2277, 2147483648
        %v3433 = vor.u32 1.1754944e-38, %v3432
        %v3434 = vsel %vm3431, %v3433, %v3429
        %v3435 = vmul.f32 1.0, %v3434
        %v3436 = vrcp.pop %v2278
        %v3437 = vmul.f32 %v2278, %v3436
        %v3438 = vsub.f32 1.0, %v3437
        %v3439 = vmul.f32 %v3436, %v3438
        %v3440 = vadd.f32 %v3436, %v3439
        %vm3441 = vweird.f32 %v2278
        %vm3442 = vweird.f32 %v3436
        %vm3443 = vmor %vm3441, %vm3442
        %v3444 = vsel %vm3443, %v3436, %v3440
        %v3445 = vand.u32 2147483647, %v2278
        %vm3446 = vcmp.eq.f32.partialorder %v3445, 8.507059e+37
        %v3447 = vand.u32 %v2278, 2147483648
        %v3448 = vor.u32 1.1754944e-38, %v3447
        %v3449 = vsel %vm3446, %v3448, %v3444
        %v3450 = vmul.f32 1.0, %v3449
        %v3451 = vrcp.pop %v2279
        %v3452 = vmul.f32 %v2279, %v3451
        %v3453 = vsub.f32 1.0, %v3452
        %v3454 = vmul.f32 %v3451, %v3453
        %v3455 = vadd.f32 %v3451, %v3454
        %vm3456 = vweird.f32 %v2279
        %vm3457 = vweird.f32 %v3451
        %vm3458 = vmor %vm3456, %vm3457
        %v3459 = vsel %vm3458, %v3451, %v3455
        %v3460 = vand.u32 2147483647, %v2279
        %vm3461 = vcmp.eq.f32.partialorder %v3460, 8.507059e+37
        %v3462 = vand.u32 %v2279, 2147483648
        %v3463 = vor.u32 1.1754944e-38, %v3462
        %v3464 = vsel %vm3461, %v3463, %v3459
        %v3465 = vmul.f32 1.0, %v3464
        %v3466 = vrcp.pop %v2280
        %v3467 = vmul.f32 %v2280, %v3466
        %v3468 = vsub.f32 1.0, %v3467
        %v3469 = vmul.f32 %v3466, %v3468
        %v3470 = vadd.f32 %v3466, %v3469
        %vm3471 = vweird.f32 %v2280
        %vm3472 = vweird.f32 %v3466
        %vm3473 = vmor %vm3471, %vm3472
        %v3474 = vsel %vm3473, %v3466, %v3470
        %v3475 = vand.u32 2147483647, %v2280
        %vm3476 = vcmp.eq.f32.partialorder %v3475, 8.507059e+37
        %v3477 = vand.u32 %v2280, 2147483648
        %v3478 = vor.u32 1.1754944e-38, %v3477
        %v3479 = vsel %vm3476, %v3478, %v3474
        %v3480 = vmul.f32 1.0, %v3479
        %v3481 = vrcp.pop %v2281
        %v3482 = vmul.f32 %v2281, %v3481
        %v3483 = vsub.f32 1.0, %v3482
        %v3484 = vmul.f32 %v3481, %v3483
        %v3485 = vadd.f32 %v3481, %v3484
        %vm3486 = vweird.f32 %v2281
        %vm3487 = vweird.f32 %v3481
        %vm3488 = vmor %vm3486, %vm3487
        %v3489 = vsel %vm3488, %v3481, %v3485
        %v3490 = vand.u32 2147483647, %v2281
        %vm3491 = vcmp.eq.f32.partialorder %v3490, 8.507059e+37
        %v3492 = vand.u32 %v2281, 2147483648
        %v3493 = vor.u32 1.1754944e-38, %v3492
        %v3494 = vsel %vm3491, %v3493, %v3489
        %v3495 = vmul.f32 1.0, %v3494
        %v3496 = vrcp.pop %v2282
        %v3497 = vmul.f32 %v2282, %v3496
        %v3498 = vsub.f32 1.0, %v3497
        %v3499 = vmul.f32 %v3496, %v3498
        %v3500 = vadd.f32 %v3496, %v3499
        %vm3501 = vweird.f32 %v2282
        %vm3502 = vweird.f32 %v3496
        %vm3503 = vmor %vm3501, %vm3502
        %v3504 = vsel %vm3503, %v3496, %v3500
        %v3505 = vand.u32 2147483647, %v2282
        %vm3506 = vcmp.eq.f32.partialorder %v3505, 8.507059e+37
        %v3507 = vand.u32 %v2282, 2147483648
        %v3508 = vor.u32 1.1754944e-38, %v3507
        %v3509 = vsel %vm3506, %v3508, %v3504
        %v3510 = vmul.f32 1.0, %v3509
        %v3511 = vrcp.pop %v2283
        %v3512 = vmul.f32 %v2283, %v3511
        %v3513 = vsub.f32 1.0, %v3512
        %v3514 = vmul.f32 %v3511, %v3513
        %v3515 = vadd.f32 %v3511, %v3514
        %vm3516 = vweird.f32 %v2283
        %vm3517 = vweird.f32 %v3511
        %vm3518 = vmor %vm3516, %vm3517
        %v3519 = vsel %vm3518, %v3511, %v3515
        %v3520 = vand.u32 2147483647, %v2283
        %vm3521 = vcmp.eq.f32.partialorder %v3520, 8.507059e+37
        %v3522 = vand.u32 %v2283, 2147483648
        %v3523 = vor.u32 1.1754944e-38, %v3522
        %v3524 = vsel %vm3521, %v3523, %v3519
        %v3525 = vmul.f32 1.0, %v3524
        %v3526 = vrcp.pop %v2284
        %v3527 = vmul.f32 %v2284, %v3526
        %v3528 = vsub.f32 1.0, %v3527
        %v3529 = vmul.f32 %v3526, %v3528
        %v3530 = vadd.f32 %v3526, %v3529
        %vm3531 = vweird.f32 %v2284
        %vm3532 = vweird.f32 %v3526
        %vm3533 = vmor %vm3531, %vm3532
        %v3534 = vsel %vm3533, %v3526, %v3530
        %v3535 = vand.u32 2147483647, %v2284
        %vm3536 = vcmp.eq.f32.partialorder %v3535, 8.507059e+37
        %v3537 = vand.u32 %v2284, 2147483648
        %v3538 = vor.u32 1.1754944e-38, %v3537
        %v3539 = vsel %vm3536, %v3538, %v3534
        %v3540 = vmul.f32 1.0, %v3539
        %v3541 = vrcp.pop %v2285
        %v3542 = vmul.f32 %v2285, %v3541
        %v3543 = vsub.f32 1.0, %v3542
        %v3544 = vmul.f32 %v3541, %v3543
        %v3545 = vadd.f32 %v3541, %v3544
        %vm3546 = vweird.f32 %v2285
        %vm3547 = vweird.f32 %v3541
        %vm3548 = vmor %vm3546, %vm3547
        %v3549 = vsel %vm3548, %v3541, %v3545
        %v3550 = vand.u32 2147483647, %v2285
        %vm3551 = vcmp.eq.f32.partialorder %v3550, 8.507059e+37
        %v3552 = vand.u32 %v2285, 2147483648
        %v3553 = vor.u32 1.1754944e-38, %v3552
        %v3554 = vsel %vm3551, %v3553, %v3549
        %v3555 = vmul.f32 1.0, %v3554
        %v3556 = vrcp.pop %v2286
        %v3557 = vmul.f32 %v2286, %v3556
        %v3558 = vsub.f32 1.0, %v3557
        %v3559 = vmul.f32 %v3556, %v3558
        %v3560 = vadd.f32 %v3556, %v3559
        %vm3561 = vweird.f32 %v2286
        %vm3562 = vweird.f32 %v3556
        %vm3563 = vmor %vm3561, %vm3562
        %v3564 = vsel %vm3563, %v3556, %v3560
        %v3565 = vand.u32 2147483647, %v2286
        %vm3566 = vcmp.eq.f32.partialorder %v3565, 8.507059e+37
        %v3567 = vand.u32 %v2286, 2147483648
        %v3568 = vor.u32 1.1754944e-38, %v3567
        %v3569 = vsel %vm3566, %v3568, %v3564
        %v3570 = vmul.f32 1.0, %v3569
        %v3571 = vrcp.pop %v2287
        %v3572 = vmul.f32 %v2287, %v3571
        %v3573 = vsub.f32 1.0, %v3572
        %v3574 = vmul.f32 %v3571, %v3573
        %v3575 = vadd.f32 %v3571, %v3574
        %vm3576 = vweird.f32 %v2287
        %vm3577 = vweird.f32 %v3571
        %vm3578 = vmor %vm3576, %vm3577
        %v3579 = vsel %vm3578, %v3571, %v3575
        %v3580 = vand.u32 2147483647, %v2287
        %vm3581 = vcmp.eq.f32.partialorder %v3580, 8.507059e+37
        %v3582 = vand.u32 %v2287, 2147483648
        %v3583 = vor.u32 1.1754944e-38, %v3582
        %v3584 = vsel %vm3581, %v3583, %v3579
        %v3585 = vmul.f32 1.0, %v3584
        %v3586 = vrcp.pop %v2288
        %v3587 = vmul.f32 %v2288, %v3586
        %v3588 = vsub.f32 1.0, %v3587
        %v3589 = vmul.f32 %v3586, %v3588
        %v3590 = vadd.f32 %v3586, %v3589
        %vm3591 = vweird.f32 %v2288
        %vm3592 = vweird.f32 %v3586
        %vm3593 = vmor %vm3591, %vm3592
        %v3594 = vsel %vm3593, %v3586, %v3590
        %v3595 = vand.u32 2147483647, %v2288
        %vm3596 = vcmp.eq.f32.partialorder %v3595, 8.507059e+37
        %v3597 = vand.u32 %v2288, 2147483648
        %v3598 = vor.u32 1.1754944e-38, %v3597
        %v3599 = vsel %vm3596, %v3598, %v3594
        %v3600 = vmul.f32 1.0, %v3599
        %v3601 = vrcp.pop %v2289
        %v3602 = vmul.f32 %v2289, %v3601
        %v3603 = vsub.f32 1.0, %v3602
        %v3604 = vmul.f32 %v3601, %v3603
        %v3605 = vadd.f32 %v3601, %v3604
        %vm3606 = vweird.f32 %v2289
        %vm3607 = vweird.f32 %v3601
        %vm3608 = vmor %vm3606, %vm3607
        %v3609 = vsel %vm3608, %v3601, %v3605
        %v3610 = vand.u32 2147483647, %v2289
        %vm3611 = vcmp.eq.f32.partialorder %v3610, 8.507059e+37
        %v3612 = vand.u32 %v2289, 2147483648
        %v3613 = vor.u32 1.1754944e-38, %v3612
        %v3614 = vsel %vm3611, %v3613, %v3609
        %v3615 = vmul.f32 1.0, %v3614
        %v3616 = vrcp.pop %v2290
        %v3617 = vmul.f32 %v2290, %v3616
        %v3618 = vsub.f32 1.0, %v3617
        %v3619 = vmul.f32 %v3616, %v3618
        %v3620 = vadd.f32 %v3616, %v3619
        %vm3621 = vweird.f32 %v2290
        %vm3622 = vweird.f32 %v3616
        %vm3623 = vmor %vm3621, %vm3622
        %v3624 = vsel %vm3623, %v3616, %v3620
        %v3625 = vand.u32 2147483647, %v2290
        %vm3626 = vcmp.eq.f32.partialorder %v3625, 8.507059e+37
        %v3627 = vand.u32 %v2290, 2147483648
        %v3628 = vor.u32 1.1754944e-38, %v3627
        %v3629 = vsel %vm3626, %v3628, %v3624
        %v3630 = vmul.f32 1.0, %v3629
        %v3631 = vrcp.pop %v2291
        %v3632 = vmul.f32 %v2291, %v3631
        %v3633 = vsub.f32 1.0, %v3632
        %v3634 = vmul.f32 %v3631, %v3633
        %v3635 = vadd.f32 %v3631, %v3634
        %vm3636 = vweird.f32 %v2291
        %vm3637 = vweird.f32 %v3631
        %vm3638 = vmor %vm3636, %vm3637
        %v3639 = vsel %vm3638, %v3631, %v3635
        %v3640 = vand.u32 2147483647, %v2291
        %vm3641 = vcmp.eq.f32.partialorder %v3640, 8.507059e+37
        %v3642 = vand.u32 %v2291, 2147483648
        %v3643 = vor.u32 1.1754944e-38, %v3642
        %v3644 = vsel %vm3641, %v3643, %v3639
        %v3645 = vmul.f32 1.0, %v3644
        %v3646 = vrcp.pop %v2292
        %v3647 = vmul.f32 %v2292, %v3646
        %v3648 = vsub.f32 1.0, %v3647
        %v3649 = vmul.f32 %v3646, %v3648
        %v3650 = vadd.f32 %v3646, %v3649
        %vm3651 = vweird.f32 %v2292
        %vm3652 = vweird.f32 %v3646
        %vm3653 = vmor %vm3651, %vm3652
        %v3654 = vsel %vm3653, %v3646, %v3650
        %v3655 = vand.u32 2147483647, %v2292
        %vm3656 = vcmp.eq.f32.partialorder %v3655, 8.507059e+37
        %v3657 = vand.u32 %v2292, 2147483648
        %v3658 = vor.u32 1.1754944e-38, %v3657
        %v3659 = vsel %vm3656, %v3658, %v3654
        %v3660 = vmul.f32 1.0, %v3659
        %v3661 = vrcp.pop %v2293
        %v3662 = vmul.f32 %v2293, %v3661
        %v3663 = vsub.f32 1.0, %v3662
        %v3664 = vmul.f32 %v3661, %v3663
        %v3665 = vadd.f32 %v3661, %v3664
        %vm3666 = vweird.f32 %v2293
        %vm3667 = vweird.f32 %v3661
        %vm3668 = vmor %vm3666, %vm3667
        %v3669 = vsel %vm3668, %v3661, %v3665
        %v3670 = vand.u32 2147483647, %v2293
        %vm3671 = vcmp.eq.f32.partialorder %v3670, 8.507059e+37
        %v3672 = vand.u32 %v2293, 2147483648
        %v3673 = vor.u32 1.1754944e-38, %v3672
        %v3674 = vsel %vm3671, %v3673, %v3669
        %v3675 = vmul.f32 1.0, %v3674
        %v3676 = vrcp.pop %v2294
        %v3677 = vmul.f32 %v2294, %v3676
        %v3678 = vsub.f32 1.0, %v3677
        %v3679 = vmul.f32 %v3676, %v3678
        %v3680 = vadd.f32 %v3676, %v3679
        %vm3681 = vweird.f32 %v2294
        %vm3682 = vweird.f32 %v3676
        %vm3683 = vmor %vm3681, %vm3682
        %v3684 = vsel %vm3683, %v3676, %v3680
        %v3685 = vand.u32 2147483647, %v2294
        %vm3686 = vcmp.eq.f32.partialorder %v3685, 8.507059e+37
        %v3687 = vand.u32 %v2294, 2147483648
        %v3688 = vor.u32 1.1754944e-38, %v3687
        %v3689 = vsel %vm3686, %v3688, %v3684
        %v3690 = vmul.f32 1.0, %v3689
        %v3691 = vrcp.pop %v2295
        %v3692 = vmul.f32 %v2295, %v3691
        %v3693 = vsub.f32 1.0, %v3692
        %v3694 = vmul.f32 %v3691, %v3693
        %v3695 = vadd.f32 %v3691, %v3694
        %vm3696 = vweird.f32 %v2295
        %vm3697 = vweird.f32 %v3691
        %vm3698 = vmor %vm3696, %vm3697
        %v3699 = vsel %vm3698, %v3691, %v3695
        %v3700 = vand.u32 2147483647, %v2295
        %vm3701 = vcmp.eq.f32.partialorder %v3700, 8.507059e+37
        %v3702 = vand.u32 %v2295, 2147483648
        %v3703 = vor.u32 1.1754944e-38, %v3702
        %v3704 = vsel %vm3701, %v3703, %v3699
        %v3705 = vmul.f32 1.0, %v3704
        %v3706 = vrcp.pop %v2296
        %v3707 = vmul.f32 %v2296, %v3706
        %v3708 = vsub.f32 1.0, %v3707
        %v3709 = vmul.f32 %v3706, %v3708
        %v3710 = vadd.f32 %v3706, %v3709
        %vm3711 = vweird.f32 %v2296
        %vm3712 = vweird.f32 %v3706
        %vm3713 = vmor %vm3711, %vm3712
        %v3714 = vsel %vm3713, %v3706, %v3710
        %v3715 = vand.u32 2147483647, %v2296
        %vm3716 = vcmp.eq.f32.partialorder %v3715, 8.507059e+37
        %v3717 = vand.u32 %v2296, 2147483648
        %v3718 = vor.u32 1.1754944e-38, %v3717
        %v3719 = vsel %vm3716, %v3718, %v3714
        %v3720 = vmul.f32 1.0, %v3719
        %v3721 = vrcp.pop %v2297
        %v3722 = vmul.f32 %v2297, %v3721
        %v3723 = vsub.f32 1.0, %v3722
        %v3724 = vmul.f32 %v3721, %v3723
        %v3725 = vadd.f32 %v3721, %v3724
        %vm3726 = vweird.f32 %v2297
        %vm3727 = vweird.f32 %v3721
        %vm3728 = vmor %vm3726, %vm3727
        %v3729 = vsel %vm3728, %v3721, %v3725
        %v3730 = vand.u32 2147483647, %v2297
        %vm3731 = vcmp.eq.f32.partialorder %v3730, 8.507059e+37
        %v3732 = vand.u32 %v2297, 2147483648
        %v3733 = vor.u32 1.1754944e-38, %v3732
        %v3734 = vsel %vm3731, %v3733, %v3729
        %v3735 = vmul.f32 1.0, %v3734
        %v3736 = vrcp.pop %v2298
        %v3737 = vmul.f32 %v2298, %v3736
        %v3738 = vsub.f32 1.0, %v3737
        %v3739 = vmul.f32 %v3736, %v3738
        %v3740 = vadd.f32 %v3736, %v3739
        %vm3741 = vweird.f32 %v2298
        %vm3742 = vweird.f32 %v3736
        %vm3743 = vmor %vm3741, %vm3742
        %v3744 = vsel %vm3743, %v3736, %v3740
        %v3745 = vand.u32 2147483647, %v2298
        %vm3746 = vcmp.eq.f32.partialorder %v3745, 8.507059e+37
        %v3747 = vand.u32 %v2298, 2147483648
        %v3748 = vor.u32 1.1754944e-38, %v3747
        %v3749 = vsel %vm3746, %v3748, %v3744
        %v3750 = vmul.f32 1.0, %v3749
        %v3751 = vrcp.pop %v2299
        %v3752 = vmul.f32 %v2299, %v3751
        %v3753 = vsub.f32 1.0, %v3752
        %v3754 = vmul.f32 %v3751, %v3753
        %v3755 = vadd.f32 %v3751, %v3754
        %vm3756 = vweird.f32 %v2299
        %vm3757 = vweird.f32 %v3751
        %vm3758 = vmor %vm3756, %vm3757
        %v3759 = vsel %vm3758, %v3751, %v3755
        %v3760 = vand.u32 2147483647, %v2299
        %vm3761 = vcmp.eq.f32.partialorder %v3760, 8.507059e+37
        %v3762 = vand.u32 %v2299, 2147483648
        %v3763 = vor.u32 1.1754944e-38, %v3762
        %v3764 = vsel %vm3761, %v3763, %v3759
        %v3765 = vmul.f32 1.0, %v3764
        %v3766 = vrcp.pop %v2300
        %v3767 = vmul.f32 %v2300, %v3766
        %v3768 = vsub.f32 1.0, %v3767
        %v3769 = vmul.f32 %v3766, %v3768
        %v3770 = vadd.f32 %v3766, %v3769
        %vm3771 = vweird.f32 %v2300
        %vm3772 = vweird.f32 %v3766
        %vm3773 = vmor %vm3771, %vm3772
        %v3774 = vsel %vm3773, %v3766, %v3770
        %v3775 = vand.u32 2147483647, %v2300
        %vm3776 = vcmp.eq.f32.partialorder %v3775, 8.507059e+37
        %v3777 = vand.u32 %v2300, 2147483648
        %v3778 = vor.u32 1.1754944e-38, %v3777
        %v3779 = vsel %vm3776, %v3778, %v3774
        %v3780 = vmul.f32 1.0, %v3779
        %v3781 = vrcp.pop %v2301
        %v3782 = vmul.f32 %v2301, %v3781
        %v3783 = vsub.f32 1.0, %v3782
        %v3784 = vmul.f32 %v3781, %v3783
        %v3785 = vadd.f32 %v3781, %v3784
        %vm3786 = vweird.f32 %v2301
        %vm3787 = vweird.f32 %v3781
        %vm3788 = vmor %vm3786, %vm3787
        %v3789 = vsel %vm3788, %v3781, %v3785
        %v3790 = vand.u32 2147483647, %v2301
        %vm3791 = vcmp.eq.f32.partialorder %v3790, 8.507059e+37
        %v3792 = vand.u32 %v2301, 2147483648
        %v3793 = vor.u32 1.1754944e-38, %v3792
        %v3794 = vsel %vm3791, %v3793, %v3789
        %v3795 = vmul.f32 1.0, %v3794
        %v3796 = vrcp.pop %v2302
        %v3797 = vmul.f32 %v2302, %v3796
        %v3798 = vsub.f32 1.0, %v3797
        %v3799 = vmul.f32 %v3796, %v3798
        %v3800 = vadd.f32 %v3796, %v3799
        %vm3801 = vweird.f32 %v2302
        %vm3802 = vweird.f32 %v3796
        %vm3803 = vmor %vm3801, %vm3802
        %v3804 = vsel %vm3803, %v3796, %v3800
        %v3805 = vand.u32 2147483647, %v2302
        %vm3806 = vcmp.eq.f32.partialorder %v3805, 8.507059e+37
        %v3807 = vand.u32 %v2302, 2147483648
        %v3808 = vor.u32 1.1754944e-38, %v3807
        %v3809 = vsel %vm3806, %v3808, %v3804
        %v3810 = vmul.f32 1.0, %v3809
        %v3811 = vrcp.pop %v2303
        %v3812 = vmul.f32 %v2303, %v3811
        %v3813 = vsub.f32 1.0, %v3812
        %v3814 = vmul.f32 %v3811, %v3813
        %v3815 = vadd.f32 %v3811, %v3814
        %vm3816 = vweird.f32 %v2303
        %vm3817 = vweird.f32 %v3811
        %vm3818 = vmor %vm3816, %vm3817
        %v3819 = vsel %vm3818, %v3811, %v3815
        %v3820 = vand.u32 2147483647, %v2303
        %vm3821 = vcmp.eq.f32.partialorder %v3820, 8.507059e+37
        %v3822 = vand.u32 %v2303, 2147483648
        %v3823 = vor.u32 1.1754944e-38, %v3822
        %v3824 = vsel %vm3821, %v3823, %v3819
        %v3825 = vmul.f32 1.0, %v3824
        %v3826 = vrcp.pop %v2304
        %v3827 = vmul.f32 %v2304, %v3826
        %v3828 = vsub.f32 1.0, %v3827
        %v3829 = vmul.f32 %v3826, %v3828
        %v3830 = vadd.f32 %v3826, %v3829
        %vm3831 = vweird.f32 %v2304
        %vm3832 = vweird.f32 %v3826
        %vm3833 = vmor %vm3831, %vm3832
        %v3834 = vsel %vm3833, %v3826, %v3830
        %v3835 = vand.u32 2147483647, %v2304
        %vm3836 = vcmp.eq.f32.partialorder %v3835, 8.507059e+37
        %v3837 = vand.u32 %v2304, 2147483648
        %v3838 = vor.u32 1.1754944e-38, %v3837
        %v3839 = vsel %vm3836, %v3838, %v3834
        %v3840 = vmul.f32 1.0, %v3839
        %v3841 = vrcp.pop %v2305
        %v3842 = vmul.f32 %v2305, %v3841
        %v3843 = vsub.f32 1.0, %v3842
        %v3844 = vmul.f32 %v3841, %v3843
        %v3845 = vadd.f32 %v3841, %v3844
        %vm3846 = vweird.f32 %v2305
        %vm3847 = vweird.f32 %v3841
        %vm3848 = vmor %vm3846, %vm3847
        %v3849 = vsel %vm3848, %v3841, %v3845
        %v3850 = vand.u32 2147483647, %v2305
        %vm3851 = vcmp.eq.f32.partialorder %v3850, 8.507059e+37
        %v3852 = vand.u32 %v2305, 2147483648
        %v3853 = vor.u32 1.1754944e-38, %v3852
        %v3854 = vsel %vm3851, %v3853, %v3849
        %v3855 = vmul.f32 1.0, %v3854
        %v3856 = vrcp.pop %v2306
        %v3857 = vmul.f32 %v2306, %v3856
        %v3858 = vsub.f32 1.0, %v3857
        %v3859 = vmul.f32 %v3856, %v3858
        %v3860 = vadd.f32 %v3856, %v3859
        %vm3861 = vweird.f32 %v2306
        %vm3862 = vweird.f32 %v3856
        %vm3863 = vmor %vm3861, %vm3862
        %v3864 = vsel %vm3863, %v3856, %v3860
        %v3865 = vand.u32 2147483647, %v2306
        %vm3866 = vcmp.eq.f32.partialorder %v3865, 8.507059e+37
        %v3867 = vand.u32 %v2306, 2147483648
        %v3868 = vor.u32 1.1754944e-38, %v3867
        %v3869 = vsel %vm3866, %v3868, %v3864
        %v3870 = vmul.f32 1.0, %v3869
        %v3871 = vrcp.pop %v2307
        %v3872 = vmul.f32 %v2307, %v3871
        %v3873 = vsub.f32 1.0, %v3872
        %v3874 = vmul.f32 %v3871, %v3873
        %v3875 = vadd.f32 %v3871, %v3874
        %vm3876 = vweird.f32 %v2307
        %vm3877 = vweird.f32 %v3871
        %vm3878 = vmor %vm3876, %vm3877
        %v3879 = vsel %vm3878, %v3871, %v3875
        %v3880 = vand.u32 2147483647, %v2307
        %vm3881 = vcmp.eq.f32.partialorder %v3880, 8.507059e+37
        %v3882 = vand.u32 %v2307, 2147483648
        %v3883 = vor.u32 1.1754944e-38, %v3882
        %v3884 = vsel %vm3881, %v3883, %v3879
        %v3885 = vmul.f32 1.0, %v3884
        %v3886 = vrcp.pop %v2308
        %v3887 = vmul.f32 %v2308, %v3886
        %v3888 = vsub.f32 1.0, %v3887
        %v3889 = vmul.f32 %v3886, %v3888
        %v3890 = vadd.f32 %v3886, %v3889
        %vm3891 = vweird.f32 %v2308
        %vm3892 = vweird.f32 %v3886
        %vm3893 = vmor %vm3891, %vm3892
        %v3894 = vsel %vm3893, %v3886, %v3890
        %v3895 = vand.u32 2147483647, %v2308
        %vm3896 = vcmp.eq.f32.partialorder %v3895, 8.507059e+37
        %v3897 = vand.u32 %v2308, 2147483648
        %v3898 = vor.u32 1.1754944e-38, %v3897
        %v3899 = vsel %vm3896, %v3898, %v3894
        %v3900 = vmul.f32 1.0, %v3899
        %v3901 = vrcp.pop %v2309
        %v3902 = vmul.f32 %v2309, %v3901
        %v3903 = vsub.f32 1.0, %v3902
        %v3904 = vmul.f32 %v3901, %v3903
        %v3905 = vadd.f32 %v3901, %v3904
        %vm3906 = vweird.f32 %v2309
        %vm3907 = vweird.f32 %v3901
        %vm3908 = vmor %vm3906, %vm3907
        %v3909 = vsel %vm3908, %v3901, %v3905
        %v3910 = vand.u32 2147483647, %v2309
        %vm3911 = vcmp.eq.f32.partialorder %v3910, 8.507059e+37
        %v3912 = vand.u32 %v2309, 2147483648
        %v3913 = vor.u32 1.1754944e-38, %v3912
        %v3914 = vsel %vm3911, %v3913, %v3909
        %v3915 = vmul.f32 1.0, %v3914
        %v3916 = vrcp.pop %v2310
        %v3917 = vmul.f32 %v2310, %v3916
        %v3918 = vsub.f32 1.0, %v3917
        %v3919 = vmul.f32 %v3916, %v3918
        %v3920 = vadd.f32 %v3916, %v3919
        %vm3921 = vweird.f32 %v2310
        %vm3922 = vweird.f32 %v3916
        %vm3923 = vmor %vm3921, %vm3922
        %v3924 = vsel %vm3923, %v3916, %v3920
        %v3925 = vand.u32 2147483647, %v2310
        %vm3926 = vcmp.eq.f32.partialorder %v3925, 8.507059e+37
        %v3927 = vand.u32 %v2310, 2147483648
        %v3928 = vor.u32 1.1754944e-38, %v3927
        %v3929 = vsel %vm3926, %v3928, %v3924
        %v3930 = vmul.f32 1.0, %v3929
        %v3931 = vrcp.pop %v2311
        %v3932 = vmul.f32 %v2311, %v3931
        %v3933 = vsub.f32 1.0, %v3932
        %v3934 = vmul.f32 %v3931, %v3933
        %v3935 = vadd.f32 %v3931, %v3934
        %vm3936 = vweird.f32 %v2311
        %vm3937 = vweird.f32 %v3931
        %vm3938 = vmor %vm3936, %vm3937
        %v3939 = vsel %vm3938, %v3931, %v3935
        %v3940 = vand.u32 2147483647, %v2311
        %vm3941 = vcmp.eq.f32.partialorder %v3940, 8.507059e+37
        %v3942 = vand.u32 %v2311, 2147483648
        %v3943 = vor.u32 1.1754944e-38, %v3942
        %v3944 = vsel %vm3941, %v3943, %v3939
        %v3945 = vmul.f32 1.0, %v3944
        %v3946 = vrcp.pop %v2312
        %v3947 = vmul.f32 %v2312, %v3946
        %v3948 = vsub.f32 1.0, %v3947
        %v3949 = vmul.f32 %v3946, %v3948
        %v3950 = vadd.f32 %v3946, %v3949
        %vm3951 = vweird.f32 %v2312
        %vm3952 = vweird.f32 %v3946
        %vm3953 = vmor %vm3951, %vm3952
        %v3954 = vsel %vm3953, %v3946, %v3950
        %v3955 = vand.u32 2147483647, %v2312
        %vm3956 = vcmp.eq.f32.partialorder %v3955, 8.507059e+37
        %v3957 = vand.u32 %v2312, 2147483648
        %v3958 = vor.u32 1.1754944e-38, %v3957
        %v3959 = vsel %vm3956, %v3958, %v3954
        %v3960 = vmul.f32 1.0, %v3959
        %v3961 = vrcp.pop %v2313
        %v3962 = vmul.f32 %v2313, %v3961
        %v3963 = vsub.f32 1.0, %v3962
        %v3964 = vmul.f32 %v3961, %v3963
        %v3965 = vadd.f32 %v3961, %v3964
        %vm3966 = vweird.f32 %v2313
        %vm3967 = vweird.f32 %v3961
        %vm3968 = vmor %vm3966, %vm3967
        %v3969 = vsel %vm3968, %v3961, %v3965
        %v3970 = vand.u32 2147483647, %v2313
        %vm3971 = vcmp.eq.f32.partialorder %v3970, 8.507059e+37
        %v3972 = vand.u32 %v2313, 2147483648
        %v3973 = vor.u32 1.1754944e-38, %v3972
        %v3974 = vsel %vm3971, %v3973, %v3969
        %v3975 = vmul.f32 1.0, %v3974
        %v3976 = vrcp.pop %v2314
        %v3977 = vmul.f32 %v2314, %v3976
        %v3978 = vsub.f32 1.0, %v3977
        %v3979 = vmul.f32 %v3976, %v3978
        %v3980 = vadd.f32 %v3976, %v3979
        %vm3981 = vweird.f32 %v2314
        %vm3982 = vweird.f32 %v3976
        %vm3983 = vmor %vm3981, %vm3982
        %v3984 = vsel %vm3983, %v3976, %v3980
        %v3985 = vand.u32 2147483647, %v2314
        %vm3986 = vcmp.eq.f32.partialorder %v3985, 8.507059e+37
        %v3987 = vand.u32 %v2314, 2147483648
        %v3988 = vor.u32 1.1754944e-38, %v3987
        %v3989 = vsel %vm3986, %v3988, %v3984
        %v3990 = vmul.f32 1.0, %v3989
        %v3991 = vrcp.pop %v2315
        %v3992 = vmul.f32 %v2315, %v3991
        %v3993 = vsub.f32 1.0, %v3992
        %v3994 = vmul.f32 %v3991, %v3993
        %v3995 = vadd.f32 %v3991, %v3994
        %vm3996 = vweird.f32 %v2315
        %vm3997 = vweird.f32 %v3991
        %vm3998 = vmor %vm3996, %vm3997
        %v3999 = vsel %vm3998, %v3991, %v3995
        %v4000 = vand.u32 2147483647, %v2315
        %vm4001 = vcmp.eq.f32.partialorder %v4000, 8.507059e+37
        %v4002 = vand.u32 %v2315, 2147483648
        %v4003 = vor.u32 1.1754944e-38, %v4002
        %v4004 = vsel %vm4001, %v4003, %v3999
        %v4005 = vmul.f32 1.0, %v4004
        %v4006 = vrcp.pop %v2316
        %v4007 = vmul.f32 %v2316, %v4006
        %v4008 = vsub.f32 1.0, %v4007
        %v4009 = vmul.f32 %v4006, %v4008
        %v4010 = vadd.f32 %v4006, %v4009
        %vm4011 = vweird.f32 %v2316
        %vm4012 = vweird.f32 %v4006
        %vm4013 = vmor %vm4011, %vm4012
        %v4014 = vsel %vm4013, %v4006, %v4010
        %v4015 = vand.u32 2147483647, %v2316
        %vm4016 = vcmp.eq.f32.partialorder %v4015, 8.507059e+37
        %v4017 = vand.u32 %v2316, 2147483648
        %v4018 = vor.u32 1.1754944e-38, %v4017
        %v4019 = vsel %vm4016, %v4018, %v4014
        %v4020 = vmul.f32 1.0, %v4019
        %v4021 = vrcp.pop %v2317
        %v4022 = vmul.f32 %v2317, %v4021
        %v4023 = vsub.f32 1.0, %v4022
        %v4024 = vmul.f32 %v4021, %v4023
        %v4025 = vadd.f32 %v4021, %v4024
        %vm4026 = vweird.f32 %v2317
        %vm4027 = vweird.f32 %v4021
        %vm4028 = vmor %vm4026, %vm4027
        %v4029 = vsel %vm4028, %v4021, %v4025
        %v4030 = vand.u32 2147483647, %v2317
        %vm4031 = vcmp.eq.f32.partialorder %v4030, 8.507059e+37
        %v4032 = vand.u32 %v2317, 2147483648
        %v4033 = vor.u32 1.1754944e-38, %v4032
        %v4034 = vsel %vm4031, %v4033, %v4029
        %v4035 = vmul.f32 1.0, %v4034
        %v4036 = vrcp.pop %v2318
        %v4037 = vmul.f32 %v2318, %v4036
        %v4038 = vsub.f32 1.0, %v4037
        %v4039 = vmul.f32 %v4036, %v4038
        %v4040 = vadd.f32 %v4036, %v4039
        %vm4041 = vweird.f32 %v2318
        %vm4042 = vweird.f32 %v4036
        %vm4043 = vmor %vm4041, %vm4042
        %v4044 = vsel %vm4043, %v4036, %v4040
        %v4045 = vand.u32 2147483647, %v2318
        %vm4046 = vcmp.eq.f32.partialorder %v4045, 8.507059e+37
        %v4047 = vand.u32 %v2318, 2147483648
        %v4048 = vor.u32 1.1754944e-38, %v4047
        %v4049 = vsel %vm4046, %v4048, %v4044
        %v4050 = vmul.f32 1.0, %v4049
        %v4051 = vrcp.pop %v2319
        %v4052 = vmul.f32 %v2319, %v4051
        %v4053 = vsub.f32 1.0, %v4052
        %v4054 = vmul.f32 %v4051, %v4053
        %v4055 = vadd.f32 %v4051, %v4054
        %vm4056 = vweird.f32 %v2319
        %vm4057 = vweird.f32 %v4051
        %vm4058 = vmor %vm4056, %vm4057
        %v4059 = vsel %vm4058, %v4051, %v4055
        %v4060 = vand.u32 2147483647, %v2319
        %vm4061 = vcmp.eq.f32.partialorder %v4060, 8.507059e+37
        %v4062 = vand.u32 %v2319, 2147483648
        %v4063 = vor.u32 1.1754944e-38, %v4062
        %v4064 = vsel %vm4061, %v4063, %v4059
        %v4065 = vmul.f32 1.0, %v4064
        %v4066 = vrcp.pop %v2320
        %v4067 = vmul.f32 %v2320, %v4066
        %v4068 = vsub.f32 1.0, %v4067
        %v4069 = vmul.f32 %v4066, %v4068
        %v4070 = vadd.f32 %v4066, %v4069
        %vm4071 = vweird.f32 %v2320
        %vm4072 = vweird.f32 %v4066
        %vm4073 = vmor %vm4071, %vm4072
        %v4074 = vsel %vm4073, %v4066, %v4070
        %v4075 = vand.u32 2147483647, %v2320
        %vm4076 = vcmp.eq.f32.partialorder %v4075, 8.507059e+37
        %v4077 = vand.u32 %v2320, 2147483648
        %v4078 = vor.u32 1.1754944e-38, %v4077
        %v4079 = vsel %vm4076, %v4078, %v4074
        %v4080 = vmul.f32 1.0, %v4079
        %v4081 = vrcp.pop %v2321
        %v4082 = vmul.f32 %v2321, %v4081
        %v4083 = vsub.f32 1.0, %v4082
        %v4084 = vmul.f32 %v4081, %v4083
        %v4085 = vadd.f32 %v4081, %v4084
        %vm4086 = vweird.f32 %v2321
        %vm4087 = vweird.f32 %v4081
        %vm4088 = vmor %vm4086, %vm4087
        %v4089 = vsel %vm4088, %v4081, %v4085
        %v4090 = vand.u32 2147483647, %v2321
        %vm4091 = vcmp.eq.f32.partialorder %v4090, 8.507059e+37
        %v4092 = vand.u32 %v2321, 2147483648
        %v4093 = vor.u32 1.1754944e-38, %v4092
        %v4094 = vsel %vm4091, %v4093, %v4089
        %v4095 = vmul.f32 1.0, %v4094
        %v4096 = vrcp.pop %v2322
        %v4097 = vmul.f32 %v2322, %v4096
        %v4098 = vsub.f32 1.0, %v4097
        %v4099 = vmul.f32 %v4096, %v4098
        %v4100 = vadd.f32 %v4096, %v4099
        %vm4101 = vweird.f32 %v2322
        %vm4102 = vweird.f32 %v4096
        %vm4103 = vmor %vm4101, %vm4102
        %v4104 = vsel %vm4103, %v4096, %v4100
        %v4105 = vand.u32 2147483647, %v2322
        %vm4106 = vcmp.eq.f32.partialorder %v4105, 8.507059e+37
        %v4107 = vand.u32 %v2322, 2147483648
        %v4108 = vor.u32 1.1754944e-38, %v4107
        %v4109 = vsel %vm4106, %v4108, %v4104
        %v4110 = vmul.f32 1.0, %v4109
        %v4111 = vrcp.pop %v2323
        %v4112 = vmul.f32 %v2323, %v4111
        %v4113 = vsub.f32 1.0, %v4112
        %v4114 = vmul.f32 %v4111, %v4113
        %v4115 = vadd.f32 %v4111, %v4114
        %vm4116 = vweird.f32 %v2323
        %vm4117 = vweird.f32 %v4111
        %vm4118 = vmor %vm4116, %vm4117
        %v4119 = vsel %vm4118, %v4111, %v4115
        %v4120 = vand.u32 2147483647, %v2323
        %vm4121 = vcmp.eq.f32.partialorder %v4120, 8.507059e+37
        %v4122 = vand.u32 %v2323, 2147483648
        %v4123 = vor.u32 1.1754944e-38, %v4122
        %v4124 = vsel %vm4121, %v4123, %v4119
        %v4125 = vmul.f32 1.0, %v4124
        %v4126 = vrcp.pop %v2324
        %v4127 = vmul.f32 %v2324, %v4126
        %v4128 = vsub.f32 1.0, %v4127
        %v4129 = vmul.f32 %v4126, %v4128
        %v4130 = vadd.f32 %v4126, %v4129
        %vm4131 = vweird.f32 %v2324
        %vm4132 = vweird.f32 %v4126
        %vm4133 = vmor %vm4131, %vm4132
        %v4134 = vsel %vm4133, %v4126, %v4130
        %v4135 = vand.u32 2147483647, %v2324
        %vm4136 = vcmp.eq.f32.partialorder %v4135, 8.507059e+37
        %v4137 = vand.u32 %v2324, 2147483648
        %v4138 = vor.u32 1.1754944e-38, %v4137
        %v4139 = vsel %vm4136, %v4138, %v4134
        %v4140 = vmul.f32 1.0, %v4139
        %v4141 = vrcp.pop %v2325
        %v4142 = vmul.f32 %v2325, %v4141
        %v4143 = vsub.f32 1.0, %v4142
        %v4144 = vmul.f32 %v4141, %v4143
        %v4145 = vadd.f32 %v4141, %v4144
        %vm4146 = vweird.f32 %v2325
        %vm4147 = vweird.f32 %v4141
        %vm4148 = vmor %vm4146, %vm4147
        %v4149 = vsel %vm4148, %v4141, %v4145
        %v4150 = vand.u32 2147483647, %v2325
        %vm4151 = vcmp.eq.f32.partialorder %v4150, 8.507059e+37
        %v4152 = vand.u32 %v2325, 2147483648
        %v4153 = vor.u32 1.1754944e-38, %v4152
        %v4154 = vsel %vm4151, %v4153, %v4149
        %v4155 = vmul.f32 1.0, %v4154
        %v4156 = vrcp.pop %v2326
        %v4157 = vmul.f32 %v2326, %v4156
        %v4158 = vsub.f32 1.0, %v4157
        %v4159 = vmul.f32 %v4156, %v4158
        %v4160 = vadd.f32 %v4156, %v4159
        %vm4161 = vweird.f32 %v2326
        %vm4162 = vweird.f32 %v4156
        %vm4163 = vmor %vm4161, %vm4162
        %v4164 = vsel %vm4163, %v4156, %v4160
        %v4165 = vand.u32 2147483647, %v2326
        %vm4166 = vcmp.eq.f32.partialorder %v4165, 8.507059e+37
        %v4167 = vand.u32 %v2326, 2147483648
        %v4168 = vor.u32 1.1754944e-38, %v4167
        %v4169 = vsel %vm4166, %v4168, %v4164
        %v4170 = vmul.f32 1.0, %v4169
        %v4171 = vrcp.pop %v2327
        %v4172 = vmul.f32 %v2327, %v4171
        %v4173 = vsub.f32 1.0, %v4172
        %v4174 = vmul.f32 %v4171, %v4173
        %v4175 = vadd.f32 %v4171, %v4174
        %vm4176 = vweird.f32 %v2327
        %vm4177 = vweird.f32 %v4171
        %vm4178 = vmor %vm4176, %vm4177
        %v4179 = vsel %vm4178, %v4171, %v4175
        %v4180 = vand.u32 2147483647, %v2327
        %vm4181 = vcmp.eq.f32.partialorder %v4180, 8.507059e+37
        %v4182 = vand.u32 %v2327, 2147483648
        %v4183 = vor.u32 1.1754944e-38, %v4182
        %v4184 = vsel %vm4181, %v4183, %v4179
        %v4185 = vmul.f32 1.0, %v4184
        %v4186 = vrcp.pop %v2328
        %v4187 = vmul.f32 %v2328, %v4186
        %v4188 = vsub.f32 1.0, %v4187
        %v4189 = vmul.f32 %v4186, %v4188
        %v4190 = vadd.f32 %v4186, %v4189
        %vm4191 = vweird.f32 %v2328
        %vm4192 = vweird.f32 %v4186
        %vm4193 = vmor %vm4191, %vm4192
        %v4194 = vsel %vm4193, %v4186, %v4190
        %v4195 = vand.u32 2147483647, %v2328
        %vm4196 = vcmp.eq.f32.partialorder %v4195, 8.507059e+37
        %v4197 = vand.u32 %v2328, 2147483648
        %v4198 = vor.u32 1.1754944e-38, %v4197
        %v4199 = vsel %vm4196, %v4198, %v4194
        %v4200 = vmul.f32 1.0, %v4199
        %v4201 = vrcp.pop %v2329
        %v4202 = vmul.f32 %v2329, %v4201
        %v4203 = vsub.f32 1.0, %v4202
        %v4204 = vmul.f32 %v4201, %v4203
        %v4205 = vadd.f32 %v4201, %v4204
        %vm4206 = vweird.f32 %v2329
        %vm4207 = vweird.f32 %v4201
        %vm4208 = vmor %vm4206, %vm4207
        %v4209 = vsel %vm4208, %v4201, %v4205
        %v4210 = vand.u32 2147483647, %v2329
        %vm4211 = vcmp.eq.f32.partialorder %v4210, 8.507059e+37
        %v4212 = vand.u32 %v2329, 2147483648
        %v4213 = vor.u32 1.1754944e-38, %v4212
        %v4214 = vsel %vm4211, %v4213, %v4209
        %v4215 = vmul.f32 1.0, %v4214
        %v4216 = vrcp.pop %v2330
        %v4217 = vmul.f32 %v2330, %v4216
        %v4218 = vsub.f32 1.0, %v4217
        %v4219 = vmul.f32 %v4216, %v4218
        %v4220 = vadd.f32 %v4216, %v4219
        %vm4221 = vweird.f32 %v2330
        %vm4222 = vweird.f32 %v4216
        %vm4223 = vmor %vm4221, %vm4222
        %v4224 = vsel %vm4223, %v4216, %v4220
        %v4225 = vand.u32 2147483647, %v2330
        %vm4226 = vcmp.eq.f32.partialorder %v4225, 8.507059e+37
        %v4227 = vand.u32 %v2330, 2147483648
        %v4228 = vor.u32 1.1754944e-38, %v4227
        %v4229 = vsel %vm4226, %v4228, %v4224
        %v4230 = vmul.f32 1.0, %v4229
        %v4231 = vrcp.pop %v2331
        %v4232 = vmul.f32 %v2331, %v4231
        %v4233 = vsub.f32 1.0, %v4232
        %v4234 = vmul.f32 %v4231, %v4233
        %v4235 = vadd.f32 %v4231, %v4234
        %vm4236 = vweird.f32 %v2331
        %vm4237 = vweird.f32 %v4231
        %vm4238 = vmor %vm4236, %vm4237
        %v4239 = vsel %vm4238, %v4231, %v4235
        %v4240 = vand.u32 2147483647, %v2331
        %vm4241 = vcmp.eq.f32.partialorder %v4240, 8.507059e+37
        %v4242 = vand.u32 %v2331, 2147483648
        %v4243 = vor.u32 1.1754944e-38, %v4242
        %v4244 = vsel %vm4241, %v4243, %v4239
        %v4245 = vmul.f32 1.0, %v4244
        %v4246 = vrcp.pop %v2332
        %v4247 = vmul.f32 %v2332, %v4246
        %v4248 = vsub.f32 1.0, %v4247
        %v4249 = vmul.f32 %v4246, %v4248
        %v4250 = vadd.f32 %v4246, %v4249
        %vm4251 = vweird.f32 %v2332
        %vm4252 = vweird.f32 %v4246
        %vm4253 = vmor %vm4251, %vm4252
        %v4254 = vsel %vm4253, %v4246, %v4250
        %v4255 = vand.u32 2147483647, %v2332
        %vm4256 = vcmp.eq.f32.partialorder %v4255, 8.507059e+37
        %v4257 = vand.u32 %v2332, 2147483648
        %v4258 = vor.u32 1.1754944e-38, %v4257
        %v4259 = vsel %vm4256, %v4258, %v4254
        %v4260 = vmul.f32 1.0, %v4259
        %v4261 = vrcp.pop %v2333
        %v4262 = vmul.f32 %v2333, %v4261
        %v4263 = vsub.f32 1.0, %v4262
        %v4264 = vmul.f32 %v4261, %v4263
        %v4265 = vadd.f32 %v4261, %v4264
        %vm4266 = vweird.f32 %v2333
        %vm4267 = vweird.f32 %v4261
        %vm4268 = vmor %vm4266, %vm4267
        %v4269 = vsel %vm4268, %v4261, %v4265
        %v4270 = vand.u32 2147483647, %v2333
        %vm4271 = vcmp.eq.f32.partialorder %v4270, 8.507059e+37
        %v4272 = vand.u32 %v2333, 2147483648
        %v4273 = vor.u32 1.1754944e-38, %v4272
        %v4274 = vsel %vm4271, %v4273, %v4269
        %v4275 = vmul.f32 1.0, %v4274
        %v4276 = vrcp.pop %v2334
        %v4277 = vmul.f32 %v2334, %v4276
        %v4278 = vsub.f32 1.0, %v4277
        %v4279 = vmul.f32 %v4276, %v4278
        %v4280 = vadd.f32 %v4276, %v4279
        %vm4281 = vweird.f32 %v2334
        %vm4282 = vweird.f32 %v4276
        %vm4283 = vmor %vm4281, %vm4282
        %v4284 = vsel %vm4283, %v4276, %v4280
        %v4285 = vand.u32 2147483647, %v2334
        %vm4286 = vcmp.eq.f32.partialorder %v4285, 8.507059e+37
        %v4287 = vand.u32 %v2334, 2147483648
        %v4288 = vor.u32 1.1754944e-38, %v4287
        %v4289 = vsel %vm4286, %v4288, %v4284
        %v4290 = vmul.f32 1.0, %v4289
        %v4291 = vrcp.pop %v2335
        %v4292 = vmul.f32 %v2335, %v4291
        %v4293 = vsub.f32 1.0, %v4292
        %v4294 = vmul.f32 %v4291, %v4293
        %v4295 = vadd.f32 %v4291, %v4294
        %vm4296 = vweird.f32 %v2335
        %vm4297 = vweird.f32 %v4291
        %vm4298 = vmor %vm4296, %vm4297
        %v4299 = vsel %vm4298, %v4291, %v4295
        %v4300 = vand.u32 2147483647, %v2335
        %vm4301 = vcmp.eq.f32.partialorder %v4300, 8.507059e+37
        %v4302 = vand.u32 %v2335, 2147483648
        %v4303 = vor.u32 1.1754944e-38, %v4302
        %v4304 = vsel %vm4301, %v4303, %v4299
        %v4305 = vmul.f32 1.0, %v4304
        %v4306 = vrcp.pop %v2336
        %v4307 = vmul.f32 %v2336, %v4306
        %v4308 = vsub.f32 1.0, %v4307
        %v4309 = vmul.f32 %v4306, %v4308
        %v4310 = vadd.f32 %v4306, %v4309
        %vm4311 = vweird.f32 %v2336
        %vm4312 = vweird.f32 %v4306
        %vm4313 = vmor %vm4311, %vm4312
        %v4314 = vsel %vm4313, %v4306, %v4310
        %v4315 = vand.u32 2147483647, %v2336
        %vm4316 = vcmp.eq.f32.partialorder %v4315, 8.507059e+37
        %v4317 = vand.u32 %v2336, 2147483648
        %v4318 = vor.u32 1.1754944e-38, %v4317
        %v4319 = vsel %vm4316, %v4318, %v4314
        %v4320 = vmul.f32 1.0, %v4319
        %v4321 = vrcp.pop %v2337
        %v4322 = vmul.f32 %v2337, %v4321
        %v4323 = vsub.f32 1.0, %v4322
        %v4324 = vmul.f32 %v4321, %v4323
        %v4325 = vadd.f32 %v4321, %v4324
        %vm4326 = vweird.f32 %v2337
        %vm4327 = vweird.f32 %v4321
        %vm4328 = vmor %vm4326, %vm4327
        %v4329 = vsel %vm4328, %v4321, %v4325
        %v4330 = vand.u32 2147483647, %v2337
        %vm4331 = vcmp.eq.f32.partialorder %v4330, 8.507059e+37
        %v4332 = vand.u32 %v2337, 2147483648
        %v4333 = vor.u32 1.1754944e-38, %v4332
        %v4334 = vsel %vm4331, %v4333, %v4329
        %v4335 = vmul.f32 1.0, %v4334
        %v4336 = vrcp.pop %v2338
        %v4337 = vmul.f32 %v2338, %v4336
        %v4338 = vsub.f32 1.0, %v4337
        %v4339 = vmul.f32 %v4336, %v4338
        %v4340 = vadd.f32 %v4336, %v4339
        %vm4341 = vweird.f32 %v2338
        %vm4342 = vweird.f32 %v4336
        %vm4343 = vmor %vm4341, %vm4342
        %v4344 = vsel %vm4343, %v4336, %v4340
        %v4345 = vand.u32 2147483647, %v2338
        %vm4346 = vcmp.eq.f32.partialorder %v4345, 8.507059e+37
        %v4347 = vand.u32 %v2338, 2147483648
        %v4348 = vor.u32 1.1754944e-38, %v4347
        %v4349 = vsel %vm4346, %v4348, %v4344
        %v4350 = vmul.f32 1.0, %v4349
        %v4351 = vrcp.pop %v2339
        %v4352 = vmul.f32 %v2339, %v4351
        %v4353 = vsub.f32 1.0, %v4352
        %v4354 = vmul.f32 %v4351, %v4353
        %v4355 = vadd.f32 %v4351, %v4354
        %vm4356 = vweird.f32 %v2339
        %vm4357 = vweird.f32 %v4351
        %vm4358 = vmor %vm4356, %vm4357
        %v4359 = vsel %vm4358, %v4351, %v4355
        %v4360 = vand.u32 2147483647, %v2339
        %vm4361 = vcmp.eq.f32.partialorder %v4360, 8.507059e+37
        %v4362 = vand.u32 %v2339, 2147483648
        %v4363 = vor.u32 1.1754944e-38, %v4362
        %v4364 = vsel %vm4361, %v4363, %v4359
        %v4365 = vmul.f32 1.0, %v4364
        %v4366 = vrcp.pop %v2340
        %v4367 = vmul.f32 %v2340, %v4366
        %v4368 = vsub.f32 1.0, %v4367
        %v4369 = vmul.f32 %v4366, %v4368
        %v4370 = vadd.f32 %v4366, %v4369
        %vm4371 = vweird.f32 %v2340
        %vm4372 = vweird.f32 %v4366
        %vm4373 = vmor %vm4371, %vm4372
        %v4374 = vsel %vm4373, %v4366, %v4370
        %v4375 = vand.u32 2147483647, %v2340
        %vm4376 = vcmp.eq.f32.partialorder %v4375, 8.507059e+37
        %v4377 = vand.u32 %v2340, 2147483648
        %v4378 = vor.u32 1.1754944e-38, %v4377
        %v4379 = vsel %vm4376, %v4378, %v4374
        %v4380 = vmul.f32 1.0, %v4379
        %v4381 = vrcp.pop %v2341
        %v4382 = vmul.f32 %v2341, %v4381
        %v4383 = vsub.f32 1.0, %v4382
        %v4384 = vmul.f32 %v4381, %v4383
        %v4385 = vadd.f32 %v4381, %v4384
        %vm4386 = vweird.f32 %v2341
        %vm4387 = vweird.f32 %v4381
        %vm4388 = vmor %vm4386, %vm4387
        %v4389 = vsel %vm4388, %v4381, %v4385
        %v4390 = vand.u32 2147483647, %v2341
        %vm4391 = vcmp.eq.f32.partialorder %v4390, 8.507059e+37
        %v4392 = vand.u32 %v2341, 2147483648
        %v4393 = vor.u32 1.1754944e-38, %v4392
        %v4394 = vsel %vm4391, %v4393, %v4389
        %v4395 = vmul.f32 1.0, %v4394
        %v4396 = vrcp.pop %v2342
        %v4397 = vmul.f32 %v2342, %v4396
        %v4398 = vsub.f32 1.0, %v4397
        %v4399 = vmul.f32 %v4396, %v4398
        %v4400 = vadd.f32 %v4396, %v4399
        %vm4401 = vweird.f32 %v2342
        %vm4402 = vweird.f32 %v4396
        %vm4403 = vmor %vm4401, %vm4402
        %v4404 = vsel %vm4403, %v4396, %v4400
        %v4405 = vand.u32 2147483647, %v2342
        %vm4406 = vcmp.eq.f32.partialorder %v4405, 8.507059e+37
        %v4407 = vand.u32 %v2342, 2147483648
        %v4408 = vor.u32 1.1754944e-38, %v4407
        %v4409 = vsel %vm4406, %v4408, %v4404
        %v4410 = vmul.f32 1.0, %v4409
        %v4411 = vrcp.pop %v2343
        %v4412 = vmul.f32 %v2343, %v4411
        %v4413 = vsub.f32 1.0, %v4412
        %v4414 = vmul.f32 %v4411, %v4413
        %v4415 = vadd.f32 %v4411, %v4414
        %vm4416 = vweird.f32 %v2343
        %vm4417 = vweird.f32 %v4411
        %vm4418 = vmor %vm4416, %vm4417
        %v4419 = vsel %vm4418, %v4411, %v4415
        %v4420 = vand.u32 2147483647, %v2343
        %vm4421 = vcmp.eq.f32.partialorder %v4420, 8.507059e+37
        %v4422 = vand.u32 %v2343, 2147483648
        %v4423 = vor.u32 1.1754944e-38, %v4422
        %v4424 = vsel %vm4421, %v4423, %v4419
        %v4425 = vmul.f32 1.0, %v4424
        %v4426 = vrcp.pop %v2344
        %v4427 = vmul.f32 %v2344, %v4426
        %v4428 = vsub.f32 1.0, %v4427
        %v4429 = vmul.f32 %v4426, %v4428
        %v4430 = vadd.f32 %v4426, %v4429
        %vm4431 = vweird.f32 %v2344
        %vm4432 = vweird.f32 %v4426
        %vm4433 = vmor %vm4431, %vm4432
        %v4434 = vsel %vm4433, %v4426, %v4430
        %v4435 = vand.u32 2147483647, %v2344
        %vm4436 = vcmp.eq.f32.partialorder %v4435, 8.507059e+37
        %v4437 = vand.u32 %v2344, 2147483648
        %v4438 = vor.u32 1.1754944e-38, %v4437
        %v4439 = vsel %vm4436, %v4438, %v4434
        %v4440 = vmul.f32 1.0, %v4439
        %v4441 = vrcp.pop %v2345
        %v4442 = vmul.f32 %v2345, %v4441
        %v4443 = vsub.f32 1.0, %v4442
        %v4444 = vmul.f32 %v4441, %v4443
        %v4445 = vadd.f32 %v4441, %v4444
        %vm4446 = vweird.f32 %v2345
        %vm4447 = vweird.f32 %v4441
        %vm4448 = vmor %vm4446, %vm4447
        %v4449 = vsel %vm4448, %v4441, %v4445
        %v4450 = vand.u32 2147483647, %v2345
        %vm4451 = vcmp.eq.f32.partialorder %v4450, 8.507059e+37
        %v4452 = vand.u32 %v2345, 2147483648
        %v4453 = vor.u32 1.1754944e-38, %v4452
        %v4454 = vsel %vm4451, %v4453, %v4449
        %v4455 = vmul.f32 1.0, %v4454
        %v4456 = vrcp.pop %v2346
        %v4457 = vmul.f32 %v2346, %v4456
        %v4458 = vsub.f32 1.0, %v4457
        %v4459 = vmul.f32 %v4456, %v4458
        %v4460 = vadd.f32 %v4456, %v4459
        %vm4461 = vweird.f32 %v2346
        %vm4462 = vweird.f32 %v4456
        %vm4463 = vmor %vm4461, %vm4462
        %v4464 = vsel %vm4463, %v4456, %v4460
        %v4465 = vand.u32 2147483647, %v2346
        %vm4466 = vcmp.eq.f32.partialorder %v4465, 8.507059e+37
        %v4467 = vand.u32 %v2346, 2147483648
        %v4468 = vor.u32 1.1754944e-38, %v4467
        %v4469 = vsel %vm4466, %v4468, %v4464
        %v4470 = vmul.f32 1.0, %v4469
        %v4471 = vrcp.pop %v2347
        %v4472 = vmul.f32 %v2347, %v4471
        %v4473 = vsub.f32 1.0, %v4472
        %v4474 = vmul.f32 %v4471, %v4473
        %v4475 = vadd.f32 %v4471, %v4474
        %vm4476 = vweird.f32 %v2347
        %vm4477 = vweird.f32 %v4471
        %vm4478 = vmor %vm4476, %vm4477
        %v4479 = vsel %vm4478, %v4471, %v4475
        %v4480 = vand.u32 2147483647, %v2347
        %vm4481 = vcmp.eq.f32.partialorder %v4480, 8.507059e+37
        %v4482 = vand.u32 %v2347, 2147483648
        %v4483 = vor.u32 1.1754944e-38, %v4482
        %v4484 = vsel %vm4481, %v4483, %v4479
        %v4485 = vmul.f32 1.0, %v4484
        %v4486 = vrcp.pop %v2348
        %v4487 = vmul.f32 %v2348, %v4486
        %v4488 = vsub.f32 1.0, %v4487
        %v4489 = vmul.f32 %v4486, %v4488
        %v4490 = vadd.f32 %v4486, %v4489
        %vm4491 = vweird.f32 %v2348
        %vm4492 = vweird.f32 %v4486
        %vm4493 = vmor %vm4491, %vm4492
        %v4494 = vsel %vm4493, %v4486, %v4490
        %v4495 = vand.u32 2147483647, %v2348
        %vm4496 = vcmp.eq.f32.partialorder %v4495, 8.507059e+37
        %v4497 = vand.u32 %v2348, 2147483648
        %v4498 = vor.u32 1.1754944e-38, %v4497
        %v4499 = vsel %vm4496, %v4498, %v4494
        %v4500 = vmul.f32 1.0, %v4499
        %v4501 = vrcp.pop %v2349
        %v4502 = vmul.f32 %v2349, %v4501
        %v4503 = vsub.f32 1.0, %v4502
        %v4504 = vmul.f32 %v4501, %v4503
        %v4505 = vadd.f32 %v4501, %v4504
        %vm4506 = vweird.f32 %v2349
        %vm4507 = vweird.f32 %v4501
        %vm4508 = vmor %vm4506, %vm4507
        %v4509 = vsel %vm4508, %v4501, %v4505
        %v4510 = vand.u32 2147483647, %v2349
        %vm4511 = vcmp.eq.f32.partialorder %v4510, 8.507059e+37
        %v4512 = vand.u32 %v2349, 2147483648
        %v4513 = vor.u32 1.1754944e-38, %v4512
        %v4514 = vsel %vm4511, %v4513, %v4509
        %v4515 = vmul.f32 1.0, %v4514
        %v4516 = vrcp.pop %v2350
        %v4517 = vmul.f32 %v2350, %v4516
        %v4518 = vsub.f32 1.0, %v4517
        %v4519 = vmul.f32 %v4516, %v4518
        %v4520 = vadd.f32 %v4516, %v4519
        %vm4521 = vweird.f32 %v2350
        %vm4522 = vweird.f32 %v4516
        %vm4523 = vmor %vm4521, %vm4522
        %v4524 = vsel %vm4523, %v4516, %v4520
        %v4525 = vand.u32 2147483647, %v2350
        %vm4526 = vcmp.eq.f32.partialorder %v4525, 8.507059e+37
        %v4527 = vand.u32 %v2350, 2147483648
        %v4528 = vor.u32 1.1754944e-38, %v4527
        %v4529 = vsel %vm4526, %v4528, %v4524
        %v4530 = vmul.f32 1.0, %v4529
        %v4531 = vrcp.pop %v2351
        %v4532 = vmul.f32 %v2351, %v4531
        %v4533 = vsub.f32 1.0, %v4532
        %v4534 = vmul.f32 %v4531, %v4533
        %v4535 = vadd.f32 %v4531, %v4534
        %vm4536 = vweird.f32 %v2351
        %vm4537 = vweird.f32 %v4531
        %vm4538 = vmor %vm4536, %vm4537
        %v4539 = vsel %vm4538, %v4531, %v4535
        %v4540 = vand.u32 2147483647, %v2351
        %vm4541 = vcmp.eq.f32.partialorder %v4540, 8.507059e+37
        %v4542 = vand.u32 %v2351, 2147483648
        %v4543 = vor.u32 1.1754944e-38, %v4542
        %v4544 = vsel %vm4541, %v4543, %v4539
        %v4545 = vmul.f32 1.0, %v4544
        %v4546 = vrcp.pop %v2352
        %v4547 = vmul.f32 %v2352, %v4546
        %v4548 = vsub.f32 1.0, %v4547
        %v4549 = vmul.f32 %v4546, %v4548
        %v4550 = vadd.f32 %v4546, %v4549
        %vm4551 = vweird.f32 %v2352
        %vm4552 = vweird.f32 %v4546
        %vm4553 = vmor %vm4551, %vm4552
        %v4554 = vsel %vm4553, %v4546, %v4550
        %v4555 = vand.u32 2147483647, %v2352
        %vm4556 = vcmp.eq.f32.partialorder %v4555, 8.507059e+37
        %v4557 = vand.u32 %v2352, 2147483648
        %v4558 = vor.u32 1.1754944e-38, %v4557
        %v4559 = vsel %vm4556, %v4558, %v4554
        %v4560 = vmul.f32 1.0, %v4559
        %v4561 = vrcp.pop %v2353
        %v4562 = vmul.f32 %v2353, %v4561
        %v4563 = vsub.f32 1.0, %v4562
        %v4564 = vmul.f32 %v4561, %v4563
        %v4565 = vadd.f32 %v4561, %v4564
        %vm4566 = vweird.f32 %v2353
        %vm4567 = vweird.f32 %v4561
        %vm4568 = vmor %vm4566, %vm4567
        %v4569 = vsel %vm4568, %v4561, %v4565
        %v4570 = vand.u32 2147483647, %v2353
        %vm4571 = vcmp.eq.f32.partialorder %v4570, 8.507059e+37
        %v4572 = vand.u32 %v2353, 2147483648
        %v4573 = vor.u32 1.1754944e-38, %v4572
        %v4574 = vsel %vm4571, %v4573, %v4569
        %v4575 = vmul.f32 1.0, %v4574
        %v4576 = vrcp.pop %v2354
        %v4577 = vmul.f32 %v2354, %v4576
        %v4578 = vsub.f32 1.0, %v4577
        %v4579 = vmul.f32 %v4576, %v4578
        %v4580 = vadd.f32 %v4576, %v4579
        %vm4581 = vweird.f32 %v2354
        %vm4582 = vweird.f32 %v4576
        %vm4583 = vmor %vm4581, %vm4582
        %v4584 = vsel %vm4583, %v4576, %v4580
        %v4585 = vand.u32 2147483647, %v2354
        %vm4586 = vcmp.eq.f32.partialorder %v4585, 8.507059e+37
        %v4587 = vand.u32 %v2354, 2147483648
        %v4588 = vor.u32 1.1754944e-38, %v4587
        %v4589 = vsel %vm4586, %v4588, %v4584
        %v4590 = vmul.f32 1.0, %v4589
        %v4591 = vrcp.pop %v2355
        %v4592 = vmul.f32 %v2355, %v4591
        %v4593 = vsub.f32 1.0, %v4592
        %v4594 = vmul.f32 %v4591, %v4593
        %v4595 = vadd.f32 %v4591, %v4594
        %vm4596 = vweird.f32 %v2355
        %vm4597 = vweird.f32 %v4591
        %vm4598 = vmor %vm4596, %vm4597
        %v4599 = vsel %vm4598, %v4591, %v4595
        %v4600 = vand.u32 2147483647, %v2355
        %vm4601 = vcmp.eq.f32.partialorder %v4600, 8.507059e+37
        %v4602 = vand.u32 %v2355, 2147483648
        %v4603 = vor.u32 1.1754944e-38, %v4602
        %v4604 = vsel %vm4601, %v4603, %v4599
        %v4605 = vmul.f32 1.0, %v4604
        %v4606 = vrcp.pop %v2356
        %v4607 = vmul.f32 %v2356, %v4606
        %v4608 = vsub.f32 1.0, %v4607
        %v4609 = vmul.f32 %v4606, %v4608
        %v4610 = vadd.f32 %v4606, %v4609
        %vm4611 = vweird.f32 %v2356
        %vm4612 = vweird.f32 %v4606
        %vm4613 = vmor %vm4611, %vm4612
        %v4614 = vsel %vm4613, %v4606, %v4610
        %v4615 = vand.u32 2147483647, %v2356
        %vm4616 = vcmp.eq.f32.partialorder %v4615, 8.507059e+37
        %v4617 = vand.u32 %v2356, 2147483648
        %v4618 = vor.u32 1.1754944e-38, %v4617
        %v4619 = vsel %vm4616, %v4618, %v4614
        %v4620 = vmul.f32 1.0, %v4619
        %v4621 = vrcp.pop %v2357
        %v4622 = vmul.f32 %v2357, %v4621
        %v4623 = vsub.f32 1.0, %v4622
        %v4624 = vmul.f32 %v4621, %v4623
        %v4625 = vadd.f32 %v4621, %v4624
        %vm4626 = vweird.f32 %v2357
        %vm4627 = vweird.f32 %v4621
        %vm4628 = vmor %vm4626, %vm4627
        %v4629 = vsel %vm4628, %v4621, %v4625
        %v4630 = vand.u32 2147483647, %v2357
        %vm4631 = vcmp.eq.f32.partialorder %v4630, 8.507059e+37
        %v4632 = vand.u32 %v2357, 2147483648
        %v4633 = vor.u32 1.1754944e-38, %v4632
        %v4634 = vsel %vm4631, %v4633, %v4629
        %v4635 = vmul.f32 1.0, %v4634
        %v4636 = vrcp.pop %v2358
        %v4637 = vmul.f32 %v2358, %v4636
        %v4638 = vsub.f32 1.0, %v4637
        %v4639 = vmul.f32 %v4636, %v4638
        %v4640 = vadd.f32 %v4636, %v4639
        %vm4641 = vweird.f32 %v2358
        %vm4642 = vweird.f32 %v4636
        %vm4643 = vmor %vm4641, %vm4642
        %v4644 = vsel %vm4643, %v4636, %v4640
        %v4645 = vand.u32 2147483647, %v2358
        %vm4646 = vcmp.eq.f32.partialorder %v4645, 8.507059e+37
        %v4647 = vand.u32 %v2358, 2147483648
        %v4648 = vor.u32 1.1754944e-38, %v4647
        %v4649 = vsel %vm4646, %v4648, %v4644
        %v4650 = vmul.f32 1.0, %v4649
        %v4651 = vrcp.pop %v2359
        %v4652 = vmul.f32 %v2359, %v4651
        %v4653 = vsub.f32 1.0, %v4652
        %v4654 = vmul.f32 %v4651, %v4653
        %v4655 = vadd.f32 %v4651, %v4654
        %vm4656 = vweird.f32 %v2359
        %vm4657 = vweird.f32 %v4651
        %vm4658 = vmor %vm4656, %vm4657
        %v4659 = vsel %vm4658, %v4651, %v4655
        %v4660 = vand.u32 2147483647, %v2359
        %vm4661 = vcmp.eq.f32.partialorder %v4660, 8.507059e+37
        %v4662 = vand.u32 %v2359, 2147483648
        %v4663 = vor.u32 1.1754944e-38, %v4662
        %v4664 = vsel %vm4661, %v4663, %v4659
        %v4665 = vmul.f32 1.0, %v4664
        %v4666 = vrcp.pop %v2360
        %v4667 = vmul.f32 %v2360, %v4666
        %v4668 = vsub.f32 1.0, %v4667
        %v4669 = vmul.f32 %v4666, %v4668
        %v4670 = vadd.f32 %v4666, %v4669
        %vm4671 = vweird.f32 %v2360
        %vm4672 = vweird.f32 %v4666
        %vm4673 = vmor %vm4671, %vm4672
        %v4674 = vsel %vm4673, %v4666, %v4670
        %v4675 = vand.u32 2147483647, %v2360
        %vm4676 = vcmp.eq.f32.partialorder %v4675, 8.507059e+37
        %v4677 = vand.u32 %v2360, 2147483648
        %v4678 = vor.u32 1.1754944e-38, %v4677
        %v4679 = vsel %vm4676, %v4678, %v4674
        %v4680 = vmul.f32 1.0, %v4679
        %v4681 = vrcp.pop %v2361
        %v4682 = vmul.f32 %v2361, %v4681
        %v4683 = vsub.f32 1.0, %v4682
        %v4684 = vmul.f32 %v4681, %v4683
        %v4685 = vadd.f32 %v4681, %v4684
        %vm4686 = vweird.f32 %v2361
        %vm4687 = vweird.f32 %v4681
        %vm4688 = vmor %vm4686, %vm4687
        %v4689 = vsel %vm4688, %v4681, %v4685
        %v4690 = vand.u32 2147483647, %v2361
        %vm4691 = vcmp.eq.f32.partialorder %v4690, 8.507059e+37
        %v4692 = vand.u32 %v2361, 2147483648
        %v4693 = vor.u32 1.1754944e-38, %v4692
        %v4694 = vsel %vm4691, %v4693, %v4689
        %v4695 = vmul.f32 1.0, %v4694
        %v4696 = vrcp.pop %v2362
        %v4697 = vmul.f32 %v2362, %v4696
        %v4698 = vsub.f32 1.0, %v4697
        %v4699 = vmul.f32 %v4696, %v4698
        %v4700 = vadd.f32 %v4696, %v4699
        %vm4701 = vweird.f32 %v2362
        %vm4702 = vweird.f32 %v4696
        %vm4703 = vmor %vm4701, %vm4702
        %v4704 = vsel %vm4703, %v4696, %v4700
        %v4705 = vand.u32 2147483647, %v2362
        %vm4706 = vcmp.eq.f32.partialorder %v4705, 8.507059e+37
        %v4707 = vand.u32 %v2362, 2147483648
        %v4708 = vor.u32 1.1754944e-38, %v4707
        %v4709 = vsel %vm4706, %v4708, %v4704
        %v4710 = vmul.f32 1.0, %v4709
        %v4711 = vrcp.pop %v2363
        %v4712 = vmul.f32 %v2363, %v4711
        %v4713 = vsub.f32 1.0, %v4712
        %v4714 = vmul.f32 %v4711, %v4713
        %v4715 = vadd.f32 %v4711, %v4714
        %vm4716 = vweird.f32 %v2363
        %vm4717 = vweird.f32 %v4711
        %vm4718 = vmor %vm4716, %vm4717
        %v4719 = vsel %vm4718, %v4711, %v4715
        %v4720 = vand.u32 2147483647, %v2363
        %vm4721 = vcmp.eq.f32.partialorder %v4720, 8.507059e+37
        %v4722 = vand.u32 %v2363, 2147483648
        %v4723 = vor.u32 1.1754944e-38, %v4722
        %v4724 = vsel %vm4721, %v4723, %v4719
        %v4725 = vmul.f32 1.0, %v4724
        %v4726 = vrcp.pop %v2364
        %v4727 = vmul.f32 %v2364, %v4726
        %v4728 = vsub.f32 1.0, %v4727
        %v4729 = vmul.f32 %v4726, %v4728
        %v4730 = vadd.f32 %v4726, %v4729
        %vm4731 = vweird.f32 %v2364
        %vm4732 = vweird.f32 %v4726
        %vm4733 = vmor %vm4731, %vm4732
        %v4734 = vsel %vm4733, %v4726, %v4730
        %v4735 = vand.u32 2147483647, %v2364
        %vm4736 = vcmp.eq.f32.partialorder %v4735, 8.507059e+37
        %v4737 = vand.u32 %v2364, 2147483648
        %v4738 = vor.u32 1.1754944e-38, %v4737
        %v4739 = vsel %vm4736, %v4738, %v4734
        %v4740 = vmul.f32 1.0, %v4739
        %v4741 = vrcp.pop %v2365
        %v4742 = vmul.f32 %v2365, %v4741
        %v4743 = vsub.f32 1.0, %v4742
        %v4744 = vmul.f32 %v4741, %v4743
        %v4745 = vadd.f32 %v4741, %v4744
        %vm4746 = vweird.f32 %v2365
        %vm4747 = vweird.f32 %v4741
        %vm4748 = vmor %vm4746, %vm4747
        %v4749 = vsel %vm4748, %v4741, %v4745
        %v4750 = vand.u32 2147483647, %v2365
        %vm4751 = vcmp.eq.f32.partialorder %v4750, 8.507059e+37
        %v4752 = vand.u32 %v2365, 2147483648
        %v4753 = vor.u32 1.1754944e-38, %v4752
        %v4754 = vsel %vm4751, %v4753, %v4749
        %v4755 = vmul.f32 1.0, %v4754
        %v4756 = vrcp.pop %v2366
        %v4757 = vmul.f32 %v2366, %v4756
        %v4758 = vsub.f32 1.0, %v4757
        %v4759 = vmul.f32 %v4756, %v4758
        %v4760 = vadd.f32 %v4756, %v4759
        %vm4761 = vweird.f32 %v2366
        %vm4762 = vweird.f32 %v4756
        %vm4763 = vmor %vm4761, %vm4762
        %v4764 = vsel %vm4763, %v4756, %v4760
        %v4765 = vand.u32 2147483647, %v2366
        %vm4766 = vcmp.eq.f32.partialorder %v4765, 8.507059e+37
        %v4767 = vand.u32 %v2366, 2147483648
        %v4768 = vor.u32 1.1754944e-38, %v4767
        %v4769 = vsel %vm4766, %v4768, %v4764
        %v4770 = vmul.f32 1.0, %v4769
        %v4771 = vrcp.pop %v2367
        %v4772 = vmul.f32 %v2367, %v4771
        %v4773 = vsub.f32 1.0, %v4772
        %v4774 = vmul.f32 %v4771, %v4773
        %v4775 = vadd.f32 %v4771, %v4774
        %vm4776 = vweird.f32 %v2367
        %vm4777 = vweird.f32 %v4771
        %vm4778 = vmor %vm4776, %vm4777
        %v4779 = vsel %vm4778, %v4771, %v4775
        %v4780 = vand.u32 2147483647, %v2367
        %vm4781 = vcmp.eq.f32.partialorder %v4780, 8.507059e+37
        %v4782 = vand.u32 %v2367, 2147483648
        %v4783 = vor.u32 1.1754944e-38, %v4782
        %v4784 = vsel %vm4781, %v4783, %v4779
        %v4785 = vmul.f32 1.0, %v4784
        %v4786 = vrcp.pop %v2368
        %v4787 = vmul.f32 %v2368, %v4786
        %v4788 = vsub.f32 1.0, %v4787
        %v4789 = vmul.f32 %v4786, %v4788
        %v4790 = vadd.f32 %v4786, %v4789
        %vm4791 = vweird.f32 %v2368
        %vm4792 = vweird.f32 %v4786
        %vm4793 = vmor %vm4791, %vm4792
        %v4794 = vsel %vm4793, %v4786, %v4790
        %v4795 = vand.u32 2147483647, %v2368
        %vm4796 = vcmp.eq.f32.partialorder %v4795, 8.507059e+37
        %v4797 = vand.u32 %v2368, 2147483648
        %v4798 = vor.u32 1.1754944e-38, %v4797
        %v4799 = vsel %vm4796, %v4798, %v4794
        %v4800 = vmul.f32 1.0, %v4799
        %v4801 = vrcp.pop %v2369
        %v4802 = vmul.f32 %v2369, %v4801
        %v4803 = vsub.f32 1.0, %v4802
        %v4804 = vmul.f32 %v4801, %v4803
        %v4805 = vadd.f32 %v4801, %v4804
        %vm4806 = vweird.f32 %v2369
        %vm4807 = vweird.f32 %v4801
        %vm4808 = vmor %vm4806, %vm4807
        %v4809 = vsel %vm4808, %v4801, %v4805
        %v4810 = vand.u32 2147483647, %v2369
        %vm4811 = vcmp.eq.f32.partialorder %v4810, 8.507059e+37
        %v4812 = vand.u32 %v2369, 2147483648
        %v4813 = vor.u32 1.1754944e-38, %v4812
        %v4814 = vsel %vm4811, %v4813, %v4809
        %v4815 = vmul.f32 1.0, %v4814
        %v4816 = vrcp.pop %v2370
        %v4817 = vmul.f32 %v2370, %v4816
        %v4818 = vsub.f32 1.0, %v4817
        %v4819 = vmul.f32 %v4816, %v4818
        %v4820 = vadd.f32 %v4816, %v4819
        %vm4821 = vweird.f32 %v2370
        %vm4822 = vweird.f32 %v4816
        %vm4823 = vmor %vm4821, %vm4822
        %v4824 = vsel %vm4823, %v4816, %v4820
        %v4825 = vand.u32 2147483647, %v2370
        %vm4826 = vcmp.eq.f32.partialorder %v4825, 8.507059e+37
        %v4827 = vand.u32 %v2370, 2147483648
        %v4828 = vor.u32 1.1754944e-38, %v4827
        %v4829 = vsel %vm4826, %v4828, %v4824
        %v4830 = vmul.f32 1.0, %v4829
        %v4831 = vrcp.pop %v2371
        %v4832 = vmul.f32 %v2371, %v4831
        %v4833 = vsub.f32 1.0, %v4832
        %v4834 = vmul.f32 %v4831, %v4833
        %v4835 = vadd.f32 %v4831, %v4834
        %vm4836 = vweird.f32 %v2371
        %vm4837 = vweird.f32 %v4831
        %vm4838 = vmor %vm4836, %vm4837
        %v4839 = vsel %vm4838, %v4831, %v4835
        %v4840 = vand.u32 2147483647, %v2371
        %vm4841 = vcmp.eq.f32.partialorder %v4840, 8.507059e+37
        %v4842 = vand.u32 %v2371, 2147483648
        %v4843 = vor.u32 1.1754944e-38, %v4842
        %v4844 = vsel %vm4841, %v4843, %v4839
        %v4845 = vmul.f32 1.0, %v4844
        %v4846 = vrcp.pop %v2372
        %v4847 = vmul.f32 %v2372, %v4846
        %v4848 = vsub.f32 1.0, %v4847
        %v4849 = vmul.f32 %v4846, %v4848
        %v4850 = vadd.f32 %v4846, %v4849
        %vm4851 = vweird.f32 %v2372
        %vm4852 = vweird.f32 %v4846
        %vm4853 = vmor %vm4851, %vm4852
        %v4854 = vsel %vm4853, %v4846, %v4850
        %v4855 = vand.u32 2147483647, %v2372
        %vm4856 = vcmp.eq.f32.partialorder %v4855, 8.507059e+37
        %v4857 = vand.u32 %v2372, 2147483648
        %v4858 = vor.u32 1.1754944e-38, %v4857
        %v4859 = vsel %vm4856, %v4858, %v4854
        %v4860 = vmul.f32 1.0, %v4859
        %v4861 = vrcp.pop %v2373
        %v4862 = vmul.f32 %v2373, %v4861
        %v4863 = vsub.f32 1.0, %v4862
        %v4864 = vmul.f32 %v4861, %v4863
        %v4865 = vadd.f32 %v4861, %v4864
        %vm4866 = vweird.f32 %v2373
        %vm4867 = vweird.f32 %v4861
        %vm4868 = vmor %vm4866, %vm4867
        %v4869 = vsel %vm4868, %v4861, %v4865
        %v4870 = vand.u32 2147483647, %v2373
        %vm4871 = vcmp.eq.f32.partialorder %v4870, 8.507059e+37
        %v4872 = vand.u32 %v2373, 2147483648
        %v4873 = vor.u32 1.1754944e-38, %v4872
        %v4874 = vsel %vm4871, %v4873, %v4869
        %v4875 = vmul.f32 1.0, %v4874
        %v4876 = vrcp.pop %v2374
        %v4877 = vmul.f32 %v2374, %v4876
        %v4878 = vsub.f32 1.0, %v4877
        %v4879 = vmul.f32 %v4876, %v4878
        %v4880 = vadd.f32 %v4876, %v4879
        %vm4881 = vweird.f32 %v2374
        %vm4882 = vweird.f32 %v4876
        %vm4883 = vmor %vm4881, %vm4882
        %v4884 = vsel %vm4883, %v4876, %v4880
        %v4885 = vand.u32 2147483647, %v2374
        %vm4886 = vcmp.eq.f32.partialorder %v4885, 8.507059e+37
        %v4887 = vand.u32 %v2374, 2147483648
        %v4888 = vor.u32 1.1754944e-38, %v4887
        %v4889 = vsel %vm4886, %v4888, %v4884
        %v4890 = vmul.f32 1.0, %v4889
        %v4891 = vrcp.pop %v2375
        %v4892 = vmul.f32 %v2375, %v4891
        %v4893 = vsub.f32 1.0, %v4892
        %v4894 = vmul.f32 %v4891, %v4893
        %v4895 = vadd.f32 %v4891, %v4894
        %vm4896 = vweird.f32 %v2375
        %vm4897 = vweird.f32 %v4891
        %vm4898 = vmor %vm4896, %vm4897
        %v4899 = vsel %vm4898, %v4891, %v4895
        %v4900 = vand.u32 2147483647, %v2375
        %vm4901 = vcmp.eq.f32.partialorder %v4900, 8.507059e+37
        %v4902 = vand.u32 %v2375, 2147483648
        %v4903 = vor.u32 1.1754944e-38, %v4902
        %v4904 = vsel %vm4901, %v4903, %v4899
        %v4905 = vmul.f32 1.0, %v4904
        %v4906 = vrcp.pop %v2376
        %v4907 = vmul.f32 %v2376, %v4906
        %v4908 = vsub.f32 1.0, %v4907
        %v4909 = vmul.f32 %v4906, %v4908
        %v4910 = vadd.f32 %v4906, %v4909
        %vm4911 = vweird.f32 %v2376
        %vm4912 = vweird.f32 %v4906
        %vm4913 = vmor %vm4911, %vm4912
        %v4914 = vsel %vm4913, %v4906, %v4910
        %v4915 = vand.u32 2147483647, %v2376
        %vm4916 = vcmp.eq.f32.partialorder %v4915, 8.507059e+37
        %v4917 = vand.u32 %v2376, 2147483648
        %v4918 = vor.u32 1.1754944e-38, %v4917
        %v4919 = vsel %vm4916, %v4918, %v4914
        %v4920 = vmul.f32 1.0, %v4919
        %v4921 = vrcp.pop %v2377
        %v4922 = vmul.f32 %v2377, %v4921
        %v4923 = vsub.f32 1.0, %v4922
        %v4924 = vmul.f32 %v4921, %v4923
        %v4925 = vadd.f32 %v4921, %v4924
        %vm4926 = vweird.f32 %v2377
        %vm4927 = vweird.f32 %v4921
        %vm4928 = vmor %vm4926, %vm4927
        %v4929 = vsel %vm4928, %v4921, %v4925
        %v4930 = vand.u32 2147483647, %v2377
        %vm4931 = vcmp.eq.f32.partialorder %v4930, 8.507059e+37
        %v4932 = vand.u32 %v2377, 2147483648
        %v4933 = vor.u32 1.1754944e-38, %v4932
        %v4934 = vsel %vm4931, %v4933, %v4929
        %v4935 = vmul.f32 1.0, %v4934
        %v4936 = vrcp.pop %v2378
        %v4937 = vmul.f32 %v2378, %v4936
        %v4938 = vsub.f32 1.0, %v4937
        %v4939 = vmul.f32 %v4936, %v4938
        %v4940 = vadd.f32 %v4936, %v4939
        %vm4941 = vweird.f32 %v2378
        %vm4942 = vweird.f32 %v4936
        %vm4943 = vmor %vm4941, %vm4942
        %v4944 = vsel %vm4943, %v4936, %v4940
        %v4945 = vand.u32 2147483647, %v2378
        %vm4946 = vcmp.eq.f32.partialorder %v4945, 8.507059e+37
        %v4947 = vand.u32 %v2378, 2147483648
        %v4948 = vor.u32 1.1754944e-38, %v4947
        %v4949 = vsel %vm4946, %v4948, %v4944
        %v4950 = vmul.f32 1.0, %v4949
        %v4951 = vrcp.pop %v2379
        %v4952 = vmul.f32 %v2379, %v4951
        %v4953 = vsub.f32 1.0, %v4952
        %v4954 = vmul.f32 %v4951, %v4953
        %v4955 = vadd.f32 %v4951, %v4954
        %vm4956 = vweird.f32 %v2379
        %vm4957 = vweird.f32 %v4951
        %vm4958 = vmor %vm4956, %vm4957
        %v4959 = vsel %vm4958, %v4951, %v4955
        %v4960 = vand.u32 2147483647, %v2379
        %vm4961 = vcmp.eq.f32.partialorder %v4960, 8.507059e+37
        %v4962 = vand.u32 %v2379, 2147483648
        %v4963 = vor.u32 1.1754944e-38, %v4962
        %v4964 = vsel %vm4961, %v4963, %v4959
        %v4965 = vmul.f32 1.0, %v4964
        %v4966 = vrcp.pop %v2380
        %v4967 = vmul.f32 %v2380, %v4966
        %v4968 = vsub.f32 1.0, %v4967
        %v4969 = vmul.f32 %v4966, %v4968
        %v4970 = vadd.f32 %v4966, %v4969
        %vm4971 = vweird.f32 %v2380
        %vm4972 = vweird.f32 %v4966
        %vm4973 = vmor %vm4971, %vm4972
        %v4974 = vsel %vm4973, %v4966, %v4970
        %v4975 = vand.u32 2147483647, %v2380
        %vm4976 = vcmp.eq.f32.partialorder %v4975, 8.507059e+37
        %v4977 = vand.u32 %v2380, 2147483648
        %v4978 = vor.u32 1.1754944e-38, %v4977
        %v4979 = vsel %vm4976, %v4978, %v4974
        %v4980 = vmul.f32 1.0, %v4979
        %v4981 = vrcp.pop %v2381
        %v4982 = vmul.f32 %v2381, %v4981
        %v4983 = vsub.f32 1.0, %v4982
        %v4984 = vmul.f32 %v4981, %v4983
        %v4985 = vadd.f32 %v4981, %v4984
        %vm4986 = vweird.f32 %v2381
        %vm4987 = vweird.f32 %v4981
        %vm4988 = vmor %vm4986, %vm4987
        %v4989 = vsel %vm4988, %v4981, %v4985
        %v4990 = vand.u32 2147483647, %v2381
        %vm4991 = vcmp.eq.f32.partialorder %v4990, 8.507059e+37
        %v4992 = vand.u32 %v2381, 2147483648
        %v4993 = vor.u32 1.1754944e-38, %v4992
        %v4994 = vsel %vm4991, %v4993, %v4989
        %v4995 = vmul.f32 1.0, %v4994
        %v4996 = vrcp.pop %v2382
        %v4997 = vmul.f32 %v2382, %v4996
        %v4998 = vsub.f32 1.0, %v4997
        %v4999 = vmul.f32 %v4996, %v4998
        %v5000 = vadd.f32 %v4996, %v4999
        %vm5001 = vweird.f32 %v2382
        %vm5002 = vweird.f32 %v4996
        %vm5003 = vmor %vm5001, %vm5002
        %v5004 = vsel %vm5003, %v4996, %v5000
        %v5005 = vand.u32 2147483647, %v2382
        %vm5006 = vcmp.eq.f32.partialorder %v5005, 8.507059e+37
        %v5007 = vand.u32 %v2382, 2147483648
        %v5008 = vor.u32 1.1754944e-38, %v5007
        %v5009 = vsel %vm5006, %v5008, %v5004
        %v5010 = vmul.f32 1.0, %v5009
        %v5011 = vrcp.pop %v2383
        %v5012 = vmul.f32 %v2383, %v5011
        %v5013 = vsub.f32 1.0, %v5012
        %v5014 = vmul.f32 %v5011, %v5013
        %v5015 = vadd.f32 %v5011, %v5014
        %vm5016 = vweird.f32 %v2383
        %vm5017 = vweird.f32 %v5011
        %vm5018 = vmor %vm5016, %vm5017
        %v5019 = vsel %vm5018, %v5011, %v5015
        %v5020 = vand.u32 2147483647, %v2383
        %vm5021 = vcmp.eq.f32.partialorder %v5020, 8.507059e+37
        %v5022 = vand.u32 %v2383, 2147483648
        %v5023 = vor.u32 1.1754944e-38, %v5022
        %v5024 = vsel %vm5021, %v5023, %v5019
        %v5025 = vmul.f32 1.0, %v5024
        %v5026 = vrcp.pop %v2384
        %v5027 = vmul.f32 %v2384, %v5026
        %v5028 = vsub.f32 1.0, %v5027
        %v5029 = vmul.f32 %v5026, %v5028
        %v5030 = vadd.f32 %v5026, %v5029
        %vm5031 = vweird.f32 %v2384
        %vm5032 = vweird.f32 %v5026
        %vm5033 = vmor %vm5031, %vm5032
        %v5034 = vsel %vm5033, %v5026, %v5030
        %v5035 = vand.u32 2147483647, %v2384
        %vm5036 = vcmp.eq.f32.partialorder %v5035, 8.507059e+37
        %v5037 = vand.u32 %v2384, 2147483648
        %v5038 = vor.u32 1.1754944e-38, %v5037
        %v5039 = vsel %vm5036, %v5038, %v5034
        %v5040 = vmul.f32 1.0, %v5039
        %v5041 = vrcp.pop %v2385
        %v5042 = vmul.f32 %v2385, %v5041
        %v5043 = vsub.f32 1.0, %v5042
        %v5044 = vmul.f32 %v5041, %v5043
        %v5045 = vadd.f32 %v5041, %v5044
        %vm5046 = vweird.f32 %v2385
        %vm5047 = vweird.f32 %v5041
        %vm5048 = vmor %vm5046, %vm5047
        %v5049 = vsel %vm5048, %v5041, %v5045
        %v5050 = vand.u32 2147483647, %v2385
        %vm5051 = vcmp.eq.f32.partialorder %v5050, 8.507059e+37
        %v5052 = vand.u32 %v2385, 2147483648
        %v5053 = vor.u32 1.1754944e-38, %v5052
        %v5054 = vsel %vm5051, %v5053, %v5049
        %v5055 = vmul.f32 1.0, %v5054
        %v5056 = vrcp.pop %v2386
        %v5057 = vmul.f32 %v2386, %v5056
        %v5058 = vsub.f32 1.0, %v5057
        %v5059 = vmul.f32 %v5056, %v5058
        %v5060 = vadd.f32 %v5056, %v5059
        %vm5061 = vweird.f32 %v2386
        %vm5062 = vweird.f32 %v5056
        %vm5063 = vmor %vm5061, %vm5062
        %v5064 = vsel %vm5063, %v5056, %v5060
        %v5065 = vand.u32 2147483647, %v2386
        %vm5066 = vcmp.eq.f32.partialorder %v5065, 8.507059e+37
        %v5067 = vand.u32 %v2386, 2147483648
        %v5068 = vor.u32 1.1754944e-38, %v5067
        %v5069 = vsel %vm5066, %v5068, %v5064
        %v5070 = vmul.f32 1.0, %v5069
        %v5071 = vrcp.pop %v2387
        %v5072 = vmul.f32 %v2387, %v5071
        %v5073 = vsub.f32 1.0, %v5072
        %v5074 = vmul.f32 %v5071, %v5073
        %v5075 = vadd.f32 %v5071, %v5074
        %vm5076 = vweird.f32 %v2387
        %vm5077 = vweird.f32 %v5071
        %vm5078 = vmor %vm5076, %vm5077
        %v5079 = vsel %vm5078, %v5071, %v5075
        %v5080 = vand.u32 2147483647, %v2387
        %vm5081 = vcmp.eq.f32.partialorder %v5080, 8.507059e+37
        %v5082 = vand.u32 %v2387, 2147483648
        %v5083 = vor.u32 1.1754944e-38, %v5082
        %v5084 = vsel %vm5081, %v5083, %v5079
        %v5085 = vmul.f32 1.0, %v5084
        %v5086 = vrcp.pop %v2388
        %v5087 = vmul.f32 %v2388, %v5086
        %v5088 = vsub.f32 1.0, %v5087
        %v5089 = vmul.f32 %v5086, %v5088
        %v5090 = vadd.f32 %v5086, %v5089
        %vm5091 = vweird.f32 %v2388
        %vm5092 = vweird.f32 %v5086
        %vm5093 = vmor %vm5091, %vm5092
        %v5094 = vsel %vm5093, %v5086, %v5090
        %v5095 = vand.u32 2147483647, %v2388
        %vm5096 = vcmp.eq.f32.partialorder %v5095, 8.507059e+37
        %v5097 = vand.u32 %v2388, 2147483648
        %v5098 = vor.u32 1.1754944e-38, %v5097
        %v5099 = vsel %vm5096, %v5098, %v5094
        %v5100 = vmul.f32 1.0, %v5099
        %v5101 = vrcp.pop %v2389
        %v5102 = vmul.f32 %v2389, %v5101
        %v5103 = vsub.f32 1.0, %v5102
        %v5104 = vmul.f32 %v5101, %v5103
        %v5105 = vadd.f32 %v5101, %v5104
        %vm5106 = vweird.f32 %v2389
        %vm5107 = vweird.f32 %v5101
        %vm5108 = vmor %vm5106, %vm5107
        %v5109 = vsel %vm5108, %v5101, %v5105
        %v5110 = vand.u32 2147483647, %v2389
        %vm5111 = vcmp.eq.f32.partialorder %v5110, 8.507059e+37
        %v5112 = vand.u32 %v2389, 2147483648
        %v5113 = vor.u32 1.1754944e-38, %v5112
        %v5114 = vsel %vm5111, %v5113, %v5109
        %v5115 = vmul.f32 1.0, %v5114
        %v5116 = vrcp.pop %v2390
        %v5117 = vmul.f32 %v2390, %v5116
        %v5118 = vsub.f32 1.0, %v5117
        %v5119 = vmul.f32 %v5116, %v5118
        %v5120 = vadd.f32 %v5116, %v5119
        %vm5121 = vweird.f32 %v2390
        %vm5122 = vweird.f32 %v5116
        %vm5123 = vmor %vm5121, %vm5122
        %v5124 = vsel %vm5123, %v5116, %v5120
        %v5125 = vand.u32 2147483647, %v2390
        %vm5126 = vcmp.eq.f32.partialorder %v5125, 8.507059e+37
        %v5127 = vand.u32 %v2390, 2147483648
        %v5128 = vor.u32 1.1754944e-38, %v5127
        %v5129 = vsel %vm5126, %v5128, %v5124
        %v5130 = vmul.f32 1.0, %v5129
        %v5131 = vrcp.pop %v2391
        %v5132 = vmul.f32 %v2391, %v5131
        %v5133 = vsub.f32 1.0, %v5132
        %v5134 = vmul.f32 %v5131, %v5133
        %v5135 = vadd.f32 %v5131, %v5134
        %vm5136 = vweird.f32 %v2391
        %vm5137 = vweird.f32 %v5131
        %vm5138 = vmor %vm5136, %vm5137
        %v5139 = vsel %vm5138, %v5131, %v5135
        %v5140 = vand.u32 2147483647, %v2391
        %vm5141 = vcmp.eq.f32.partialorder %v5140, 8.507059e+37
        %v5142 = vand.u32 %v2391, 2147483648
        %v5143 = vor.u32 1.1754944e-38, %v5142
        %v5144 = vsel %vm5141, %v5143, %v5139
        %v5145 = vmul.f32 1.0, %v5144
        %v5146 = vrcp.pop %v2392
        %v5147 = vmul.f32 %v2392, %v5146
        %v5148 = vsub.f32 1.0, %v5147
        %v5149 = vmul.f32 %v5146, %v5148
        %v5150 = vadd.f32 %v5146, %v5149
        %vm5151 = vweird.f32 %v2392
        %vm5152 = vweird.f32 %v5146
        %vm5153 = vmor %vm5151, %vm5152
        %v5154 = vsel %vm5153, %v5146, %v5150
        %v5155 = vand.u32 2147483647, %v2392
        %vm5156 = vcmp.eq.f32.partialorder %v5155, 8.507059e+37
        %v5157 = vand.u32 %v2392, 2147483648
        %v5158 = vor.u32 1.1754944e-38, %v5157
        %v5159 = vsel %vm5156, %v5158, %v5154
        %v5160 = vmul.f32 1.0, %v5159
        %v5161 = vrcp.pop %v2393
        %v5162 = vmul.f32 %v2393, %v5161
        %v5163 = vsub.f32 1.0, %v5162
        %v5164 = vmul.f32 %v5161, %v5163
        %v5165 = vadd.f32 %v5161, %v5164
        %vm5166 = vweird.f32 %v2393
        %vm5167 = vweird.f32 %v5161
        %vm5168 = vmor %vm5166, %vm5167
        %v5169 = vsel %vm5168, %v5161, %v5165
        %v5170 = vand.u32 2147483647, %v2393
        %vm5171 = vcmp.eq.f32.partialorder %v5170, 8.507059e+37
        %v5172 = vand.u32 %v2393, 2147483648
        %v5173 = vor.u32 1.1754944e-38, %v5172
        %v5174 = vsel %vm5171, %v5173, %v5169
        %v5175 = vmul.f32 1.0, %v5174
        %v5176 = vrcp.pop %v2394
        %v5177 = vmul.f32 %v2394, %v5176
        %v5178 = vsub.f32 1.0, %v5177
        %v5179 = vmul.f32 %v5176, %v5178
        %v5180 = vadd.f32 %v5176, %v5179
        %vm5181 = vweird.f32 %v2394
        %vm5182 = vweird.f32 %v5176
        %vm5183 = vmor %vm5181, %vm5182
        %v5184 = vsel %vm5183, %v5176, %v5180
        %v5185 = vand.u32 2147483647, %v2394
        %vm5186 = vcmp.eq.f32.partialorder %v5185, 8.507059e+37
        %v5187 = vand.u32 %v2394, 2147483648
        %v5188 = vor.u32 1.1754944e-38, %v5187
        %v5189 = vsel %vm5186, %v5188, %v5184
        %v5190 = vmul.f32 1.0, %v5189
        %v5191 = vrcp.pop %v2395
        %v5192 = vmul.f32 %v2395, %v5191
        %v5193 = vsub.f32 1.0, %v5192
        %v5194 = vmul.f32 %v5191, %v5193
        %v5195 = vadd.f32 %v5191, %v5194
        %vm5196 = vweird.f32 %v2395
        %vm5197 = vweird.f32 %v5191
        %vm5198 = vmor %vm5196, %vm5197
        %v5199 = vsel %vm5198, %v5191, %v5195
        %v5200 = vand.u32 2147483647, %v2395
        %vm5201 = vcmp.eq.f32.partialorder %v5200, 8.507059e+37
        %v5202 = vand.u32 %v2395, 2147483648
        %v5203 = vor.u32 1.1754944e-38, %v5202
        %v5204 = vsel %vm5201, %v5203, %v5199
        %v5205 = vmul.f32 1.0, %v5204
        %v5206 = vrcp.pop %v2396
        %v5207 = vmul.f32 %v2396, %v5206
        %v5208 = vsub.f32 1.0, %v5207
        %v5209 = vmul.f32 %v5206, %v5208
        %v5210 = vadd.f32 %v5206, %v5209
        %vm5211 = vweird.f32 %v2396
        %vm5212 = vweird.f32 %v5206
        %vm5213 = vmor %vm5211, %vm5212
        %v5214 = vsel %vm5213, %v5206, %v5210
        %v5215 = vand.u32 2147483647, %v2396
        %vm5216 = vcmp.eq.f32.partialorder %v5215, 8.507059e+37
        %v5217 = vand.u32 %v2396, 2147483648
        %v5218 = vor.u32 1.1754944e-38, %v5217
        %v5219 = vsel %vm5216, %v5218, %v5214
        %v5220 = vmul.f32 1.0, %v5219
        %v5221 = vrcp.pop %v2397
        %v5222 = vmul.f32 %v2397, %v5221
        %v5223 = vsub.f32 1.0, %v5222
        %v5224 = vmul.f32 %v5221, %v5223
        %v5225 = vadd.f32 %v5221, %v5224
        %vm5226 = vweird.f32 %v2397
        %vm5227 = vweird.f32 %v5221
        %vm5228 = vmor %vm5226, %vm5227
        %v5229 = vsel %vm5228, %v5221, %v5225
        %v5230 = vand.u32 2147483647, %v2397
        %vm5231 = vcmp.eq.f32.partialorder %v5230, 8.507059e+37
        %v5232 = vand.u32 %v2397, 2147483648
        %v5233 = vor.u32 1.1754944e-38, %v5232
        %v5234 = vsel %vm5231, %v5233, %v5229
        %v5235 = vmul.f32 1.0, %v5234
        %v5236 = vrcp.pop %v2398
        %v5237 = vmul.f32 %v2398, %v5236
        %v5238 = vsub.f32 1.0, %v5237
        %v5239 = vmul.f32 %v5236, %v5238
        %v5240 = vadd.f32 %v5236, %v5239
        %vm5241 = vweird.f32 %v2398
        %vm5242 = vweird.f32 %v5236
        %vm5243 = vmor %vm5241, %vm5242
        %v5244 = vsel %vm5243, %v5236, %v5240
        %v5245 = vand.u32 2147483647, %v2398
        %vm5246 = vcmp.eq.f32.partialorder %v5245, 8.507059e+37
        %v5247 = vand.u32 %v2398, 2147483648
        %v5248 = vor.u32 1.1754944e-38, %v5247
        %v5249 = vsel %vm5246, %v5248, %v5244
        %v5250 = vmul.f32 1.0, %v5249
        %v5251 = vrcp.pop %v2399
        %v5252 = vmul.f32 %v2399, %v5251
        %v5253 = vsub.f32 1.0, %v5252
        %v5254 = vmul.f32 %v5251, %v5253
        %v5255 = vadd.f32 %v5251, %v5254
        %vm5256 = vweird.f32 %v2399
        %vm5257 = vweird.f32 %v5251
        %vm5258 = vmor %vm5256, %vm5257
        %v5259 = vsel %vm5258, %v5251, %v5255
        %v5260 = vand.u32 2147483647, %v2399
        %vm5261 = vcmp.eq.f32.partialorder %v5260, 8.507059e+37
        %v5262 = vand.u32 %v2399, 2147483648
        %v5263 = vor.u32 1.1754944e-38, %v5262
        %v5264 = vsel %vm5261, %v5263, %v5259
        %v5265 = vmul.f32 1.0, %v5264
        %v5266 = vrcp.pop %v2400
        %v5267 = vmul.f32 %v2400, %v5266
        %v5268 = vsub.f32 1.0, %v5267
        %v5269 = vmul.f32 %v5266, %v5268
        %v5270 = vadd.f32 %v5266, %v5269
        %vm5271 = vweird.f32 %v2400
        %vm5272 = vweird.f32 %v5266
        %vm5273 = vmor %vm5271, %vm5272
        %v5274 = vsel %vm5273, %v5266, %v5270
        %v5275 = vand.u32 2147483647, %v2400
        %vm5276 = vcmp.eq.f32.partialorder %v5275, 8.507059e+37
        %v5277 = vand.u32 %v2400, 2147483648
        %v5278 = vor.u32 1.1754944e-38, %v5277
        %v5279 = vsel %vm5276, %v5278, %v5274
        %v5280 = vmul.f32 1.0, %v5279
        %v5281 = vld [vmem:[#allocation10] sm:$0xff]
        %v5282 = vld [vmem:[#allocation10 + $0x8] sm:$0xff]
        %v5283 = vld [vmem:[#allocation10 + $0x10] sm:$0xff]
        %v5284 = vld [vmem:[#allocation10 + $0x18] sm:$0xff]
        %v5285 = vld [vmem:[#allocation10 + $0x20] sm:$0xff]
        %v5286 = vld [vmem:[#allocation10 + $0x28] sm:$0xff]
        %v5287 = vld [vmem:[#allocation10 + $0x30] sm:$0xff]
        %v5288 = vld [vmem:[#allocation10 + $0x38] sm:$0xff]
        %v5289 = vld [vmem:[#allocation10 + $0x40] sm:$0xff]
        %v5290 = vld [vmem:[#allocation10 + $0x48] sm:$0xff]
        %v5291 = vld [vmem:[#allocation10 + $0x50] sm:$0xff]
        %v5292 = vld [vmem:[#allocation10 + $0x58] sm:$0xff]
        %v5293 = vld [vmem:[#allocation10 + $0x60] sm:$0xff]
        %v5294 = vld [vmem:[#allocation10 + $0x68] sm:$0xff]
        %v5295 = vld [vmem:[#allocation10 + $0x70] sm:$0xff]
        %v5296 = vld [vmem:[#allocation10 + $0x78] sm:$0xff]
        %v5297 = vld [vmem:[#allocation10 + $0x80] sm:$0xff]
        %v5298 = vld [vmem:[#allocation10 + $0x88] sm:$0xff]
        %v5299 = vld [vmem:[#allocation10 + $0x90] sm:$0xff]
        %v5300 = vld [vmem:[#allocation10 + $0x98] sm:$0xff]
        %v5301 = vld [vmem:[#allocation10 + $0xa0] sm:$0xff]
        %v5302 = vld [vmem:[#allocation10 + $0xa8] sm:$0xff]
        %v5303 = vld [vmem:[#allocation10 + $0xb0] sm:$0xff]
        %v5304 = vld [vmem:[#allocation10 + $0xb8] sm:$0xff]
        %v5305 = vld [vmem:[#allocation10 + $0xc0] sm:$0xff]
        %v5306 = vld [vmem:[#allocation10 + $0xc8] sm:$0xff]
        %v5307 = vld [vmem:[#allocation10 + $0xd0] sm:$0xff]
        %v5308 = vld [vmem:[#allocation10 + $0xd8] sm:$0xff]
        %v5309 = vld [vmem:[#allocation10 + $0xe0] sm:$0xff]
        %v5310 = vld [vmem:[#allocation10 + $0xe8] sm:$0xff]
        %v5311 = vld [vmem:[#allocation10 + $0xf0] sm:$0xff]
        %v5312 = vld [vmem:[#allocation10 + $0xf8] sm:$0xff]
        %v5313 = vld [vmem:[#allocation10 + $0x100] sm:$0xff]
        %v5314 = vld [vmem:[#allocation10 + $0x108] sm:$0xff]
        %v5315 = vld [vmem:[#allocation10 + $0x110] sm:$0xff]
        %v5316 = vld [vmem:[#allocation10 + $0x118] sm:$0xff]
        %v5317 = vld [vmem:[#allocation10 + $0x120] sm:$0xff]
        %v5318 = vld [vmem:[#allocation10 + $0x128] sm:$0xff]
        %v5319 = vld [vmem:[#allocation10 + $0x130] sm:$0xff]
        %v5320 = vld [vmem:[#allocation10 + $0x138] sm:$0xff]
        %v5321 = vld [vmem:[#allocation10 + $0x140] sm:$0xff]
        %v5322 = vld [vmem:[#allocation10 + $0x148] sm:$0xff]
        %v5323 = vld [vmem:[#allocation10 + $0x150] sm:$0xff]
        %v5324 = vld [vmem:[#allocation10 + $0x158] sm:$0xff]
        %v5325 = vld [vmem:[#allocation10 + $0x160] sm:$0xff]
        %v5326 = vld [vmem:[#allocation10 + $0x168] sm:$0xff]
        %v5327 = vld [vmem:[#allocation10 + $0x170] sm:$0xff]
        %v5328 = vld [vmem:[#allocation10 + $0x178] sm:$0xff]
        %v5329 = vld [vmem:[#allocation10 + $0x180] sm:$0xff]
        %v5330 = vld [vmem:[#allocation10 + $0x188] sm:$0xff]
        %v5331 = vld [vmem:[#allocation10 + $0x190] sm:$0xff]
        %v5332 = vld [vmem:[#allocation10 + $0x198] sm:$0xff]
        %v5333 = vld [vmem:[#allocation10 + $0x1a0] sm:$0xff]
        %v5334 = vld [vmem:[#allocation10 + $0x1a8] sm:$0xff]
        %v5335 = vld [vmem:[#allocation10 + $0x1b0] sm:$0xff]
        %v5336 = vld [vmem:[#allocation10 + $0x1b8] sm:$0xff]
        %v5337 = vld [vmem:[#allocation10 + $0x1c0] sm:$0xff]
        %v5338 = vld [vmem:[#allocation10 + $0x1c8] sm:$0xff]
        %v5339 = vld [vmem:[#allocation10 + $0x1d0] sm:$0xff]
        %v5340 = vld [vmem:[#allocation10 + $0x1d8] sm:$0xff]
        %v5341 = vld [vmem:[#allocation10 + $0x1e0] sm:$0xff]
        %v5342 = vld [vmem:[#allocation10 + $0x1e8] sm:$0xff]
        %v5343 = vld [vmem:[#allocation10 + $0x1f0] sm:$0xff]
        %v5344 = vld [vmem:[#allocation10 + $0x1f8] sm:$0xff]
        %v5345 = vld [vmem:[#allocation10 + $0x200] sm:$0xff]
        %v5346 = vld [vmem:[#allocation10 + $0x208] sm:$0xff]
        %v5347 = vld [vmem:[#allocation10 + $0x210] sm:$0xff]
        %v5348 = vld [vmem:[#allocation10 + $0x218] sm:$0xff]
        %v5349 = vld [vmem:[#allocation10 + $0x220] sm:$0xff]
        %v5350 = vld [vmem:[#allocation10 + $0x228] sm:$0xff]
        %v5351 = vld [vmem:[#allocation10 + $0x230] sm:$0xff]
        %v5352 = vld [vmem:[#allocation10 + $0x238] sm:$0xff]
        %v5353 = vld [vmem:[#allocation10 + $0x240] sm:$0xff]
        %v5354 = vld [vmem:[#allocation10 + $0x248] sm:$0xff]
        %v5355 = vld [vmem:[#allocation10 + $0x250] sm:$0xff]
        %v5356 = vld [vmem:[#allocation10 + $0x258] sm:$0xff]
        %v5357 = vld [vmem:[#allocation10 + $0x260] sm:$0xff]
        %v5358 = vld [vmem:[#allocation10 + $0x268] sm:$0xff]
        %v5359 = vld [vmem:[#allocation10 + $0x270] sm:$0xff]
        %v5360 = vld [vmem:[#allocation10 + $0x278] sm:$0xff]
        %v5361 = vld [vmem:[#allocation10 + $0x280] sm:$0xff]
        %v5362 = vld [vmem:[#allocation10 + $0x288] sm:$0xff]
        %v5363 = vld [vmem:[#allocation10 + $0x290] sm:$0xff]
        %v5364 = vld [vmem:[#allocation10 + $0x298] sm:$0xff]
        %v5365 = vld [vmem:[#allocation10 + $0x2a0] sm:$0xff]
        %v5366 = vld [vmem:[#allocation10 + $0x2a8] sm:$0xff]
        %v5367 = vld [vmem:[#allocation10 + $0x2b0] sm:$0xff]
        %v5368 = vld [vmem:[#allocation10 + $0x2b8] sm:$0xff]
        %v5369 = vld [vmem:[#allocation10 + $0x2c0] sm:$0xff]
        %v5370 = vld [vmem:[#allocation10 + $0x2c8] sm:$0xff]
        %v5371 = vld [vmem:[#allocation10 + $0x2d0] sm:$0xff]
        %v5372 = vld [vmem:[#allocation10 + $0x2d8] sm:$0xff]
        %v5373 = vld [vmem:[#allocation10 + $0x2e0] sm:$0xff]
        %v5374 = vld [vmem:[#allocation10 + $0x2e8] sm:$0xff]
        %v5375 = vld [vmem:[#allocation10 + $0x2f0] sm:$0xff]
        %v5376 = vld [vmem:[#allocation10 + $0x2f8] sm:$0xff]
        %v5377 = vld [vmem:[#allocation10 + $0x300] sm:$0xff]
        %v5378 = vld [vmem:[#allocation10 + $0x308] sm:$0xff]
        %v5379 = vld [vmem:[#allocation10 + $0x310] sm:$0xff]
        %v5380 = vld [vmem:[#allocation10 + $0x318] sm:$0xff]
        %v5381 = vld [vmem:[#allocation10 + $0x320] sm:$0xff]
        %v5382 = vld [vmem:[#allocation10 + $0x328] sm:$0xff]
        %v5383 = vld [vmem:[#allocation10 + $0x330] sm:$0xff]
        %v5384 = vld [vmem:[#allocation10 + $0x338] sm:$0xff]
        %v5385 = vld [vmem:[#allocation10 + $0x340] sm:$0xff]
        %v5386 = vld [vmem:[#allocation10 + $0x348] sm:$0xff]
        %v5387 = vld [vmem:[#allocation10 + $0x350] sm:$0xff]
        %v5388 = vld [vmem:[#allocation10 + $0x358] sm:$0xff]
        %v5389 = vld [vmem:[#allocation10 + $0x360] sm:$0xff]
        %v5390 = vld [vmem:[#allocation10 + $0x368] sm:$0xff]
        %v5391 = vld [vmem:[#allocation10 + $0x370] sm:$0xff]
        %v5392 = vld [vmem:[#allocation10 + $0x378] sm:$0xff]
        %v5393 = vld [vmem:[#allocation10 + $0x380] sm:$0xff]
        %v5394 = vld [vmem:[#allocation10 + $0x388] sm:$0xff]
        %v5395 = vld [vmem:[#allocation10 + $0x390] sm:$0xff]
        %v5396 = vld [vmem:[#allocation10 + $0x398] sm:$0xff]
        %v5397 = vld [vmem:[#allocation10 + $0x3a0] sm:$0xff]
        %v5398 = vld [vmem:[#allocation10 + $0x3a8] sm:$0xff]
        %v5399 = vld [vmem:[#allocation10 + $0x3b0] sm:$0xff]
        %v5400 = vld [vmem:[#allocation10 + $0x3b8] sm:$0xff]
        %v5401 = vld [vmem:[#allocation10 + $0x3c0] sm:$0xff]
        %v5402 = vld [vmem:[#allocation10 + $0x3c8] sm:$0xff]
        %v5403 = vld [vmem:[#allocation10 + $0x3d0] sm:$0xff]
        %v5404 = vld [vmem:[#allocation10 + $0x3d8] sm:$0xff]
        %v5405 = vld [vmem:[#allocation10 + $0x3e0] sm:$0xff]
        %v5406 = vld [vmem:[#allocation10 + $0x3e8] sm:$0xff]
        %v5407 = vld [vmem:[#allocation10 + $0x3f0] sm:$0xff]
        %v5408 = vld [vmem:[#allocation10 + $0x3f8] sm:$0xff]
        %v5409 = vld [vmem:[#allocation10 + $0x400] sm:$0xff]
        %v5410 = vld [vmem:[#allocation10 + $0x408] sm:$0xff]
        %v5411 = vld [vmem:[#allocation10 + $0x410] sm:$0xff]
        %v5412 = vld [vmem:[#allocation10 + $0x418] sm:$0xff]
        %v5413 = vld [vmem:[#allocation10 + $0x420] sm:$0xff]
        %v5414 = vld [vmem:[#allocation10 + $0x428] sm:$0xff]
        %v5415 = vld [vmem:[#allocation10 + $0x430] sm:$0xff]
        %v5416 = vld [vmem:[#allocation10 + $0x438] sm:$0xff]
        %v5417 = vld [vmem:[#allocation10 + $0x440] sm:$0xff]
        %v5418 = vld [vmem:[#allocation10 + $0x448] sm:$0xff]
        %v5419 = vld [vmem:[#allocation10 + $0x450] sm:$0xff]
        %v5420 = vld [vmem:[#allocation10 + $0x458] sm:$0xff]
        %v5421 = vld [vmem:[#allocation10 + $0x460] sm:$0xff]
        %v5422 = vld [vmem:[#allocation10 + $0x468] sm:$0xff]
        %v5423 = vld [vmem:[#allocation10 + $0x470] sm:$0xff]
        %v5424 = vld [vmem:[#allocation10 + $0x478] sm:$0xff]
        %v5425 = vld [vmem:[#allocation10 + $0x480] sm:$0xff]
        %v5426 = vld [vmem:[#allocation10 + $0x488] sm:$0xff]
        %v5427 = vld [vmem:[#allocation10 + $0x490] sm:$0xff]
        %v5428 = vld [vmem:[#allocation10 + $0x498] sm:$0xff]
        %v5429 = vld [vmem:[#allocation10 + $0x4a0] sm:$0xff]
        %v5430 = vld [vmem:[#allocation10 + $0x4a8] sm:$0xff]
        %v5431 = vld [vmem:[#allocation10 + $0x4b0] sm:$0xff]
        %v5432 = vld [vmem:[#allocation10 + $0x4b8] sm:$0xff]
        %v5433 = vld [vmem:[#allocation10 + $0x4c0] sm:$0xff]
        %v5434 = vld [vmem:[#allocation10 + $0x4c8] sm:$0xff]
        %v5435 = vld [vmem:[#allocation10 + $0x4d0] sm:$0xff]
        %v5436 = vld [vmem:[#allocation10 + $0x4d8] sm:$0xff]
        %v5437 = vld [vmem:[#allocation10 + $0x4e0] sm:$0xff]
        %v5438 = vld [vmem:[#allocation10 + $0x4e8] sm:$0xff]
        %v5439 = vld [vmem:[#allocation10 + $0x4f0] sm:$0xff]
        %v5440 = vld [vmem:[#allocation10 + $0x4f8] sm:$0xff]
        %v5441 = vld [vmem:[#allocation10 + $0x500] sm:$0xff]
        %v5442 = vld [vmem:[#allocation10 + $0x508] sm:$0xff]
        %v5443 = vld [vmem:[#allocation10 + $0x510] sm:$0xff]
        %v5444 = vld [vmem:[#allocation10 + $0x518] sm:$0xff]
        %v5445 = vld [vmem:[#allocation10 + $0x520] sm:$0xff]
        %v5446 = vld [vmem:[#allocation10 + $0x528] sm:$0xff]
        %v5447 = vld [vmem:[#allocation10 + $0x530] sm:$0xff]
        %v5448 = vld [vmem:[#allocation10 + $0x538] sm:$0xff]
        %v5449 = vld [vmem:[#allocation10 + $0x540] sm:$0xff]
        %v5450 = vld [vmem:[#allocation10 + $0x548] sm:$0xff]
        %v5451 = vld [vmem:[#allocation10 + $0x550] sm:$0xff]
        %v5452 = vld [vmem:[#allocation10 + $0x558] sm:$0xff]
        %v5453 = vld [vmem:[#allocation10 + $0x560] sm:$0xff]
        %v5454 = vld [vmem:[#allocation10 + $0x568] sm:$0xff]
        %v5455 = vld [vmem:[#allocation10 + $0x570] sm:$0xff]
        %v5456 = vld [vmem:[#allocation10 + $0x578] sm:$0xff]
        %v5457 = vld [vmem:[#allocation10 + $0x580] sm:$0xff]
        %v5458 = vld [vmem:[#allocation10 + $0x588] sm:$0xff]
        %v5459 = vld [vmem:[#allocation10 + $0x590] sm:$0xff]
        %v5460 = vld [vmem:[#allocation10 + $0x598] sm:$0xff]
        %v5461 = vld [vmem:[#allocation10 + $0x5a0] sm:$0xff]
        %v5462 = vld [vmem:[#allocation10 + $0x5a8] sm:$0xff]
        %v5463 = vld [vmem:[#allocation10 + $0x5b0] sm:$0xff]
        %v5464 = vld [vmem:[#allocation10 + $0x5b8] sm:$0xff]
        %v5465 = vld [vmem:[#allocation10 + $0x5c0] sm:$0xff]
        %v5466 = vld [vmem:[#allocation10 + $0x5c8] sm:$0xff]
        %v5467 = vld [vmem:[#allocation10 + $0x5d0] sm:$0xff]
        %v5468 = vld [vmem:[#allocation10 + $0x5d8] sm:$0xff]
        %v5469 = vld [vmem:[#allocation10 + $0x5e0] sm:$0xff]
        %v5470 = vld [vmem:[#allocation10 + $0x5e8] sm:$0xff]
        %v5471 = vld [vmem:[#allocation10 + $0x5f0] sm:$0xff]
        %v5472 = vld [vmem:[#allocation10 + $0x5f8] sm:$0xff]
        %v5473 = vld [vmem:[#allocation10 + $0x600] sm:$0xff]
        %v5474 = vld [vmem:[#allocation10 + $0x608] sm:$0xff]
        %v5475 = vld [vmem:[#allocation10 + $0x610] sm:$0xff]
        %v5476 = vld [vmem:[#allocation10 + $0x618] sm:$0xff]
        %v5477 = vld [vmem:[#allocation10 + $0x620] sm:$0xff]
        %v5478 = vld [vmem:[#allocation10 + $0x628] sm:$0xff]
        %v5479 = vld [vmem:[#allocation10 + $0x630] sm:$0xff]
        %v5480 = vld [vmem:[#allocation10 + $0x638] sm:$0xff]
        %v5481 = vld [vmem:[#allocation10 + $0x640] sm:$0xff]
        %v5482 = vld [vmem:[#allocation10 + $0x648] sm:$0xff]
        %v5483 = vld [vmem:[#allocation10 + $0x650] sm:$0xff]
        %v5484 = vld [vmem:[#allocation10 + $0x658] sm:$0xff]
        %v5485 = vld [vmem:[#allocation10 + $0x660] sm:$0xff]
        %v5486 = vld [vmem:[#allocation10 + $0x668] sm:$0xff]
        %v5487 = vld [vmem:[#allocation10 + $0x670] sm:$0xff]
        %v5488 = vld [vmem:[#allocation10 + $0x678] sm:$0xff]
        %v5489 = vld [vmem:[#allocation10 + $0x680] sm:$0xff]
        %v5490 = vld [vmem:[#allocation10 + $0x688] sm:$0xff]
        %v5491 = vld [vmem:[#allocation10 + $0x690] sm:$0xff]
        %v5492 = vld [vmem:[#allocation10 + $0x698] sm:$0xff]
        %v5493 = vld [vmem:[#allocation10 + $0x6a0] sm:$0xff]
        %v5494 = vld [vmem:[#allocation10 + $0x6a8] sm:$0xff]
        %v5495 = vld [vmem:[#allocation10 + $0x6b0] sm:$0xff]
        %v5496 = vld [vmem:[#allocation10 + $0x6b8] sm:$0xff]
        %v5497 = vld [vmem:[#allocation10 + $0x6c0] sm:$0xff]
        %v5498 = vld [vmem:[#allocation10 + $0x6c8] sm:$0xff]
        %v5499 = vld [vmem:[#allocation10 + $0x6d0] sm:$0xff]
        %v5500 = vld [vmem:[#allocation10 + $0x6d8] sm:$0xff]
        %v5501 = vld [vmem:[#allocation10 + $0x6e0] sm:$0xff]
        %v5502 = vld [vmem:[#allocation10 + $0x6e8] sm:$0xff]
        %v5503 = vld [vmem:[#allocation10 + $0x6f0] sm:$0xff]
        %v5504 = vld [vmem:[#allocation10 + $0x6f8] sm:$0xff]
        %v5505 = vld [vmem:[#allocation10 + $0x700] sm:$0xff]
        %v5506 = vld [vmem:[#allocation10 + $0x708] sm:$0xff]
        %v5507 = vld [vmem:[#allocation10 + $0x710] sm:$0xff]
        %v5508 = vld [vmem:[#allocation10 + $0x718] sm:$0xff]
        %v5509 = vld [vmem:[#allocation10 + $0x720] sm:$0xff]
        %v5510 = vld [vmem:[#allocation10 + $0x728] sm:$0xff]
        %v5511 = vld [vmem:[#allocation10 + $0x730] sm:$0xff]
        %v5512 = vld [vmem:[#allocation10 + $0x738] sm:$0xff]
        %v5513 = vld [vmem:[#allocation10 + $0x740] sm:$0xff]
        %v5514 = vld [vmem:[#allocation10 + $0x748] sm:$0xff]
        %v5515 = vld [vmem:[#allocation10 + $0x750] sm:$0xff]
        %v5516 = vld [vmem:[#allocation10 + $0x758] sm:$0xff]
        %v5517 = vld [vmem:[#allocation10 + $0x760] sm:$0xff]
        %v5518 = vld [vmem:[#allocation10 + $0x768] sm:$0xff]
        %v5519 = vld [vmem:[#allocation10 + $0x770] sm:$0xff]
        %v5520 = vld [vmem:[#allocation10 + $0x778] sm:$0xff]
        %v5521 = vld [vmem:[#allocation10 + $0x780] sm:$0xff]
        %v5522 = vld [vmem:[#allocation10 + $0x788] sm:$0xff]
        %v5523 = vld [vmem:[#allocation10 + $0x790] sm:$0xff]
        %v5524 = vld [vmem:[#allocation10 + $0x798] sm:$0xff]
        %v5525 = vld [vmem:[#allocation10 + $0x7a0] sm:$0xff]
        %v5526 = vld [vmem:[#allocation10 + $0x7a8] sm:$0xff]
        %v5527 = vld [vmem:[#allocation10 + $0x7b0] sm:$0xff]
        %v5528 = vld [vmem:[#allocation10 + $0x7b8] sm:$0xff]
        %v5529 = vld [vmem:[#allocation10 + $0x7c0] sm:$0xff]
        %v5530 = vld [vmem:[#allocation10 + $0x7c8] sm:$0xff]
        %v5531 = vld [vmem:[#allocation10 + $0x7d0] sm:$0xff]
        %v5532 = vld [vmem:[#allocation10 + $0x7d8] sm:$0xff]
        %v5533 = vld [vmem:[#allocation10 + $0x7e0] sm:$0xff]
        %v5534 = vld [vmem:[#allocation10 + $0x7e8] sm:$0xff]
        %v5535 = vld [vmem:[#allocation10 + $0x7f0] sm:$0xff]
        %v5536 = vld [vmem:[#allocation10 + $0x7f8] sm:$0xff]
        %v5537 = vld [vmem:[#allocation10 + $0x800] sm:$0xff]
        %v5538 = vld [vmem:[#allocation10 + $0x808] sm:$0xff]
        %v5539 = vld [vmem:[#allocation10 + $0x810] sm:$0xff]
        %v5540 = vld [vmem:[#allocation10 + $0x818] sm:$0xff]
        %v5541 = vld [vmem:[#allocation10 + $0x820] sm:$0xff]
        %v5542 = vld [vmem:[#allocation10 + $0x828] sm:$0xff]
        %v5543 = vld [vmem:[#allocation10 + $0x830] sm:$0xff]
        %v5544 = vld [vmem:[#allocation10 + $0x838] sm:$0xff]
        %v5545 = vld [vmem:[#allocation10 + $0x840] sm:$0xff]
        %v5546 = vld [vmem:[#allocation10 + $0x848] sm:$0xff]
        %v5547 = vld [vmem:[#allocation10 + $0x850] sm:$0xff]
        %v5548 = vld [vmem:[#allocation10 + $0x858] sm:$0xff]
        %v5549 = vld [vmem:[#allocation10 + $0x860] sm:$0xff]
        %v5550 = vld [vmem:[#allocation10 + $0x868] sm:$0xff]
        %v5551 = vld [vmem:[#allocation10 + $0x870] sm:$0xff]
        %v5552 = vld [vmem:[#allocation10 + $0x878] sm:$0xff]
        %v5553 = vld [vmem:[#allocation10 + $0x880] sm:$0xff]
        %v5554 = vld [vmem:[#allocation10 + $0x888] sm:$0xff]
        %v5555 = vld [vmem:[#allocation10 + $0x890] sm:$0xff]
        %v5556 = vld [vmem:[#allocation10 + $0x898] sm:$0xff]
        %v5557 = vld [vmem:[#allocation10 + $0x8a0] sm:$0xff]
        %v5558 = vld [vmem:[#allocation10 + $0x8a8] sm:$0xff]
        %v5559 = vld [vmem:[#allocation10 + $0x8b0] sm:$0xff]
        %v5560 = vld [vmem:[#allocation10 + $0x8b8] sm:$0xff]
        %v5561 = vld [vmem:[#allocation10 + $0x8c0] sm:$0xff]
        %v5562 = vld [vmem:[#allocation10 + $0x8c8] sm:$0xff]
        %v5563 = vld [vmem:[#allocation10 + $0x8d0] sm:$0xff]
        %v5564 = vld [vmem:[#allocation10 + $0x8d8] sm:$0xff]
        %v5565 = vld [vmem:[#allocation10 + $0x8e0] sm:$0xff]
        %v5566 = vld [vmem:[#allocation10 + $0x8e8] sm:$0xff]
        %v5567 = vld [vmem:[#allocation10 + $0x8f0] sm:$0xff]
        %v5568 = vld [vmem:[#allocation10 + $0x8f8] sm:$0xff]
        %v5569 = vld [vmem:[#allocation11] sm:$0x7]
        %v5571 = vperm.slane %v5569, 0
        %v5572 = vperm.slane %v5569, 1
        %v5573 = vperm.slane %v5569, 2
        %5577 = vmatpush.msra.mxu0 %v5326
        %5578 = vmatpush.msra.mxu0 %v5323
        %5579 = vmatpush.msra.mxu0 %v5320
        %5580 = vmatpush.msra.mxu0 %v5317
        %5581 = vmatpush.msra.mxu0 %v5314
        %5582 = vmatpush.msra.mxu0 %v5311
        %5583 = vmatpush.msra.mxu0 %v5308
        %5584 = vmatpush.msra.mxu0 %v5305
        %5585 = vmatpush.msra.mxu0 %v5302
        %5586 = vmatpush.msra.mxu0 %v5299
        %5587 = vmatpush.msra.mxu0 %v5296
        %5588 = vmatpush.msra.mxu0 %v5293
        %5589 = vmatpush.msra.mxu0 %v5290
        %5590 = vmatpush.msra.mxu0 %v5287
        %5591 = vmatpush.msra.mxu0 %v5284
        %5592 = vmatpush.msra.mxu0 %v5281
        %5593 = vmatmul.f32.gmra.mxu0 %v2415
        %v5594 = vpop.f32.mrf.mxu0
        %v5595 = vadd.f32 %v5571, %v5594
        %5596 = vmatmul.f32.gmra.mxu0 %v2505
        %v5597 = vpop.f32.mrf.mxu0
        %v5598 = vadd.f32 %v5571, %v5597
        %5599 = vmatmul.f32.gmra.mxu0 %v2595
        %v5600 = vpop.f32.mrf.mxu0
        %v5601 = vadd.f32 %v5571, %v5600
        %5602 = vmatmul.f32.gmra.mxu0 %v2685
        %v5603 = vpop.f32.mrf.mxu0
        %v5604 = vadd.f32 %v5571, %v5603
        %5605 = vmatmul.f32.gmra.mxu0 %v2775
        %v5606 = vpop.f32.mrf.mxu0
        %v5607 = vadd.f32 %v5571, %v5606
        %5608 = vmatmul.f32.gmra.mxu0 %v2865
        %v5609 = vpop.f32.mrf.mxu0
        %v5610 = vadd.f32 %v5571, %v5609
        %5611 = vmatmul.f32.gmra.mxu0 %v2955
        %v5612 = vpop.f32.mrf.mxu0
        %v5613 = vadd.f32 %v5571, %v5612
        %5614 = vmatmul.f32.gmra.mxu0 %v3045
        %v5615 = vpop.f32.mrf.mxu0
        %v5616 = vadd.f32 %v5571, %v5615
        %5617 = vmatmul.f32.gmra.mxu0 %v3135
        %v5618 = vpop.f32.mrf.mxu0
        %v5619 = vadd.f32 %v5571, %v5618
        %5620 = vmatmul.f32.gmra.mxu0 %v3225
        %v5621 = vpop.f32.mrf.mxu0
        %v5622 = vadd.f32 %v5571, %v5621
        %5623 = vmatmul.f32.gmra.mxu0 %v3315
        %v5624 = vpop.f32.mrf.mxu0
        %v5625 = vadd.f32 %v5571, %v5624
        %5626 = vmatmul.f32.gmra.mxu0 %v3405
        %v5627 = vpop.f32.mrf.mxu0
        %v5628 = vadd.f32 %v5571, %v5627
        %5629 = vmatmul.f32.gmra.mxu0 %v3495
        %v5630 = vpop.f32.mrf.mxu0
        %v5631 = vadd.f32 %v5571, %v5630
        %5632 = vmatmul.f32.gmra.mxu0 %v3585
        %v5633 = vpop.f32.mrf.mxu0
        %v5634 = vadd.f32 %v5571, %v5633
        %5635 = vmatmul.f32.gmra.mxu0 %v3675
        %v5636 = vpop.f32.mrf.mxu0
        %v5637 = vadd.f32 %v5571, %v5636
        %5638 = vmatmul.f32.gmra.mxu0 %v3765
        %v5639 = vpop.f32.mrf.mxu0
        %v5640 = vadd.f32 %v5571, %v5639
        %5641 = vmatmul.f32.gmra.mxu0 %v3855
        %v5642 = vpop.f32.mrf.mxu0
        %v5643 = vadd.f32 %v5571, %v5642
        %5644 = vmatmul.f32.gmra.mxu0 %v3945
        %v5645 = vpop.f32.mrf.mxu0
        %v5646 = vadd.f32 %v5571, %v5645
        %5647 = vmatmul.f32.gmra.mxu0 %v4035
        %v5648 = vpop.f32.mrf.mxu0
        %v5649 = vadd.f32 %v5571, %v5648
        %5650 = vmatmul.f32.gmra.mxu0 %v4125
        %v5651 = vpop.f32.mrf.mxu0
        %v5652 = vadd.f32 %v5571, %v5651
        %5653 = vmatmul.f32.gmra.mxu0 %v4215
        %v5654 = vpop.f32.mrf.mxu0
        %v5655 = vadd.f32 %v5571, %v5654
        %5656 = vmatmul.f32.gmra.mxu0 %v4305
        %v5657 = vpop.f32.mrf.mxu0
        %v5658 = vadd.f32 %v5571, %v5657
        %5659 = vmatmul.f32.gmra.mxu0 %v4395
        %v5660 = vpop.f32.mrf.mxu0
        %v5661 = vadd.f32 %v5571, %v5660
        %5662 = vmatmul.f32.gmra.mxu0 %v4485
        %v5663 = vpop.f32.mrf.mxu0
        %v5664 = vadd.f32 %v5571, %v5663
        %5665 = vmatmul.f32.gmra.mxu0 %v4575
        %v5666 = vpop.f32.mrf.mxu0
        %v5667 = vadd.f32 %v5571, %v5666
        %5668 = vmatmul.f32.gmra.mxu0 %v4665
        %v5669 = vpop.f32.mrf.mxu0
        %v5670 = vadd.f32 %v5571, %v5669
        %5671 = vmatmul.f32.gmra.mxu0 %v4755
        %v5672 = vpop.f32.mrf.mxu0
        %v5673 = vadd.f32 %v5571, %v5672
        %5674 = vmatmul.f32.gmra.mxu0 %v4845
        %v5675 = vpop.f32.mrf.mxu0
        %v5676 = vadd.f32 %v5571, %v5675
        %5677 = vmatmul.f32.gmra.mxu0 %v4935
        %v5678 = vpop.f32.mrf.mxu0
        %v5679 = vadd.f32 %v5571, %v5678
        %5680 = vmatmul.f32.gmra.mxu0 %v5025
        %v5681 = vpop.f32.mrf.mxu0
        %v5682 = vadd.f32 %v5571, %v5681
        %5683 = vmatmul.f32.gmra.mxu0 %v5115
        %v5684 = vpop.f32.mrf.mxu0
        %v5685 = vadd.f32 %v5571, %v5684
        %5686 = vmatmul.f32.gmra.mxu0 %v5205
        %v5687 = vpop.f32.mrf.mxu0
        %v5688 = vadd.f32 %v5571, %v5687
        %5689 = vdwg.mxu0
        %5690 = vmatpush.msra.mxu0 %v5374
        %5691 = vmatpush.msra.mxu0 %v5371
        %5692 = vmatpush.msra.mxu0 %v5368
        %5693 = vmatpush.msra.mxu0 %v5365
        %5694 = vmatpush.msra.mxu0 %v5362
        %5695 = vmatpush.msra.mxu0 %v5359
        %5696 = vmatpush.msra.mxu0 %v5356
        %5697 = vmatpush.msra.mxu0 %v5353
        %5698 = vmatpush.msra.mxu0 %v5350
        %5699 = vmatpush.msra.mxu0 %v5347
        %5700 = vmatpush.msra.mxu0 %v5344
        %5701 = vmatpush.msra.mxu0 %v5341
        %5702 = vmatpush.msra.mxu0 %v5338
        %5703 = vmatpush.msra.mxu0 %v5335
        %5704 = vmatpush.msra.mxu0 %v5332
        %5705 = vmatpush.msra.mxu0 %v5329
        %5706 = vmatmul.f32.gmra.mxu0 %v2430
        %v5707 = vpop.f32.mrf.mxu0
        %v5708 = vadd.f32 %v5595, %v5707
        %5709 = vmatmul.f32.gmra.mxu0 %v2520
        %v5710 = vpop.f32.mrf.mxu0
        %v5711 = vadd.f32 %v5598, %v5710
        %5712 = vmatmul.f32.gmra.mxu0 %v2610
        %v5713 = vpop.f32.mrf.mxu0
        %v5714 = vadd.f32 %v5601, %v5713
        %5715 = vmatmul.f32.gmra.mxu0 %v2700
        %v5716 = vpop.f32.mrf.mxu0
        %v5717 = vadd.f32 %v5604, %v5716
        %5718 = vmatmul.f32.gmra.mxu0 %v2790
        %v5719 = vpop.f32.mrf.mxu0
        %v5720 = vadd.f32 %v5607, %v5719
        %5721 = vmatmul.f32.gmra.mxu0 %v2880
        %v5722 = vpop.f32.mrf.mxu0
        %v5723 = vadd.f32 %v5610, %v5722
        %5724 = vmatmul.f32.gmra.mxu0 %v2970
        %v5725 = vpop.f32.mrf.mxu0
        %v5726 = vadd.f32 %v5613, %v5725
        %5727 = vmatmul.f32.gmra.mxu0 %v3060
        %v5728 = vpop.f32.mrf.mxu0
        %v5729 = vadd.f32 %v5616, %v5728
        %5730 = vmatmul.f32.gmra.mxu0 %v3150
        %v5731 = vpop.f32.mrf.mxu0
        %v5732 = vadd.f32 %v5619, %v5731
        %5733 = vmatmul.f32.gmra.mxu0 %v3240
        %v5734 = vpop.f32.mrf.mxu0
        %v5735 = vadd.f32 %v5622, %v5734
        %5736 = vmatmul.f32.gmra.mxu0 %v3330
        %v5737 = vpop.f32.mrf.mxu0
        %v5738 = vadd.f32 %v5625, %v5737
        %5739 = vmatmul.f32.gmra.mxu0 %v3420
        %v5740 = vpop.f32.mrf.mxu0
        %v5741 = vadd.f32 %v5628, %v5740
        %5742 = vmatmul.f32.gmra.mxu0 %v3510
        %v5743 = vpop.f32.mrf.mxu0
        %v5744 = vadd.f32 %v5631, %v5743
        %5745 = vmatmul.f32.gmra.mxu0 %v3600
        %v5746 = vpop.f32.mrf.mxu0
        %v5747 = vadd.f32 %v5634, %v5746
        %5748 = vmatmul.f32.gmra.mxu0 %v3690
        %v5749 = vpop.f32.mrf.mxu0
        %v5750 = vadd.f32 %v5637, %v5749
        %5751 = vmatmul.f32.gmra.mxu0 %v3780
        %v5752 = vpop.f32.mrf.mxu0
        %v5753 = vadd.f32 %v5640, %v5752
        %5754 = vmatmul.f32.gmra.mxu0 %v3870
        %v5755 = vpop.f32.mrf.mxu0
        %v5756 = vadd.f32 %v5643, %v5755
        %5757 = vmatmul.f32.gmra.mxu0 %v3960
        %v5758 = vpop.f32.mrf.mxu0
        %v5759 = vadd.f32 %v5646, %v5758
        %5760 = vmatmul.f32.gmra.mxu0 %v4050
        %v5761 = vpop.f32.mrf.mxu0
        %v5762 = vadd.f32 %v5649, %v5761
        %5763 = vmatmul.f32.gmra.mxu0 %v4140
        %v5764 = vpop.f32.mrf.mxu0
        %v5765 = vadd.f32 %v5652, %v5764
        %5766 = vmatmul.f32.gmra.mxu0 %v4230
        %v5767 = vpop.f32.mrf.mxu0
        %v5768 = vadd.f32 %v5655, %v5767
        %5769 = vmatmul.f32.gmra.mxu0 %v4320
        %v5770 = vpop.f32.mrf.mxu0
        %v5771 = vadd.f32 %v5658, %v5770
        %5772 = vmatmul.f32.gmra.mxu0 %v4410
        %v5773 = vpop.f32.mrf.mxu0
        %v5774 = vadd.f32 %v5661, %v5773
        %5775 = vmatmul.f32.gmra.mxu0 %v4500
        %v5776 = vpop.f32.mrf.mxu0
        %v5777 = vadd.f32 %v5664, %v5776
        %5778 = vmatmul.f32.gmra.mxu0 %v4590
        %v5779 = vpop.f32.mrf.mxu0
        %v5780 = vadd.f32 %v5667, %v5779
        %5781 = vmatmul.f32.gmra.mxu0 %v4680
        %v5782 = vpop.f32.mrf.mxu0
        %v5783 = vadd.f32 %v5670, %v5782
        %5784 = vmatmul.f32.gmra.mxu0 %v4770
        %v5785 = vpop.f32.mrf.mxu0
        %v5786 = vadd.f32 %v5673, %v5785
        %5787 = vmatmul.f32.gmra.mxu0 %v4860
        %v5788 = vpop.f32.mrf.mxu0
        %v5789 = vadd.f32 %v5676, %v5788
        %5790 = vmatmul.f32.gmra.mxu0 %v4950
        %v5791 = vpop.f32.mrf.mxu0
        %v5792 = vadd.f32 %v5679, %v5791
        %5793 = vmatmul.f32.gmra.mxu0 %v5040
        %v5794 = vpop.f32.mrf.mxu0
        %v5795 = vadd.f32 %v5682, %v5794
        %5796 = vmatmul.f32.gmra.mxu0 %v5130
        %v5797 = vpop.f32.mrf.mxu0
        %v5798 = vadd.f32 %v5685, %v5797
        %5799 = vmatmul.f32.gmra.mxu0 %v5220
        %v5800 = vpop.f32.mrf.mxu0
        %v5801 = vadd.f32 %v5688, %v5800
        %5802 = vdwg.mxu0
        %5803 = vmatpush.msra.mxu0 %v5422
        %5804 = vmatpush.msra.mxu0 %v5419
        %5805 = vmatpush.msra.mxu0 %v5416
        %5806 = vmatpush.msra.mxu0 %v5413
        %5807 = vmatpush.msra.mxu0 %v5410
        %5808 = vmatpush.msra.mxu0 %v5407
        %5809 = vmatpush.msra.mxu0 %v5404
        %5810 = vmatpush.msra.mxu0 %v5401
        %5811 = vmatpush.msra.mxu0 %v5398
        %5812 = vmatpush.msra.mxu0 %v5395
        %5813 = vmatpush.msra.mxu0 %v5392
        %5814 = vmatpush.msra.mxu0 %v5389
        %5815 = vmatpush.msra.mxu0 %v5386
        %5816 = vmatpush.msra.mxu0 %v5383
        %5817 = vmatpush.msra.mxu0 %v5380
        %5818 = vmatpush.msra.mxu0 %v5377
        %5819 = vmatmul.f32.gmra.mxu0 %v2445
        %v5820 = vpop.f32.mrf.mxu0
        %v5821 = vadd.f32 %v5708, %v5820
        %5822 = vmatmul.f32.gmra.mxu0 %v2535
        %v5823 = vpop.f32.mrf.mxu0
        %v5824 = vadd.f32 %v5711, %v5823
        %5825 = vmatmul.f32.gmra.mxu0 %v2625
        %v5826 = vpop.f32.mrf.mxu0
        %v5827 = vadd.f32 %v5714, %v5826
        %5828 = vmatmul.f32.gmra.mxu0 %v2715
        %v5829 = vpop.f32.mrf.mxu0
        %v5830 = vadd.f32 %v5717, %v5829
        %5831 = vmatmul.f32.gmra.mxu0 %v2805
        %v5832 = vpop.f32.mrf.mxu0
        %v5833 = vadd.f32 %v5720, %v5832
        %5834 = vmatmul.f32.gmra.mxu0 %v2895
        %v5835 = vpop.f32.mrf.mxu0
        %v5836 = vadd.f32 %v5723, %v5835
        %5837 = vmatmul.f32.gmra.mxu0 %v2985
        %v5838 = vpop.f32.mrf.mxu0
        %v5839 = vadd.f32 %v5726, %v5838
        %5840 = vmatmul.f32.gmra.mxu0 %v3075
        %v5841 = vpop.f32.mrf.mxu0
        %v5842 = vadd.f32 %v5729, %v5841
        %5843 = vmatmul.f32.gmra.mxu0 %v3165
        %v5844 = vpop.f32.mrf.mxu0
        %v5845 = vadd.f32 %v5732, %v5844
        %5846 = vmatmul.f32.gmra.mxu0 %v3255
        %v5847 = vpop.f32.mrf.mxu0
        %v5848 = vadd.f32 %v5735, %v5847
        %5849 = vmatmul.f32.gmra.mxu0 %v3345
        %v5850 = vpop.f32.mrf.mxu0
        %v5851 = vadd.f32 %v5738, %v5850
        %5852 = vmatmul.f32.gmra.mxu0 %v3435
        %v5853 = vpop.f32.mrf.mxu0
        %v5854 = vadd.f32 %v5741, %v5853
        %5855 = vmatmul.f32.gmra.mxu0 %v3525
        %v5856 = vpop.f32.mrf.mxu0
        %v5857 = vadd.f32 %v5744, %v5856
        %5858 = vmatmul.f32.gmra.mxu0 %v3615
        %v5859 = vpop.f32.mrf.mxu0
        %v5860 = vadd.f32 %v5747, %v5859
        %5861 = vmatmul.f32.gmra.mxu0 %v3705
        %v5862 = vpop.f32.mrf.mxu0
        %v5863 = vadd.f32 %v5750, %v5862
        %5864 = vmatmul.f32.gmra.mxu0 %v3795
        %v5865 = vpop.f32.mrf.mxu0
        %v5866 = vadd.f32 %v5753, %v5865
        %5867 = vmatmul.f32.gmra.mxu0 %v3885
        %v5868 = vpop.f32.mrf.mxu0
        %v5869 = vadd.f32 %v5756, %v5868
        %5870 = vmatmul.f32.gmra.mxu0 %v3975
        %v5871 = vpop.f32.mrf.mxu0
        %v5872 = vadd.f32 %v5759, %v5871
        %5873 = vmatmul.f32.gmra.mxu0 %v4065
        %v5874 = vpop.f32.mrf.mxu0
        %v5875 = vadd.f32 %v5762, %v5874
        %5876 = vmatmul.f32.gmra.mxu0 %v4155
        %v5877 = vpop.f32.mrf.mxu0
        %v5878 = vadd.f32 %v5765, %v5877
        %5879 = vmatmul.f32.gmra.mxu0 %v4245
        %v5880 = vpop.f32.mrf.mxu0
        %v5881 = vadd.f32 %v5768, %v5880
        %5882 = vmatmul.f32.gmra.mxu0 %v4335
        %v5883 = vpop.f32.mrf.mxu0
        %v5884 = vadd.f32 %v5771, %v5883
        %5885 = vmatmul.f32.gmra.mxu0 %v4425
        %v5886 = vpop.f32.mrf.mxu0
        %v5887 = vadd.f32 %v5774, %v5886
        %5888 = vmatmul.f32.gmra.mxu0 %v4515
        %v5889 = vpop.f32.mrf.mxu0
        %v5890 = vadd.f32 %v5777, %v5889
        %5891 = vmatmul.f32.gmra.mxu0 %v4605
        %v5892 = vpop.f32.mrf.mxu0
        %v5893 = vadd.f32 %v5780, %v5892
        %5894 = vmatmul.f32.gmra.mxu0 %v4695
        %v5895 = vpop.f32.mrf.mxu0
        %v5896 = vadd.f32 %v5783, %v5895
        %5897 = vmatmul.f32.gmra.mxu0 %v4785
        %v5898 = vpop.f32.mrf.mxu0
        %v5899 = vadd.f32 %v5786, %v5898
        %5900 = vmatmul.f32.gmra.mxu0 %v4875
        %v5901 = vpop.f32.mrf.mxu0
        %v5902 = vadd.f32 %v5789, %v5901
        %5903 = vmatmul.f32.gmra.mxu0 %v4965
        %v5904 = vpop.f32.mrf.mxu0
        %v5905 = vadd.f32 %v5792, %v5904
        %5906 = vmatmul.f32.gmra.mxu0 %v5055
        %v5907 = vpop.f32.mrf.mxu0
        %v5908 = vadd.f32 %v5795, %v5907
        %5909 = vmatmul.f32.gmra.mxu0 %v5145
        %v5910 = vpop.f32.mrf.mxu0
        %v5911 = vadd.f32 %v5798, %v5910
        %5912 = vmatmul.f32.gmra.mxu0 %v5235
        %v5913 = vpop.f32.mrf.mxu0
        %v5914 = vadd.f32 %v5801, %v5913
        %5915 = vdwg.mxu0
        %5916 = vmatpush.msra.mxu0 %v5470
        %5917 = vmatpush.msra.mxu0 %v5467
        %5918 = vmatpush.msra.mxu0 %v5464
        %5919 = vmatpush.msra.mxu0 %v5461
        %5920 = vmatpush.msra.mxu0 %v5458
        %5921 = vmatpush.msra.mxu0 %v5455
        %5922 = vmatpush.msra.mxu0 %v5452
        %5923 = vmatpush.msra.mxu0 %v5449
        %5924 = vmatpush.msra.mxu0 %v5446
        %5925 = vmatpush.msra.mxu0 %v5443
        %5926 = vmatpush.msra.mxu0 %v5440
        %5927 = vmatpush.msra.mxu0 %v5437
        %5928 = vmatpush.msra.mxu0 %v5434
        %5929 = vmatpush.msra.mxu0 %v5431
        %5930 = vmatpush.msra.mxu0 %v5428
        %5931 = vmatpush.msra.mxu0 %v5425
        %5932 = vmatmul.f32.gmra.mxu0 %v2460
        %v5933 = vpop.f32.mrf.mxu0
        %v5934 = vadd.f32 %v5821, %v5933
        %5935 = vmatmul.f32.gmra.mxu0 %v2550
        %v5936 = vpop.f32.mrf.mxu0
        %v5937 = vadd.f32 %v5824, %v5936
        %5938 = vmatmul.f32.gmra.mxu0 %v2640
        %v5939 = vpop.f32.mrf.mxu0
        %v5940 = vadd.f32 %v5827, %v5939
        %5941 = vmatmul.f32.gmra.mxu0 %v2730
        %v5942 = vpop.f32.mrf.mxu0
        %v5943 = vadd.f32 %v5830, %v5942
        %5944 = vmatmul.f32.gmra.mxu0 %v2820
        %v5945 = vpop.f32.mrf.mxu0
        %v5946 = vadd.f32 %v5833, %v5945
        %5947 = vmatmul.f32.gmra.mxu0 %v2910
        %v5948 = vpop.f32.mrf.mxu0
        %v5949 = vadd.f32 %v5836, %v5948
        %5950 = vmatmul.f32.gmra.mxu0 %v3000
        %v5951 = vpop.f32.mrf.mxu0
        %v5952 = vadd.f32 %v5839, %v5951
        %5953 = vmatmul.f32.gmra.mxu0 %v3090
        %v5954 = vpop.f32.mrf.mxu0
        %v5955 = vadd.f32 %v5842, %v5954
        %5956 = vmatmul.f32.gmra.mxu0 %v3180
        %v5957 = vpop.f32.mrf.mxu0
        %v5958 = vadd.f32 %v5845, %v5957
        %5959 = vmatmul.f32.gmra.mxu0 %v3270
        %v5960 = vpop.f32.mrf.mxu0
        %v5961 = vadd.f32 %v5848, %v5960
        %5962 = vmatmul.f32.gmra.mxu0 %v3360
        %v5963 = vpop.f32.mrf.mxu0
        %v5964 = vadd.f32 %v5851, %v5963
        %5965 = vmatmul.f32.gmra.mxu0 %v3450
        %v5966 = vpop.f32.mrf.mxu0
        %v5967 = vadd.f32 %v5854, %v5966
        %5968 = vmatmul.f32.gmra.mxu0 %v3540
        %v5969 = vpop.f32.mrf.mxu0
        %v5970 = vadd.f32 %v5857, %v5969
        %5971 = vmatmul.f32.gmra.mxu0 %v3630
        %v5972 = vpop.f32.mrf.mxu0
        %v5973 = vadd.f32 %v5860, %v5972
        %5974 = vmatmul.f32.gmra.mxu0 %v3720
        %v5975 = vpop.f32.mrf.mxu0
        %v5976 = vadd.f32 %v5863, %v5975
        %5977 = vmatmul.f32.gmra.mxu0 %v3810
        %v5978 = vpop.f32.mrf.mxu0
        %v5979 = vadd.f32 %v5866, %v5978
        %5980 = vmatmul.f32.gmra.mxu0 %v3900
        %v5981 = vpop.f32.mrf.mxu0
        %v5982 = vadd.f32 %v5869, %v5981
        %5983 = vmatmul.f32.gmra.mxu0 %v3990
        %v5984 = vpop.f32.mrf.mxu0
        %v5985 = vadd.f32 %v5872, %v5984
        %5986 = vmatmul.f32.gmra.mxu0 %v4080
        %v5987 = vpop.f32.mrf.mxu0
        %v5988 = vadd.f32 %v5875, %v5987
        %5989 = vmatmul.f32.gmra.mxu0 %v4170
        %v5990 = vpop.f32.mrf.mxu0
        %v5991 = vadd.f32 %v5878, %v5990
        %5992 = vmatmul.f32.gmra.mxu0 %v4260
        %v5993 = vpop.f32.mrf.mxu0
        %v5994 = vadd.f32 %v5881, %v5993
        %5995 = vmatmul.f32.gmra.mxu0 %v4350
        %v5996 = vpop.f32.mrf.mxu0
        %v5997 = vadd.f32 %v5884, %v5996
        %5998 = vmatmul.f32.gmra.mxu0 %v4440
        %v5999 = vpop.f32.mrf.mxu0
        %v6000 = vadd.f32 %v5887, %v5999
        %6001 = vmatmul.f32.gmra.mxu0 %v4530
        %v6002 = vpop.f32.mrf.mxu0
        %v6003 = vadd.f32 %v5890, %v6002
        %6004 = vmatmul.f32.gmra.mxu0 %v4620
        %v6005 = vpop.f32.mrf.mxu0
        %v6006 = vadd.f32 %v5893, %v6005
        %6007 = vmatmul.f32.gmra.mxu0 %v4710
        %v6008 = vpop.f32.mrf.mxu0
        %v6009 = vadd.f32 %v5896, %v6008
        %6010 = vmatmul.f32.gmra.mxu0 %v4800
        %v6011 = vpop.f32.mrf.mxu0
        %v6012 = vadd.f32 %v5899, %v6011
        %6013 = vmatmul.f32.gmra.mxu0 %v4890
        %v6014 = vpop.f32.mrf.mxu0
        %v6015 = vadd.f32 %v5902, %v6014
        %6016 = vmatmul.f32.gmra.mxu0 %v4980
        %v6017 = vpop.f32.mrf.mxu0
        %v6018 = vadd.f32 %v5905, %v6017
        %6019 = vmatmul.f32.gmra.mxu0 %v5070
        %v6020 = vpop.f32.mrf.mxu0
        %v6021 = vadd.f32 %v5908, %v6020
        %6022 = vmatmul.f32.gmra.mxu0 %v5160
        %v6023 = vpop.f32.mrf.mxu0
        %v6024 = vadd.f32 %v5911, %v6023
        %6025 = vmatmul.f32.gmra.mxu0 %v5250
        %v6026 = vpop.f32.mrf.mxu0
        %v6027 = vadd.f32 %v5914, %v6026
        %6028 = vdwg.mxu0
        %6029 = vmatpush.msra.mxu0 %v5518
        %6030 = vmatpush.msra.mxu0 %v5515
        %6031 = vmatpush.msra.mxu0 %v5512
        %6032 = vmatpush.msra.mxu0 %v5509
        %6033 = vmatpush.msra.mxu0 %v5506
        %6034 = vmatpush.msra.mxu0 %v5503
        %6035 = vmatpush.msra.mxu0 %v5500
        %6036 = vmatpush.msra.mxu0 %v5497
        %6037 = vmatpush.msra.mxu0 %v5494
        %6038 = vmatpush.msra.mxu0 %v5491
        %6039 = vmatpush.msra.mxu0 %v5488
        %6040 = vmatpush.msra.mxu0 %v5485
        %6041 = vmatpush.msra.mxu0 %v5482
        %6042 = vmatpush.msra.mxu0 %v5479
        %6043 = vmatpush.msra.mxu0 %v5476
        %6044 = vmatpush.msra.mxu0 %v5473
        %6045 = vmatmul.f32.gmra.mxu0 %v2475
        %v6046 = vpop.f32.mrf.mxu0
        %v6047 = vadd.f32 %v5934, %v6046
        %6048 = vmatmul.f32.gmra.mxu0 %v2565
        %v6049 = vpop.f32.mrf.mxu0
        %v6050 = vadd.f32 %v5937, %v6049
        %6051 = vmatmul.f32.gmra.mxu0 %v2655
        %v6052 = vpop.f32.mrf.mxu0
        %v6053 = vadd.f32 %v5940, %v6052
        %6054 = vmatmul.f32.gmra.mxu0 %v2745
        %v6055 = vpop.f32.mrf.mxu0
        %v6056 = vadd.f32 %v5943, %v6055
        %6057 = vmatmul.f32.gmra.mxu0 %v2835
        %v6058 = vpop.f32.mrf.mxu0
        %v6059 = vadd.f32 %v5946, %v6058
        %6060 = vmatmul.f32.gmra.mxu0 %v2925
        %v6061 = vpop.f32.mrf.mxu0
        %v6062 = vadd.f32 %v5949, %v6061
        %6063 = vmatmul.f32.gmra.mxu0 %v3015
        %v6064 = vpop.f32.mrf.mxu0
        %v6065 = vadd.f32 %v5952, %v6064
        %6066 = vmatmul.f32.gmra.mxu0 %v3105
        %v6067 = vpop.f32.mrf.mxu0
        %v6068 = vadd.f32 %v5955, %v6067
        %6069 = vmatmul.f32.gmra.mxu0 %v3195
        %v6070 = vpop.f32.mrf.mxu0
        %v6071 = vadd.f32 %v5958, %v6070
        %6072 = vmatmul.f32.gmra.mxu0 %v3285
        %v6073 = vpop.f32.mrf.mxu0
        %v6074 = vadd.f32 %v5961, %v6073
        %6075 = vmatmul.f32.gmra.mxu0 %v3375
        %v6076 = vpop.f32.mrf.mxu0
        %v6077 = vadd.f32 %v5964, %v6076
        %6078 = vmatmul.f32.gmra.mxu0 %v3465
        %v6079 = vpop.f32.mrf.mxu0
        %v6080 = vadd.f32 %v5967, %v6079
        %6081 = vmatmul.f32.gmra.mxu0 %v3555
        %v6082 = vpop.f32.mrf.mxu0
        %v6083 = vadd.f32 %v5970, %v6082
        %6084 = vmatmul.f32.gmra.mxu0 %v3645
        %v6085 = vpop.f32.mrf.mxu0
        %v6086 = vadd.f32 %v5973, %v6085
        %6087 = vmatmul.f32.gmra.mxu0 %v3735
        %v6088 = vpop.f32.mrf.mxu0
        %v6089 = vadd.f32 %v5976, %v6088
        %6090 = vmatmul.f32.gmra.mxu0 %v3825
        %v6091 = vpop.f32.mrf.mxu0
        %v6092 = vadd.f32 %v5979, %v6091
        %6093 = vmatmul.f32.gmra.mxu0 %v3915
        %v6094 = vpop.f32.mrf.mxu0
        %v6095 = vadd.f32 %v5982, %v6094
        %6096 = vmatmul.f32.gmra.mxu0 %v4005
        %v6097 = vpop.f32.mrf.mxu0
        %v6098 = vadd.f32 %v5985, %v6097
        %6099 = vmatmul.f32.gmra.mxu0 %v4095
        %v6100 = vpop.f32.mrf.mxu0
        %v6101 = vadd.f32 %v5988, %v6100
        %6102 = vmatmul.f32.gmra.mxu0 %v4185
        %v6103 = vpop.f32.mrf.mxu0
        %v6104 = vadd.f32 %v5991, %v6103
        %6105 = vmatmul.f32.gmra.mxu0 %v4275
        %v6106 = vpop.f32.mrf.mxu0
        %v6107 = vadd.f32 %v5994, %v6106
        %6108 = vmatmul.f32.gmra.mxu0 %v4365
        %v6109 = vpop.f32.mrf.mxu0
        %v6110 = vadd.f32 %v5997, %v6109
        %6111 = vmatmul.f32.gmra.mxu0 %v4455
        %v6112 = vpop.f32.mrf.mxu0
        %v6113 = vadd.f32 %v6000, %v6112
        %6114 = vmatmul.f32.gmra.mxu0 %v4545
        %v6115 = vpop.f32.mrf.mxu0
        %v6116 = vadd.f32 %v6003, %v6115
        %6117 = vmatmul.f32.gmra.mxu0 %v4635
        %v6118 = vpop.f32.mrf.mxu0
        %v6119 = vadd.f32 %v6006, %v6118
        %6120 = vmatmul.f32.gmra.mxu0 %v4725
        %v6121 = vpop.f32.mrf.mxu0
        %v6122 = vadd.f32 %v6009, %v6121
        %6123 = vmatmul.f32.gmra.mxu0 %v4815
        %v6124 = vpop.f32.mrf.mxu0
        %v6125 = vadd.f32 %v6012, %v6124
        %6126 = vmatmul.f32.gmra.mxu0 %v4905
        %v6127 = vpop.f32.mrf.mxu0
        %v6128 = vadd.f32 %v6015, %v6127
        %6129 = vmatmul.f32.gmra.mxu0 %v4995
        %v6130 = vpop.f32.mrf.mxu0
        %v6131 = vadd.f32 %v6018, %v6130
        %6132 = vmatmul.f32.gmra.mxu0 %v5085
        %v6133 = vpop.f32.mrf.mxu0
        %v6134 = vadd.f32 %v6021, %v6133
        %6135 = vmatmul.f32.gmra.mxu0 %v5175
        %v6136 = vpop.f32.mrf.mxu0
        %v6137 = vadd.f32 %v6024, %v6136
        %6138 = vmatmul.f32.gmra.mxu0 %v5265
        %v6139 = vpop.f32.mrf.mxu0
        %v6140 = vadd.f32 %v6027, %v6139
        %6141 = vdwg.mxu0
        %6142 = vmatpush.msra.mxu0 %v5566
        %6143 = vmatpush.msra.mxu0 %v5563
        %6144 = vmatpush.msra.mxu0 %v5560
        %6145 = vmatpush.msra.mxu0 %v5557
        %6146 = vmatpush.msra.mxu0 %v5554
        %6147 = vmatpush.msra.mxu0 %v5551
        %6148 = vmatpush.msra.mxu0 %v5548
        %6149 = vmatpush.msra.mxu0 %v5545
        %6150 = vmatpush.msra.mxu0 %v5542
        %6151 = vmatpush.msra.mxu0 %v5539
        %6152 = vmatpush.msra.mxu0 %v5536
        %6153 = vmatpush.msra.mxu0 %v5533
        %6154 = vmatpush.msra.mxu0 %v5530
        %6155 = vmatpush.msra.mxu0 %v5527
        %6156 = vmatpush.msra.mxu0 %v5524
        %6157 = vmatpush.msra.mxu0 %v5521
        %6158 = vmatmul.f32.gmra.mxu0 %v2490
        %v6159 = vpop.f32.mrf.mxu0
        %v6160 = vadd.f32 %v6047, %v6159
        %6161 = vmatmul.f32.gmra.mxu0 %v2580
        %v6162 = vpop.f32.mrf.mxu0
        %v6163 = vadd.f32 %v6050, %v6162
        %6164 = vmatmul.f32.gmra.mxu0 %v2670
        %v6165 = vpop.f32.mrf.mxu0
        %v6166 = vadd.f32 %v6053, %v6165
        %6167 = vmatmul.f32.gmra.mxu0 %v2760
        %v6168 = vpop.f32.mrf.mxu0
        %v6169 = vadd.f32 %v6056, %v6168
        %6170 = vmatmul.f32.gmra.mxu0 %v2850
        %v6171 = vpop.f32.mrf.mxu0
        %v6172 = vadd.f32 %v6059, %v6171
        %6173 = vmatmul.f32.gmra.mxu0 %v2940
        %v6174 = vpop.f32.mrf.mxu0
        %v6175 = vadd.f32 %v6062, %v6174
        %6176 = vmatmul.f32.gmra.mxu0 %v3030
        %v6177 = vpop.f32.mrf.mxu0
        %v6178 = vadd.f32 %v6065, %v6177
        %6179 = vmatmul.f32.gmra.mxu0 %v3120
        %v6180 = vpop.f32.mrf.mxu0
        %v6181 = vadd.f32 %v6068, %v6180
        %6182 = vmatmul.f32.gmra.mxu0 %v3210
        %v6183 = vpop.f32.mrf.mxu0
        %v6184 = vadd.f32 %v6071, %v6183
        %6185 = vmatmul.f32.gmra.mxu0 %v3300
        %v6186 = vpop.f32.mrf.mxu0
        %v6187 = vadd.f32 %v6074, %v6186
        %6188 = vmatmul.f32.gmra.mxu0 %v3390
        %v6189 = vpop.f32.mrf.mxu0
        %v6190 = vadd.f32 %v6077, %v6189
        %6191 = vmatmul.f32.gmra.mxu0 %v3480
        %v6192 = vpop.f32.mrf.mxu0
        %v6193 = vadd.f32 %v6080, %v6192
        %6194 = vmatmul.f32.gmra.mxu0 %v3570
        %v6195 = vpop.f32.mrf.mxu0
        %v6196 = vadd.f32 %v6083, %v6195
        %6197 = vmatmul.f32.gmra.mxu0 %v3660
        %v6198 = vpop.f32.mrf.mxu0
        %v6199 = vadd.f32 %v6086, %v6198
        %6200 = vmatmul.f32.gmra.mxu0 %v3750
        %v6201 = vpop.f32.mrf.mxu0
        %v6202 = vadd.f32 %v6089, %v6201
        %6203 = vmatmul.f32.gmra.mxu0 %v3840
        %v6204 = vpop.f32.mrf.mxu0
        %v6205 = vadd.f32 %v6092, %v6204
        %6206 = vmatmul.f32.gmra.mxu0 %v3930
        %v6207 = vpop.f32.mrf.mxu0
        %v6208 = vadd.f32 %v6095, %v6207
        %6209 = vmatmul.f32.gmra.mxu0 %v4020
        %v6210 = vpop.f32.mrf.mxu0
        %v6211 = vadd.f32 %v6098, %v6210
        %6212 = vmatmul.f32.gmra.mxu0 %v4110
        %v6213 = vpop.f32.mrf.mxu0
        %v6214 = vadd.f32 %v6101, %v6213
        %6215 = vmatmul.f32.gmra.mxu0 %v4200
        %v6216 = vpop.f32.mrf.mxu0
        %v6217 = vadd.f32 %v6104, %v6216
        %6218 = vmatmul.f32.gmra.mxu0 %v4290
        %v6219 = vpop.f32.mrf.mxu0
        %v6220 = vadd.f32 %v6107, %v6219
        %6221 = vmatmul.f32.gmra.mxu0 %v4380
        %v6222 = vpop.f32.mrf.mxu0
        %v6223 = vadd.f32 %v6110, %v6222
        %6224 = vmatmul.f32.gmra.mxu0 %v4470
        %v6225 = vpop.f32.mrf.mxu0
        %v6226 = vadd.f32 %v6113, %v6225
        %6227 = vmatmul.f32.gmra.mxu0 %v4560
        %v6228 = vpop.f32.mrf.mxu0
        %v6229 = vadd.f32 %v6116, %v6228
        %6230 = vmatmul.f32.gmra.mxu0 %v4650
        %v6231 = vpop.f32.mrf.mxu0
        %v6232 = vadd.f32 %v6119, %v6231
        %6233 = vmatmul.f32.gmra.mxu0 %v4740
        %v6234 = vpop.f32.mrf.mxu0
        %v6235 = vadd.f32 %v6122, %v6234
        %6236 = vmatmul.f32.gmra.mxu0 %v4830
        %v6237 = vpop.f32.mrf.mxu0
        %v6238 = vadd.f32 %v6125, %v6237
        %6239 = vmatmul.f32.gmra.mxu0 %v4920
        %v6240 = vpop.f32.mrf.mxu0
        %v6241 = vadd.f32 %v6128, %v6240
        %6242 = vmatmul.f32.gmra.mxu0 %v5010
        %v6243 = vpop.f32.mrf.mxu0
        %v6244 = vadd.f32 %v6131, %v6243
        %6245 = vmatmul.f32.gmra.mxu0 %v5100
        %v6246 = vpop.f32.mrf.mxu0
        %v6247 = vadd.f32 %v6134, %v6246
        %6248 = vmatmul.f32.gmra.mxu0 %v5190
        %v6249 = vpop.f32.mrf.mxu0
        %v6250 = vadd.f32 %v6137, %v6249
        %6251 = vmatmul.f32.gmra.mxu0 %v5280
        %v6252 = vpop.f32.mrf.mxu0
        %v6253 = vadd.f32 %v6140, %v6252
        %6254 = vdwg.mxu0
        %6255 = vmatpush.msra.mxu0 %v5327
        %6256 = vmatpush.msra.mxu0 %v5324
        %6257 = vmatpush.msra.mxu0 %v5321
        %6258 = vmatpush.msra.mxu0 %v5318
        %6259 = vmatpush.msra.mxu0 %v5315
        %6260 = vmatpush.msra.mxu0 %v5312
        %6261 = vmatpush.msra.mxu0 %v5309
        %6262 = vmatpush.msra.mxu0 %v5306
        %6263 = vmatpush.msra.mxu0 %v5303
        %6264 = vmatpush.msra.mxu0 %v5300
        %6265 = vmatpush.msra.mxu0 %v5297
        %6266 = vmatpush.msra.mxu0 %v5294
        %6267 = vmatpush.msra.mxu0 %v5291
        %6268 = vmatpush.msra.mxu0 %v5288
        %6269 = vmatpush.msra.mxu0 %v5285
        %6270 = vmatpush.msra.mxu0 %v5282
        %6271 = vmatmul.f32.gmra.mxu0 %v2415
        %v6272 = vpop.f32.mrf.mxu0
        %v6273 = vadd.f32 %v5572, %v6272
        %6274 = vmatmul.f32.gmra.mxu0 %v2505
        %v6275 = vpop.f32.mrf.mxu0
        %v6276 = vadd.f32 %v5572, %v6275
        %6277 = vmatmul.f32.gmra.mxu0 %v2595
        %v6278 = vpop.f32.mrf.mxu0
        %v6279 = vadd.f32 %v5572, %v6278
        %6280 = vmatmul.f32.gmra.mxu0 %v2685
        %v6281 = vpop.f32.mrf.mxu0
        %v6282 = vadd.f32 %v5572, %v6281
        %6283 = vmatmul.f32.gmra.mxu0 %v2775
        %v6284 = vpop.f32.mrf.mxu0
        %v6285 = vadd.f32 %v5572, %v6284
        %6286 = vmatmul.f32.gmra.mxu0 %v2865
        %v6287 = vpop.f32.mrf.mxu0
        %v6288 = vadd.f32 %v5572, %v6287
        %6289 = vmatmul.f32.gmra.mxu0 %v2955
        %v6290 = vpop.f32.mrf.mxu0
        %v6291 = vadd.f32 %v5572, %v6290
        %6292 = vmatmul.f32.gmra.mxu0 %v3045
        %v6293 = vpop.f32.mrf.mxu0
        %v6294 = vadd.f32 %v5572, %v6293
        %6295 = vmatmul.f32.gmra.mxu0 %v3135
        %v6296 = vpop.f32.mrf.mxu0
        %v6297 = vadd.f32 %v5572, %v6296
        %6298 = vmatmul.f32.gmra.mxu0 %v3225
        %v6299 = vpop.f32.mrf.mxu0
        %v6300 = vadd.f32 %v5572, %v6299
        %6301 = vmatmul.f32.gmra.mxu0 %v3315
        %v6302 = vpop.f32.mrf.mxu0
        %v6303 = vadd.f32 %v5572, %v6302
        %6304 = vmatmul.f32.gmra.mxu0 %v3405
        %v6305 = vpop.f32.mrf.mxu0
        %v6306 = vadd.f32 %v5572, %v6305
        %6307 = vmatmul.f32.gmra.mxu0 %v3495
        %v6308 = vpop.f32.mrf.mxu0
        %v6309 = vadd.f32 %v5572, %v6308
        %6310 = vmatmul.f32.gmra.mxu0 %v3585
        %v6311 = vpop.f32.mrf.mxu0
        %v6312 = vadd.f32 %v5572, %v6311
        %6313 = vmatmul.f32.gmra.mxu0 %v3675
        %v6314 = vpop.f32.mrf.mxu0
        %v6315 = vadd.f32 %v5572, %v6314
        %6316 = vmatmul.f32.gmra.mxu0 %v3765
        %v6317 = vpop.f32.mrf.mxu0
        %v6318 = vadd.f32 %v5572, %v6317
        %6319 = vmatmul.f32.gmra.mxu0 %v3855
        %v6320 = vpop.f32.mrf.mxu0
        %v6321 = vadd.f32 %v5572, %v6320
        %6322 = vmatmul.f32.gmra.mxu0 %v3945
        %v6323 = vpop.f32.mrf.mxu0
        %v6324 = vadd.f32 %v5572, %v6323
        %6325 = vmatmul.f32.gmra.mxu0 %v4035
        %v6326 = vpop.f32.mrf.mxu0
        %v6327 = vadd.f32 %v5572, %v6326
        %6328 = vmatmul.f32.gmra.mxu0 %v4125
        %v6329 = vpop.f32.mrf.mxu0
        %v6330 = vadd.f32 %v5572, %v6329
        %6331 = vmatmul.f32.gmra.mxu0 %v4215
        %v6332 = vpop.f32.mrf.mxu0
        %v6333 = vadd.f32 %v5572, %v6332
        %6334 = vmatmul.f32.gmra.mxu0 %v4305
        %v6335 = vpop.f32.mrf.mxu0
        %v6336 = vadd.f32 %v5572, %v6335
        %6337 = vmatmul.f32.gmra.mxu0 %v4395
        %v6338 = vpop.f32.mrf.mxu0
        %v6339 = vadd.f32 %v5572, %v6338
        %6340 = vmatmul.f32.gmra.mxu0 %v4485
        %v6341 = vpop.f32.mrf.mxu0
        %v6342 = vadd.f32 %v5572, %v6341
        %6343 = vmatmul.f32.gmra.mxu0 %v4575
        %v6344 = vpop.f32.mrf.mxu0
        %v6345 = vadd.f32 %v5572, %v6344
        %6346 = vmatmul.f32.gmra.mxu0 %v4665
        %v6347 = vpop.f32.mrf.mxu0
        %v6348 = vadd.f32 %v5572, %v6347
        %6349 = vmatmul.f32.gmra.mxu0 %v4755
        %v6350 = vpop.f32.mrf.mxu0
        %v6351 = vadd.f32 %v5572, %v6350
        %6352 = vmatmul.f32.gmra.mxu0 %v4845
        %v6353 = vpop.f32.mrf.mxu0
        %v6354 = vadd.f32 %v5572, %v6353
        %6355 = vmatmul.f32.gmra.mxu0 %v4935
        %v6356 = vpop.f32.mrf.mxu0
        %v6357 = vadd.f32 %v5572, %v6356
        %6358 = vmatmul.f32.gmra.mxu0 %v5025
        %v6359 = vpop.f32.mrf.mxu0
        %v6360 = vadd.f32 %v5572, %v6359
        %6361 = vmatmul.f32.gmra.mxu0 %v5115
        %v6362 = vpop.f32.mrf.mxu0
        %v6363 = vadd.f32 %v5572, %v6362
        %6364 = vmatmul.f32.gmra.mxu0 %v5205
        %v6365 = vpop.f32.mrf.mxu0
        %v6366 = vadd.f32 %v5572, %v6365
        %6367 = vdwg.mxu0
        %6368 = vmatpush.msra.mxu0 %v5375
        %6369 = vmatpush.msra.mxu0 %v5372
        %6370 = vmatpush.msra.mxu0 %v5369
        %6371 = vmatpush.msra.mxu0 %v5366
        %6372 = vmatpush.msra.mxu0 %v5363
        %6373 = vmatpush.msra.mxu0 %v5360
        %6374 = vmatpush.msra.mxu0 %v5357
        %6375 = vmatpush.msra.mxu0 %v5354
        %6376 = vmatpush.msra.mxu0 %v5351
        %6377 = vmatpush.msra.mxu0 %v5348
        %6378 = vmatpush.msra.mxu0 %v5345
        %6379 = vmatpush.msra.mxu0 %v5342
        %6380 = vmatpush.msra.mxu0 %v5339
        %6381 = vmatpush.msra.mxu0 %v5336
        %6382 = vmatpush.msra.mxu0 %v5333
        %6383 = vmatpush.msra.mxu0 %v5330
        %6384 = vmatmul.f32.gmra.mxu0 %v2430
        %v6385 = vpop.f32.mrf.mxu0
        %v6386 = vadd.f32 %v6273, %v6385
        %6387 = vmatmul.f32.gmra.mxu0 %v2520
        %v6388 = vpop.f32.mrf.mxu0
        %v6389 = vadd.f32 %v6276, %v6388
        %6390 = vmatmul.f32.gmra.mxu0 %v2610
        %v6391 = vpop.f32.mrf.mxu0
        %v6392 = vadd.f32 %v6279, %v6391
        %6393 = vmatmul.f32.gmra.mxu0 %v2700
        %v6394 = vpop.f32.mrf.mxu0
        %v6395 = vadd.f32 %v6282, %v6394
        %6396 = vmatmul.f32.gmra.mxu0 %v2790
        %v6397 = vpop.f32.mrf.mxu0
        %v6398 = vadd.f32 %v6285, %v6397
        %6399 = vmatmul.f32.gmra.mxu0 %v2880
        %v6400 = vpop.f32.mrf.mxu0
        %v6401 = vadd.f32 %v6288, %v6400
        %6402 = vmatmul.f32.gmra.mxu0 %v2970
        %v6403 = vpop.f32.mrf.mxu0
        %v6404 = vadd.f32 %v6291, %v6403
        %6405 = vmatmul.f32.gmra.mxu0 %v3060
        %v6406 = vpop.f32.mrf.mxu0
        %v6407 = vadd.f32 %v6294, %v6406
        %6408 = vmatmul.f32.gmra.mxu0 %v3150
        %v6409 = vpop.f32.mrf.mxu0
        %v6410 = vadd.f32 %v6297, %v6409
        %6411 = vmatmul.f32.gmra.mxu0 %v3240
        %v6412 = vpop.f32.mrf.mxu0
        %v6413 = vadd.f32 %v6300, %v6412
        %6414 = vmatmul.f32.gmra.mxu0 %v3330
        %v6415 = vpop.f32.mrf.mxu0
        %v6416 = vadd.f32 %v6303, %v6415
        %6417 = vmatmul.f32.gmra.mxu0 %v3420
        %v6418 = vpop.f32.mrf.mxu0
        %v6419 = vadd.f32 %v6306, %v6418
        %6420 = vmatmul.f32.gmra.mxu0 %v3510
        %v6421 = vpop.f32.mrf.mxu0
        %v6422 = vadd.f32 %v6309, %v6421
        %6423 = vmatmul.f32.gmra.mxu0 %v3600
        %v6424 = vpop.f32.mrf.mxu0
        %v6425 = vadd.f32 %v6312, %v6424
        %6426 = vmatmul.f32.gmra.mxu0 %v3690
        %v6427 = vpop.f32.mrf.mxu0
        %v6428 = vadd.f32 %v6315, %v6427
        %6429 = vmatmul.f32.gmra.mxu0 %v3780
        %v6430 = vpop.f32.mrf.mxu0
        %v6431 = vadd.f32 %v6318, %v6430
        %6432 = vmatmul.f32.gmra.mxu0 %v3870
        %v6433 = vpop.f32.mrf.mxu0
        %v6434 = vadd.f32 %v6321, %v6433
        %6435 = vmatmul.f32.gmra.mxu0 %v3960
        %v6436 = vpop.f32.mrf.mxu0
        %v6437 = vadd.f32 %v6324, %v6436
        %6438 = vmatmul.f32.gmra.mxu0 %v4050
        %v6439 = vpop.f32.mrf.mxu0
        %v6440 = vadd.f32 %v6327, %v6439
        %6441 = vmatmul.f32.gmra.mxu0 %v4140
        %v6442 = vpop.f32.mrf.mxu0
        %v6443 = vadd.f32 %v6330, %v6442
        %6444 = vmatmul.f32.gmra.mxu0 %v4230
        %v6445 = vpop.f32.mrf.mxu0
        %v6446 = vadd.f32 %v6333, %v6445
        %6447 = vmatmul.f32.gmra.mxu0 %v4320
        %v6448 = vpop.f32.mrf.mxu0
        %v6449 = vadd.f32 %v6336, %v6448
        %6450 = vmatmul.f32.gmra.mxu0 %v4410
        %v6451 = vpop.f32.mrf.mxu0
        %v6452 = vadd.f32 %v6339, %v6451
        %6453 = vmatmul.f32.gmra.mxu0 %v4500
        %v6454 = vpop.f32.mrf.mxu0
        %v6455 = vadd.f32 %v6342, %v6454
        %6456 = vmatmul.f32.gmra.mxu0 %v4590
        %v6457 = vpop.f32.mrf.mxu0
        %v6458 = vadd.f32 %v6345, %v6457
        %6459 = vmatmul.f32.gmra.mxu0 %v4680
        %v6460 = vpop.f32.mrf.mxu0
        %v6461 = vadd.f32 %v6348, %v6460
        %6462 = vmatmul.f32.gmra.mxu0 %v4770
        %v6463 = vpop.f32.mrf.mxu0
        %v6464 = vadd.f32 %v6351, %v6463
        %6465 = vmatmul.f32.gmra.mxu0 %v4860
        %v6466 = vpop.f32.mrf.mxu0
        %v6467 = vadd.f32 %v6354, %v6466
        %6468 = vmatmul.f32.gmra.mxu0 %v4950
        %v6469 = vpop.f32.mrf.mxu0
        %v6470 = vadd.f32 %v6357, %v6469
        %6471 = vmatmul.f32.gmra.mxu0 %v5040
        %v6472 = vpop.f32.mrf.mxu0
        %v6473 = vadd.f32 %v6360, %v6472
        %6474 = vmatmul.f32.gmra.mxu0 %v5130
        %v6475 = vpop.f32.mrf.mxu0
        %v6476 = vadd.f32 %v6363, %v6475
        %6477 = vmatmul.f32.gmra.mxu0 %v5220
        %v6478 = vpop.f32.mrf.mxu0
        %v6479 = vadd.f32 %v6366, %v6478
        %6480 = vdwg.mxu0
        %6481 = vmatpush.msra.mxu0 %v5423
        %6482 = vmatpush.msra.mxu0 %v5420
        %6483 = vmatpush.msra.mxu0 %v5417
        %6484 = vmatpush.msra.mxu0 %v5414
        %6485 = vmatpush.msra.mxu0 %v5411
        %6486 = vmatpush.msra.mxu0 %v5408
        %6487 = vmatpush.msra.mxu0 %v5405
        %6488 = vmatpush.msra.mxu0 %v5402
        %6489 = vmatpush.msra.mxu0 %v5399
        %6490 = vmatpush.msra.mxu0 %v5396
        %6491 = vmatpush.msra.mxu0 %v5393
        %6492 = vmatpush.msra.mxu0 %v5390
        %6493 = vmatpush.msra.mxu0 %v5387
        %6494 = vmatpush.msra.mxu0 %v5384
        %6495 = vmatpush.msra.mxu0 %v5381
        %6496 = vmatpush.msra.mxu0 %v5378
        %6497 = vmatmul.f32.gmra.mxu0 %v2445
        %v6498 = vpop.f32.mrf.mxu0
        %v6499 = vadd.f32 %v6386, %v6498
        %6500 = vmatmul.f32.gmra.mxu0 %v2535
        %v6501 = vpop.f32.mrf.mxu0
        %v6502 = vadd.f32 %v6389, %v6501
        %6503 = vmatmul.f32.gmra.mxu0 %v2625
        %v6504 = vpop.f32.mrf.mxu0
        %v6505 = vadd.f32 %v6392, %v6504
        %6506 = vmatmul.f32.gmra.mxu0 %v2715
        %v6507 = vpop.f32.mrf.mxu0
        %v6508 = vadd.f32 %v6395, %v6507
        %6509 = vmatmul.f32.gmra.mxu0 %v2805
        %v6510 = vpop.f32.mrf.mxu0
        %v6511 = vadd.f32 %v6398, %v6510
        %6512 = vmatmul.f32.gmra.mxu0 %v2895
        %v6513 = vpop.f32.mrf.mxu0
        %v6514 = vadd.f32 %v6401, %v6513
        %6515 = vmatmul.f32.gmra.mxu0 %v2985
        %v6516 = vpop.f32.mrf.mxu0
        %v6517 = vadd.f32 %v6404, %v6516
        %6518 = vmatmul.f32.gmra.mxu0 %v3075
        %v6519 = vpop.f32.mrf.mxu0
        %v6520 = vadd.f32 %v6407, %v6519
        %6521 = vmatmul.f32.gmra.mxu0 %v3165
        %v6522 = vpop.f32.mrf.mxu0
        %v6523 = vadd.f32 %v6410, %v6522
        %6524 = vmatmul.f32.gmra.mxu0 %v3255
        %v6525 = vpop.f32.mrf.mxu0
        %v6526 = vadd.f32 %v6413, %v6525
        %6527 = vmatmul.f32.gmra.mxu0 %v3345
        %v6528 = vpop.f32.mrf.mxu0
        %v6529 = vadd.f32 %v6416, %v6528
        %6530 = vmatmul.f32.gmra.mxu0 %v3435
        %v6531 = vpop.f32.mrf.mxu0
        %v6532 = vadd.f32 %v6419, %v6531
        %6533 = vmatmul.f32.gmra.mxu0 %v3525
        %v6534 = vpop.f32.mrf.mxu0
        %v6535 = vadd.f32 %v6422, %v6534
        %6536 = vmatmul.f32.gmra.mxu0 %v3615
        %v6537 = vpop.f32.mrf.mxu0
        %v6538 = vadd.f32 %v6425, %v6537
        %6539 = vmatmul.f32.gmra.mxu0 %v3705
        %v6540 = vpop.f32.mrf.mxu0
        %v6541 = vadd.f32 %v6428, %v6540
        %6542 = vmatmul.f32.gmra.mxu0 %v3795
        %v6543 = vpop.f32.mrf.mxu0
        %v6544 = vadd.f32 %v6431, %v6543
        %6545 = vmatmul.f32.gmra.mxu0 %v3885
        %v6546 = vpop.f32.mrf.mxu0
        %v6547 = vadd.f32 %v6434, %v6546
        %6548 = vmatmul.f32.gmra.mxu0 %v3975
        %v6549 = vpop.f32.mrf.mxu0
        %v6550 = vadd.f32 %v6437, %v6549
        %6551 = vmatmul.f32.gmra.mxu0 %v4065
        %v6552 = vpop.f32.mrf.mxu0
        %v6553 = vadd.f32 %v6440, %v6552
        %6554 = vmatmul.f32.gmra.mxu0 %v4155
        %v6555 = vpop.f32.mrf.mxu0
        %v6556 = vadd.f32 %v6443, %v6555
        %6557 = vmatmul.f32.gmra.mxu0 %v4245
        %v6558 = vpop.f32.mrf.mxu0
        %v6559 = vadd.f32 %v6446, %v6558
        %6560 = vmatmul.f32.gmra.mxu0 %v4335
        %v6561 = vpop.f32.mrf.mxu0
        %v6562 = vadd.f32 %v6449, %v6561
        %6563 = vmatmul.f32.gmra.mxu0 %v4425
        %v6564 = vpop.f32.mrf.mxu0
        %v6565 = vadd.f32 %v6452, %v6564
        %6566 = vmatmul.f32.gmra.mxu0 %v4515
        %v6567 = vpop.f32.mrf.mxu0
        %v6568 = vadd.f32 %v6455, %v6567
        %6569 = vmatmul.f32.gmra.mxu0 %v4605
        %v6570 = vpop.f32.mrf.mxu0
        %v6571 = vadd.f32 %v6458, %v6570
        %6572 = vmatmul.f32.gmra.mxu0 %v4695
        %v6573 = vpop.f32.mrf.mxu0
        %v6574 = vadd.f32 %v6461, %v6573
        %6575 = vmatmul.f32.gmra.mxu0 %v4785
        %v6576 = vpop.f32.mrf.mxu0
        %v6577 = vadd.f32 %v6464, %v6576
        %6578 = vmatmul.f32.gmra.mxu0 %v4875
        %v6579 = vpop.f32.mrf.mxu0
        %v6580 = vadd.f32 %v6467, %v6579
        %6581 = vmatmul.f32.gmra.mxu0 %v4965
        %v6582 = vpop.f32.mrf.mxu0
        %v6583 = vadd.f32 %v6470, %v6582
        %6584 = vmatmul.f32.gmra.mxu0 %v5055
        %v6585 = vpop.f32.mrf.mxu0
        %v6586 = vadd.f32 %v6473, %v6585
        %6587 = vmatmul.f32.gmra.mxu0 %v5145
        %v6588 = vpop.f32.mrf.mxu0
        %v6589 = vadd.f32 %v6476, %v6588
        %6590 = vmatmul.f32.gmra.mxu0 %v5235
        %v6591 = vpop.f32.mrf.mxu0
        %v6592 = vadd.f32 %v6479, %v6591
        %6593 = vdwg.mxu0
        %6594 = vmatpush.msra.mxu0 %v5471
        %6595 = vmatpush.msra.mxu0 %v5468
        %6596 = vmatpush.msra.mxu0 %v5465
        %6597 = vmatpush.msra.mxu0 %v5462
        %6598 = vmatpush.msra.mxu0 %v5459
        %6599 = vmatpush.msra.mxu0 %v5456
        %6600 = vmatpush.msra.mxu0 %v5453
        %6601 = vmatpush.msra.mxu0 %v5450
        %6602 = vmatpush.msra.mxu0 %v5447
        %6603 = vmatpush.msra.mxu0 %v5444
        %6604 = vmatpush.msra.mxu0 %v5441
        %6605 = vmatpush.msra.mxu0 %v5438
        %6606 = vmatpush.msra.mxu0 %v5435
        %6607 = vmatpush.msra.mxu0 %v5432
        %6608 = vmatpush.msra.mxu0 %v5429
        %6609 = vmatpush.msra.mxu0 %v5426
        %6610 = vmatmul.f32.gmra.mxu0 %v2460
        %v6611 = vpop.f32.mrf.mxu0
        %v6612 = vadd.f32 %v6499, %v6611
        %6613 = vmatmul.f32.gmra.mxu0 %v2550
        %v6614 = vpop.f32.mrf.mxu0
        %v6615 = vadd.f32 %v6502, %v6614
        %6616 = vmatmul.f32.gmra.mxu0 %v2640
        %v6617 = vpop.f32.mrf.mxu0
        %v6618 = vadd.f32 %v6505, %v6617
        %6619 = vmatmul.f32.gmra.mxu0 %v2730
        %v6620 = vpop.f32.mrf.mxu0
        %v6621 = vadd.f32 %v6508, %v6620
        %6622 = vmatmul.f32.gmra.mxu0 %v2820
        %v6623 = vpop.f32.mrf.mxu0
        %v6624 = vadd.f32 %v6511, %v6623
        %6625 = vmatmul.f32.gmra.mxu0 %v2910
        %v6626 = vpop.f32.mrf.mxu0
        %v6627 = vadd.f32 %v6514, %v6626
        %6628 = vmatmul.f32.gmra.mxu0 %v3000
        %v6629 = vpop.f32.mrf.mxu0
        %v6630 = vadd.f32 %v6517, %v6629
        %6631 = vmatmul.f32.gmra.mxu0 %v3090
        %v6632 = vpop.f32.mrf.mxu0
        %v6633 = vadd.f32 %v6520, %v6632
        %6634 = vmatmul.f32.gmra.mxu0 %v3180
        %v6635 = vpop.f32.mrf.mxu0
        %v6636 = vadd.f32 %v6523, %v6635
        %6637 = vmatmul.f32.gmra.mxu0 %v3270
        %v6638 = vpop.f32.mrf.mxu0
        %v6639 = vadd.f32 %v6526, %v6638
        %6640 = vmatmul.f32.gmra.mxu0 %v3360
        %v6641 = vpop.f32.mrf.mxu0
        %v6642 = vadd.f32 %v6529, %v6641
        %6643 = vmatmul.f32.gmra.mxu0 %v3450
        %v6644 = vpop.f32.mrf.mxu0
        %v6645 = vadd.f32 %v6532, %v6644
        %6646 = vmatmul.f32.gmra.mxu0 %v3540
        %v6647 = vpop.f32.mrf.mxu0
        %v6648 = vadd.f32 %v6535, %v6647
        %6649 = vmatmul.f32.gmra.mxu0 %v3630
        %v6650 = vpop.f32.mrf.mxu0
        %v6651 = vadd.f32 %v6538, %v6650
        %6652 = vmatmul.f32.gmra.mxu0 %v3720
        %v6653 = vpop.f32.mrf.mxu0
        %v6654 = vadd.f32 %v6541, %v6653
        %6655 = vmatmul.f32.gmra.mxu0 %v3810
        %v6656 = vpop.f32.mrf.mxu0
        %v6657 = vadd.f32 %v6544, %v6656
        %6658 = vmatmul.f32.gmra.mxu0 %v3900
        %v6659 = vpop.f32.mrf.mxu0
        %v6660 = vadd.f32 %v6547, %v6659
        %6661 = vmatmul.f32.gmra.mxu0 %v3990
        %v6662 = vpop.f32.mrf.mxu0
        %v6663 = vadd.f32 %v6550, %v6662
        %6664 = vmatmul.f32.gmra.mxu0 %v4080
        %v6665 = vpop.f32.mrf.mxu0
        %v6666 = vadd.f32 %v6553, %v6665
        %6667 = vmatmul.f32.gmra.mxu0 %v4170
        %v6668 = vpop.f32.mrf.mxu0
        %v6669 = vadd.f32 %v6556, %v6668
        %6670 = vmatmul.f32.gmra.mxu0 %v4260
        %v6671 = vpop.f32.mrf.mxu0
        %v6672 = vadd.f32 %v6559, %v6671
        %6673 = vmatmul.f32.gmra.mxu0 %v4350
        %v6674 = vpop.f32.mrf.mxu0
        %v6675 = vadd.f32 %v6562, %v6674
        %6676 = vmatmul.f32.gmra.mxu0 %v4440
        %v6677 = vpop.f32.mrf.mxu0
        %v6678 = vadd.f32 %v6565, %v6677
        %6679 = vmatmul.f32.gmra.mxu0 %v4530
        %v6680 = vpop.f32.mrf.mxu0
        %v6681 = vadd.f32 %v6568, %v6680
        %6682 = vmatmul.f32.gmra.mxu0 %v4620
        %v6683 = vpop.f32.mrf.mxu0
        %v6684 = vadd.f32 %v6571, %v6683
        %6685 = vmatmul.f32.gmra.mxu0 %v4710
        %v6686 = vpop.f32.mrf.mxu0
        %v6687 = vadd.f32 %v6574, %v6686
        %6688 = vmatmul.f32.gmra.mxu0 %v4800
        %v6689 = vpop.f32.mrf.mxu0
        %v6690 = vadd.f32 %v6577, %v6689
        %6691 = vmatmul.f32.gmra.mxu0 %v4890
        %v6692 = vpop.f32.mrf.mxu0
        %v6693 = vadd.f32 %v6580, %v6692
        %6694 = vmatmul.f32.gmra.mxu0 %v4980
        %v6695 = vpop.f32.mrf.mxu0
        %v6696 = vadd.f32 %v6583, %v6695
        %6697 = vmatmul.f32.gmra.mxu0 %v5070
        %v6698 = vpop.f32.mrf.mxu0
        %v6699 = vadd.f32 %v6586, %v6698
        %6700 = vmatmul.f32.gmra.mxu0 %v5160
        %v6701 = vpop.f32.mrf.mxu0
        %v6702 = vadd.f32 %v6589, %v6701
        %6703 = vmatmul.f32.gmra.mxu0 %v5250
        %v6704 = vpop.f32.mrf.mxu0
        %v6705 = vadd.f32 %v6592, %v6704
        %6706 = vdwg.mxu0
        %6707 = vmatpush.msra.mxu0 %v5519
        %6708 = vmatpush.msra.mxu0 %v5516
        %6709 = vmatpush.msra.mxu0 %v5513
        %6710 = vmatpush.msra.mxu0 %v5510
        %6711 = vmatpush.msra.mxu0 %v5507
        %6712 = vmatpush.msra.mxu0 %v5504
        %6713 = vmatpush.msra.mxu0 %v5501
        %6714 = vmatpush.msra.mxu0 %v5498
        %6715 = vmatpush.msra.mxu0 %v5495
        %6716 = vmatpush.msra.mxu0 %v5492
        %6717 = vmatpush.msra.mxu0 %v5489
        %6718 = vmatpush.msra.mxu0 %v5486
        %6719 = vmatpush.msra.mxu0 %v5483
        %6720 = vmatpush.msra.mxu0 %v5480
        %6721 = vmatpush.msra.mxu0 %v5477
        %6722 = vmatpush.msra.mxu0 %v5474
        %6723 = vmatmul.f32.gmra.mxu0 %v2475
        %v6724 = vpop.f32.mrf.mxu0
        %v6725 = vadd.f32 %v6612, %v6724
        %6726 = vmatmul.f32.gmra.mxu0 %v2565
        %v6727 = vpop.f32.mrf.mxu0
        %v6728 = vadd.f32 %v6615, %v6727
        %6729 = vmatmul.f32.gmra.mxu0 %v2655
        %v6730 = vpop.f32.mrf.mxu0
        %v6731 = vadd.f32 %v6618, %v6730
        %6732 = vmatmul.f32.gmra.mxu0 %v2745
        %v6733 = vpop.f32.mrf.mxu0
        %v6734 = vadd.f32 %v6621, %v6733
        %6735 = vmatmul.f32.gmra.mxu0 %v2835
        %v6736 = vpop.f32.mrf.mxu0
        %v6737 = vadd.f32 %v6624, %v6736
        %6738 = vmatmul.f32.gmra.mxu0 %v2925
        %v6739 = vpop.f32.mrf.mxu0
        %v6740 = vadd.f32 %v6627, %v6739
        %6741 = vmatmul.f32.gmra.mxu0 %v3015
        %v6742 = vpop.f32.mrf.mxu0
        %v6743 = vadd.f32 %v6630, %v6742
        %6744 = vmatmul.f32.gmra.mxu0 %v3105
        %v6745 = vpop.f32.mrf.mxu0
        %v6746 = vadd.f32 %v6633, %v6745
        %6747 = vmatmul.f32.gmra.mxu0 %v3195
        %v6748 = vpop.f32.mrf.mxu0
        %v6749 = vadd.f32 %v6636, %v6748
        %6750 = vmatmul.f32.gmra.mxu0 %v3285
        %v6751 = vpop.f32.mrf.mxu0
        %v6752 = vadd.f32 %v6639, %v6751
        %6753 = vmatmul.f32.gmra.mxu0 %v3375
        %v6754 = vpop.f32.mrf.mxu0
        %v6755 = vadd.f32 %v6642, %v6754
        %6756 = vmatmul.f32.gmra.mxu0 %v3465
        %v6757 = vpop.f32.mrf.mxu0
        %v6758 = vadd.f32 %v6645, %v6757
        %6759 = vmatmul.f32.gmra.mxu0 %v3555
        %v6760 = vpop.f32.mrf.mxu0
        %v6761 = vadd.f32 %v6648, %v6760
        %6762 = vmatmul.f32.gmra.mxu0 %v3645
        %v6763 = vpop.f32.mrf.mxu0
        %v6764 = vadd.f32 %v6651, %v6763
        %6765 = vmatmul.f32.gmra.mxu0 %v3735
        %v6766 = vpop.f32.mrf.mxu0
        %v6767 = vadd.f32 %v6654, %v6766
        %6768 = vmatmul.f32.gmra.mxu0 %v3825
        %v6769 = vpop.f32.mrf.mxu0
        %v6770 = vadd.f32 %v6657, %v6769
        %6771 = vmatmul.f32.gmra.mxu0 %v3915
        %v6772 = vpop.f32.mrf.mxu0
        %v6773 = vadd.f32 %v6660, %v6772
        %6774 = vmatmul.f32.gmra.mxu0 %v4005
        %v6775 = vpop.f32.mrf.mxu0
        %v6776 = vadd.f32 %v6663, %v6775
        %6777 = vmatmul.f32.gmra.mxu0 %v4095
        %v6778 = vpop.f32.mrf.mxu0
        %v6779 = vadd.f32 %v6666, %v6778
        %6780 = vmatmul.f32.gmra.mxu0 %v4185
        %v6781 = vpop.f32.mrf.mxu0
        %v6782 = vadd.f32 %v6669, %v6781
        %6783 = vmatmul.f32.gmra.mxu0 %v4275
        %v6784 = vpop.f32.mrf.mxu0
        %v6785 = vadd.f32 %v6672, %v6784
        %6786 = vmatmul.f32.gmra.mxu0 %v4365
        %v6787 = vpop.f32.mrf.mxu0
        %v6788 = vadd.f32 %v6675, %v6787
        %6789 = vmatmul.f32.gmra.mxu0 %v4455
        %v6790 = vpop.f32.mrf.mxu0
        %v6791 = vadd.f32 %v6678, %v6790
        %6792 = vmatmul.f32.gmra.mxu0 %v4545
        %v6793 = vpop.f32.mrf.mxu0
        %v6794 = vadd.f32 %v6681, %v6793
        %6795 = vmatmul.f32.gmra.mxu0 %v4635
        %v6796 = vpop.f32.mrf.mxu0
        %v6797 = vadd.f32 %v6684, %v6796
        %6798 = vmatmul.f32.gmra.mxu0 %v4725
        %v6799 = vpop.f32.mrf.mxu0
        %v6800 = vadd.f32 %v6687, %v6799
        %6801 = vmatmul.f32.gmra.mxu0 %v4815
        %v6802 = vpop.f32.mrf.mxu0
        %v6803 = vadd.f32 %v6690, %v6802
        %6804 = vmatmul.f32.gmra.mxu0 %v4905
        %v6805 = vpop.f32.mrf.mxu0
        %v6806 = vadd.f32 %v6693, %v6805
        %6807 = vmatmul.f32.gmra.mxu0 %v4995
        %v6808 = vpop.f32.mrf.mxu0
        %v6809 = vadd.f32 %v6696, %v6808
        %6810 = vmatmul.f32.gmra.mxu0 %v5085
        %v6811 = vpop.f32.mrf.mxu0
        %v6812 = vadd.f32 %v6699, %v6811
        %6813 = vmatmul.f32.gmra.mxu0 %v5175
        %v6814 = vpop.f32.mrf.mxu0
        %v6815 = vadd.f32 %v6702, %v6814
        %6816 = vmatmul.f32.gmra.mxu0 %v5265
        %v6817 = vpop.f32.mrf.mxu0
        %v6818 = vadd.f32 %v6705, %v6817
        %6819 = vdwg.mxu0
        %6820 = vmatpush.msra.mxu0 %v5567
        %6821 = vmatpush.msra.mxu0 %v5564
        %6822 = vmatpush.msra.mxu0 %v5561
        %6823 = vmatpush.msra.mxu0 %v5558
        %6824 = vmatpush.msra.mxu0 %v5555
        %6825 = vmatpush.msra.mxu0 %v5552
        %6826 = vmatpush.msra.mxu0 %v5549
        %6827 = vmatpush.msra.mxu0 %v5546
        %6828 = vmatpush.msra.mxu0 %v5543
        %6829 = vmatpush.msra.mxu0 %v5540
        %6830 = vmatpush.msra.mxu0 %v5537
        %6831 = vmatpush.msra.mxu0 %v5534
        %6832 = vmatpush.msra.mxu0 %v5531
        %6833 = vmatpush.msra.mxu0 %v5528
        %6834 = vmatpush.msra.mxu0 %v5525
        %6835 = vmatpush.msra.mxu0 %v5522
        %6836 = vmatmul.f32.gmra.mxu0 %v2490
        %v6837 = vpop.f32.mrf.mxu0
        %v6838 = vadd.f32 %v6725, %v6837
        %6839 = vmatmul.f32.gmra.mxu0 %v2580
        %v6840 = vpop.f32.mrf.mxu0
        %v6841 = vadd.f32 %v6728, %v6840
        %6842 = vmatmul.f32.gmra.mxu0 %v2670
        %v6843 = vpop.f32.mrf.mxu0
        %v6844 = vadd.f32 %v6731, %v6843
        %6845 = vmatmul.f32.gmra.mxu0 %v2760
        %v6846 = vpop.f32.mrf.mxu0
        %v6847 = vadd.f32 %v6734, %v6846
        %6848 = vmatmul.f32.gmra.mxu0 %v2850
        %v6849 = vpop.f32.mrf.mxu0
        %v6850 = vadd.f32 %v6737, %v6849
        %6851 = vmatmul.f32.gmra.mxu0 %v2940
        %v6852 = vpop.f32.mrf.mxu0
        %v6853 = vadd.f32 %v6740, %v6852
        %6854 = vmatmul.f32.gmra.mxu0 %v3030
        %v6855 = vpop.f32.mrf.mxu0
        %v6856 = vadd.f32 %v6743, %v6855
        %6857 = vmatmul.f32.gmra.mxu0 %v3120
        %v6858 = vpop.f32.mrf.mxu0
        %v6859 = vadd.f32 %v6746, %v6858
        %6860 = vmatmul.f32.gmra.mxu0 %v3210
        %v6861 = vpop.f32.mrf.mxu0
        %v6862 = vadd.f32 %v6749, %v6861
        %6863 = vmatmul.f32.gmra.mxu0 %v3300
        %v6864 = vpop.f32.mrf.mxu0
        %v6865 = vadd.f32 %v6752, %v6864
        %6866 = vmatmul.f32.gmra.mxu0 %v3390
        %v6867 = vpop.f32.mrf.mxu0
        %v6868 = vadd.f32 %v6755, %v6867
        %6869 = vmatmul.f32.gmra.mxu0 %v3480
        %v6870 = vpop.f32.mrf.mxu0
        %v6871 = vadd.f32 %v6758, %v6870
        %6872 = vmatmul.f32.gmra.mxu0 %v3570
        %v6873 = vpop.f32.mrf.mxu0
        %v6874 = vadd.f32 %v6761, %v6873
        %6875 = vmatmul.f32.gmra.mxu0 %v3660
        %v6876 = vpop.f32.mrf.mxu0
        %v6877 = vadd.f32 %v6764, %v6876
        %6878 = vmatmul.f32.gmra.mxu0 %v3750
        %v6879 = vpop.f32.mrf.mxu0
        %v6880 = vadd.f32 %v6767, %v6879
        %6881 = vmatmul.f32.gmra.mxu0 %v3840
        %v6882 = vpop.f32.mrf.mxu0
        %v6883 = vadd.f32 %v6770, %v6882
        %6884 = vmatmul.f32.gmra.mxu0 %v3930
        %v6885 = vpop.f32.mrf.mxu0
        %v6886 = vadd.f32 %v6773, %v6885
        %6887 = vmatmul.f32.gmra.mxu0 %v4020
        %v6888 = vpop.f32.mrf.mxu0
        %v6889 = vadd.f32 %v6776, %v6888
        %6890 = vmatmul.f32.gmra.mxu0 %v4110
        %v6891 = vpop.f32.mrf.mxu0
        %v6892 = vadd.f32 %v6779, %v6891
        %6893 = vmatmul.f32.gmra.mxu0 %v4200
        %v6894 = vpop.f32.mrf.mxu0
        %v6895 = vadd.f32 %v6782, %v6894
        %6896 = vmatmul.f32.gmra.mxu0 %v4290
        %v6897 = vpop.f32.mrf.mxu0
        %v6898 = vadd.f32 %v6785, %v6897
        %6899 = vmatmul.f32.gmra.mxu0 %v4380
        %v6900 = vpop.f32.mrf.mxu0
        %v6901 = vadd.f32 %v6788, %v6900
        %6902 = vmatmul.f32.gmra.mxu0 %v4470
        %v6903 = vpop.f32.mrf.mxu0
        %v6904 = vadd.f32 %v6791, %v6903
        %6905 = vmatmul.f32.gmra.mxu0 %v4560
        %v6906 = vpop.f32.mrf.mxu0
        %v6907 = vadd.f32 %v6794, %v6906
        %6908 = vmatmul.f32.gmra.mxu0 %v4650
        %v6909 = vpop.f32.mrf.mxu0
        %v6910 = vadd.f32 %v6797, %v6909
        %6911 = vmatmul.f32.gmra.mxu0 %v4740
        %v6912 = vpop.f32.mrf.mxu0
        %v6913 = vadd.f32 %v6800, %v6912
        %6914 = vmatmul.f32.gmra.mxu0 %v4830
        %v6915 = vpop.f32.mrf.mxu0
        %v6916 = vadd.f32 %v6803, %v6915
        %6917 = vmatmul.f32.gmra.mxu0 %v4920
        %v6918 = vpop.f32.mrf.mxu0
        %v6919 = vadd.f32 %v6806, %v6918
        %6920 = vmatmul.f32.gmra.mxu0 %v5010
        %v6921 = vpop.f32.mrf.mxu0
        %v6922 = vadd.f32 %v6809, %v6921
        %6923 = vmatmul.f32.gmra.mxu0 %v5100
        %v6924 = vpop.f32.mrf.mxu0
        %v6925 = vadd.f32 %v6812, %v6924
        %6926 = vmatmul.f32.gmra.mxu0 %v5190
        %v6927 = vpop.f32.mrf.mxu0
        %v6928 = vadd.f32 %v6815, %v6927
        %6929 = vmatmul.f32.gmra.mxu0 %v5280
        %v6930 = vpop.f32.mrf.mxu0
        %v6931 = vadd.f32 %v6818, %v6930
        %6932 = vdwg.mxu0
        %6933 = vmatpush.msra.mxu0 %v5328
        %6934 = vmatpush.msra.mxu0 %v5325
        %6935 = vmatpush.msra.mxu0 %v5322
        %6936 = vmatpush.msra.mxu0 %v5319
        %6937 = vmatpush.msra.mxu0 %v5316
        %6938 = vmatpush.msra.mxu0 %v5313
        %6939 = vmatpush.msra.mxu0 %v5310
        %6940 = vmatpush.msra.mxu0 %v5307
        %6941 = vmatpush.msra.mxu0 %v5304
        %6942 = vmatpush.msra.mxu0 %v5301
        %6943 = vmatpush.msra.mxu0 %v5298
        %6944 = vmatpush.msra.mxu0 %v5295
        %6945 = vmatpush.msra.mxu0 %v5292
        %6946 = vmatpush.msra.mxu0 %v5289
        %6947 = vmatpush.msra.mxu0 %v5286
        %6948 = vmatpush.msra.mxu0 %v5283
        %6949 = vmatmul.f32.gmra.mxu0 %v2415
        %v6950 = vpop.f32.mrf.mxu0
        %v6951 = vadd.f32 %v5573, %v6950
        %6952 = vmatmul.f32.gmra.mxu0 %v2505
        %v6953 = vpop.f32.mrf.mxu0
        %v6954 = vadd.f32 %v5573, %v6953
        %6955 = vmatmul.f32.gmra.mxu0 %v2595
        %v6956 = vpop.f32.mrf.mxu0
        %v6957 = vadd.f32 %v5573, %v6956
        %6958 = vmatmul.f32.gmra.mxu0 %v2685
        %v6959 = vpop.f32.mrf.mxu0
        %v6960 = vadd.f32 %v5573, %v6959
        %6961 = vmatmul.f32.gmra.mxu0 %v2775
        %v6962 = vpop.f32.mrf.mxu0
        %v6963 = vadd.f32 %v5573, %v6962
        %6964 = vmatmul.f32.gmra.mxu0 %v2865
        %v6965 = vpop.f32.mrf.mxu0
        %v6966 = vadd.f32 %v5573, %v6965
        %6967 = vmatmul.f32.gmra.mxu0 %v2955
        %v6968 = vpop.f32.mrf.mxu0
        %v6969 = vadd.f32 %v5573, %v6968
        %6970 = vmatmul.f32.gmra.mxu0 %v3045
        %v6971 = vpop.f32.mrf.mxu0
        %v6972 = vadd.f32 %v5573, %v6971
        %6973 = vmatmul.f32.gmra.mxu0 %v3135
        %v6974 = vpop.f32.mrf.mxu0
        %v6975 = vadd.f32 %v5573, %v6974
        %6976 = vmatmul.f32.gmra.mxu0 %v3225
        %v6977 = vpop.f32.mrf.mxu0
        %v6978 = vadd.f32 %v5573, %v6977
        %6979 = vmatmul.f32.gmra.mxu0 %v3315
        %v6980 = vpop.f32.mrf.mxu0
        %v6981 = vadd.f32 %v5573, %v6980
        %6982 = vmatmul.f32.gmra.mxu0 %v3405
        %v6983 = vpop.f32.mrf.mxu0
        %v6984 = vadd.f32 %v5573, %v6983
        %6985 = vmatmul.f32.gmra.mxu0 %v3495
        %v6986 = vpop.f32.mrf.mxu0
        %v6987 = vadd.f32 %v5573, %v6986
        %6988 = vmatmul.f32.gmra.mxu0 %v3585
        %v6989 = vpop.f32.mrf.mxu0
        %v6990 = vadd.f32 %v5573, %v6989
        %6991 = vmatmul.f32.gmra.mxu0 %v3675
        %v6992 = vpop.f32.mrf.mxu0
        %v6993 = vadd.f32 %v5573, %v6992
        %6994 = vmatmul.f32.gmra.mxu0 %v3765
        %v6995 = vpop.f32.mrf.mxu0
        %v6996 = vadd.f32 %v5573, %v6995
        %6997 = vmatmul.f32.gmra.mxu0 %v3855
        %v6998 = vpop.f32.mrf.mxu0
        %v6999 = vadd.f32 %v5573, %v6998
        %7000 = vmatmul.f32.gmra.mxu0 %v3945
        %v7001 = vpop.f32.mrf.mxu0
        %v7002 = vadd.f32 %v5573, %v7001
        %7003 = vmatmul.f32.gmra.mxu0 %v4035
        %v7004 = vpop.f32.mrf.mxu0
        %v7005 = vadd.f32 %v5573, %v7004
        %7006 = vmatmul.f32.gmra.mxu0 %v4125
        %v7007 = vpop.f32.mrf.mxu0
        %v7008 = vadd.f32 %v5573, %v7007
        %7009 = vmatmul.f32.gmra.mxu0 %v4215
        %v7010 = vpop.f32.mrf.mxu0
        %v7011 = vadd.f32 %v5573, %v7010
        %7012 = vmatmul.f32.gmra.mxu0 %v4305
        %v7013 = vpop.f32.mrf.mxu0
        %v7014 = vadd.f32 %v5573, %v7013
        %7015 = vmatmul.f32.gmra.mxu0 %v4395
        %v7016 = vpop.f32.mrf.mxu0
        %v7017 = vadd.f32 %v5573, %v7016
        %7018 = vmatmul.f32.gmra.mxu0 %v4485
        %v7019 = vpop.f32.mrf.mxu0
        %v7020 = vadd.f32 %v5573, %v7019
        %7021 = vmatmul.f32.gmra.mxu0 %v4575
        %v7022 = vpop.f32.mrf.mxu0
        %v7023 = vadd.f32 %v5573, %v7022
        %7024 = vmatmul.f32.gmra.mxu0 %v4665
        %v7025 = vpop.f32.mrf.mxu0
        %v7026 = vadd.f32 %v5573, %v7025
        %7027 = vmatmul.f32.gmra.mxu0 %v4755
        %v7028 = vpop.f32.mrf.mxu0
        %v7029 = vadd.f32 %v5573, %v7028
        %7030 = vmatmul.f32.gmra.mxu0 %v4845
        %v7031 = vpop.f32.mrf.mxu0
        %v7032 = vadd.f32 %v5573, %v7031
        %7033 = vmatmul.f32.gmra.mxu0 %v4935
        %v7034 = vpop.f32.mrf.mxu0
        %v7035 = vadd.f32 %v5573, %v7034
        %7036 = vmatmul.f32.gmra.mxu0 %v5025
        %v7037 = vpop.f32.mrf.mxu0
        %v7038 = vadd.f32 %v5573, %v7037
        %7039 = vmatmul.f32.gmra.mxu0 %v5115
        %v7040 = vpop.f32.mrf.mxu0
        %v7041 = vadd.f32 %v5573, %v7040
        %7042 = vmatmul.f32.gmra.mxu0 %v5205
        %v7043 = vpop.f32.mrf.mxu0
        %v7044 = vadd.f32 %v5573, %v7043
        %7045 = vdwg.mxu0
        %7046 = vmatpush.msra.mxu0 %v5376
        %7047 = vmatpush.msra.mxu0 %v5373
        %7048 = vmatpush.msra.mxu0 %v5370
        %7049 = vmatpush.msra.mxu0 %v5367
        %7050 = vmatpush.msra.mxu0 %v5364
        %7051 = vmatpush.msra.mxu0 %v5361
        %7052 = vmatpush.msra.mxu0 %v5358
        %7053 = vmatpush.msra.mxu0 %v5355
        %7054 = vmatpush.msra.mxu0 %v5352
        %7055 = vmatpush.msra.mxu0 %v5349
        %7056 = vmatpush.msra.mxu0 %v5346
        %7057 = vmatpush.msra.mxu0 %v5343
        %7058 = vmatpush.msra.mxu0 %v5340
        %7059 = vmatpush.msra.mxu0 %v5337
        %7060 = vmatpush.msra.mxu0 %v5334
        %7061 = vmatpush.msra.mxu0 %v5331
        %7062 = vmatmul.f32.gmra.mxu0 %v2430
        %v7063 = vpop.f32.mrf.mxu0
        %v7064 = vadd.f32 %v6951, %v7063
        %7065 = vmatmul.f32.gmra.mxu0 %v2520
        %v7066 = vpop.f32.mrf.mxu0
        %v7067 = vadd.f32 %v6954, %v7066
        %7068 = vmatmul.f32.gmra.mxu0 %v2610
        %v7069 = vpop.f32.mrf.mxu0
        %v7070 = vadd.f32 %v6957, %v7069
        %7071 = vmatmul.f32.gmra.mxu0 %v2700
        %v7072 = vpop.f32.mrf.mxu0
        %v7073 = vadd.f32 %v6960, %v7072
        %7074 = vmatmul.f32.gmra.mxu0 %v2790
        %v7075 = vpop.f32.mrf.mxu0
        %v7076 = vadd.f32 %v6963, %v7075
        %7077 = vmatmul.f32.gmra.mxu0 %v2880
        %v7078 = vpop.f32.mrf.mxu0
        %v7079 = vadd.f32 %v6966, %v7078
        %7080 = vmatmul.f32.gmra.mxu0 %v2970
        %v7081 = vpop.f32.mrf.mxu0
        %v7082 = vadd.f32 %v6969, %v7081
        %7083 = vmatmul.f32.gmra.mxu0 %v3060
        %v7084 = vpop.f32.mrf.mxu0
        %v7085 = vadd.f32 %v6972, %v7084
        %7086 = vmatmul.f32.gmra.mxu0 %v3150
        %v7087 = vpop.f32.mrf.mxu0
        %v7088 = vadd.f32 %v6975, %v7087
        %7089 = vmatmul.f32.gmra.mxu0 %v3240
        %v7090 = vpop.f32.mrf.mxu0
        %v7091 = vadd.f32 %v6978, %v7090
        %7092 = vmatmul.f32.gmra.mxu0 %v3330
        %v7093 = vpop.f32.mrf.mxu0
        %v7094 = vadd.f32 %v6981, %v7093
        %7095 = vmatmul.f32.gmra.mxu0 %v3420
        %v7096 = vpop.f32.mrf.mxu0
        %v7097 = vadd.f32 %v6984, %v7096
        %7098 = vmatmul.f32.gmra.mxu0 %v3510
        %v7099 = vpop.f32.mrf.mxu0
        %v7100 = vadd.f32 %v6987, %v7099
        %7101 = vmatmul.f32.gmra.mxu0 %v3600
        %v7102 = vpop.f32.mrf.mxu0
        %v7103 = vadd.f32 %v6990, %v7102
        %7104 = vmatmul.f32.gmra.mxu0 %v3690
        %v7105 = vpop.f32.mrf.mxu0
        %v7106 = vadd.f32 %v6993, %v7105
        %7107 = vmatmul.f32.gmra.mxu0 %v3780
        %v7108 = vpop.f32.mrf.mxu0
        %v7109 = vadd.f32 %v6996, %v7108
        %7110 = vmatmul.f32.gmra.mxu0 %v3870
        %v7111 = vpop.f32.mrf.mxu0
        %v7112 = vadd.f32 %v6999, %v7111
        %7113 = vmatmul.f32.gmra.mxu0 %v3960
        %v7114 = vpop.f32.mrf.mxu0
        %v7115 = vadd.f32 %v7002, %v7114
        %7116 = vmatmul.f32.gmra.mxu0 %v4050
        %v7117 = vpop.f32.mrf.mxu0
        %v7118 = vadd.f32 %v7005, %v7117
        %7119 = vmatmul.f32.gmra.mxu0 %v4140
        %v7120 = vpop.f32.mrf.mxu0
        %v7121 = vadd.f32 %v7008, %v7120
        %7122 = vmatmul.f32.gmra.mxu0 %v4230
        %v7123 = vpop.f32.mrf.mxu0
        %v7124 = vadd.f32 %v7011, %v7123
        %7125 = vmatmul.f32.gmra.mxu0 %v4320
        %v7126 = vpop.f32.mrf.mxu0
        %v7127 = vadd.f32 %v7014, %v7126
        %7128 = vmatmul.f32.gmra.mxu0 %v4410
        %v7129 = vpop.f32.mrf.mxu0
        %v7130 = vadd.f32 %v7017, %v7129
        %7131 = vmatmul.f32.gmra.mxu0 %v4500
        %v7132 = vpop.f32.mrf.mxu0
        %v7133 = vadd.f32 %v7020, %v7132
        %7134 = vmatmul.f32.gmra.mxu0 %v4590
        %v7135 = vpop.f32.mrf.mxu0
        %v7136 = vadd.f32 %v7023, %v7135
        %7137 = vmatmul.f32.gmra.mxu0 %v4680
        %v7138 = vpop.f32.mrf.mxu0
        %v7139 = vadd.f32 %v7026, %v7138
        %7140 = vmatmul.f32.gmra.mxu0 %v4770
        %v7141 = vpop.f32.mrf.mxu0
        %v7142 = vadd.f32 %v7029, %v7141
        %7143 = vmatmul.f32.gmra.mxu0 %v4860
        %v7144 = vpop.f32.mrf.mxu0
        %v7145 = vadd.f32 %v7032, %v7144
        %7146 = vmatmul.f32.gmra.mxu0 %v4950
        %v7147 = vpop.f32.mrf.mxu0
        %v7148 = vadd.f32 %v7035, %v7147
        %7149 = vmatmul.f32.gmra.mxu0 %v5040
        %v7150 = vpop.f32.mrf.mxu0
        %v7151 = vadd.f32 %v7038, %v7150
        %7152 = vmatmul.f32.gmra.mxu0 %v5130
        %v7153 = vpop.f32.mrf.mxu0
        %v7154 = vadd.f32 %v7041, %v7153
        %7155 = vmatmul.f32.gmra.mxu0 %v5220
        %v7156 = vpop.f32.mrf.mxu0
        %v7157 = vadd.f32 %v7044, %v7156
        %7158 = vdwg.mxu0
        %7159 = vmatpush.msra.mxu0 %v5424
        %7160 = vmatpush.msra.mxu0 %v5421
        %7161 = vmatpush.msra.mxu0 %v5418
        %7162 = vmatpush.msra.mxu0 %v5415
        %7163 = vmatpush.msra.mxu0 %v5412
        %7164 = vmatpush.msra.mxu0 %v5409
        %7165 = vmatpush.msra.mxu0 %v5406
        %7166 = vmatpush.msra.mxu0 %v5403
        %7167 = vmatpush.msra.mxu0 %v5400
        %7168 = vmatpush.msra.mxu0 %v5397
        %7169 = vmatpush.msra.mxu0 %v5394
        %7170 = vmatpush.msra.mxu0 %v5391
        %7171 = vmatpush.msra.mxu0 %v5388
        %7172 = vmatpush.msra.mxu0 %v5385
        %7173 = vmatpush.msra.mxu0 %v5382
        %7174 = vmatpush.msra.mxu0 %v5379
        %7175 = vmatmul.f32.gmra.mxu0 %v2445
        %v7176 = vpop.f32.mrf.mxu0
        %v7177 = vadd.f32 %v7064, %v7176
        %7178 = vmatmul.f32.gmra.mxu0 %v2535
        %v7179 = vpop.f32.mrf.mxu0
        %v7180 = vadd.f32 %v7067, %v7179
        %7181 = vmatmul.f32.gmra.mxu0 %v2625
        %v7182 = vpop.f32.mrf.mxu0
        %v7183 = vadd.f32 %v7070, %v7182
        %7184 = vmatmul.f32.gmra.mxu0 %v2715
        %v7185 = vpop.f32.mrf.mxu0
        %v7186 = vadd.f32 %v7073, %v7185
        %7187 = vmatmul.f32.gmra.mxu0 %v2805
        %v7188 = vpop.f32.mrf.mxu0
        %v7189 = vadd.f32 %v7076, %v7188
        %7190 = vmatmul.f32.gmra.mxu0 %v2895
        %v7191 = vpop.f32.mrf.mxu0
        %v7192 = vadd.f32 %v7079, %v7191
        %7193 = vmatmul.f32.gmra.mxu0 %v2985
        %v7194 = vpop.f32.mrf.mxu0
        %v7195 = vadd.f32 %v7082, %v7194
        %7196 = vmatmul.f32.gmra.mxu0 %v3075
        %v7197 = vpop.f32.mrf.mxu0
        %v7198 = vadd.f32 %v7085, %v7197
        %7199 = vmatmul.f32.gmra.mxu0 %v3165
        %v7200 = vpop.f32.mrf.mxu0
        %v7201 = vadd.f32 %v7088, %v7200
        %7202 = vmatmul.f32.gmra.mxu0 %v3255
        %v7203 = vpop.f32.mrf.mxu0
        %v7204 = vadd.f32 %v7091, %v7203
        %7205 = vmatmul.f32.gmra.mxu0 %v3345
        %v7206 = vpop.f32.mrf.mxu0
        %v7207 = vadd.f32 %v7094, %v7206
        %7208 = vmatmul.f32.gmra.mxu0 %v3435
        %v7209 = vpop.f32.mrf.mxu0
        %v7210 = vadd.f32 %v7097, %v7209
        %7211 = vmatmul.f32.gmra.mxu0 %v3525
        %v7212 = vpop.f32.mrf.mxu0
        %v7213 = vadd.f32 %v7100, %v7212
        %7214 = vmatmul.f32.gmra.mxu0 %v3615
        %v7215 = vpop.f32.mrf.mxu0
        %v7216 = vadd.f32 %v7103, %v7215
        %7217 = vmatmul.f32.gmra.mxu0 %v3705
        %v7218 = vpop.f32.mrf.mxu0
        %v7219 = vadd.f32 %v7106, %v7218
        %7220 = vmatmul.f32.gmra.mxu0 %v3795
        %v7221 = vpop.f32.mrf.mxu0
        %v7222 = vadd.f32 %v7109, %v7221
        %7223 = vmatmul.f32.gmra.mxu0 %v3885
        %v7224 = vpop.f32.mrf.mxu0
        %v7225 = vadd.f32 %v7112, %v7224
        %7226 = vmatmul.f32.gmra.mxu0 %v3975
        %v7227 = vpop.f32.mrf.mxu0
        %v7228 = vadd.f32 %v7115, %v7227
        %7229 = vmatmul.f32.gmra.mxu0 %v4065
        %v7230 = vpop.f32.mrf.mxu0
        %v7231 = vadd.f32 %v7118, %v7230
        %7232 = vmatmul.f32.gmra.mxu0 %v4155
        %v7233 = vpop.f32.mrf.mxu0
        %v7234 = vadd.f32 %v7121, %v7233
        %7235 = vmatmul.f32.gmra.mxu0 %v4245
        %v7236 = vpop.f32.mrf.mxu0
        %v7237 = vadd.f32 %v7124, %v7236
        %7238 = vmatmul.f32.gmra.mxu0 %v4335
        %v7239 = vpop.f32.mrf.mxu0
        %v7240 = vadd.f32 %v7127, %v7239
        %7241 = vmatmul.f32.gmra.mxu0 %v4425
        %v7242 = vpop.f32.mrf.mxu0
        %v7243 = vadd.f32 %v7130, %v7242
        %7244 = vmatmul.f32.gmra.mxu0 %v4515
        %v7245 = vpop.f32.mrf.mxu0
        %v7246 = vadd.f32 %v7133, %v7245
        %7247 = vmatmul.f32.gmra.mxu0 %v4605
        %v7248 = vpop.f32.mrf.mxu0
        %v7249 = vadd.f32 %v7136, %v7248
        %7250 = vmatmul.f32.gmra.mxu0 %v4695
        %v7251 = vpop.f32.mrf.mxu0
        %v7252 = vadd.f32 %v7139, %v7251
        %7253 = vmatmul.f32.gmra.mxu0 %v4785
        %v7254 = vpop.f32.mrf.mxu0
        %v7255 = vadd.f32 %v7142, %v7254
        %7256 = vmatmul.f32.gmra.mxu0 %v4875
        %v7257 = vpop.f32.mrf.mxu0
        %v7258 = vadd.f32 %v7145, %v7257
        %7259 = vmatmul.f32.gmra.mxu0 %v4965
        %v7260 = vpop.f32.mrf.mxu0
        %v7261 = vadd.f32 %v7148, %v7260
        %7262 = vmatmul.f32.gmra.mxu0 %v5055
        %v7263 = vpop.f32.mrf.mxu0
        %v7264 = vadd.f32 %v7151, %v7263
        %7265 = vmatmul.f32.gmra.mxu0 %v5145
        %v7266 = vpop.f32.mrf.mxu0
        %v7267 = vadd.f32 %v7154, %v7266
        %7268 = vmatmul.f32.gmra.mxu0 %v5235
        %v7269 = vpop.f32.mrf.mxu0
        %v7270 = vadd.f32 %v7157, %v7269
        %7271 = vdwg.mxu0
        %7272 = vmatpush.msra.mxu0 %v5472
        %7273 = vmatpush.msra.mxu0 %v5469
        %7274 = vmatpush.msra.mxu0 %v5466
        %7275 = vmatpush.msra.mxu0 %v5463
        %7276 = vmatpush.msra.mxu0 %v5460
        %7277 = vmatpush.msra.mxu0 %v5457
        %7278 = vmatpush.msra.mxu0 %v5454
        %7279 = vmatpush.msra.mxu0 %v5451
        %7280 = vmatpush.msra.mxu0 %v5448
        %7281 = vmatpush.msra.mxu0 %v5445
        %7282 = vmatpush.msra.mxu0 %v5442
        %7283 = vmatpush.msra.mxu0 %v5439
        %7284 = vmatpush.msra.mxu0 %v5436
        %7285 = vmatpush.msra.mxu0 %v5433
        %7286 = vmatpush.msra.mxu0 %v5430
        %7287 = vmatpush.msra.mxu0 %v5427
        %7288 = vmatmul.f32.gmra.mxu0 %v2460
        %v7289 = vpop.f32.mrf.mxu0
        %v7290 = vadd.f32 %v7177, %v7289
        %7291 = vmatmul.f32.gmra.mxu0 %v2550
        %v7292 = vpop.f32.mrf.mxu0
        %v7293 = vadd.f32 %v7180, %v7292
        %7294 = vmatmul.f32.gmra.mxu0 %v2640
        %v7295 = vpop.f32.mrf.mxu0
        %v7296 = vadd.f32 %v7183, %v7295
        %7297 = vmatmul.f32.gmra.mxu0 %v2730
        %v7298 = vpop.f32.mrf.mxu0
        %v7299 = vadd.f32 %v7186, %v7298
        %7300 = vmatmul.f32.gmra.mxu0 %v2820
        %v7301 = vpop.f32.mrf.mxu0
        %v7302 = vadd.f32 %v7189, %v7301
        %7303 = vmatmul.f32.gmra.mxu0 %v2910
        %v7304 = vpop.f32.mrf.mxu0
        %v7305 = vadd.f32 %v7192, %v7304
        %7306 = vmatmul.f32.gmra.mxu0 %v3000
        %v7307 = vpop.f32.mrf.mxu0
        %v7308 = vadd.f32 %v7195, %v7307
        %7309 = vmatmul.f32.gmra.mxu0 %v3090
        %v7310 = vpop.f32.mrf.mxu0
        %v7311 = vadd.f32 %v7198, %v7310
        %7312 = vmatmul.f32.gmra.mxu0 %v3180
        %v7313 = vpop.f32.mrf.mxu0
        %v7314 = vadd.f32 %v7201, %v7313
        %7315 = vmatmul.f32.gmra.mxu0 %v3270
        %v7316 = vpop.f32.mrf.mxu0
        %v7317 = vadd.f32 %v7204, %v7316
        %7318 = vmatmul.f32.gmra.mxu0 %v3360
        %v7319 = vpop.f32.mrf.mxu0
        %v7320 = vadd.f32 %v7207, %v7319
        %7321 = vmatmul.f32.gmra.mxu0 %v3450
        %v7322 = vpop.f32.mrf.mxu0
        %v7323 = vadd.f32 %v7210, %v7322
        %7324 = vmatmul.f32.gmra.mxu0 %v3540
        %v7325 = vpop.f32.mrf.mxu0
        %v7326 = vadd.f32 %v7213, %v7325
        %7327 = vmatmul.f32.gmra.mxu0 %v3630
        %v7328 = vpop.f32.mrf.mxu0
        %v7329 = vadd.f32 %v7216, %v7328
        %7330 = vmatmul.f32.gmra.mxu0 %v3720
        %v7331 = vpop.f32.mrf.mxu0
        %v7332 = vadd.f32 %v7219, %v7331
        %7333 = vmatmul.f32.gmra.mxu0 %v3810
        %v7334 = vpop.f32.mrf.mxu0
        %v7335 = vadd.f32 %v7222, %v7334
        %7336 = vmatmul.f32.gmra.mxu0 %v3900
        %v7337 = vpop.f32.mrf.mxu0
        %v7338 = vadd.f32 %v7225, %v7337
        %7339 = vmatmul.f32.gmra.mxu0 %v3990
        %v7340 = vpop.f32.mrf.mxu0
        %v7341 = vadd.f32 %v7228, %v7340
        %7342 = vmatmul.f32.gmra.mxu0 %v4080
        %v7343 = vpop.f32.mrf.mxu0
        %v7344 = vadd.f32 %v7231, %v7343
        %7345 = vmatmul.f32.gmra.mxu0 %v4170
        %v7346 = vpop.f32.mrf.mxu0
        %v7347 = vadd.f32 %v7234, %v7346
        %7348 = vmatmul.f32.gmra.mxu0 %v4260
        %v7349 = vpop.f32.mrf.mxu0
        %v7350 = vadd.f32 %v7237, %v7349
        %7351 = vmatmul.f32.gmra.mxu0 %v4350
        %v7352 = vpop.f32.mrf.mxu0
        %v7353 = vadd.f32 %v7240, %v7352
        %7354 = vmatmul.f32.gmra.mxu0 %v4440
        %v7355 = vpop.f32.mrf.mxu0
        %v7356 = vadd.f32 %v7243, %v7355
        %7357 = vmatmul.f32.gmra.mxu0 %v4530
        %v7358 = vpop.f32.mrf.mxu0
        %v7359 = vadd.f32 %v7246, %v7358
        %7360 = vmatmul.f32.gmra.mxu0 %v4620
        %v7361 = vpop.f32.mrf.mxu0
        %v7362 = vadd.f32 %v7249, %v7361
        %7363 = vmatmul.f32.gmra.mxu0 %v4710
        %v7364 = vpop.f32.mrf.mxu0
        %v7365 = vadd.f32 %v7252, %v7364
        %7366 = vmatmul.f32.gmra.mxu0 %v4800
        %v7367 = vpop.f32.mrf.mxu0
        %v7368 = vadd.f32 %v7255, %v7367
        %7369 = vmatmul.f32.gmra.mxu0 %v4890
        %v7370 = vpop.f32.mrf.mxu0
        %v7371 = vadd.f32 %v7258, %v7370
        %7372 = vmatmul.f32.gmra.mxu0 %v4980
        %v7373 = vpop.f32.mrf.mxu0
        %v7374 = vadd.f32 %v7261, %v7373
        %7375 = vmatmul.f32.gmra.mxu0 %v5070
        %v7376 = vpop.f32.mrf.mxu0
        %v7377 = vadd.f32 %v7264, %v7376
        %7378 = vmatmul.f32.gmra.mxu0 %v5160
        %v7379 = vpop.f32.mrf.mxu0
        %v7380 = vadd.f32 %v7267, %v7379
        %7381 = vmatmul.f32.gmra.mxu0 %v5250
        %v7382 = vpop.f32.mrf.mxu0
        %v7383 = vadd.f32 %v7270, %v7382
        %7384 = vdwg.mxu0
        %7385 = vmatpush.msra.mxu0 %v5520
        %7386 = vmatpush.msra.mxu0 %v5517
        %7387 = vmatpush.msra.mxu0 %v5514
        %7388 = vmatpush.msra.mxu0 %v5511
        %7389 = vmatpush.msra.mxu0 %v5508
        %7390 = vmatpush.msra.mxu0 %v5505
        %7391 = vmatpush.msra.mxu0 %v5502
        %7392 = vmatpush.msra.mxu0 %v5499
        %7393 = vmatpush.msra.mxu0 %v5496
        %7394 = vmatpush.msra.mxu0 %v5493
        %7395 = vmatpush.msra.mxu0 %v5490
        %7396 = vmatpush.msra.mxu0 %v5487
        %7397 = vmatpush.msra.mxu0 %v5484
        %7398 = vmatpush.msra.mxu0 %v5481
        %7399 = vmatpush.msra.mxu0 %v5478
        %7400 = vmatpush.msra.mxu0 %v5475
        %7401 = vmatmul.f32.gmra.mxu0 %v2475
        %v7402 = vpop.f32.mrf.mxu0
        %v7403 = vadd.f32 %v7290, %v7402
        %7404 = vmatmul.f32.gmra.mxu0 %v2565
        %v7405 = vpop.f32.mrf.mxu0
        %v7406 = vadd.f32 %v7293, %v7405
        %7407 = vmatmul.f32.gmra.mxu0 %v2655
        %v7408 = vpop.f32.mrf.mxu0
        %v7409 = vadd.f32 %v7296, %v7408
        %7410 = vmatmul.f32.gmra.mxu0 %v2745
        %v7411 = vpop.f32.mrf.mxu0
        %v7412 = vadd.f32 %v7299, %v7411
        %7413 = vmatmul.f32.gmra.mxu0 %v2835
        %v7414 = vpop.f32.mrf.mxu0
        %v7415 = vadd.f32 %v7302, %v7414
        %7416 = vmatmul.f32.gmra.mxu0 %v2925
        %v7417 = vpop.f32.mrf.mxu0
        %v7418 = vadd.f32 %v7305, %v7417
        %7419 = vmatmul.f32.gmra.mxu0 %v3015
        %v7420 = vpop.f32.mrf.mxu0
        %v7421 = vadd.f32 %v7308, %v7420
        %7422 = vmatmul.f32.gmra.mxu0 %v3105
        %v7423 = vpop.f32.mrf.mxu0
        %v7424 = vadd.f32 %v7311, %v7423
        %7425 = vmatmul.f32.gmra.mxu0 %v3195
        %v7426 = vpop.f32.mrf.mxu0
        %v7427 = vadd.f32 %v7314, %v7426
        %7428 = vmatmul.f32.gmra.mxu0 %v3285
        %v7429 = vpop.f32.mrf.mxu0
        %v7430 = vadd.f32 %v7317, %v7429
        %7431 = vmatmul.f32.gmra.mxu0 %v3375
        %v7432 = vpop.f32.mrf.mxu0
        %v7433 = vadd.f32 %v7320, %v7432
        %7434 = vmatmul.f32.gmra.mxu0 %v3465
        %v7435 = vpop.f32.mrf.mxu0
        %v7436 = vadd.f32 %v7323, %v7435
        %7437 = vmatmul.f32.gmra.mxu0 %v3555
        %v7438 = vpop.f32.mrf.mxu0
        %v7439 = vadd.f32 %v7326, %v7438
        %7440 = vmatmul.f32.gmra.mxu0 %v3645
        %v7441 = vpop.f32.mrf.mxu0
        %v7442 = vadd.f32 %v7329, %v7441
        %7443 = vmatmul.f32.gmra.mxu0 %v3735
        %v7444 = vpop.f32.mrf.mxu0
        %v7445 = vadd.f32 %v7332, %v7444
        %7446 = vmatmul.f32.gmra.mxu0 %v3825
        %v7447 = vpop.f32.mrf.mxu0
        %v7448 = vadd.f32 %v7335, %v7447
        %7449 = vmatmul.f32.gmra.mxu0 %v3915
        %v7450 = vpop.f32.mrf.mxu0
        %v7451 = vadd.f32 %v7338, %v7450
        %7452 = vmatmul.f32.gmra.mxu0 %v4005
        %v7453 = vpop.f32.mrf.mxu0
        %v7454 = vadd.f32 %v7341, %v7453
        %7455 = vmatmul.f32.gmra.mxu0 %v4095
        %v7456 = vpop.f32.mrf.mxu0
        %v7457 = vadd.f32 %v7344, %v7456
        %7458 = vmatmul.f32.gmra.mxu0 %v4185
        %v7459 = vpop.f32.mrf.mxu0
        %v7460 = vadd.f32 %v7347, %v7459
        %7461 = vmatmul.f32.gmra.mxu0 %v4275
        %v7462 = vpop.f32.mrf.mxu0
        %v7463 = vadd.f32 %v7350, %v7462
        %7464 = vmatmul.f32.gmra.mxu0 %v4365
        %v7465 = vpop.f32.mrf.mxu0
        %v7466 = vadd.f32 %v7353, %v7465
        %7467 = vmatmul.f32.gmra.mxu0 %v4455
        %v7468 = vpop.f32.mrf.mxu0
        %v7469 = vadd.f32 %v7356, %v7468
        %7470 = vmatmul.f32.gmra.mxu0 %v4545
        %v7471 = vpop.f32.mrf.mxu0
        %v7472 = vadd.f32 %v7359, %v7471
        %7473 = vmatmul.f32.gmra.mxu0 %v4635
        %v7474 = vpop.f32.mrf.mxu0
        %v7475 = vadd.f32 %v7362, %v7474
        %7476 = vmatmul.f32.gmra.mxu0 %v4725
        %v7477 = vpop.f32.mrf.mxu0
        %v7478 = vadd.f32 %v7365, %v7477
        %7479 = vmatmul.f32.gmra.mxu0 %v4815
        %v7480 = vpop.f32.mrf.mxu0
        %v7481 = vadd.f32 %v7368, %v7480
        %7482 = vmatmul.f32.gmra.mxu0 %v4905
        %v7483 = vpop.f32.mrf.mxu0
        %v7484 = vadd.f32 %v7371, %v7483
        %7485 = vmatmul.f32.gmra.mxu0 %v4995
        %v7486 = vpop.f32.mrf.mxu0
        %v7487 = vadd.f32 %v7374, %v7486
        %7488 = vmatmul.f32.gmra.mxu0 %v5085
        %v7489 = vpop.f32.mrf.mxu0
        %v7490 = vadd.f32 %v7377, %v7489
        %7491 = vmatmul.f32.gmra.mxu0 %v5175
        %v7492 = vpop.f32.mrf.mxu0
        %v7493 = vadd.f32 %v7380, %v7492
        %7494 = vmatmul.f32.gmra.mxu0 %v5265
        %v7495 = vpop.f32.mrf.mxu0
        %v7496 = vadd.f32 %v7383, %v7495
        %7497 = vdwg.mxu0
        %7498 = vmatpush.msra.mxu0 %v5568
        %7499 = vmatpush.msra.mxu0 %v5565
        %7500 = vmatpush.msra.mxu0 %v5562
        %7501 = vmatpush.msra.mxu0 %v5559
        %7502 = vmatpush.msra.mxu0 %v5556
        %7503 = vmatpush.msra.mxu0 %v5553
        %7504 = vmatpush.msra.mxu0 %v5550
        %7505 = vmatpush.msra.mxu0 %v5547
        %7506 = vmatpush.msra.mxu0 %v5544
        %7507 = vmatpush.msra.mxu0 %v5541
        %7508 = vmatpush.msra.mxu0 %v5538
        %7509 = vmatpush.msra.mxu0 %v5535
        %7510 = vmatpush.msra.mxu0 %v5532
        %7511 = vmatpush.msra.mxu0 %v5529
        %7512 = vmatpush.msra.mxu0 %v5526
        %7513 = vmatpush.msra.mxu0 %v5523
        %7514 = vmatmul.f32.gmra.mxu0 %v2490
        %v7515 = vpop.f32.mrf.mxu0
        %v7516 = vadd.f32 %v7403, %v7515
        %7517 = vmatmul.f32.gmra.mxu0 %v2580
        %v7518 = vpop.f32.mrf.mxu0
        %v7519 = vadd.f32 %v7406, %v7518
        %7520 = vmatmul.f32.gmra.mxu0 %v2670
        %v7521 = vpop.f32.mrf.mxu0
        %v7522 = vadd.f32 %v7409, %v7521
        %7523 = vmatmul.f32.gmra.mxu0 %v2760
        %v7524 = vpop.f32.mrf.mxu0
        %v7525 = vadd.f32 %v7412, %v7524
        %7526 = vmatmul.f32.gmra.mxu0 %v2850
        %v7527 = vpop.f32.mrf.mxu0
        %v7528 = vadd.f32 %v7415, %v7527
        %7529 = vmatmul.f32.gmra.mxu0 %v2940
        %v7530 = vpop.f32.mrf.mxu0
        %v7531 = vadd.f32 %v7418, %v7530
        %7532 = vmatmul.f32.gmra.mxu0 %v3030
        %v7533 = vpop.f32.mrf.mxu0
        %v7534 = vadd.f32 %v7421, %v7533
        %7535 = vmatmul.f32.gmra.mxu0 %v3120
        %v7536 = vpop.f32.mrf.mxu0
        %v7537 = vadd.f32 %v7424, %v7536
        %7538 = vmatmul.f32.gmra.mxu0 %v3210
        %v7539 = vpop.f32.mrf.mxu0
        %v7540 = vadd.f32 %v7427, %v7539
        %7541 = vmatmul.f32.gmra.mxu0 %v3300
        %v7542 = vpop.f32.mrf.mxu0
        %v7543 = vadd.f32 %v7430, %v7542
        %7544 = vmatmul.f32.gmra.mxu0 %v3390
        %v7545 = vpop.f32.mrf.mxu0
        %v7546 = vadd.f32 %v7433, %v7545
        %7547 = vmatmul.f32.gmra.mxu0 %v3480
        %v7548 = vpop.f32.mrf.mxu0
        %v7549 = vadd.f32 %v7436, %v7548
        %7550 = vmatmul.f32.gmra.mxu0 %v3570
        %v7551 = vpop.f32.mrf.mxu0
        %v7552 = vadd.f32 %v7439, %v7551
        %7553 = vmatmul.f32.gmra.mxu0 %v3660
        %v7554 = vpop.f32.mrf.mxu0
        %v7555 = vadd.f32 %v7442, %v7554
        %7556 = vmatmul.f32.gmra.mxu0 %v3750
        %v7557 = vpop.f32.mrf.mxu0
        %v7558 = vadd.f32 %v7445, %v7557
        %7559 = vmatmul.f32.gmra.mxu0 %v3840
        %v7560 = vpop.f32.mrf.mxu0
        %v7561 = vadd.f32 %v7448, %v7560
        %7562 = vmatmul.f32.gmra.mxu0 %v3930
        %v7563 = vpop.f32.mrf.mxu0
        %v7564 = vadd.f32 %v7451, %v7563
        %7565 = vmatmul.f32.gmra.mxu0 %v4020
        %v7566 = vpop.f32.mrf.mxu0
        %v7567 = vadd.f32 %v7454, %v7566
        %7568 = vmatmul.f32.gmra.mxu0 %v4110
        %v7569 = vpop.f32.mrf.mxu0
        %v7570 = vadd.f32 %v7457, %v7569
        %7571 = vmatmul.f32.gmra.mxu0 %v4200
        %v7572 = vpop.f32.mrf.mxu0
        %v7573 = vadd.f32 %v7460, %v7572
        %7574 = vmatmul.f32.gmra.mxu0 %v4290
        %v7575 = vpop.f32.mrf.mxu0
        %v7576 = vadd.f32 %v7463, %v7575
        %7577 = vmatmul.f32.gmra.mxu0 %v4380
        %v7578 = vpop.f32.mrf.mxu0
        %v7579 = vadd.f32 %v7466, %v7578
        %7580 = vmatmul.f32.gmra.mxu0 %v4470
        %v7581 = vpop.f32.mrf.mxu0
        %v7582 = vadd.f32 %v7469, %v7581
        %7583 = vmatmul.f32.gmra.mxu0 %v4560
        %v7584 = vpop.f32.mrf.mxu0
        %v7585 = vadd.f32 %v7472, %v7584
        %7586 = vmatmul.f32.gmra.mxu0 %v4650
        %v7587 = vpop.f32.mrf.mxu0
        %v7588 = vadd.f32 %v7475, %v7587
        %7589 = vmatmul.f32.gmra.mxu0 %v4740
        %v7590 = vpop.f32.mrf.mxu0
        %v7591 = vadd.f32 %v7478, %v7590
        %7592 = vmatmul.f32.gmra.mxu0 %v4830
        %v7593 = vpop.f32.mrf.mxu0
        %v7594 = vadd.f32 %v7481, %v7593
        %7595 = vmatmul.f32.gmra.mxu0 %v4920
        %v7596 = vpop.f32.mrf.mxu0
        %v7597 = vadd.f32 %v7484, %v7596
        %7598 = vmatmul.f32.gmra.mxu0 %v5010
        %v7599 = vpop.f32.mrf.mxu0
        %v7600 = vadd.f32 %v7487, %v7599
        %7601 = vmatmul.f32.gmra.mxu0 %v5100
        %v7602 = vpop.f32.mrf.mxu0
        %v7603 = vadd.f32 %v7490, %v7602
        %7604 = vmatmul.f32.gmra.mxu0 %v5190
        %v7605 = vpop.f32.mrf.mxu0
        %v7606 = vadd.f32 %v7493, %v7605
        %7607 = vmatmul.f32.gmra.mxu0 %v5280
        %v7608 = vpop.f32.mrf.mxu0
        %v7609 = vadd.f32 %v7496, %v7608
        %7610 = vdwg.mxu0
        %v7611 = vld [vmem:[%s426] sm:$0xff]
        %v7612 = vld [vmem:[%s426 + $0x8] sm:$0xff]
        %v7613 = vld [vmem:[%s426 + $0x10] sm:$0xff]
        %v7614 = vld [vmem:[%s426 + $0x18] sm:$0xff]
        %v7615 = vld [vmem:[%s426 + $0x20] sm:$0xff]
        %v7616 = vld [vmem:[%s426 + $0x28] sm:$0xff]
        %v7617 = vld [vmem:[%s426 + $0x30] sm:$0xff]
        %v7618 = vld [vmem:[%s426 + $0x38] sm:$0xff]
        %v7619 = vld [vmem:[%s426 + $0x40] sm:$0xff]
        %v7620 = vld [vmem:[%s426 + $0x48] sm:$0xff]
        %v7621 = vld [vmem:[%s426 + $0x50] sm:$0xff]
        %v7622 = vld [vmem:[%s426 + $0x58] sm:$0xff]
        %v7623 = vld [vmem:[%s426 + $0x60] sm:$0xff]
        %v7624 = vld [vmem:[%s426 + $0x68] sm:$0xff]
        %v7625 = vld [vmem:[%s426 + $0x70] sm:$0xff]
        %v7626 = vld [vmem:[%s426 + $0x78] sm:$0xff]
        %v7627 = vld [vmem:[%s426 + $0x80] sm:$0xff]
        %v7628 = vld [vmem:[%s426 + $0x88] sm:$0xff]
        %v7629 = vld [vmem:[%s426 + $0x90] sm:$0xff]
        %v7630 = vld [vmem:[%s426 + $0x98] sm:$0xff]
        %v7631 = vld [vmem:[%s426 + $0xa0] sm:$0xff]
        %v7632 = vld [vmem:[%s426 + $0xa8] sm:$0xff]
        %v7633 = vld [vmem:[%s426 + $0xb0] sm:$0xff]
        %v7634 = vld [vmem:[%s426 + $0xb8] sm:$0xff]
        %v7635 = vld [vmem:[%s426 + $0xc0] sm:$0xff]
        %v7636 = vld [vmem:[%s426 + $0xc8] sm:$0xff]
        %v7637 = vld [vmem:[%s426 + $0xd0] sm:$0xff]
        %v7638 = vld [vmem:[%s426 + $0xd8] sm:$0xff]
        %v7639 = vld [vmem:[%s426 + $0xe0] sm:$0xff]
        %v7640 = vld [vmem:[%s426 + $0xe8] sm:$0xff]
        %v7641 = vld [vmem:[%s426 + $0xf0] sm:$0xff]
        %v7642 = vld [vmem:[%s426 + $0xf8] sm:$0xff]
        %7644 = vset.pattern.permute.xlu0 0
        %7645 = vperm.xlu0 %7644, %v7611
        %v7646 = vpop.permute.xlu0 %7645
        %7649 = vset.pattern.permute.xlu0 0
        %7650 = vperm.xlu0 %7649, %v7612
        %v7651 = vpop.permute.xlu0 %7650
        %7654 = vset.pattern.permute.xlu0 0
        %7655 = vperm.xlu0 %7654, %v7613
        %v7656 = vpop.permute.xlu0 %7655
        %7659 = vset.pattern.permute.xlu0 0
        %7660 = vperm.xlu0 %7659, %v7614
        %v7661 = vpop.permute.xlu0 %7660
        %7664 = vset.pattern.permute.xlu0 0
        %7665 = vperm.xlu0 %7664, %v7615
        %v7666 = vpop.permute.xlu0 %7665
        %7669 = vset.pattern.permute.xlu0 0
        %7670 = vperm.xlu0 %7669, %v7616
        %v7671 = vpop.permute.xlu0 %7670
        %7674 = vset.pattern.permute.xlu0 0
        %7675 = vperm.xlu0 %7674, %v7617
        %v7676 = vpop.permute.xlu0 %7675
        %7679 = vset.pattern.permute.xlu0 0
        %7680 = vperm.xlu0 %7679, %v7618
        %v7681 = vpop.permute.xlu0 %7680
        %7684 = vset.pattern.permute.xlu0 0
        %7685 = vperm.xlu0 %7684, %v7619
        %v7686 = vpop.permute.xlu0 %7685
        %7689 = vset.pattern.permute.xlu0 0
        %7690 = vperm.xlu0 %7689, %v7620
        %v7691 = vpop.permute.xlu0 %7690
        %7694 = vset.pattern.permute.xlu0 0
        %7695 = vperm.xlu0 %7694, %v7621
        %v7696 = vpop.permute.xlu0 %7695
        %7699 = vset.pattern.permute.xlu0 0
        %7700 = vperm.xlu0 %7699, %v7622
        %v7701 = vpop.permute.xlu0 %7700
        %7704 = vset.pattern.permute.xlu0 0
        %7705 = vperm.xlu0 %7704, %v7623
        %v7706 = vpop.permute.xlu0 %7705
        %7709 = vset.pattern.permute.xlu0 0
        %7710 = vperm.xlu0 %7709, %v7624
        %v7711 = vpop.permute.xlu0 %7710
        %7714 = vset.pattern.permute.xlu0 0
        %7715 = vperm.xlu0 %7714, %v7625
        %v7716 = vpop.permute.xlu0 %7715
        %7719 = vset.pattern.permute.xlu0 0
        %7720 = vperm.xlu0 %7719, %v7626
        %v7721 = vpop.permute.xlu0 %7720
        %7724 = vset.pattern.permute.xlu0 0
        %7725 = vperm.xlu0 %7724, %v7627
        %v7726 = vpop.permute.xlu0 %7725
        %7729 = vset.pattern.permute.xlu0 0
        %7730 = vperm.xlu0 %7729, %v7628
        %v7731 = vpop.permute.xlu0 %7730
        %7734 = vset.pattern.permute.xlu0 0
        %7735 = vperm.xlu0 %7734, %v7629
        %v7736 = vpop.permute.xlu0 %7735
        %7739 = vset.pattern.permute.xlu0 0
        %7740 = vperm.xlu0 %7739, %v7630
        %v7741 = vpop.permute.xlu0 %7740
        %7744 = vset.pattern.permute.xlu0 0
        %7745 = vperm.xlu0 %7744, %v7631
        %v7746 = vpop.permute.xlu0 %7745
        %7749 = vset.pattern.permute.xlu0 0
        %7750 = vperm.xlu0 %7749, %v7632
        %v7751 = vpop.permute.xlu0 %7750
        %7754 = vset.pattern.permute.xlu0 0
        %7755 = vperm.xlu0 %7754, %v7633
        %v7756 = vpop.permute.xlu0 %7755
        %7759 = vset.pattern.permute.xlu0 0
        %7760 = vperm.xlu0 %7759, %v7634
        %v7761 = vpop.permute.xlu0 %7760
        %7764 = vset.pattern.permute.xlu0 0
        %7765 = vperm.xlu0 %7764, %v7635
        %v7766 = vpop.permute.xlu0 %7765
        %7769 = vset.pattern.permute.xlu0 0
        %7770 = vperm.xlu0 %7769, %v7636
        %v7771 = vpop.permute.xlu0 %7770
        %7774 = vset.pattern.permute.xlu0 0
        %7775 = vperm.xlu0 %7774, %v7637
        %v7776 = vpop.permute.xlu0 %7775
        %7779 = vset.pattern.permute.xlu0 0
        %7780 = vperm.xlu0 %7779, %v7638
        %v7781 = vpop.permute.xlu0 %7780
        %7784 = vset.pattern.permute.xlu0 0
        %7785 = vperm.xlu0 %7784, %v7639
        %v7786 = vpop.permute.xlu0 %7785
        %7789 = vset.pattern.permute.xlu0 0
        %7790 = vperm.xlu0 %7789, %v7640
        %v7791 = vpop.permute.xlu0 %7790
        %7794 = vset.pattern.permute.xlu0 0
        %7795 = vperm.xlu0 %7794, %v7641
        %v7796 = vpop.permute.xlu0 %7795
        %7799 = vset.pattern.permute.xlu0 0
        %7800 = vperm.xlu0 %7799, %v7642
        %v7801 = vpop.permute.xlu0 %7800
        %v7803 = vmul.f32 %v7646, %v6160
        %v7804 = vmul.f32 %v7651, %v6163
        %v7805 = vmul.f32 %v7656, %v6166
        %v7806 = vmul.f32 %v7661, %v6169
        %v7807 = vmul.f32 %v7666, %v6172
        %v7808 = vmul.f32 %v7671, %v6175
        %v7809 = vmul.f32 %v7676, %v6178
        %v7810 = vmul.f32 %v7681, %v6181
        %v7811 = vmul.f32 %v7686, %v6184
        %v7812 = vmul.f32 %v7691, %v6187
        %v7813 = vmul.f32 %v7696, %v6190
        %v7814 = vmul.f32 %v7701, %v6193
        %v7815 = vmul.f32 %v7706, %v6196
        %v7816 = vmul.f32 %v7711, %v6199
        %v7817 = vmul.f32 %v7716, %v6202
        %v7818 = vmul.f32 %v7721, %v6205
        %v7819 = vmul.f32 %v7726, %v6208
        %v7820 = vmul.f32 %v7731, %v6211
        %v7821 = vmul.f32 %v7736, %v6214
        %v7822 = vmul.f32 %v7741, %v6217
        %v7823 = vmul.f32 %v7746, %v6220
        %v7824 = vmul.f32 %v7751, %v6223
        %v7825 = vmul.f32 %v7756, %v6226
        %v7826 = vmul.f32 %v7761, %v6229
        %v7827 = vmul.f32 %v7766, %v6232
        %v7828 = vmul.f32 %v7771, %v6235
        %v7829 = vmul.f32 %v7776, %v6238
        %v7830 = vmul.f32 %v7781, %v6241
        %v7831 = vmul.f32 %v7786, %v6244
        %v7832 = vmul.f32 %v7791, %v6247
        %v7833 = vmul.f32 %v7796, %v6250
        %v7834 = vmul.f32 %v7801, %v6253
        %7835 = vset.pattern.permute.xlu0 1
        %7836 = vperm.xlu0 %7835, %v7611
        %v7837 = vpop.permute.xlu0 %7836
        %7839 = vset.pattern.permute.xlu0 1
        %7840 = vperm.xlu0 %7839, %v7612
        %v7841 = vpop.permute.xlu0 %7840
        %7843 = vset.pattern.permute.xlu0 1
        %7844 = vperm.xlu0 %7843, %v7613
        %v7845 = vpop.permute.xlu0 %7844
        %7847 = vset.pattern.permute.xlu0 1
        %7848 = vperm.xlu0 %7847, %v7614
        %v7849 = vpop.permute.xlu0 %7848
        %7851 = vset.pattern.permute.xlu0 1
        %7852 = vperm.xlu0 %7851, %v7615
        %v7853 = vpop.permute.xlu0 %7852
        %7855 = vset.pattern.permute.xlu0 1
        %7856 = vperm.xlu0 %7855, %v7616
        %v7857 = vpop.permute.xlu0 %7856
        %7859 = vset.pattern.permute.xlu0 1
        %7860 = vperm.xlu0 %7859, %v7617
        %v7861 = vpop.permute.xlu0 %7860
        %7863 = vset.pattern.permute.xlu0 1
        %7864 = vperm.xlu0 %7863, %v7618
        %v7865 = vpop.permute.xlu0 %7864
        %7867 = vset.pattern.permute.xlu0 1
        %7868 = vperm.xlu0 %7867, %v7619
        %v7869 = vpop.permute.xlu0 %7868
        %7871 = vset.pattern.permute.xlu0 1
        %7872 = vperm.xlu0 %7871, %v7620
        %v7873 = vpop.permute.xlu0 %7872
        %7875 = vset.pattern.permute.xlu0 1
        %7876 = vperm.xlu0 %7875, %v7621
        %v7877 = vpop.permute.xlu0 %7876
        %7879 = vset.pattern.permute.xlu0 1
        %7880 = vperm.xlu0 %7879, %v7622
        %v7881 = vpop.permute.xlu0 %7880
        %7883 = vset.pattern.permute.xlu0 1
        %7884 = vperm.xlu0 %7883, %v7623
        %v7885 = vpop.permute.xlu0 %7884
        %7887 = vset.pattern.permute.xlu0 1
        %7888 = vperm.xlu0 %7887, %v7624
        %v7889 = vpop.permute.xlu0 %7888
        %7891 = vset.pattern.permute.xlu0 1
        %7892 = vperm.xlu0 %7891, %v7625
        %v7893 = vpop.permute.xlu0 %7892
        %7895 = vset.pattern.permute.xlu0 1
        %7896 = vperm.xlu0 %7895, %v7626
        %v7897 = vpop.permute.xlu0 %7896
        %7899 = vset.pattern.permute.xlu0 1
        %7900 = vperm.xlu0 %7899, %v7627
        %v7901 = vpop.permute.xlu0 %7900
        %7903 = vset.pattern.permute.xlu0 1
        %7904 = vperm.xlu0 %7903, %v7628
        %v7905 = vpop.permute.xlu0 %7904
        %7907 = vset.pattern.permute.xlu0 1
        %7908 = vperm.xlu0 %7907, %v7629
        %v7909 = vpop.permute.xlu0 %7908
        %7911 = vset.pattern.permute.xlu0 1
        %7912 = vperm.xlu0 %7911, %v7630
        %v7913 = vpop.permute.xlu0 %7912
        %7915 = vset.pattern.permute.xlu0 1
        %7916 = vperm.xlu0 %7915, %v7631
        %v7917 = vpop.permute.xlu0 %7916
        %7919 = vset.pattern.permute.xlu0 1
        %7920 = vperm.xlu0 %7919, %v7632
        %v7921 = vpop.permute.xlu0 %7920
        %7923 = vset.pattern.permute.xlu0 1
        %7924 = vperm.xlu0 %7923, %v7633
        %v7925 = vpop.permute.xlu0 %7924
        %7927 = vset.pattern.permute.xlu0 1
        %7928 = vperm.xlu0 %7927, %v7634
        %v7929 = vpop.permute.xlu0 %7928
        %7931 = vset.pattern.permute.xlu0 1
        %7932 = vperm.xlu0 %7931, %v7635
        %v7933 = vpop.permute.xlu0 %7932
        %7935 = vset.pattern.permute.xlu0 1
        %7936 = vperm.xlu0 %7935, %v7636
        %v7937 = vpop.permute.xlu0 %7936
        %7939 = vset.pattern.permute.xlu0 1
        %7940 = vperm.xlu0 %7939, %v7637
        %v7941 = vpop.permute.xlu0 %7940
        %7943 = vset.pattern.permute.xlu0 1
        %7944 = vperm.xlu0 %7943, %v7638
        %v7945 = vpop.permute.xlu0 %7944
        %7947 = vset.pattern.permute.xlu0 1
        %7948 = vperm.xlu0 %7947, %v7639
        %v7949 = vpop.permute.xlu0 %7948
        %7951 = vset.pattern.permute.xlu0 1
        %7952 = vperm.xlu0 %7951, %v7640
        %v7953 = vpop.permute.xlu0 %7952
        %7955 = vset.pattern.permute.xlu0 1
        %7956 = vperm.xlu0 %7955, %v7641
        %v7957 = vpop.permute.xlu0 %7956
        %7959 = vset.pattern.permute.xlu0 1
        %7960 = vperm.xlu0 %7959, %v7642
        %v7961 = vpop.permute.xlu0 %7960
        %v7963 = vmul.f32 %v7837, %v6838
        %v7964 = vmul.f32 %v7841, %v6841
        %v7965 = vmul.f32 %v7845, %v6844
        %v7966 = vmul.f32 %v7849, %v6847
        %v7967 = vmul.f32 %v7853, %v6850
        %v7968 = vmul.f32 %v7857, %v6853
        %v7969 = vmul.f32 %v7861, %v6856
        %v7970 = vmul.f32 %v7865, %v6859
        %v7971 = vmul.f32 %v7869, %v6862
        %v7972 = vmul.f32 %v7873, %v6865
        %v7973 = vmul.f32 %v7877, %v6868
        %v7974 = vmul.f32 %v7881, %v6871
        %v7975 = vmul.f32 %v7885, %v6874
        %v7976 = vmul.f32 %v7889, %v6877
        %v7977 = vmul.f32 %v7893, %v6880
        %v7978 = vmul.f32 %v7897, %v6883
        %v7979 = vmul.f32 %v7901, %v6886
        %v7980 = vmul.f32 %v7905, %v6889
        %v7981 = vmul.f32 %v7909, %v6892
        %v7982 = vmul.f32 %v7913, %v6895
        %v7983 = vmul.f32 %v7917, %v6898
        %v7984 = vmul.f32 %v7921, %v6901
        %v7985 = vmul.f32 %v7925, %v6904
        %v7986 = vmul.f32 %v7929, %v6907
        %v7987 = vmul.f32 %v7933, %v6910
        %v7988 = vmul.f32 %v7937, %v6913
        %v7989 = vmul.f32 %v7941, %v6916
        %v7990 = vmul.f32 %v7945, %v6919
        %v7991 = vmul.f32 %v7949, %v6922
        %v7992 = vmul.f32 %v7953, %v6925
        %v7993 = vmul.f32 %v7957, %v6928
        %v7994 = vmul.f32 %v7961, %v6931
        %v7995 = vadd.f32 %v7803, %v7963
        %v7996 = vadd.f32 %v7804, %v7964
        %v7997 = vadd.f32 %v7805, %v7965
        %v7998 = vadd.f32 %v7806, %v7966
        %v7999 = vadd.f32 %v7807, %v7967
        %v8000 = vadd.f32 %v7808, %v7968
        %v8001 = vadd.f32 %v7809, %v7969
        %v8002 = vadd.f32 %v7810, %v7970
        %v8003 = vadd.f32 %v7811, %v7971
        %v8004 = vadd.f32 %v7812, %v7972
        %v8005 = vadd.f32 %v7813, %v7973
        %v8006 = vadd.f32 %v7814, %v7974
        %v8007 = vadd.f32 %v7815, %v7975
        %v8008 = vadd.f32 %v7816, %v7976
        %v8009 = vadd.f32 %v7817, %v7977
        %v8010 = vadd.f32 %v7818, %v7978
        %v8011 = vadd.f32 %v7819, %v7979
        %v8012 = vadd.f32 %v7820, %v7980
        %v8013 = vadd.f32 %v7821, %v7981
        %v8014 = vadd.f32 %v7822, %v7982
        %v8015 = vadd.f32 %v7823, %v7983
        %v8016 = vadd.f32 %v7824, %v7984
        %v8017 = vadd.f32 %v7825, %v7985
        %v8018 = vadd.f32 %v7826, %v7986
        %v8019 = vadd.f32 %v7827, %v7987
        %v8020 = vadd.f32 %v7828, %v7988
        %v8021 = vadd.f32 %v7829, %v7989
        %v8022 = vadd.f32 %v7830, %v7990
        %v8023 = vadd.f32 %v7831, %v7991
        %v8024 = vadd.f32 %v7832, %v7992
        %v8025 = vadd.f32 %v7833, %v7993
        %v8026 = vadd.f32 %v7834, %v7994
        %8027 = vset.pattern.permute.xlu0 2
        %8028 = vperm.xlu0 %8027, %v7611
        %v8029 = vpop.permute.xlu0 %8028
        %8031 = vset.pattern.permute.xlu0 2
        %8032 = vperm.xlu0 %8031, %v7612
        %v8033 = vpop.permute.xlu0 %8032
        %8035 = vset.pattern.permute.xlu0 2
        %8036 = vperm.xlu0 %8035, %v7613
        %v8037 = vpop.permute.xlu0 %8036
        %8039 = vset.pattern.permute.xlu0 2
        %8040 = vperm.xlu0 %8039, %v7614
        %v8041 = vpop.permute.xlu0 %8040
        %8043 = vset.pattern.permute.xlu0 2
        %8044 = vperm.xlu0 %8043, %v7615
        %v8045 = vpop.permute.xlu0 %8044
        %8047 = vset.pattern.permute.xlu0 2
        %8048 = vperm.xlu0 %8047, %v7616
        %v8049 = vpop.permute.xlu0 %8048
        %8051 = vset.pattern.permute.xlu0 2
        %8052 = vperm.xlu0 %8051, %v7617
        %v8053 = vpop.permute.xlu0 %8052
        %8055 = vset.pattern.permute.xlu0 2
        %8056 = vperm.xlu0 %8055, %v7618
        %v8057 = vpop.permute.xlu0 %8056
        %8059 = vset.pattern.permute.xlu0 2
        %8060 = vperm.xlu0 %8059, %v7619
        %v8061 = vpop.permute.xlu0 %8060
        %8063 = vset.pattern.permute.xlu0 2
        %8064 = vperm.xlu0 %8063, %v7620
        %v8065 = vpop.permute.xlu0 %8064
        %8067 = vset.pattern.permute.xlu0 2
        %8068 = vperm.xlu0 %8067, %v7621
        %v8069 = vpop.permute.xlu0 %8068
        %8071 = vset.pattern.permute.xlu0 2
        %8072 = vperm.xlu0 %8071, %v7622
        %v8073 = vpop.permute.xlu0 %8072
        %8075 = vset.pattern.permute.xlu0 2
        %8076 = vperm.xlu0 %8075, %v7623
        %v8077 = vpop.permute.xlu0 %8076
        %8079 = vset.pattern.permute.xlu0 2
        %8080 = vperm.xlu0 %8079, %v7624
        %v8081 = vpop.permute.xlu0 %8080
        %8083 = vset.pattern.permute.xlu0 2
        %8084 = vperm.xlu0 %8083, %v7625
        %v8085 = vpop.permute.xlu0 %8084
        %8087 = vset.pattern.permute.xlu0 2
        %8088 = vperm.xlu0 %8087, %v7626
        %v8089 = vpop.permute.xlu0 %8088
        %8091 = vset.pattern.permute.xlu0 2
        %8092 = vperm.xlu0 %8091, %v7627
        %v8093 = vpop.permute.xlu0 %8092
        %8095 = vset.pattern.permute.xlu0 2
        %8096 = vperm.xlu0 %8095, %v7628
        %v8097 = vpop.permute.xlu0 %8096
        %8099 = vset.pattern.permute.xlu0 2
        %8100 = vperm.xlu0 %8099, %v7629
        %v8101 = vpop.permute.xlu0 %8100
        %8103 = vset.pattern.permute.xlu0 2
        %8104 = vperm.xlu0 %8103, %v7630
        %v8105 = vpop.permute.xlu0 %8104
        %8107 = vset.pattern.permute.xlu0 2
        %8108 = vperm.xlu0 %8107, %v7631
        %v8109 = vpop.permute.xlu0 %8108
        %8111 = vset.pattern.permute.xlu0 2
        %8112 = vperm.xlu0 %8111, %v7632
        %v8113 = vpop.permute.xlu0 %8112
        %8115 = vset.pattern.permute.xlu0 2
        %8116 = vperm.xlu0 %8115, %v7633
        %v8117 = vpop.permute.xlu0 %8116
        %8119 = vset.pattern.permute.xlu0 2
        %8120 = vperm.xlu0 %8119, %v7634
        %v8121 = vpop.permute.xlu0 %8120
        %8123 = vset.pattern.permute.xlu0 2
        %8124 = vperm.xlu0 %8123, %v7635
        %v8125 = vpop.permute.xlu0 %8124
        %8127 = vset.pattern.permute.xlu0 2
        %8128 = vperm.xlu0 %8127, %v7636
        %v8129 = vpop.permute.xlu0 %8128
        %8131 = vset.pattern.permute.xlu0 2
        %8132 = vperm.xlu0 %8131, %v7637
        %v8133 = vpop.permute.xlu0 %8132
        %8135 = vset.pattern.permute.xlu0 2
        %8136 = vperm.xlu0 %8135, %v7638
        %v8137 = vpop.permute.xlu0 %8136
        %8139 = vset.pattern.permute.xlu0 2
        %8140 = vperm.xlu0 %8139, %v7639
        %v8141 = vpop.permute.xlu0 %8140
        %8143 = vset.pattern.permute.xlu0 2
        %8144 = vperm.xlu0 %8143, %v7640
        %v8145 = vpop.permute.xlu0 %8144
        %8147 = vset.pattern.permute.xlu0 2
        %8148 = vperm.xlu0 %8147, %v7641
        %v8149 = vpop.permute.xlu0 %8148
        %8151 = vset.pattern.permute.xlu0 2
        %8152 = vperm.xlu0 %8151, %v7642
        %v8153 = vpop.permute.xlu0 %8152
        %v8155 = vmul.f32 %v8029, %v7516
        %v8156 = vmul.f32 %v8033, %v7519
        %v8157 = vmul.f32 %v8037, %v7522
        %v8158 = vmul.f32 %v8041, %v7525
        %v8159 = vmul.f32 %v8045, %v7528
        %v8160 = vmul.f32 %v8049, %v7531
        %v8161 = vmul.f32 %v8053, %v7534
        %v8162 = vmul.f32 %v8057, %v7537
        %v8163 = vmul.f32 %v8061, %v7540
        %v8164 = vmul.f32 %v8065, %v7543
        %v8165 = vmul.f32 %v8069, %v7546
        %v8166 = vmul.f32 %v8073, %v7549
        %v8167 = vmul.f32 %v8077, %v7552
        %v8168 = vmul.f32 %v8081, %v7555
        %v8169 = vmul.f32 %v8085, %v7558
        %v8170 = vmul.f32 %v8089, %v7561
        %v8171 = vmul.f32 %v8093, %v7564
        %v8172 = vmul.f32 %v8097, %v7567
        %v8173 = vmul.f32 %v8101, %v7570
        %v8174 = vmul.f32 %v8105, %v7573
        %v8175 = vmul.f32 %v8109, %v7576
        %v8176 = vmul.f32 %v8113, %v7579
        %v8177 = vmul.f32 %v8117, %v7582
        %v8178 = vmul.f32 %v8121, %v7585
        %v8179 = vmul.f32 %v8125, %v7588
        %v8180 = vmul.f32 %v8129, %v7591
        %v8181 = vmul.f32 %v8133, %v7594
        %v8182 = vmul.f32 %v8137, %v7597
        %v8183 = vmul.f32 %v8141, %v7600
        %v8184 = vmul.f32 %v8145, %v7603
        %v8185 = vmul.f32 %v8149, %v7606
        %v8186 = vmul.f32 %v8153, %v7609
        %v8187 = vadd.f32 %v7995, %v8155
        %v8188 = vadd.f32 %v7996, %v8156
        %v8189 = vadd.f32 %v7997, %v8157
        %v8190 = vadd.f32 %v7998, %v8158
        %v8191 = vadd.f32 %v7999, %v8159
        %v8192 = vadd.f32 %v8000, %v8160
        %v8193 = vadd.f32 %v8001, %v8161
        %v8194 = vadd.f32 %v8002, %v8162
        %v8195 = vadd.f32 %v8003, %v8163
        %v8196 = vadd.f32 %v8004, %v8164
        %v8197 = vadd.f32 %v8005, %v8165
        %v8198 = vadd.f32 %v8006, %v8166
        %v8199 = vadd.f32 %v8007, %v8167
        %v8200 = vadd.f32 %v8008, %v8168
        %v8201 = vadd.f32 %v8009, %v8169
        %v8202 = vadd.f32 %v8010, %v8170
        %v8203 = vadd.f32 %v8011, %v8171
        %v8204 = vadd.f32 %v8012, %v8172
        %v8205 = vadd.f32 %v8013, %v8173
        %v8206 = vadd.f32 %v8014, %v8174
        %v8207 = vadd.f32 %v8015, %v8175
        %v8208 = vadd.f32 %v8016, %v8176
        %v8209 = vadd.f32 %v8017, %v8177
        %v8210 = vadd.f32 %v8018, %v8178
        %v8211 = vadd.f32 %v8019, %v8179
        %v8212 = vadd.f32 %v8020, %v8180
        %v8213 = vadd.f32 %v8021, %v8181
        %v8214 = vadd.f32 %v8022, %v8182
        %v8215 = vadd.f32 %v8023, %v8183
        %v8216 = vadd.f32 %v8024, %v8184
        %v8217 = vadd.f32 %v8025, %v8185
        %v8218 = vadd.f32 %v8026, %v8186
        %8219 = vst [vmem:[%s419] sm:$0xff] %v8187
        %8220 = vst [vmem:[%s419 + $0x8] sm:$0xff] %v8188
        %8221 = vst [vmem:[%s419 + $0x10] sm:$0xff] %v8189
        %8222 = vst [vmem:[%s419 + $0x18] sm:$0xff] %v8190
        %8223 = vst [vmem:[%s419 + $0x20] sm:$0xff] %v8191
        %8224 = vst [vmem:[%s419 + $0x28] sm:$0xff] %v8192
        %8225 = vst [vmem:[%s419 + $0x30] sm:$0xff] %v8193
        %8226 = vst [vmem:[%s419 + $0x38] sm:$0xff] %v8194
        %8227 = vst [vmem:[%s419 + $0x40] sm:$0xff] %v8195
        %8228 = vst [vmem:[%s419 + $0x48] sm:$0xff] %v8196
        %8229 = vst [vmem:[%s419 + $0x50] sm:$0xff] %v8197
        %8230 = vst [vmem:[%s419 + $0x58] sm:$0xff] %v8198
        %8231 = vst [vmem:[%s419 + $0x60] sm:$0xff] %v8199
        %8232 = vst [vmem:[%s419 + $0x68] sm:$0xff] %v8200
        %8233 = vst [vmem:[%s419 + $0x70] sm:$0xff] %v8201
        %8234 = vst [vmem:[%s419 + $0x78] sm:$0xff] %v8202
        %8235 = vst [vmem:[%s419 + $0x80] sm:$0xff] %v8203
        %8236 = vst [vmem:[%s419 + $0x88] sm:$0xff] %v8204
        %8237 = vst [vmem:[%s419 + $0x90] sm:$0xff] %v8205
        %8238 = vst [vmem:[%s419 + $0x98] sm:$0xff] %v8206
        %8239 = vst [vmem:[%s419 + $0xa0] sm:$0xff] %v8207
        %8240 = vst [vmem:[%s419 + $0xa8] sm:$0xff] %v8208
        %8241 = vst [vmem:[%s419 + $0xb0] sm:$0xff] %v8209
        %8242 = vst [vmem:[%s419 + $0xb8] sm:$0xff] %v8210
        %8243 = vst [vmem:[%s419 + $0xc0] sm:$0xff] %v8211
        %8244 = vst [vmem:[%s419 + $0xc8] sm:$0xff] %v8212
        %8245 = vst [vmem:[%s419 + $0xd0] sm:$0xff] %v8213
        %8246 = vst [vmem:[%s419 + $0xd8] sm:$0xff] %v8214
        %8247 = vst [vmem:[%s419 + $0xe0] sm:$0xff] %v8215
        %8248 = vst [vmem:[%s419 + $0xe8] sm:$0xff] %v8216
        %8249 = vst [vmem:[%s419 + $0xf0] sm:$0xff] %v8217
        %8250 = vst [vmem:[%s419 + $0xf8] sm:$0xff] %v8218
        %s8251 = sand.u32 %s199, 1
        %s8252 = scalar_lea.sflag [#allocation4], %s8251
        %s8253 = sand.u32 %s199, 1
        %s8254 = smul.addr %s8253, 256
        %s8255 = scalar_lea.vmem [#allocation13], %s8254
        // Predicated region
        $region73: #{tpu_custom_call.1} parent=47 // pred_check
          %p8256 = pneg %p209
        $region74: #{tpu_custom_call.1} parent=47 // pred_check_branch
          %8258 = sbr.rel (%p8256) target = $region76
        $region75: #{tpu_custom_call.1} parent=47 // pred_region
          %s8259 = smul.u32 32, %s29
          %8261 = vsyncadd %s8252, 0
          %s8262 = smul.addr %s8259, 8
          %s8263 = scalar_lea.hbm %s7, %s8262
          %s8264 = sshll.u32 %s8255, 4
          %s8265 = int_to_ptr.vmem [resolvable:$true] %s8264
          %s8266 = sshll.u32 %s8263, 4
          %s8267 = int_to_ptr.hbm [resolvable:$true] %s8266
          %8272 = dma.vmem_to_hbm [thread:$0]  %s8265, 4096, %s8267, %s8252, 128, 128, 8
        $region76: #{tpu_custom_call.1} parent=47 // pred_fallthru
          _
      $region48: #{tpu_custom_call.1} parent=5 // pred_fallthru
        _
      %p8273 = scmp.le.s32.totalorder 2, %s24
      // Predicated region
      $region77: #{tpu_custom_call.1} parent=5 // pred_check
        %p8274 = pneg %p8273
      $region78: #{tpu_custom_call.1} parent=5 // pred_check_branch
        %8276 = sbr.rel (%p8274) target = $region80
      $region79: #{tpu_custom_call.1} parent=5 // pred_region
        %s8277 = ssub.s32 %s24, 2
        // Predicated region
        $region81: #{tpu_custom_call.1} parent=79 // pred_check
          %p8278 = pneg %p215
        $region82: #{tpu_custom_call.1} parent=79 // pred_check_branch
          %8280 = sbr.rel (%p8278) target = $region84
        $region83: #{tpu_custom_call.1} parent=79 // pred_region
          %s8281 = sand.u32 %s200, 1
          %s8282 = scalar_lea.sflag [#allocation4], %s8281
          %s8283 = sand.u32 %s200, 1
          %s8284 = smul.addr %s8283, 256
          %s8285 = scalar_lea.vmem [#allocation13], %s8284
          %8287 = dma.done %s8282, 4096
        $region84: #{tpu_custom_call.1} parent=79 // pred_fallthru
          _
      $region80: #{tpu_custom_call.1} parent=5 // pred_fallthru
        _
    $region6: #{tpu_custom_call.1} parent=1 // loop_footer
      %s28 = sadd.s32 1, %s24
    $region7: #{tpu_custom_call.1} parent=1 // loop_footer_branch
      %23 = sbr.rel target = $region3
    $region8: #{tpu_custom_call.1} parent=1 // loop_exit
      _
    %8288 = vsyncpa [#allocation3], 1
    %s8289 = scalar_lea.sflag [#allocation3], 1
    %8290 = vsyncpa %s8289, 1
    %8291 = vsyncpa [#allocation6], 1
    %s8292 = scalar_lea.sflag [#allocation6], 1
    %8293 = vsyncpa %s8292, 1
    %8294 = vsyncpa [#allocation9], 1
    %8295 = vsyncpa [#allocation12], 1
    %8296 = vsyncpa [#allocation4], 1
    %s8297 = scalar_lea.sflag [#allocation4], 1
    %8298 = vsyncpa %s8297, 1

</llo_original>
